<compile_context>
chip_gen: v7x
topology: tpu7x:2x2x1
jax: 0.10.0
libtpu: 0.0.40
codegen_flags: <defaults>
</compile_context>

<pallas_src>
from functools import partial

import jax
import jax.numpy as jnp
from jax import lax
from jax.experimental import pallas as pl
from jax.experimental.pallas import tpu as pltpu


def _lstm_chunk_kernel(gx_ref, whh_ref, out_ref, h_scr, c_scr):
    """One grid step == one chunk of Tc timesteps.

    gx_ref : (Tc, B, 4H) f32   precomputed x_t @ W_ih^T + (b_ih + b_hh)
    whh_ref: (H, 4H)     bf16  recurrent weight (grid-invariant, resident)
    out_ref: (Tc, B, H)  f32   hidden states for this chunk
    h_scr  : (B, H)      f32   recurrent h, carried across chunks
    c_scr  : (B, H)      f32   recurrent c, carried across chunks
    """
    t_chunk = gx_ref.shape[0]
    hid = out_ref.shape[-1]

    @pl.when(pl.program_id(0) == 0)
    def _():
        h_scr[...] = jnp.zeros_like(h_scr)
        c_scr[...] = jnp.zeros_like(c_scr)

    # Loaded once per chunk; lane-aligned slices (3H = 1536, multiple of 128).
    whh_ifg = whh_ref[:, : 3 * hid]        # (H, 3H) bf16
    whh_o = whh_ref[:, 3 * hid:]           # (H,  H) bf16

    def _sig(x):
        # sigmoid(x) = 0.5*(tanh(x/2)+1): one EUP pass instead of exp + divide.
        return 0.5 * (jnp.tanh(0.5 * x) + 1.0)

    def step(t, carry):
        h, c = carry                        # (B, H) f32, register/VMEM-resident
        h_bf = h.astype(whh_ifg.dtype)
        pre = gx_ref[t]                     # (B, 4H) f32, bias already folded in
        # Split recurrent dot so the o-column drain overlaps the c path.
        g_ifg = pre[:, : 3 * hid] + jnp.dot(
            h_bf, whh_ifg, preferred_element_type=jnp.float32)
        g_o = pre[:, 3 * hid:] + jnp.dot(
            h_bf, whh_o, preferred_element_type=jnp.float32)
        i = _sig(g_ifg[:, :hid])
        f = _sig(g_ifg[:, hid:2 * hid])
        g = jnp.tanh(g_ifg[:, 2 * hid:])
        c_new = f * c + i * g
        o = _sig(g_o)
        h_new = o * jnp.tanh(c_new)
        out_ref[t] = h_new.astype(out_ref.dtype)
        return (h_new, c_new)

    # Bounded unroll: keeps LLO overlap across steps without blowing the
    # 64-vreg budget when Tc is large.
    h_fin, c_fin = lax.fori_loop(
        0, t_chunk, step, (h_scr[...], c_scr[...]), unroll=8
    )
    h_scr[...] = h_fin
    c_scr[...] = c_fin


@partial(jax.jit, static_argnames=("t_chunk",))
def lstm_module_forward(x, w_ih, w_hh, b_ih, b_hh, *, t_chunk=64):
    """x: (B, D, T) float32.  Returns (B, H, T) float32."""
    B, D, T = x.shape
    H = w_hh.shape[1]

    xt = jnp.transpose(x, (2, 0, 1))                          # (T, B, D)

    # --- Input projection for ALL timesteps: one big matmul (XLA, MXU-friendly).
    # bf16 operands, f32 accumulation; both biases folded in here.
    wih_t = jnp.transpose(w_ih).astype(jnp.bfloat16)          # (D, 4H)
    bias = (b_ih + b_hh).astype(jnp.float32)                  # (4H,)
    gx = jnp.dot(
        xt.reshape(T * B, D).astype(jnp.bfloat16), wih_t,
        preferred_element_type=jnp.float32,
    )
    gx = (gx + bias[None, :]).reshape(T, B, 4 * H)            # (T, B, 4H) f32

    whh_t = jnp.transpose(w_hh).astype(jnp.bfloat16)          # (H, 4H)

    # --- Sequential recurrence in a single Pallas kernel, chunked over time.
    Tc = min(t_chunk, T)
    n_chunks = pl.cdiv(T, Tc)
    T_pad = n_chunks * Tc
    if T_pad != T:
        # Zero-pad the pre-gates so every chunk is full; padded outputs are
        # discarded below (and finite, so they never contaminate h/c mid-run).
        gx = jnp.pad(gx, ((0, T_pad - T), (0, 0), (0, 0)))

    out_tbh = pl.pallas_call(
        _lstm_chunk_kernel,
        out_shape=jax.ShapeDtypeStruct((T_pad, B, H), jnp.float32),
        grid_spec=pltpu.PrefetchScalarGridSpec(
            num_scalar_prefetch=0,
            grid=(n_chunks,),
            in_specs=[
                pl.BlockSpec((Tc, B, 4 * H), lambda c: (c, 0, 0)),  # pre-gates chunk
                pl.BlockSpec((H, 4 * H), lambda c: (0, 0)),         # W_hh^T (resident)
            ],
            out_specs=pl.BlockSpec((Tc, B, H), lambda c: (c, 0, 0)),
            scratch_shapes=[
                pltpu.VMEM((B, H), jnp.float32),   # h, carried across chunks
                pltpu.VMEM((B, H), jnp.float32),   # c, carried across chunks
            ],
        ),
        compiler_params=pltpu.CompilerParams(
            dimension_semantics=("arbitrary",),    # recurrence: sequential in time
            vmem_limit_bytes=32 * 1024 * 1024,     # realizable on v5e/v6e/v7x
        ),
    )(gx, whh_t)

    out_tbh = out_tbh[:T]                                      # drop padded steps
    # (T,B,H) -> (B,H,T) to match the PyTorch module's output layout.  The kernel's
    # out_spec stays lane-dense (H=512); the permute is left to XLA — keeping
    # (T,B,H) / fusing the permute into the consumer is a caller-level choice.
    return jnp.transpose(out_tbh, (1, 2, 0))


def lstm_module_forward_ref(x, w_ih, w_hh, b_ih, b_hh):
    """Pure-JAX f32 reference (lax.scan) with identical semantics."""
    B, D, T = x.shape
    H = w_ih.shape[0] // 4
    xt = jnp.transpose(x, (2, 0, 1))

    def step(carry, x_t):
        h, c = carry
        gates = x_t @ w_ih.T + b_ih + h @ w_hh.T + b_hh
        i, f, g, o = jnp.split(gates, 4, axis=-1)
        i = jax.nn.sigmoid(i)
        f = jax.nn.sigmoid(f)
        g = jnp.tanh(g)
        o = jax.nn.sigmoid(o)
        c = f * c + i * g
        h = o * jnp.tanh(c)
        return (h, c), h

    h0 = jnp.zeros((B, H), x.dtype)
    c0 = jnp.zeros((B, H), x.dtype)
    _, hs = jax.lax.scan(step, (h0, c0), xt)                   # (T, B, H)
    return jnp.transpose(hs, (1, 2, 0))


if __name__ == "__main__":
    d_model = 512       # LSTM input size (module default)
    hidden = 512        # hard-coded hidden_size in LSTM_Module

    key = jax.random.PRNGKey(0)
    kx, k1, k2, k3, k4, kx2 = jax.random.split(key, 6)

    # PyTorch nn.LSTM init: U(-1/sqrt(hidden), 1/sqrt(hidden)) for all params.
    bound = 1.0 / (hidden ** 0.5)
    w_ih = jax.random.uniform(k1, (4 * hidden, d_model), jnp.float32, -bound, bound)
    w_hh = jax.random.uniform(k2, (4 * hidden, hidden), jnp.float32, -bound, bound)
    b_ih = jax.random.uniform(k3, (4 * hidden,), jnp.float32, -bound, bound)
    b_hh = jax.random.uniform(k4, (4 * hidden,), jnp.float32, -bound, bound)

    # --- Test 1: small demo shape (single chunk). -----------------------------
    B, T = 2, 8
    x = jax.random.normal(kx, (B, d_model, T), jnp.float32)
    out = jax.block_until_ready(lstm_module_forward(x, w_ih, w_hh, b_ih, b_hh))
    ref = lstm_module_forward_ref(x, w_ih, w_hh, b_ih, b_hh)
    assert out.shape == (B, hidden, T), out.shape
    # bf16 matmul operands (f32 accumulation) => ~1e-2-level deviation vs the
    # pure-f32 reference; bounded activations keep the recurrence error small.
    err = float(jnp.max(jnp.abs(out - ref)))
    assert err < 5e-2, f"mismatch vs reference (T=8): max abs err = {err}"

    # --- Test 2: non-divisor T + small chunk -> exercises multi-chunk carry
    # across grid steps and the zero-padded tail path. --------------------------
    T2 = 19
    x2 = jax.random.normal(kx2, (B, d_model, T2), jnp.float32)
    out2 = jax.block_until_ready(
        lstm_module_forward(x2, w_ih, w_hh, b_ih, b_hh, t_chunk=8))
    ref2 = lstm_module_forward_ref(x2, w_ih, w_hh, b_ih, b_hh)
    assert out2.shape == (B, hidden, T2), out2.shape
    err2 = float(jnp.max(jnp.abs(out2 - ref2)))
    assert err2 < 5e-2, f"mismatch vs reference (T=19, tail): max abs err = {err2}"

    print("KERNEL_OK")
</pallas_src>

<mosaic_0001>
module attributes {stable_mosaic.version = 11 : i64} {
  func.func @_lstm_chunk_kernel(%arg0: i32, %arg1: memref<8x2x2048xf32, #tpu.memory_space<vmem>>, %arg2: memref<512x2048xbf16, #tpu.memory_space<vmem>>, %arg3: memref<8x2x512xf32, #tpu.memory_space<vmem>>, %arg4: memref<2x512xf32, #tpu.memory_space<vmem>>, %arg5: memref<2x512xf32, #tpu.memory_space<vmem>>) attributes {dimension_semantics = [#tpu.dimension_semantics<arbitrary>], iteration_bounds = array<i64: 1>, scalar_prefetch = 0 : i64, scratch_operands = 2 : i64, tpu.core_type = #tpu.core_type<tc>, window_params = [{transform_indices = @transform_0, window_bounds = array<i64: 8, 2, 2048>}, {pipeline_mode = #tpu.pipeline_mode<synchronous>, transform_indices = @transform_1, window_bounds = array<i64: 512, 2048>}, {transform_indices = @transform_2, window_bounds = array<i64: 8, 2, 512>}]} {
    %c0_i32 = arith.constant 0 : i32
    %0 = arith.cmpi eq, %arg0, %c0_i32 : i32
    %1 = arith.extui %0 : i1 to i32
    %c0_i32_0 = arith.constant 0 : i32
    %2 = arith.cmpi ne, %1, %c0_i32_0 : i32
    scf.if %2 {
      %cst_131 = arith.constant 0.000000e+00 : f32
      %361 = vector.broadcast %cst_131 : f32 to vector<2x512xf32>
      %c0_132 = arith.constant 0 : index
      %c0_133 = arith.constant 0 : index
      %362 = vector.load %arg4[%c0_132, %c0_133] : memref<2x512xf32, #tpu.memory_space<vmem>>, vector<2x512xf32>
      tpu.vector_store %arg4[%c0_132, %c0_133], %361 {strides = array<i32>} : memref<2x512xf32, #tpu.memory_space<vmem>>, vector<2x512xf32>,
      %cst_134 = arith.constant 0.000000e+00 : f32
      %363 = vector.broadcast %cst_134 : f32 to vector<2x512xf32>
      %c0_135 = arith.constant 0 : index
      %c0_136 = arith.constant 0 : index
      %364 = vector.load %arg5[%c0_135, %c0_136] : memref<2x512xf32, #tpu.memory_space<vmem>>, vector<2x512xf32>
      tpu.vector_store %arg5[%c0_135, %c0_136], %363 {strides = array<i32>} : memref<2x512xf32, #tpu.memory_space<vmem>>, vector<2x512xf32>,
    } else {
    }
    %c0 = arith.constant 0 : index
    %c0_1 = arith.constant 0 : index
    %3 = vector.load %arg2[%c0, %c0_1] : memref<512x2048xbf16, #tpu.memory_space<vmem>>, vector<512x1536xbf16>
    %c0_2 = arith.constant 0 : index
    %c1536 = arith.constant 1536 : index
    %4 = vector.load %arg2[%c0_2, %c1536] : memref<512x2048xbf16, #tpu.memory_space<vmem>>, vector<512x512xbf16>
    %c0_3 = arith.constant 0 : index
    %c0_4 = arith.constant 0 : index
    %5 = vector.load %arg4[%c0_3, %c0_4] : memref<2x512xf32, #tpu.memory_space<vmem>>, vector<2x512xf32>
    %c0_5 = arith.constant 0 : index
    %c0_6 = arith.constant 0 : index
    %6 = vector.load %arg5[%c0_5, %c0_6] : memref<2x512xf32, #tpu.memory_space<vmem>>, vector<2x512xf32>
    %c0_i32_7 = arith.constant 0 : i32
    %7 = arith.truncf %5 : vector<2x512xf32> to vector<2x512xbf16>
    %8 = arith.index_cast %c0_i32_7 : i32 to index
    %c0_8 = arith.constant 0 : index
    %c0_9 = arith.constant 0 : index
    %9 = vector.load %arg1[%8, %c0_8, %c0_9] : memref<8x2x2048xf32, #tpu.memory_space<vmem>>, vector<1x2x2048xf32>
    %10 = vector.shape_cast %9 : vector<1x2x2048xf32> to vector<2x2048xf32>
    %11 = vector.extract_strided_slice %10 {offsets = [0, 0], sizes = [2, 1536], strides = [1, 1]} : vector<2x2048xf32> to vector<2x1536xf32>
    %cst = arith.constant dense<0.000000e+00> : vector<2x1536xf32>
    %12 = tpu.matmul %7, %3, %cst {dimension_numbers = #tpu.dot_dimension_numbers<[1], [0], [0], [1], [0, 0, 1, 1], [], []>} : vector<2x512xbf16>, vector<512x1536xbf16>, vector<2x1536xf32> -> vector<2x1536xf32>
    %13 = arith.addf %11, %12 : vector<2x1536xf32>
    %14 = vector.extract_strided_slice %10 {offsets = [0, 1536], sizes = [2, 512], strides = [1, 1]} : vector<2x2048xf32> to vector<2x512xf32>
    %cst_10 = arith.constant dense<0.000000e+00> : vector<2x512xf32>
    %15 = tpu.matmul %7, %4, %cst_10 {dimension_numbers = #tpu.dot_dimension_numbers<[1], [0], [0], [1], [0, 0, 1, 1], [], []>} : vector<2x512xbf16>, vector<512x512xbf16>, vector<2x512xf32> -> vector<2x512xf32>
    %16 = arith.addf %14, %15 : vector<2x512xf32>
    %17 = vector.extract_strided_slice %13 {offsets = [0, 0], sizes = [2, 512], strides = [1, 1]} : vector<2x1536xf32> to vector<2x512xf32>
    %cst_11 = arith.constant 5.000000e-01 : f32
    %18 = vector.broadcast %cst_11 : f32 to vector<2x512xf32>
    %19 = arith.mulf %18, %17 : vector<2x512xf32>
    %20 = math.tanh %19 : vector<2x512xf32>
    %cst_12 = arith.constant 1.000000e+00 : f32
    %21 = vector.broadcast %cst_12 : f32 to vector<2x512xf32>
    %22 = arith.addf %20, %21 : vector<2x512xf32>
    %cst_13 = arith.constant 5.000000e-01 : f32
    %23 = vector.broadcast %cst_13 : f32 to vector<2x512xf32>
    %24 = arith.mulf %23, %22 : vector<2x512xf32>
    %25 = vector.extract_strided_slice %13 {offsets = [0, 512], sizes = [2, 512], strides = [1, 1]} : vector<2x1536xf32> to vector<2x512xf32>
    %cst_14 = arith.constant 5.000000e-01 : f32
    %26 = vector.broadcast %cst_14 : f32 to vector<2x512xf32>
    %27 = arith.mulf %26, %25 : vector<2x512xf32>
    %28 = math.tanh %27 : vector<2x512xf32>
    %cst_15 = arith.constant 1.000000e+00 : f32
    %29 = vector.broadcast %cst_15 : f32 to vector<2x512xf32>
    %30 = arith.addf %28, %29 : vector<2x512xf32>
    %cst_16 = arith.constant 5.000000e-01 : f32
    %31 = vector.broadcast %cst_16 : f32 to vector<2x512xf32>
    %32 = arith.mulf %31, %30 : vector<2x512xf32>
    %33 = vector.extract_strided_slice %13 {offsets = [0, 1024], sizes = [2, 512], strides = [1, 1]} : vector<2x1536xf32> to vector<2x512xf32>
    %34 = math.tanh %33 : vector<2x512xf32>
    %35 = arith.mulf %32, %6 : vector<2x512xf32>
    %36 = arith.mulf %24, %34 : vector<2x512xf32>
    %37 = arith.addf %35, %36 : vector<2x512xf32>
    %cst_17 = arith.constant 5.000000e-01 : f32
    %38 = vector.broadcast %cst_17 : f32 to vector<2x512xf32>
    %39 = arith.mulf %38, %16 : vector<2x512xf32>
    %40 = math.tanh %39 : vector<2x512xf32>
    %cst_18 = arith.constant 1.000000e+00 : f32
    %41 = vector.broadcast %cst_18 : f32 to vector<2x512xf32>
    %42 = arith.addf %40, %41 : vector<2x512xf32>
    %cst_19 = arith.constant 5.000000e-01 : f32
    %43 = vector.broadcast %cst_19 : f32 to vector<2x512xf32>
    %44 = arith.mulf %43, %42 : vector<2x512xf32>
    %45 = math.tanh %37 : vector<2x512xf32>
    %46 = arith.mulf %44, %45 : vector<2x512xf32>
    %47 = arith.index_cast %c0_i32_7 : i32 to index
    %c0_20 = arith.constant 0 : index
    %c0_21 = arith.constant 0 : index
    %48 = vector.load %arg3[%47, %c0_20, %c0_21] : memref<8x2x512xf32, #tpu.memory_space<vmem>>, vector<1x2x512xf32>
    %49 = vector.shape_cast %48 : vector<1x2x512xf32> to vector<2x512xf32>
    %50 = vector.shape_cast %46 : vector<2x512xf32> to vector<1x2x512xf32>
    tpu.vector_store %arg3[%47, %c0_20, %c0_21], %50 {strides = array<i32>} : memref<8x2x512xf32, #tpu.memory_space<vmem>>, vector<1x2x512xf32>,
    %c1_i32 = arith.constant 1 : i32
    %51 = arith.truncf %46 : vector<2x512xf32> to vector<2x512xbf16>
    %52 = arith.index_cast %c1_i32 : i32 to index
    %c0_22 = arith.constant 0 : index
    %c0_23 = arith.constant 0 : index
    %53 = vector.load %arg1[%52, %c0_22, %c0_23] : memref<8x2x2048xf32, #tpu.memory_space<vmem>>, vector<1x2x2048xf32>
    %54 = vector.shape_cast %53 : vector<1x2x2048xf32> to vector<2x2048xf32>
    %55 = vector.extract_strided_slice %54 {offsets = [0, 0], sizes = [2, 1536], strides = [1, 1]} : vector<2x2048xf32> to vector<2x1536xf32>
    %cst_24 = arith.constant dense<0.000000e+00> : vector<2x1536xf32>
    %56 = tpu.matmul %51, %3, %cst_24 {dimension_numbers = #tpu.dot_dimension_numbers<[1], [0], [0], [1], [0, 0, 1, 1], [], []>} : vector<2x512xbf16>, vector<512x1536xbf16>, vector<2x1536xf32> -> vector<2x1536xf32>
    %57 = arith.addf %55, %56 : vector<2x1536xf32>
    %58 = vector.extract_strided_slice %54 {offsets = [0, 1536], sizes = [2, 512], strides = [1, 1]} : vector<2x2048xf32> to vector<2x512xf32>
    %cst_25 = arith.constant dense<0.000000e+00> : vector<2x512xf32>
    %59 = tpu.matmul %51, %4, %cst_25 {dimension_numbers = #tpu.dot_dimension_numbers<[1], [0], [0], [1], [0, 0, 1, 1], [], []>} : vector<2x512xbf16>, vector<512x512xbf16>, vector<2x512xf32> -> vector<2x512xf32>
    %60 = arith.addf %58, %59 : vector<2x512xf32>
    %61 = vector.extract_strided_slice %57 {offsets = [0, 0], sizes = [2, 512], strides = [1, 1]} : vector<2x1536xf32> to vector<2x512xf32>
    %cst_26 = arith.constant 5.000000e-01 : f32
    %62 = vector.broadcast %cst_26 : f32 to vector<2x512xf32>
    %63 = arith.mulf %62, %61 : vector<2x512xf32>
    %64 = math.tanh %63 : vector<2x512xf32>
    %cst_27 = arith.constant 1.000000e+00 : f32
    %65 = vector.broadcast %cst_27 : f32 to vector<2x512xf32>
    %66 = arith.addf %64, %65 : vector<2x512xf32>
    %cst_28 = arith.constant 5.000000e-01 : f32
    %67 = vector.broadcast %cst_28 : f32 to vector<2x512xf32>
    %68 = arith.mulf %67, %66 : vector<2x512xf32>
    %69 = vector.extract_strided_slice %57 {offsets = [0, 512], sizes = [2, 512], strides = [1, 1]} : vector<2x1536xf32> to vector<2x512xf32>
    %cst_29 = arith.constant 5.000000e-01 : f32
    %70 = vector.broadcast %cst_29 : f32 to vector<2x512xf32>
    %71 = arith.mulf %70, %69 : vector<2x512xf32>
    %72 = math.tanh %71 : vector<2x512xf32>
    %cst_30 = arith.constant 1.000000e+00 : f32
    %73 = vector.broadcast %cst_30 : f32 to vector<2x512xf32>
    %74 = arith.addf %72, %73 : vector<2x512xf32>
    %cst_31 = arith.constant 5.000000e-01 : f32
    %75 = vector.broadcast %cst_31 : f32 to vector<2x512xf32>
    %76 = arith.mulf %75, %74 : vector<2x512xf32>
    %77 = vector.extract_strided_slice %57 {offsets = [0, 1024], sizes = [2, 512], strides = [1, 1]} : vector<2x1536xf32> to vector<2x512xf32>
    %78 = math.tanh %77 : vector<2x512xf32>
    %79 = arith.mulf %76, %37 : vector<2x512xf32>
    %80 = arith.mulf %68, %78 : vector<2x512xf32>
    %81 = arith.addf %79, %80 : vector<2x512xf32>
    %cst_32 = arith.constant 5.000000e-01 : f32
    %82 = vector.broadcast %cst_32 : f32 to vector<2x512xf32>
    %83 = arith.mulf %82, %60 : vector<2x512xf32>
    %84 = math.tanh %83 : vector<2x512xf32>
    %cst_33 = arith.constant 1.000000e+00 : f32
    %85 = vector.broadcast %cst_33 : f32 to vector<2x512xf32>
    %86 = arith.addf %84, %85 : vector<2x512xf32>
    %cst_34 = arith.constant 5.000000e-01 : f32
    %87 = vector.broadcast %cst_34 : f32 to vector<2x512xf32>
    %88 = arith.mulf %87, %86 : vector<2x512xf32>
    %89 = math.tanh %81 : vector<2x512xf32>
    %90 = arith.mulf %88, %89 : vector<2x512xf32>
    %91 = arith.index_cast %c1_i32 : i32 to index
    %c0_35 = arith.constant 0 : index
    %c0_36 = arith.constant 0 : index
    %92 = vector.load %arg3[%91, %c0_35, %c0_36] : memref<8x2x512xf32, #tpu.memory_space<vmem>>, vector<1x2x512xf32>
    %93 = vector.shape_cast %92 : vector<1x2x512xf32> to vector<2x512xf32>
    %94 = vector.shape_cast %90 : vector<2x512xf32> to vector<1x2x512xf32>
    tpu.vector_store %arg3[%91, %c0_35, %c0_36], %94 {strides = array<i32>} : memref<8x2x512xf32, #tpu.memory_space<vmem>>, vector<1x2x512xf32>,
    %c2_i32 = arith.constant 2 : i32
    %95 = arith.truncf %90 : vector<2x512xf32> to vector<2x512xbf16>
    %96 = arith.index_cast %c2_i32 : i32 to index
    %c0_37 = arith.constant 0 : index
    %c0_38 = arith.constant 0 : index
    %97 = vector.load %arg1[%96, %c0_37, %c0_38] : memref<8x2x2048xf32, #tpu.memory_space<vmem>>, vector<1x2x2048xf32>
    %98 = vector.shape_cast %97 : vector<1x2x2048xf32> to vector<2x2048xf32>
    %99 = vector.extract_strided_slice %98 {offsets = [0, 0], sizes = [2, 1536], strides = [1, 1]} : vector<2x2048xf32> to vector<2x1536xf32>
    %cst_39 = arith.constant dense<0.000000e+00> : vector<2x1536xf32>
    %100 = tpu.matmul %95, %3, %cst_39 {dimension_numbers = #tpu.dot_dimension_numbers<[1], [0], [0], [1], [0, 0, 1, 1], [], []>} : vector<2x512xbf16>, vector<512x1536xbf16>, vector<2x1536xf32> -> vector<2x1536xf32>
    %101 = arith.addf %99, %100 : vector<2x1536xf32>
    %102 = vector.extract_strided_slice %98 {offsets = [0, 1536], sizes = [2, 512], strides = [1, 1]} : vector<2x2048xf32> to vector<2x512xf32>
    %cst_40 = arith.constant dense<0.000000e+00> : vector<2x512xf32>
    %103 = tpu.matmul %95, %4, %cst_40 {dimension_numbers = #tpu.dot_dimension_numbers<[1], [0], [0], [1], [0, 0, 1, 1], [], []>} : vector<2x512xbf16>, vector<512x512xbf16>, vector<2x512xf32> -> vector<2x512xf32>
    %104 = arith.addf %102, %103 : vector<2x512xf32>
    %105 = vector.extract_strided_slice %101 {offsets = [0, 0], sizes = [2, 512], strides = [1, 1]} : vector<2x1536xf32> to vector<2x512xf32>
    %cst_41 = arith.constant 5.000000e-01 : f32
    %106 = vector.broadcast %cst_41 : f32 to vector<2x512xf32>
    %107 = arith.mulf %106, %105 : vector<2x512xf32>
    %108 = math.tanh %107 : vector<2x512xf32>
    %cst_42 = arith.constant 1.000000e+00 : f32
    %109 = vector.broadcast %cst_42 : f32 to vector<2x512xf32>
    %110 = arith.addf %108, %109 : vector<2x512xf32>
    %cst_43 = arith.constant 5.000000e-01 : f32
    %111 = vector.broadcast %cst_43 : f32 to vector<2x512xf32>
    %112 = arith.mulf %111, %110 : vector<2x512xf32>
    %113 = vector.extract_strided_slice %101 {offsets = [0, 512], sizes = [2, 512], strides = [1, 1]} : vector<2x1536xf32> to vector<2x512xf32>
    %cst_44 = arith.constant 5.000000e-01 : f32
    %114 = vector.broadcast %cst_44 : f32 to vector<2x512xf32>
    %115 = arith.mulf %114, %113 : vector<2x512xf32>
    %116 = math.tanh %115 : vector<2x512xf32>
    %cst_45 = arith.constant 1.000000e+00 : f32
    %117 = vector.broadcast %cst_45 : f32 to vector<2x512xf32>
    %118 = arith.addf %116, %117 : vector<2x512xf32>
    %cst_46 = arith.constant 5.000000e-01 : f32
    %119 = vector.broadcast %cst_46 : f32 to vector<2x512xf32>
    %120 = arith.mulf %119, %118 : vector<2x512xf32>
    %121 = vector.extract_strided_slice %101 {offsets = [0, 1024], sizes = [2, 512], strides = [1, 1]} : vector<2x1536xf32> to vector<2x512xf32>
    %122 = math.tanh %121 : vector<2x512xf32>
    %123 = arith.mulf %120, %81 : vector<2x512xf32>
    %124 = arith.mulf %112, %122 : vector<2x512xf32>
    %125 = arith.addf %123, %124 : vector<2x512xf32>
    %cst_47 = arith.constant 5.000000e-01 : f32
    %126 = vector.broadcast %cst_47 : f32 to vector<2x512xf32>
    %127 = arith.mulf %126, %104 : vector<2x512xf32>
    %128 = math.tanh %127 : vector<2x512xf32>
    %cst_48 = arith.constant 1.000000e+00 : f32
    %129 = vector.broadcast %cst_48 : f32 to vector<2x512xf32>
    %130 = arith.addf %128, %129 : vector<2x512xf32>
    %cst_49 = arith.constant 5.000000e-01 : f32
    %131 = vector.broadcast %cst_49 : f32 to vector<2x512xf32>
    %132 = arith.mulf %131, %130 : vector<2x512xf32>
    %133 = math.tanh %125 : vector<2x512xf32>
    %134 = arith.mulf %132, %133 : vector<2x512xf32>
    %135 = arith.index_cast %c2_i32 : i32 to index
    %c0_50 = arith.constant 0 : index
    %c0_51 = arith.constant 0 : index
    %136 = vector.load %arg3[%135, %c0_50, %c0_51] : memref<8x2x512xf32, #tpu.memory_space<vmem>>, vector<1x2x512xf32>
    %137 = vector.shape_cast %136 : vector<1x2x512xf32> to vector<2x512xf32>
    %138 = vector.shape_cast %134 : vector<2x512xf32> to vector<1x2x512xf32>
    tpu.vector_store %arg3[%135, %c0_50, %c0_51], %138 {strides = array<i32>} : memref<8x2x512xf32, #tpu.memory_space<vmem>>, vector<1x2x512xf32>,
    %c3_i32 = arith.constant 3 : i32
    %139 = arith.truncf %134 : vector<2x512xf32> to vector<2x512xbf16>
    %140 = arith.index_cast %c3_i32 : i32 to index
    %c0_52 = arith.constant 0 : index
    %c0_53 = arith.constant 0 : index
    %141 = vector.load %arg1[%140, %c0_52, %c0_53] : memref<8x2x2048xf32, #tpu.memory_space<vmem>>, vector<1x2x2048xf32>
    %142 = vector.shape_cast %141 : vector<1x2x2048xf32> to vector<2x2048xf32>
    %143 = vector.extract_strided_slice %142 {offsets = [0, 0], sizes = [2, 1536], strides = [1, 1]} : vector<2x2048xf32> to vector<2x1536xf32>
    %cst_54 = arith.constant dense<0.000000e+00> : vector<2x1536xf32>
    %144 = tpu.matmul %139, %3, %cst_54 {dimension_numbers = #tpu.dot_dimension_numbers<[1], [0], [0], [1], [0, 0, 1, 1], [], []>} : vector<2x512xbf16>, vector<512x1536xbf16>, vector<2x1536xf32> -> vector<2x1536xf32>
    %145 = arith.addf %143, %144 : vector<2x1536xf32>
    %146 = vector.extract_strided_slice %142 {offsets = [0, 1536], sizes = [2, 512], strides = [1, 1]} : vector<2x2048xf32> to vector<2x512xf32>
    %cst_55 = arith.constant dense<0.000000e+00> : vector<2x512xf32>
    %147 = tpu.matmul %139, %4, %cst_55 {dimension_numbers = #tpu.dot_dimension_numbers<[1], [0], [0], [1], [0, 0, 1, 1], [], []>} : vector<2x512xbf16>, vector<512x512xbf16>, vector<2x512xf32> -> vector<2x512xf32>
    %148 = arith.addf %146, %147 : vector<2x512xf32>
    %149 = vector.extract_strided_slice %145 {offsets = [0, 0], sizes = [2, 512], strides = [1, 1]} : vector<2x1536xf32> to vector<2x512xf32>
    %cst_56 = arith.constant 5.000000e-01 : f32
    %150 = vector.broadcast %cst_56 : f32 to vector<2x512xf32>
    %151 = arith.mulf %150, %149 : vector<2x512xf32>
    %152 = math.tanh %151 : vector<2x512xf32>
    %cst_57 = arith.constant 1.000000e+00 : f32
    %153 = vector.broadcast %cst_57 : f32 to vector<2x512xf32>
    %154 = arith.addf %152, %153 : vector<2x512xf32>
    %cst_58 = arith.constant 5.000000e-01 : f32
    %155 = vector.broadcast %cst_58 : f32 to vector<2x512xf32>
    %156 = arith.mulf %155, %154 : vector<2x512xf32>
    %157 = vector.extract_strided_slice %145 {offsets = [0, 512], sizes = [2, 512], strides = [1, 1]} : vector<2x1536xf32> to vector<2x512xf32>
    %cst_59 = arith.constant 5.000000e-01 : f32
    %158 = vector.broadcast %cst_59 : f32 to vector<2x512xf32>
    %159 = arith.mulf %158, %157 : vector<2x512xf32>
    %160 = math.tanh %159 : vector<2x512xf32>
    %cst_60 = arith.constant 1.000000e+00 : f32
    %161 = vector.broadcast %cst_60 : f32 to vector<2x512xf32>
    %162 = arith.addf %160, %161 : vector<2x512xf32>
    %cst_61 = arith.constant 5.000000e-01 : f32
    %163 = vector.broadcast %cst_61 : f32 to vector<2x512xf32>
    %164 = arith.mulf %163, %162 : vector<2x512xf32>
    %165 = vector.extract_strided_slice %145 {offsets = [0, 1024], sizes = [2, 512], strides = [1, 1]} : vector<2x1536xf32> to vector<2x512xf32>
    %166 = math.tanh %165 : vector<2x512xf32>
    %167 = arith.mulf %164, %125 : vector<2x512xf32>
    %168 = arith.mulf %156, %166 : vector<2x512xf32>
    %169 = arith.addf %167, %168 : vector<2x512xf32>
    %cst_62 = arith.constant 5.000000e-01 : f32
    %170 = vector.broadcast %cst_62 : f32 to vector<2x512xf32>
    %171 = arith.mulf %170, %148 : vector<2x512xf32>
    %172 = math.tanh %171 : vector<2x512xf32>
    %cst_63 = arith.constant 1.000000e+00 : f32
    %173 = vector.broadcast %cst_63 : f32 to vector<2x512xf32>
    %174 = arith.addf %172, %173 : vector<2x512xf32>
    %cst_64 = arith.constant 5.000000e-01 : f32
    %175 = vector.broadcast %cst_64 : f32 to vector<2x512xf32>
    %176 = arith.mulf %175, %174 : vector<2x512xf32>
    %177 = math.tanh %169 : vector<2x512xf32>
    %178 = arith.mulf %176, %177 : vector<2x512xf32>
    %179 = arith.index_cast %c3_i32 : i32 to index
    %c0_65 = arith.constant 0 : index
    %c0_66 = arith.constant 0 : index
    %180 = vector.load %arg3[%179, %c0_65, %c0_66] : memref<8x2x512xf32, #tpu.memory_space<vmem>>, vector<1x2x512xf32>
    %181 = vector.shape_cast %180 : vector<1x2x512xf32> to vector<2x512xf32>
    %182 = vector.shape_cast %178 : vector<2x512xf32> to vector<1x2x512xf32>
    tpu.vector_store %arg3[%179, %c0_65, %c0_66], %182 {strides = array<i32>} : memref<8x2x512xf32, #tpu.memory_space<vmem>>, vector<1x2x512xf32>,
    %c4_i32 = arith.constant 4 : i32
    %183 = arith.truncf %178 : vector<2x512xf32> to vector<2x512xbf16>
    %184 = arith.index_cast %c4_i32 : i32 to index
    %c0_67 = arith.constant 0 : index
    %c0_68 = arith.constant 0 : index
    %185 = vector.load %arg1[%184, %c0_67, %c0_68] : memref<8x2x2048xf32, #tpu.memory_space<vmem>>, vector<1x2x2048xf32>
    %186 = vector.shape_cast %185 : vector<1x2x2048xf32> to vector<2x2048xf32>
    %187 = vector.extract_strided_slice %186 {offsets = [0, 0], sizes = [2, 1536], strides = [1, 1]} : vector<2x2048xf32> to vector<2x1536xf32>
    %cst_69 = arith.constant dense<0.000000e+00> : vector<2x1536xf32>
    %188 = tpu.matmul %183, %3, %cst_69 {dimension_numbers = #tpu.dot_dimension_numbers<[1], [0], [0], [1], [0, 0, 1, 1], [], []>} : vector<2x512xbf16>, vector<512x1536xbf16>, vector<2x1536xf32> -> vector<2x1536xf32>
    %189 = arith.addf %187, %188 : vector<2x1536xf32>
    %190 = vector.extract_strided_slice %186 {offsets = [0, 1536], sizes = [2, 512], strides = [1, 1]} : vector<2x2048xf32> to vector<2x512xf32>
    %cst_70 = arith.constant dense<0.000000e+00> : vector<2x512xf32>
    %191 = tpu.matmul %183, %4, %cst_70 {dimension_numbers = #tpu.dot_dimension_numbers<[1], [0], [0], [1], [0, 0, 1, 1], [], []>} : vector<2x512xbf16>, vector<512x512xbf16>, vector<2x512xf32> -> vector<2x512xf32>
    %192 = arith.addf %190, %191 : vector<2x512xf32>
    %193 = vector.extract_strided_slice %189 {offsets = [0, 0], sizes = [2, 512], strides = [1, 1]} : vector<2x1536xf32> to vector<2x512xf32>
    %cst_71 = arith.constant 5.000000e-01 : f32
    %194 = vector.broadcast %cst_71 : f32 to vector<2x512xf32>
    %195 = arith.mulf %194, %193 : vector<2x512xf32>
    %196 = math.tanh %195 : vector<2x512xf32>
    %cst_72 = arith.constant 1.000000e+00 : f32
    %197 = vector.broadcast %cst_72 : f32 to vector<2x512xf32>
    %198 = arith.addf %196, %197 : vector<2x512xf32>
    %cst_73 = arith.constant 5.000000e-01 : f32
    %199 = vector.broadcast %cst_73 : f32 to vector<2x512xf32>
    %200 = arith.mulf %199, %198 : vector<2x512xf32>
    %201 = vector.extract_strided_slice %189 {offsets = [0, 512], sizes = [2, 512], strides = [1, 1]} : vector<2x1536xf32> to vector<2x512xf32>
    %cst_74 = arith.constant 5.000000e-01 : f32
    %202 = vector.broadcast %cst_74 : f32 to vector<2x512xf32>
    %203 = arith.mulf %202, %201 : vector<2x512xf32>
    %204 = math.tanh %203 : vector<2x512xf32>
    %cst_75 = arith.constant 1.000000e+00 : f32
    %205 = vector.broadcast %cst_75 : f32 to vector<2x512xf32>
    %206 = arith.addf %204, %205 : vector<2x512xf32>
    %cst_76 = arith.constant 5.000000e-01 : f32
    %207 = vector.broadcast %cst_76 : f32 to vector<2x512xf32>
    %208 = arith.mulf %207, %206 : vector<2x512xf32>
    %209 = vector.extract_strided_slice %189 {offsets = [0, 1024], sizes = [2, 512], strides = [1, 1]} : vector<2x1536xf32> to vector<2x512xf32>
    %210 = math.tanh %209 : vector<2x512xf32>
    %211 = arith.mulf %208, %169 : vector<2x512xf32>
    %212 = arith.mulf %200, %210 : vector<2x512xf32>
    %213 = arith.addf %211, %212 : vector<2x512xf32>
    %cst_77 = arith.constant 5.000000e-01 : f32
    %214 = vector.broadcast %cst_77 : f32 to vector<2x512xf32>
    %215 = arith.mulf %214, %192 : vector<2x512xf32>
    %216 = math.tanh %215 : vector<2x512xf32>
    %cst_78 = arith.constant 1.000000e+00 : f32
    %217 = vector.broadcast %cst_78 : f32 to vector<2x512xf32>
    %218 = arith.addf %216, %217 : vector<2x512xf32>
    %cst_79 = arith.constant 5.000000e-01 : f32
    %219 = vector.broadcast %cst_79 : f32 to vector<2x512xf32>
    %220 = arith.mulf %219, %218 : vector<2x512xf32>
    %221 = math.tanh %213 : vector<2x512xf32>
    %222 = arith.mulf %220, %221 : vector<2x512xf32>
    %223 = arith.index_cast %c4_i32 : i32 to index
    %c0_80 = arith.constant 0 : index
    %c0_81 = arith.constant 0 : index
    %224 = vector.load %arg3[%223, %c0_80, %c0_81] : memref<8x2x512xf32, #tpu.memory_space<vmem>>, vector<1x2x512xf32>
    %225 = vector.shape_cast %224 : vector<1x2x512xf32> to vector<2x512xf32>
    %226 = vector.shape_cast %222 : vector<2x512xf32> to vector<1x2x512xf32>
    tpu.vector_store %arg3[%223, %c0_80, %c0_81], %226 {strides = array<i32>} : memref<8x2x512xf32, #tpu.memory_space<vmem>>, vector<1x2x512xf32>,
    %c5_i32 = arith.constant 5 : i32
    %227 = arith.truncf %222 : vector<2x512xf32> to vector<2x512xbf16>
    %228 = arith.index_cast %c5_i32 : i32 to index
    %c0_82 = arith.constant 0 : index
    %c0_83 = arith.constant 0 : index
    %229 = vector.load %arg1[%228, %c0_82, %c0_83] : memref<8x2x2048xf32, #tpu.memory_space<vmem>>, vector<1x2x2048xf32>
    %230 = vector.shape_cast %229 : vector<1x2x2048xf32> to vector<2x2048xf32>
    %231 = vector.extract_strided_slice %230 {offsets = [0, 0], sizes = [2, 1536], strides = [1, 1]} : vector<2x2048xf32> to vector<2x1536xf32>
    %cst_84 = arith.constant dense<0.000000e+00> : vector<2x1536xf32>
    %232 = tpu.matmul %227, %3, %cst_84 {dimension_numbers = #tpu.dot_dimension_numbers<[1], [0], [0], [1], [0, 0, 1, 1], [], []>} : vector<2x512xbf16>, vector<512x1536xbf16>, vector<2x1536xf32> -> vector<2x1536xf32>
    %233 = arith.addf %231, %232 : vector<2x1536xf32>
    %234 = vector.extract_strided_slice %230 {offsets = [0, 1536], sizes = [2, 512], strides = [1, 1]} : vector<2x2048xf32> to vector<2x512xf32>
    %cst_85 = arith.constant dense<0.000000e+00> : vector<2x512xf32>
    %235 = tpu.matmul %227, %4, %cst_85 {dimension_numbers = #tpu.dot_dimension_numbers<[1], [0], [0], [1], [0, 0, 1, 1], [], []>} : vector<2x512xbf16>, vector<512x512xbf16>, vector<2x512xf32> -> vector<2x512xf32>
    %236 = arith.addf %234, %235 : vector<2x512xf32>
    %237 = vector.extract_strided_slice %233 {offsets = [0, 0], sizes = [2, 512], strides = [1, 1]} : vector<2x1536xf32> to vector<2x512xf32>
    %cst_86 = arith.constant 5.000000e-01 : f32
    %238 = vector.broadcast %cst_86 : f32 to vector<2x512xf32>
    %239 = arith.mulf %238, %237 : vector<2x512xf32>
    %240 = math.tanh %239 : vector<2x512xf32>
    %cst_87 = arith.constant 1.000000e+00 : f32
    %241 = vector.broadcast %cst_87 : f32 to vector<2x512xf32>
    %242 = arith.addf %240, %241 : vector<2x512xf32>
    %cst_88 = arith.constant 5.000000e-01 : f32
    %243 = vector.broadcast %cst_88 : f32 to vector<2x512xf32>
    %244 = arith.mulf %243, %242 : vector<2x512xf32>
    %245 = vector.extract_strided_slice %233 {offsets = [0, 512], sizes = [2, 512], strides = [1, 1]} : vector<2x1536xf32> to vector<2x512xf32>
    %cst_89 = arith.constant 5.000000e-01 : f32
    %246 = vector.broadcast %cst_89 : f32 to vector<2x512xf32>
    %247 = arith.mulf %246, %245 : vector<2x512xf32>
    %248 = math.tanh %247 : vector<2x512xf32>
    %cst_90 = arith.constant 1.000000e+00 : f32
    %249 = vector.broadcast %cst_90 : f32 to vector<2x512xf32>
    %250 = arith.addf %248, %249 : vector<2x512xf32>
    %cst_91 = arith.constant 5.000000e-01 : f32
    %251 = vector.broadcast %cst_91 : f32 to vector<2x512xf32>
    %252 = arith.mulf %251, %250 : vector<2x512xf32>
    %253 = vector.extract_strided_slice %233 {offsets = [0, 1024], sizes = [2, 512], strides = [1, 1]} : vector<2x1536xf32> to vector<2x512xf32>
    %254 = math.tanh %253 : vector<2x512xf32>
    %255 = arith.mulf %252, %213 : vector<2x512xf32>
    %256 = arith.mulf %244, %254 : vector<2x512xf32>
    %257 = arith.addf %255, %256 : vector<2x512xf32>
    %cst_92 = arith.constant 5.000000e-01 : f32
    %258 = vector.broadcast %cst_92 : f32 to vector<2x512xf32>
    %259 = arith.mulf %258, %236 : vector<2x512xf32>
    %260 = math.tanh %259 : vector<2x512xf32>
    %cst_93 = arith.constant 1.000000e+00 : f32
    %261 = vector.broadcast %cst_93 : f32 to vector<2x512xf32>
    %262 = arith.addf %260, %261 : vector<2x512xf32>
    %cst_94 = arith.constant 5.000000e-01 : f32
    %263 = vector.broadcast %cst_94 : f32 to vector<2x512xf32>
    %264 = arith.mulf %263, %262 : vector<2x512xf32>
    %265 = math.tanh %257 : vector<2x512xf32>
    %266 = arith.mulf %264, %265 : vector<2x512xf32>
    %267 = arith.index_cast %c5_i32 : i32 to index
    %c0_95 = arith.constant 0 : index
    %c0_96 = arith.constant 0 : index
    %268 = vector.load %arg3[%267, %c0_95, %c0_96] : memref<8x2x512xf32, #tpu.memory_space<vmem>>, vector<1x2x512xf32>
    %269 = vector.shape_cast %268 : vector<1x2x512xf32> to vector<2x512xf32>
    %270 = vector.shape_cast %266 : vector<2x512xf32> to vector<1x2x512xf32>
    tpu.vector_store %arg3[%267, %c0_95, %c0_96], %270 {strides = array<i32>} : memref<8x2x512xf32, #tpu.memory_space<vmem>>, vector<1x2x512xf32>,
    %c6_i32 = arith.constant 6 : i32
    %271 = arith.truncf %266 : vector<2x512xf32> to vector<2x512xbf16>
    %272 = arith.index_cast %c6_i32 : i32 to index
    %c0_97 = arith.constant 0 : index
    %c0_98 = arith.constant 0 : index
    %273 = vector.load %arg1[%272, %c0_97, %c0_98] : memref<8x2x2048xf32, #tpu.memory_space<vmem>>, vector<1x2x2048xf32>
    %274 = vector.shape_cast %273 : vector<1x2x2048xf32> to vector<2x2048xf32>
    %275 = vector.extract_strided_slice %274 {offsets = [0, 0], sizes = [2, 1536], strides = [1, 1]} : vector<2x2048xf32> to vector<2x1536xf32>
    %cst_99 = arith.constant dense<0.000000e+00> : vector<2x1536xf32>
    %276 = tpu.matmul %271, %3, %cst_99 {dimension_numbers = #tpu.dot_dimension_numbers<[1], [0], [0], [1], [0, 0, 1, 1], [], []>} : vector<2x512xbf16>, vector<512x1536xbf16>, vector<2x1536xf32> -> vector<2x1536xf32>
    %277 = arith.addf %275, %276 : vector<2x1536xf32>
    %278 = vector.extract_strided_slice %274 {offsets = [0, 1536], sizes = [2, 512], strides = [1, 1]} : vector<2x2048xf32> to vector<2x512xf32>
    %cst_100 = arith.constant dense<0.000000e+00> : vector<2x512xf32>
    %279 = tpu.matmul %271, %4, %cst_100 {dimension_numbers = #tpu.dot_dimension_numbers<[1], [0], [0], [1], [0, 0, 1, 1], [], []>} : vector<2x512xbf16>, vector<512x512xbf16>, vector<2x512xf32> -> vector<2x512xf32>
    %280 = arith.addf %278, %279 : vector<2x512xf32>
    %281 = vector.extract_strided_slice %277 {offsets = [0, 0], sizes = [2, 512], strides = [1, 1]} : vector<2x1536xf32> to vector<2x512xf32>
    %cst_101 = arith.constant 5.000000e-01 : f32
    %282 = vector.broadcast %cst_101 : f32 to vector<2x512xf32>
    %283 = arith.mulf %282, %281 : vector<2x512xf32>
    %284 = math.tanh %283 : vector<2x512xf32>
    %cst_102 = arith.constant 1.000000e+00 : f32
    %285 = vector.broadcast %cst_102 : f32 to vector<2x512xf32>
    %286 = arith.addf %284, %285 : vector<2x512xf32>
    %cst_103 = arith.constant 5.000000e-01 : f32
    %287 = vector.broadcast %cst_103 : f32 to vector<2x512xf32>
    %288 = arith.mulf %287, %286 : vector<2x512xf32>
    %289 = vector.extract_strided_slice %277 {offsets = [0, 512], sizes = [2, 512], strides = [1, 1]} : vector<2x1536xf32> to vector<2x512xf32>
    %cst_104 = arith.constant 5.000000e-01 : f32
    %290 = vector.broadcast %cst_104 : f32 to vector<2x512xf32>
    %291 = arith.mulf %290, %289 : vector<2x512xf32>
    %292 = math.tanh %291 : vector<2x512xf32>
    %cst_105 = arith.constant 1.000000e+00 : f32
    %293 = vector.broadcast %cst_105 : f32 to vector<2x512xf32>
    %294 = arith.addf %292, %293 : vector<2x512xf32>
    %cst_106 = arith.constant 5.000000e-01 : f32
    %295 = vector.broadcast %cst_106 : f32 to vector<2x512xf32>
    %296 = arith.mulf %295, %294 : vector<2x512xf32>
    %297 = vector.extract_strided_slice %277 {offsets = [0, 1024], sizes = [2, 512], strides = [1, 1]} : vector<2x1536xf32> to vector<2x512xf32>
    %298 = math.tanh %297 : vector<2x512xf32>
    %299 = arith.mulf %296, %257 : vector<2x512xf32>
    %300 = arith.mulf %288, %298 : vector<2x512xf32>
    %301 = arith.addf %299, %300 : vector<2x512xf32>
    %cst_107 = arith.constant 5.000000e-01 : f32
    %302 = vector.broadcast %cst_107 : f32 to vector<2x512xf32>
    %303 = arith.mulf %302, %280 : vector<2x512xf32>
    %304 = math.tanh %303 : vector<2x512xf32>
    %cst_108 = arith.constant 1.000000e+00 : f32
    %305 = vector.broadcast %cst_108 : f32 to vector<2x512xf32>
    %306 = arith.addf %304, %305 : vector<2x512xf32>
    %cst_109 = arith.constant 5.000000e-01 : f32
    %307 = vector.broadcast %cst_109 : f32 to vector<2x512xf32>
    %308 = arith.mulf %307, %306 : vector<2x512xf32>
    %309 = math.tanh %301 : vector<2x512xf32>
    %310 = arith.mulf %308, %309 : vector<2x512xf32>
    %311 = arith.index_cast %c6_i32 : i32 to index
    %c0_110 = arith.constant 0 : index
    %c0_111 = arith.constant 0 : index
    %312 = vector.load %arg3[%311, %c0_110, %c0_111] : memref<8x2x512xf32, #tpu.memory_space<vmem>>, vector<1x2x512xf32>
    %313 = vector.shape_cast %312 : vector<1x2x512xf32> to vector<2x512xf32>
    %314 = vector.shape_cast %310 : vector<2x512xf32> to vector<1x2x512xf32>
    tpu.vector_store %arg3[%311, %c0_110, %c0_111], %314 {strides = array<i32>} : memref<8x2x512xf32, #tpu.memory_space<vmem>>, vector<1x2x512xf32>,
    %c7_i32 = arith.constant 7 : i32
    %315 = arith.truncf %310 : vector<2x512xf32> to vector<2x512xbf16>
    %316 = arith.index_cast %c7_i32 : i32 to index
    %c0_112 = arith.constant 0 : index
    %c0_113 = arith.constant 0 : index
    %317 = vector.load %arg1[%316, %c0_112, %c0_113] : memref<8x2x2048xf32, #tpu.memory_space<vmem>>, vector<1x2x2048xf32>
    %318 = vector.shape_cast %317 : vector<1x2x2048xf32> to vector<2x2048xf32>
    %319 = vector.extract_strided_slice %318 {offsets = [0, 0], sizes = [2, 1536], strides = [1, 1]} : vector<2x2048xf32> to vector<2x1536xf32>
    %cst_114 = arith.constant dense<0.000000e+00> : vector<2x1536xf32>
    %320 = tpu.matmul %315, %3, %cst_114 {dimension_numbers = #tpu.dot_dimension_numbers<[1], [0], [0], [1], [0, 0, 1, 1], [], []>} : vector<2x512xbf16>, vector<512x1536xbf16>, vector<2x1536xf32> -> vector<2x1536xf32>
    %321 = arith.addf %319, %320 : vector<2x1536xf32>
    %322 = vector.extract_strided_slice %318 {offsets = [0, 1536], sizes = [2, 512], strides = [1, 1]} : vector<2x2048xf32> to vector<2x512xf32>
    %cst_115 = arith.constant dense<0.000000e+00> : vector<2x512xf32>
    %323 = tpu.matmul %315, %4, %cst_115 {dimension_numbers = #tpu.dot_dimension_numbers<[1], [0], [0], [1], [0, 0, 1, 1], [], []>} : vector<2x512xbf16>, vector<512x512xbf16>, vector<2x512xf32> -> vector<2x512xf32>
    %324 = arith.addf %322, %323 : vector<2x512xf32>
    %325 = vector.extract_strided_slice %321 {offsets = [0, 0], sizes = [2, 512], strides = [1, 1]} : vector<2x1536xf32> to vector<2x512xf32>
    %cst_116 = arith.constant 5.000000e-01 : f32
    %326 = vector.broadcast %cst_116 : f32 to vector<2x512xf32>
    %327 = arith.mulf %326, %325 : vector<2x512xf32>
    %328 = math.tanh %327 : vector<2x512xf32>
    %cst_117 = arith.constant 1.000000e+00 : f32
    %329 = vector.broadcast %cst_117 : f32 to vector<2x512xf32>
    %330 = arith.addf %328, %329 : vector<2x512xf32>
    %cst_118 = arith.constant 5.000000e-01 : f32
    %331 = vector.broadcast %cst_118 : f32 to vector<2x512xf32>
    %332 = arith.mulf %331, %330 : vector<2x512xf32>
    %333 = vector.extract_strided_slice %321 {offsets = [0, 512], sizes = [2, 512], strides = [1, 1]} : vector<2x1536xf32> to vector<2x512xf32>
    %cst_119 = arith.constant 5.000000e-01 : f32
    %334 = vector.broadcast %cst_119 : f32 to vector<2x512xf32>
    %335 = arith.mulf %334, %333 : vector<2x512xf32>
    %336 = math.tanh %335 : vector<2x512xf32>
    %cst_120 = arith.constant 1.000000e+00 : f32
    %337 = vector.broadcast %cst_120 : f32 to vector<2x512xf32>
    %338 = arith.addf %336, %337 : vector<2x512xf32>
    %cst_121 = arith.constant 5.000000e-01 : f32
    %339 = vector.broadcast %cst_121 : f32 to vector<2x512xf32>
    %340 = arith.mulf %339, %338 : vector<2x512xf32>
    %341 = vector.extract_strided_slice %321 {offsets = [0, 1024], sizes = [2, 512], strides = [1, 1]} : vector<2x1536xf32> to vector<2x512xf32>
    %342 = math.tanh %341 : vector<2x512xf32>
    %343 = arith.mulf %340, %301 : vector<2x512xf32>
    %344 = arith.mulf %332, %342 : vector<2x512xf32>
    %345 = arith.addf %343, %344 : vector<2x512xf32>
    %cst_122 = arith.constant 5.000000e-01 : f32
    %346 = vector.broadcast %cst_122 : f32 to vector<2x512xf32>
    %347 = arith.mulf %346, %324 : vector<2x512xf32>
    %348 = math.tanh %347 : vector<2x512xf32>
    %cst_123 = arith.constant 1.000000e+00 : f32
    %349 = vector.broadcast %cst_123 : f32 to vector<2x512xf32>
    %350 = arith.addf %348, %349 : vector<2x512xf32>
    %cst_124 = arith.constant 5.000000e-01 : f32
    %351 = vector.broadcast %cst_124 : f32 to vector<2x512xf32>
    %352 = arith.mulf %351, %350 : vector<2x512xf32>
    %353 = math.tanh %345 : vector<2x512xf32>
    %354 = arith.mulf %352, %353 : vector<2x512xf32>
    %355 = arith.index_cast %c7_i32 : i32 to index
    %c0_125 = arith.constant 0 : index
    %c0_126 = arith.constant 0 : index
    %356 = vector.load %arg3[%355, %c0_125, %c0_126] : memref<8x2x512xf32, #tpu.memory_space<vmem>>, vector<1x2x512xf32>
    %357 = vector.shape_cast %356 : vector<1x2x512xf32> to vector<2x512xf32>
    %358 = vector.shape_cast %354 : vector<2x512xf32> to vector<1x2x512xf32>
    tpu.vector_store %arg3[%355, %c0_125, %c0_126], %358 {strides = array<i32>} : memref<8x2x512xf32, #tpu.memory_space<vmem>>, vector<1x2x512xf32>,
    %c8_i32 = arith.constant 8 : i32
    %c0_127 = arith.constant 0 : index
    %c0_128 = arith.constant 0 : index
    %359 = vector.load %arg4[%c0_127, %c0_128] : memref<2x512xf32, #tpu.memory_space<vmem>>, vector<2x512xf32>
    tpu.vector_store %arg4[%c0_127, %c0_128], %354 {strides = array<i32>} : memref<2x512xf32, #tpu.memory_space<vmem>>, vector<2x512xf32>,
    %c0_129 = arith.constant 0 : index
    %c0_130 = arith.constant 0 : index
    %360 = vector.load %arg5[%c0_129, %c0_130] : memref<2x512xf32, #tpu.memory_space<vmem>>, vector<2x512xf32>
    tpu.vector_store %arg5[%c0_129, %c0_130], %345 {strides = array<i32>} : memref<2x512xf32, #tpu.memory_space<vmem>>, vector<2x512xf32>,
    return
  }
  func.func @transform_0(%arg0: i32) -> (i32, i32, i32) {
    %c0_i32 = arith.constant 0 : i32
    %c0_i32_0 = arith.constant 0 : i32
    %c0_i32_1 = arith.constant 0 : i32
    return %arg0, %c0_i32, %c0_i32_0 : i32, i32, i32
  }
  func.func @transform_1(%arg0: i32) -> (i32, i32) {
    %c0_i32 = arith.constant 0 : i32
    %c0_i32_0 = arith.constant 0 : i32
    %c0_i32_1 = arith.constant 0 : i32
    return %c0_i32, %c0_i32_0 : i32, i32
  }
  func.func @transform_2(%arg0: i32) -> (i32, i32, i32) {
    %c0_i32 = arith.constant 0 : i32
    %c0_i32_0 = arith.constant 0 : i32
    %c0_i32_1 = arith.constant 0 : i32
    return %arg0, %c0_i32, %c0_i32_0 : i32, i32, i32
  }
}

</mosaic_0001>

<llo_original>
// kernel: lstm_module_forward.1
$region0: #{lstm_module_forward.1}
  #allocation0 [shape = 'u32[]', space=smem, size = 0x4, offset = 0x4, fixed_abs, tag = 'smem constant byte address 0x4 - core index']
  #allocation1 [shape = 'u32[144,128]{1,0:T(1,128)}', space=vmem, size = 0x12000, scoped, tag = 'internal scratch']
  #allocation2 [shape = 'f32[2,512]{1,0:T(2,128)}', space=vmem, size = 0x1000, scoped, tag = 'scratch operand']
  #allocation3 [shape = 'f32[2,512]{1,0:T(2,128)}', space=vmem, size = 0x1000, scoped, tag = 'scratch operand']
  %s0 = inlined_call_operand.vmem [shape: f32[8,2,2048], index: 0, kind: input, shape index: {}]
  %s1 = inlined_call_operand.vmem [shape: bf16[512,2048], index: 1, kind: input, shape index: {}]
  %s2 = inlined_call_operand.vmem [shape: f32[8,2,512], index: 2, kind: output, shape index: {}]
  %s3 = sld [smem:[#allocation0]]
  $region22: #{lstm_module_forward.1} parent=0
    _
  %s5 = ssub.s32 1, %s3
  %s6 = scalar_select 0, %s5, %s3
  // Predicated region
  $region2: #{lstm_module_forward.1} parent=0 // pred_check
    _
  $region3: #{lstm_module_forward.1} parent=0 // pred_check_branch
    %8 = sbr.rel (0) target = $region5
  $region4: #{lstm_module_forward.1} parent=0 // pred_region
    _
  $region5: #{lstm_module_forward.1} parent=0 // pred_fallthru
    _
  // Predicated region
  $region6: #{lstm_module_forward.1} parent=0 // pred_check
    _
  $region7: #{lstm_module_forward.1} parent=0 // pred_check_branch
    %10 = sbr.rel (0) target = $region9
  $region8: #{lstm_module_forward.1} parent=0 // pred_region
    _
  $region9: #{lstm_module_forward.1} parent=0 // pred_fallthru
    _
  %p11 = scmp.eq.s32.totalorder 0, 0
  // Predicated region
  $region10: #{lstm_module_forward.1} parent=0 // pred_check
    %p12 = pneg %p11
  $region11: #{lstm_module_forward.1} parent=0 // pred_check_branch
    %14 = sbr.rel (%p12) target = $region13
  $region12: #{lstm_module_forward.1} parent=0 // pred_region
    %15 = vst [vmem:[#allocation2] sm:$0xff] 0.0
    %16 = vst [vmem:[#allocation3] sm:$0xff] 0.0
  $region13: #{lstm_module_forward.1} parent=0 // pred_fallthru
    _
  %v17 = vld [vmem:[%s1] sm:$0xff]
  %v18 = vld [vmem:[%s1 + $0x8] sm:$0xff]
  %v19 = vld [vmem:[%s1 + $0x10] sm:$0xff]
  %v20 = vld [vmem:[%s1 + $0x18] sm:$0xff]
  %v21 = vld [vmem:[%s1 + $0x20] sm:$0xff]
  %v22 = vld [vmem:[%s1 + $0x28] sm:$0xff]
  %v23 = vld [vmem:[%s1 + $0x40] sm:$0xff]
  %v24 = vld [vmem:[%s1 + $0x48] sm:$0xff]
  %v25 = vld [vmem:[%s1 + $0x50] sm:$0xff]
  %v26 = vld [vmem:[%s1 + $0x58] sm:$0xff]
  %v27 = vld [vmem:[%s1 + $0x60] sm:$0xff]
  %v28 = vld [vmem:[%s1 + $0x68] sm:$0xff]
  %v29 = vld [vmem:[%s1 + $0x80] sm:$0xff]
  %v30 = vld [vmem:[%s1 + $0x88] sm:$0xff]
  %v31 = vld [vmem:[%s1 + $0x90] sm:$0xff]
  %v32 = vld [vmem:[%s1 + $0x98] sm:$0xff]
  %v33 = vld [vmem:[%s1 + $0xa0] sm:$0xff]
  %v34 = vld [vmem:[%s1 + $0xa8] sm:$0xff]
  %v35 = vld [vmem:[%s1 + $0xc0] sm:$0xff]
  %v36 = vld [vmem:[%s1 + $0xc8] sm:$0xff]
  %v37 = vld [vmem:[%s1 + $0xd0] sm:$0xff]
  %v38 = vld [vmem:[%s1 + $0xd8] sm:$0xff]
  %v39 = vld [vmem:[%s1 + $0xe0] sm:$0xff]
  %v40 = vld [vmem:[%s1 + $0xe8] sm:$0xff]
  %v41 = vld [vmem:[%s1 + $0x100] sm:$0xff]
  %v42 = vld [vmem:[%s1 + $0x108] sm:$0xff]
  %v43 = vld [vmem:[%s1 + $0x110] sm:$0xff]
  %v44 = vld [vmem:[%s1 + $0x118] sm:$0xff]
  %v45 = vld [vmem:[%s1 + $0x120] sm:$0xff]
  %v46 = vld [vmem:[%s1 + $0x128] sm:$0xff]
  %v47 = vld [vmem:[%s1 + $0x140] sm:$0xff]
  %v48 = vld [vmem:[%s1 + $0x148] sm:$0xff]
  %v49 = vld [vmem:[%s1 + $0x150] sm:$0xff]
  %v50 = vld [vmem:[%s1 + $0x158] sm:$0xff]
  %v51 = vld [vmem:[%s1 + $0x160] sm:$0xff]
  %v52 = vld [vmem:[%s1 + $0x168] sm:$0xff]
  %v53 = vld [vmem:[%s1 + $0x180] sm:$0xff]
  %v54 = vld [vmem:[%s1 + $0x188] sm:$0xff]
  %v55 = vld [vmem:[%s1 + $0x190] sm:$0xff]
  %v56 = vld [vmem:[%s1 + $0x198] sm:$0xff]
  %v57 = vld [vmem:[%s1 + $0x1a0] sm:$0xff]
  %v58 = vld [vmem:[%s1 + $0x1a8] sm:$0xff]
  %v59 = vld [vmem:[%s1 + $0x1c0] sm:$0xff]
  %v60 = vld [vmem:[%s1 + $0x1c8] sm:$0xff]
  %v61 = vld [vmem:[%s1 + $0x1d0] sm:$0xff]
  %v62 = vld [vmem:[%s1 + $0x1d8] sm:$0xff]
  %v63 = vld [vmem:[%s1 + $0x1e0] sm:$0xff]
  %v64 = vld [vmem:[%s1 + $0x1e8] sm:$0xff]
  %v65 = vld [vmem:[%s1 + $0x200] sm:$0xff]
  %v66 = vld [vmem:[%s1 + $0x208] sm:$0xff]
  %v67 = vld [vmem:[%s1 + $0x210] sm:$0xff]
  %v68 = vld [vmem:[%s1 + $0x218] sm:$0xff]
  %v69 = vld [vmem:[%s1 + $0x220] sm:$0xff]
  %v70 = vld [vmem:[%s1 + $0x228] sm:$0xff]
  %v71 = vld [vmem:[%s1 + $0x240] sm:$0xff]
  %v72 = vld [vmem:[%s1 + $0x248] sm:$0xff]
  %v73 = vld [vmem:[%s1 + $0x250] sm:$0xff]
  %v74 = vld [vmem:[%s1 + $0x258] sm:$0xff]
  %v75 = vld [vmem:[%s1 + $0x260] sm:$0xff]
  %v76 = vld [vmem:[%s1 + $0x268] sm:$0xff]
  %v77 = vld [vmem:[%s1 + $0x280] sm:$0xff]
  %v78 = vld [vmem:[%s1 + $0x288] sm:$0xff]
  %v79 = vld [vmem:[%s1 + $0x290] sm:$0xff]
  %v80 = vld [vmem:[%s1 + $0x298] sm:$0xff]
  %v81 = vld [vmem:[%s1 + $0x2a0] sm:$0xff]
  %v82 = vld [vmem:[%s1 + $0x2a8] sm:$0xff]
  %v83 = vld [vmem:[%s1 + $0x2c0] sm:$0xff]
  %v84 = vld [vmem:[%s1 + $0x2c8] sm:$0xff]
  %v85 = vld [vmem:[%s1 + $0x2d0] sm:$0xff]
  %v86 = vld [vmem:[%s1 + $0x2d8] sm:$0xff]
  %v87 = vld [vmem:[%s1 + $0x2e0] sm:$0xff]
  %v88 = vld [vmem:[%s1 + $0x2e8] sm:$0xff]
  %v89 = vld [vmem:[%s1 + $0x300] sm:$0xff]
  %v90 = vld [vmem:[%s1 + $0x308] sm:$0xff]
  %v91 = vld [vmem:[%s1 + $0x310] sm:$0xff]
  %v92 = vld [vmem:[%s1 + $0x318] sm:$0xff]
  %v93 = vld [vmem:[%s1 + $0x320] sm:$0xff]
  %v94 = vld [vmem:[%s1 + $0x328] sm:$0xff]
  %v95 = vld [vmem:[%s1 + $0x340] sm:$0xff]
  %v96 = vld [vmem:[%s1 + $0x348] sm:$0xff]
  %v97 = vld [vmem:[%s1 + $0x350] sm:$0xff]
  %v98 = vld [vmem:[%s1 + $0x358] sm:$0xff]
  %v99 = vld [vmem:[%s1 + $0x360] sm:$0xff]
  %v100 = vld [vmem:[%s1 + $0x368] sm:$0xff]
  %v101 = vld [vmem:[%s1 + $0x380] sm:$0xff]
  %v102 = vld [vmem:[%s1 + $0x388] sm:$0xff]
  %v103 = vld [vmem:[%s1 + $0x390] sm:$0xff]
  %v104 = vld [vmem:[%s1 + $0x398] sm:$0xff]
  %v105 = vld [vmem:[%s1 + $0x3a0] sm:$0xff]
  %v106 = vld [vmem:[%s1 + $0x3a8] sm:$0xff]
  %v107 = vld [vmem:[%s1 + $0x3c0] sm:$0xff]
  %v108 = vld [vmem:[%s1 + $0x3c8] sm:$0xff]
  %v109 = vld [vmem:[%s1 + $0x3d0] sm:$0xff]
  %v110 = vld [vmem:[%s1 + $0x3d8] sm:$0xff]
  %v111 = vld [vmem:[%s1 + $0x3e0] sm:$0xff]
  %v112 = vld [vmem:[%s1 + $0x3e8] sm:$0xff]
  %v113 = vld [vmem:[%s1 + $0x400] sm:$0xff]
  %v114 = vld [vmem:[%s1 + $0x408] sm:$0xff]
  %v115 = vld [vmem:[%s1 + $0x410] sm:$0xff]
  %v116 = vld [vmem:[%s1 + $0x418] sm:$0xff]
  %v117 = vld [vmem:[%s1 + $0x420] sm:$0xff]
  %v118 = vld [vmem:[%s1 + $0x428] sm:$0xff]
  %v119 = vld [vmem:[%s1 + $0x440] sm:$0xff]
  %v120 = vld [vmem:[%s1 + $0x448] sm:$0xff]
  %v121 = vld [vmem:[%s1 + $0x450] sm:$0xff]
  %v122 = vld [vmem:[%s1 + $0x458] sm:$0xff]
  %v123 = vld [vmem:[%s1 + $0x460] sm:$0xff]
  %v124 = vld [vmem:[%s1 + $0x468] sm:$0xff]
  %v125 = vld [vmem:[%s1 + $0x480] sm:$0xff]
  %v126 = vld [vmem:[%s1 + $0x488] sm:$0xff]
  %v127 = vld [vmem:[%s1 + $0x490] sm:$0xff]
  %v128 = vld [vmem:[%s1 + $0x498] sm:$0xff]
  %v129 = vld [vmem:[%s1 + $0x4a0] sm:$0xff]
  %v130 = vld [vmem:[%s1 + $0x4a8] sm:$0xff]
  %v131 = vld [vmem:[%s1 + $0x4c0] sm:$0xff]
  %v132 = vld [vmem:[%s1 + $0x4c8] sm:$0xff]
  %v133 = vld [vmem:[%s1 + $0x4d0] sm:$0xff]
  %v134 = vld [vmem:[%s1 + $0x4d8] sm:$0xff]
  %v135 = vld [vmem:[%s1 + $0x4e0] sm:$0xff]
  %v136 = vld [vmem:[%s1 + $0x4e8] sm:$0xff]
  %v137 = vld [vmem:[%s1 + $0x500] sm:$0xff]
  %v138 = vld [vmem:[%s1 + $0x508] sm:$0xff]
  %v139 = vld [vmem:[%s1 + $0x510] sm:$0xff]
  %v140 = vld [vmem:[%s1 + $0x518] sm:$0xff]
  %v141 = vld [vmem:[%s1 + $0x520] sm:$0xff]
  %v142 = vld [vmem:[%s1 + $0x528] sm:$0xff]
  %v143 = vld [vmem:[%s1 + $0x540] sm:$0xff]
  %v144 = vld [vmem:[%s1 + $0x548] sm:$0xff]
  %v145 = vld [vmem:[%s1 + $0x550] sm:$0xff]
  %v146 = vld [vmem:[%s1 + $0x558] sm:$0xff]
  %v147 = vld [vmem:[%s1 + $0x560] sm:$0xff]
  %v148 = vld [vmem:[%s1 + $0x568] sm:$0xff]
  %v149 = vld [vmem:[%s1 + $0x580] sm:$0xff]
  %v150 = vld [vmem:[%s1 + $0x588] sm:$0xff]
  %v151 = vld [vmem:[%s1 + $0x590] sm:$0xff]
  %v152 = vld [vmem:[%s1 + $0x598] sm:$0xff]
  %v153 = vld [vmem:[%s1 + $0x5a0] sm:$0xff]
  %v154 = vld [vmem:[%s1 + $0x5a8] sm:$0xff]
  %v155 = vld [vmem:[%s1 + $0x5c0] sm:$0xff]
  %v156 = vld [vmem:[%s1 + $0x5c8] sm:$0xff]
  %v157 = vld [vmem:[%s1 + $0x5d0] sm:$0xff]
  %v158 = vld [vmem:[%s1 + $0x5d8] sm:$0xff]
  %v159 = vld [vmem:[%s1 + $0x5e0] sm:$0xff]
  %v160 = vld [vmem:[%s1 + $0x5e8] sm:$0xff]
  %v161 = vld [vmem:[%s1 + $0x600] sm:$0xff]
  %v162 = vld [vmem:[%s1 + $0x608] sm:$0xff]
  %v163 = vld [vmem:[%s1 + $0x610] sm:$0xff]
  %v164 = vld [vmem:[%s1 + $0x618] sm:$0xff]
  %v165 = vld [vmem:[%s1 + $0x620] sm:$0xff]
  %v166 = vld [vmem:[%s1 + $0x628] sm:$0xff]
  %v167 = vld [vmem:[%s1 + $0x640] sm:$0xff]
  %v168 = vld [vmem:[%s1 + $0x648] sm:$0xff]
  %v169 = vld [vmem:[%s1 + $0x650] sm:$0xff]
  %v170 = vld [vmem:[%s1 + $0x658] sm:$0xff]
  %v171 = vld [vmem:[%s1 + $0x660] sm:$0xff]
  %v172 = vld [vmem:[%s1 + $0x668] sm:$0xff]
  %v173 = vld [vmem:[%s1 + $0x680] sm:$0xff]
  %v174 = vld [vmem:[%s1 + $0x688] sm:$0xff]
  %v175 = vld [vmem:[%s1 + $0x690] sm:$0xff]
  %v176 = vld [vmem:[%s1 + $0x698] sm:$0xff]
  %v177 = vld [vmem:[%s1 + $0x6a0] sm:$0xff]
  %v178 = vld [vmem:[%s1 + $0x6a8] sm:$0xff]
  %v179 = vld [vmem:[%s1 + $0x6c0] sm:$0xff]
  %v180 = vld [vmem:[%s1 + $0x6c8] sm:$0xff]
  %v181 = vld [vmem:[%s1 + $0x6d0] sm:$0xff]
  %v182 = vld [vmem:[%s1 + $0x6d8] sm:$0xff]
  %v183 = vld [vmem:[%s1 + $0x6e0] sm:$0xff]
  %v184 = vld [vmem:[%s1 + $0x6e8] sm:$0xff]
  %v185 = vld [vmem:[%s1 + $0x700] sm:$0xff]
  %v186 = vld [vmem:[%s1 + $0x708] sm:$0xff]
  %v187 = vld [vmem:[%s1 + $0x710] sm:$0xff]
  %v188 = vld [vmem:[%s1 + $0x718] sm:$0xff]
  %v189 = vld [vmem:[%s1 + $0x720] sm:$0xff]
  %v190 = vld [vmem:[%s1 + $0x728] sm:$0xff]
  %v191 = vld [vmem:[%s1 + $0x740] sm:$0xff]
  %v192 = vld [vmem:[%s1 + $0x748] sm:$0xff]
  %v193 = vld [vmem:[%s1 + $0x750] sm:$0xff]
  %v194 = vld [vmem:[%s1 + $0x758] sm:$0xff]
  %v195 = vld [vmem:[%s1 + $0x760] sm:$0xff]
  %v196 = vld [vmem:[%s1 + $0x768] sm:$0xff]
  %v197 = vld [vmem:[%s1 + $0x780] sm:$0xff]
  %v198 = vld [vmem:[%s1 + $0x788] sm:$0xff]
  %v199 = vld [vmem:[%s1 + $0x790] sm:$0xff]
  %v200 = vld [vmem:[%s1 + $0x798] sm:$0xff]
  %v201 = vld [vmem:[%s1 + $0x7a0] sm:$0xff]
  %v202 = vld [vmem:[%s1 + $0x7a8] sm:$0xff]
  %v203 = vld [vmem:[%s1 + $0x7c0] sm:$0xff]
  %v204 = vld [vmem:[%s1 + $0x7c8] sm:$0xff]
  %v205 = vld [vmem:[%s1 + $0x7d0] sm:$0xff]
  %v206 = vld [vmem:[%s1 + $0x7d8] sm:$0xff]
  %v207 = vld [vmem:[%s1 + $0x7e0] sm:$0xff]
  %v208 = vld [vmem:[%s1 + $0x7e8] sm:$0xff]
  %v209 = vld [vmem:[%s1 + $0x800] sm:$0xff]
  %v210 = vld [vmem:[%s1 + $0x808] sm:$0xff]
  %v211 = vld [vmem:[%s1 + $0x810] sm:$0xff]
  %v212 = vld [vmem:[%s1 + $0x818] sm:$0xff]
  %v213 = vld [vmem:[%s1 + $0x820] sm:$0xff]
  %v214 = vld [vmem:[%s1 + $0x828] sm:$0xff]
  %v215 = vld [vmem:[%s1 + $0x840] sm:$0xff]
  %v216 = vld [vmem:[%s1 + $0x848] sm:$0xff]
  %v217 = vld [vmem:[%s1 + $0x850] sm:$0xff]
  %v218 = vld [vmem:[%s1 + $0x858] sm:$0xff]
  %v219 = vld [vmem:[%s1 + $0x860] sm:$0xff]
  %v220 = vld [vmem:[%s1 + $0x868] sm:$0xff]
  %v221 = vld [vmem:[%s1 + $0x880] sm:$0xff]
  %v222 = vld [vmem:[%s1 + $0x888] sm:$0xff]
  %v223 = vld [vmem:[%s1 + $0x890] sm:$0xff]
  %v224 = vld [vmem:[%s1 + $0x898] sm:$0xff]
  %v225 = vld [vmem:[%s1 + $0x8a0] sm:$0xff]
  %v226 = vld [vmem:[%s1 + $0x8a8] sm:$0xff]
  %v227 = vld [vmem:[%s1 + $0x8c0] sm:$0xff]
  %v228 = vld [vmem:[%s1 + $0x8c8] sm:$0xff]
  %v229 = vld [vmem:[%s1 + $0x8d0] sm:$0xff]
  %v230 = vld [vmem:[%s1 + $0x8d8] sm:$0xff]
  %v231 = vld [vmem:[%s1 + $0x8e0] sm:$0xff]
  %v232 = vld [vmem:[%s1 + $0x8e8] sm:$0xff]
  %v233 = vld [vmem:[%s1 + $0x900] sm:$0xff]
  %v234 = vld [vmem:[%s1 + $0x908] sm:$0xff]
  %v235 = vld [vmem:[%s1 + $0x910] sm:$0xff]
  %v236 = vld [vmem:[%s1 + $0x918] sm:$0xff]
  %v237 = vld [vmem:[%s1 + $0x920] sm:$0xff]
  %v238 = vld [vmem:[%s1 + $0x928] sm:$0xff]
  %v239 = vld [vmem:[%s1 + $0x940] sm:$0xff]
  %v240 = vld [vmem:[%s1 + $0x948] sm:$0xff]
  %v241 = vld [vmem:[%s1 + $0x950] sm:$0xff]
  %v242 = vld [vmem:[%s1 + $0x958] sm:$0xff]
  %v243 = vld [vmem:[%s1 + $0x960] sm:$0xff]
  %v244 = vld [vmem:[%s1 + $0x968] sm:$0xff]
  %v245 = vld [vmem:[%s1 + $0x980] sm:$0xff]
  %v246 = vld [vmem:[%s1 + $0x988] sm:$0xff]
  %v247 = vld [vmem:[%s1 + $0x990] sm:$0xff]
  %v248 = vld [vmem:[%s1 + $0x998] sm:$0xff]
  %v249 = vld [vmem:[%s1 + $0x9a0] sm:$0xff]
  %v250 = vld [vmem:[%s1 + $0x9a8] sm:$0xff]
  %v251 = vld [vmem:[%s1 + $0x9c0] sm:$0xff]
  %v252 = vld [vmem:[%s1 + $0x9c8] sm:$0xff]
  %v253 = vld [vmem:[%s1 + $0x9d0] sm:$0xff]
  %v254 = vld [vmem:[%s1 + $0x9d8] sm:$0xff]
  %v255 = vld [vmem:[%s1 + $0x9e0] sm:$0xff]
  %v256 = vld [vmem:[%s1 + $0x9e8] sm:$0xff]
  %v257 = vld [vmem:[%s1 + $0xa00] sm:$0xff]
  %v258 = vld [vmem:[%s1 + $0xa08] sm:$0xff]
  %v259 = vld [vmem:[%s1 + $0xa10] sm:$0xff]
  %v260 = vld [vmem:[%s1 + $0xa18] sm:$0xff]
  %v261 = vld [vmem:[%s1 + $0xa20] sm:$0xff]
  %v262 = vld [vmem:[%s1 + $0xa28] sm:$0xff]
  %v263 = vld [vmem:[%s1 + $0xa40] sm:$0xff]
  %v264 = vld [vmem:[%s1 + $0xa48] sm:$0xff]
  %v265 = vld [vmem:[%s1 + $0xa50] sm:$0xff]
  %v266 = vld [vmem:[%s1 + $0xa58] sm:$0xff]
  %v267 = vld [vmem:[%s1 + $0xa60] sm:$0xff]
  %v268 = vld [vmem:[%s1 + $0xa68] sm:$0xff]
  %v269 = vld [vmem:[%s1 + $0xa80] sm:$0xff]
  %v270 = vld [vmem:[%s1 + $0xa88] sm:$0xff]
  %v271 = vld [vmem:[%s1 + $0xa90] sm:$0xff]
  %v272 = vld [vmem:[%s1 + $0xa98] sm:$0xff]
  %v273 = vld [vmem:[%s1 + $0xaa0] sm:$0xff]
  %v274 = vld [vmem:[%s1 + $0xaa8] sm:$0xff]
  %v275 = vld [vmem:[%s1 + $0xac0] sm:$0xff]
  %v276 = vld [vmem:[%s1 + $0xac8] sm:$0xff]
  %v277 = vld [vmem:[%s1 + $0xad0] sm:$0xff]
  %v278 = vld [vmem:[%s1 + $0xad8] sm:$0xff]
  %v279 = vld [vmem:[%s1 + $0xae0] sm:$0xff]
  %v280 = vld [vmem:[%s1 + $0xae8] sm:$0xff]
  %v281 = vld [vmem:[%s1 + $0xb00] sm:$0xff]
  %v282 = vld [vmem:[%s1 + $0xb08] sm:$0xff]
  %v283 = vld [vmem:[%s1 + $0xb10] sm:$0xff]
  %v284 = vld [vmem:[%s1 + $0xb18] sm:$0xff]
  %v285 = vld [vmem:[%s1 + $0xb20] sm:$0xff]
  %v286 = vld [vmem:[%s1 + $0xb28] sm:$0xff]
  %v287 = vld [vmem:[%s1 + $0xb40] sm:$0xff]
  %v288 = vld [vmem:[%s1 + $0xb48] sm:$0xff]
  %v289 = vld [vmem:[%s1 + $0xb50] sm:$0xff]
  %v290 = vld [vmem:[%s1 + $0xb58] sm:$0xff]
  %v291 = vld [vmem:[%s1 + $0xb60] sm:$0xff]
  %v292 = vld [vmem:[%s1 + $0xb68] sm:$0xff]
  %v293 = vld [vmem:[%s1 + $0xb80] sm:$0xff]
  %v294 = vld [vmem:[%s1 + $0xb88] sm:$0xff]
  %v295 = vld [vmem:[%s1 + $0xb90] sm:$0xff]
  %v296 = vld [vmem:[%s1 + $0xb98] sm:$0xff]
  %v297 = vld [vmem:[%s1 + $0xba0] sm:$0xff]
  %v298 = vld [vmem:[%s1 + $0xba8] sm:$0xff]
  %v299 = vld [vmem:[%s1 + $0xbc0] sm:$0xff]
  %v300 = vld [vmem:[%s1 + $0xbc8] sm:$0xff]
  %v301 = vld [vmem:[%s1 + $0xbd0] sm:$0xff]
  %v302 = vld [vmem:[%s1 + $0xbd8] sm:$0xff]
  %v303 = vld [vmem:[%s1 + $0xbe0] sm:$0xff]
  %v304 = vld [vmem:[%s1 + $0xbe8] sm:$0xff]
  %v305 = vld [vmem:[%s1 + $0xc00] sm:$0xff]
  %v306 = vld [vmem:[%s1 + $0xc08] sm:$0xff]
  %v307 = vld [vmem:[%s1 + $0xc10] sm:$0xff]
  %v308 = vld [vmem:[%s1 + $0xc18] sm:$0xff]
  %v309 = vld [vmem:[%s1 + $0xc20] sm:$0xff]
  %v310 = vld [vmem:[%s1 + $0xc28] sm:$0xff]
  %v311 = vld [vmem:[%s1 + $0xc40] sm:$0xff]
  %v312 = vld [vmem:[%s1 + $0xc48] sm:$0xff]
  %v313 = vld [vmem:[%s1 + $0xc50] sm:$0xff]
  %v314 = vld [vmem:[%s1 + $0xc58] sm:$0xff]
  %v315 = vld [vmem:[%s1 + $0xc60] sm:$0xff]
  %v316 = vld [vmem:[%s1 + $0xc68] sm:$0xff]
  %v317 = vld [vmem:[%s1 + $0xc80] sm:$0xff]
  %v318 = vld [vmem:[%s1 + $0xc88] sm:$0xff]
  %v319 = vld [vmem:[%s1 + $0xc90] sm:$0xff]
  %v320 = vld [vmem:[%s1 + $0xc98] sm:$0xff]
  %v321 = vld [vmem:[%s1 + $0xca0] sm:$0xff]
  %v322 = vld [vmem:[%s1 + $0xca8] sm:$0xff]
  %v323 = vld [vmem:[%s1 + $0xcc0] sm:$0xff]
  %v324 = vld [vmem:[%s1 + $0xcc8] sm:$0xff]
  %v325 = vld [vmem:[%s1 + $0xcd0] sm:$0xff]
  %v326 = vld [vmem:[%s1 + $0xcd8] sm:$0xff]
  %v327 = vld [vmem:[%s1 + $0xce0] sm:$0xff]
  %v328 = vld [vmem:[%s1 + $0xce8] sm:$0xff]
  %v329 = vld [vmem:[%s1 + $0xd00] sm:$0xff]
  %v330 = vld [vmem:[%s1 + $0xd08] sm:$0xff]
  %v331 = vld [vmem:[%s1 + $0xd10] sm:$0xff]
  %v332 = vld [vmem:[%s1 + $0xd18] sm:$0xff]
  %v333 = vld [vmem:[%s1 + $0xd20] sm:$0xff]
  %v334 = vld [vmem:[%s1 + $0xd28] sm:$0xff]
  %v335 = vld [vmem:[%s1 + $0xd40] sm:$0xff]
  %v336 = vld [vmem:[%s1 + $0xd48] sm:$0xff]
  %v337 = vld [vmem:[%s1 + $0xd50] sm:$0xff]
  %v338 = vld [vmem:[%s1 + $0xd58] sm:$0xff]
  %v339 = vld [vmem:[%s1 + $0xd60] sm:$0xff]
  %v340 = vld [vmem:[%s1 + $0xd68] sm:$0xff]
  %v341 = vld [vmem:[%s1 + $0xd80] sm:$0xff]
  %v342 = vld [vmem:[%s1 + $0xd88] sm:$0xff]
  %v343 = vld [vmem:[%s1 + $0xd90] sm:$0xff]
  %v344 = vld [vmem:[%s1 + $0xd98] sm:$0xff]
  %v345 = vld [vmem:[%s1 + $0xda0] sm:$0xff]
  %v346 = vld [vmem:[%s1 + $0xda8] sm:$0xff]
  %v347 = vld [vmem:[%s1 + $0xdc0] sm:$0xff]
  %v348 = vld [vmem:[%s1 + $0xdc8] sm:$0xff]
  %v349 = vld [vmem:[%s1 + $0xdd0] sm:$0xff]
  %v350 = vld [vmem:[%s1 + $0xdd8] sm:$0xff]
  %v351 = vld [vmem:[%s1 + $0xde0] sm:$0xff]
  %v352 = vld [vmem:[%s1 + $0xde8] sm:$0xff]
  %v353 = vld [vmem:[%s1 + $0xe00] sm:$0xff]
  %v354 = vld [vmem:[%s1 + $0xe08] sm:$0xff]
  %v355 = vld [vmem:[%s1 + $0xe10] sm:$0xff]
  %v356 = vld [vmem:[%s1 + $0xe18] sm:$0xff]
  %v357 = vld [vmem:[%s1 + $0xe20] sm:$0xff]
  %v358 = vld [vmem:[%s1 + $0xe28] sm:$0xff]
  %v359 = vld [vmem:[%s1 + $0xe40] sm:$0xff]
  %v360 = vld [vmem:[%s1 + $0xe48] sm:$0xff]
  %v361 = vld [vmem:[%s1 + $0xe50] sm:$0xff]
  %v362 = vld [vmem:[%s1 + $0xe58] sm:$0xff]
  %v363 = vld [vmem:[%s1 + $0xe60] sm:$0xff]
  %v364 = vld [vmem:[%s1 + $0xe68] sm:$0xff]
  %v365 = vld [vmem:[%s1 + $0xe80] sm:$0xff]
  %v366 = vld [vmem:[%s1 + $0xe88] sm:$0xff]
  %v367 = vld [vmem:[%s1 + $0xe90] sm:$0xff]
  %v368 = vld [vmem:[%s1 + $0xe98] sm:$0xff]
  %v369 = vld [vmem:[%s1 + $0xea0] sm:$0xff]
  %v370 = vld [vmem:[%s1 + $0xea8] sm:$0xff]
  %v371 = vld [vmem:[%s1 + $0xec0] sm:$0xff]
  %v372 = vld [vmem:[%s1 + $0xec8] sm:$0xff]
  %v373 = vld [vmem:[%s1 + $0xed0] sm:$0xff]
  %v374 = vld [vmem:[%s1 + $0xed8] sm:$0xff]
  %v375 = vld [vmem:[%s1 + $0xee0] sm:$0xff]
  %v376 = vld [vmem:[%s1 + $0xee8] sm:$0xff]
  %v377 = vld [vmem:[%s1 + $0xf00] sm:$0xff]
  %v378 = vld [vmem:[%s1 + $0xf08] sm:$0xff]
  %v379 = vld [vmem:[%s1 + $0xf10] sm:$0xff]
  %v380 = vld [vmem:[%s1 + $0xf18] sm:$0xff]
  %v381 = vld [vmem:[%s1 + $0xf20] sm:$0xff]
  %v382 = vld [vmem:[%s1 + $0xf28] sm:$0xff]
  %v383 = vld [vmem:[%s1 + $0xf40] sm:$0xff]
  %v384 = vld [vmem:[%s1 + $0xf48] sm:$0xff]
  %v385 = vld [vmem:[%s1 + $0xf50] sm:$0xff]
  %v386 = vld [vmem:[%s1 + $0xf58] sm:$0xff]
  %v387 = vld [vmem:[%s1 + $0xf60] sm:$0xff]
  %v388 = vld [vmem:[%s1 + $0xf68] sm:$0xff]
  %v389 = vld [vmem:[%s1 + $0xf80] sm:$0xff]
  %v390 = vld [vmem:[%s1 + $0xf88] sm:$0xff]
  %v391 = vld [vmem:[%s1 + $0xf90] sm:$0xff]
  %v392 = vld [vmem:[%s1 + $0xf98] sm:$0xff]
  %v393 = vld [vmem:[%s1 + $0xfa0] sm:$0xff]
  %v394 = vld [vmem:[%s1 + $0xfa8] sm:$0xff]
  %v395 = vld [vmem:[%s1 + $0xfc0] sm:$0xff]
  %v396 = vld [vmem:[%s1 + $0xfc8] sm:$0xff]
  %v397 = vld [vmem:[%s1 + $0xfd0] sm:$0xff]
  %v398 = vld [vmem:[%s1 + $0xfd8] sm:$0xff]
  %v399 = vld [vmem:[%s1 + $0xfe0] sm:$0xff]
  %v400 = vld [vmem:[%s1 + $0xfe8] sm:$0xff]
  %v401 = vld [vmem:[%s1 + $0x30] sm:$0xff]
  %v402 = vld [vmem:[%s1 + $0x38] sm:$0xff]
  %v403 = vld [vmem:[%s1 + $0x70] sm:$0xff]
  %v404 = vld [vmem:[%s1 + $0x78] sm:$0xff]
  %v405 = vld [vmem:[%s1 + $0xb0] sm:$0xff]
  %v406 = vld [vmem:[%s1 + $0xb8] sm:$0xff]
  %v407 = vld [vmem:[%s1 + $0xf0] sm:$0xff]
  %v408 = vld [vmem:[%s1 + $0xf8] sm:$0xff]
  %v409 = vld [vmem:[%s1 + $0x130] sm:$0xff]
  %v410 = vld [vmem:[%s1 + $0x138] sm:$0xff]
  %v411 = vld [vmem:[%s1 + $0x170] sm:$0xff]
  %v412 = vld [vmem:[%s1 + $0x178] sm:$0xff]
  %v413 = vld [vmem:[%s1 + $0x1b0] sm:$0xff]
  %v414 = vld [vmem:[%s1 + $0x1b8] sm:$0xff]
  %v415 = vld [vmem:[%s1 + $0x1f0] sm:$0xff]
  %v416 = vld [vmem:[%s1 + $0x1f8] sm:$0xff]
  %v417 = vld [vmem:[%s1 + $0x230] sm:$0xff]
  %v418 = vld [vmem:[%s1 + $0x238] sm:$0xff]
  %v419 = vld [vmem:[%s1 + $0x270] sm:$0xff]
  %v420 = vld [vmem:[%s1 + $0x278] sm:$0xff]
  %v421 = vld [vmem:[%s1 + $0x2b0] sm:$0xff]
  %v422 = vld [vmem:[%s1 + $0x2b8] sm:$0xff]
  %v423 = vld [vmem:[%s1 + $0x2f0] sm:$0xff]
  %v424 = vld [vmem:[%s1 + $0x2f8] sm:$0xff]
  %v425 = vld [vmem:[%s1 + $0x330] sm:$0xff]
  %v426 = vld [vmem:[%s1 + $0x338] sm:$0xff]
  %v427 = vld [vmem:[%s1 + $0x370] sm:$0xff]
  %v428 = vld [vmem:[%s1 + $0x378] sm:$0xff]
  %v429 = vld [vmem:[%s1 + $0x3b0] sm:$0xff]
  %v430 = vld [vmem:[%s1 + $0x3b8] sm:$0xff]
  %v431 = vld [vmem:[%s1 + $0x3f0] sm:$0xff]
  %v432 = vld [vmem:[%s1 + $0x3f8] sm:$0xff]
  %v433 = vld [vmem:[%s1 + $0x430] sm:$0xff]
  %v434 = vld [vmem:[%s1 + $0x438] sm:$0xff]
  %v435 = vld [vmem:[%s1 + $0x470] sm:$0xff]
  %v436 = vld [vmem:[%s1 + $0x478] sm:$0xff]
  %v437 = vld [vmem:[%s1 + $0x4b0] sm:$0xff]
  %v438 = vld [vmem:[%s1 + $0x4b8] sm:$0xff]
  %v439 = vld [vmem:[%s1 + $0x4f0] sm:$0xff]
  %v440 = vld [vmem:[%s1 + $0x4f8] sm:$0xff]
  %v441 = vld [vmem:[%s1 + $0x530] sm:$0xff]
  %v442 = vld [vmem:[%s1 + $0x538] sm:$0xff]
  %v443 = vld [vmem:[%s1 + $0x570] sm:$0xff]
  %v444 = vld [vmem:[%s1 + $0x578] sm:$0xff]
  %v445 = vld [vmem:[%s1 + $0x5b0] sm:$0xff]
  %v446 = vld [vmem:[%s1 + $0x5b8] sm:$0xff]
  %v447 = vld [vmem:[%s1 + $0x5f0] sm:$0xff]
  %v448 = vld [vmem:[%s1 + $0x5f8] sm:$0xff]
  %v449 = vld [vmem:[%s1 + $0x630] sm:$0xff]
  %v450 = vld [vmem:[%s1 + $0x638] sm:$0xff]
  %v451 = vld [vmem:[%s1 + $0x670] sm:$0xff]
  %v452 = vld [vmem:[%s1 + $0x678] sm:$0xff]
  %v453 = vld [vmem:[%s1 + $0x6b0] sm:$0xff]
  %v454 = vld [vmem:[%s1 + $0x6b8] sm:$0xff]
  %v455 = vld [vmem:[%s1 + $0x6f0] sm:$0xff]
  %v456 = vld [vmem:[%s1 + $0x6f8] sm:$0xff]
  %v457 = vld [vmem:[%s1 + $0x730] sm:$0xff]
  %v458 = vld [vmem:[%s1 + $0x738] sm:$0xff]
  %v459 = vld [vmem:[%s1 + $0x770] sm:$0xff]
  %v460 = vld [vmem:[%s1 + $0x778] sm:$0xff]
  %v461 = vld [vmem:[%s1 + $0x7b0] sm:$0xff]
  %v462 = vld [vmem:[%s1 + $0x7b8] sm:$0xff]
  %v463 = vld [vmem:[%s1 + $0x7f0] sm:$0xff]
  %v464 = vld [vmem:[%s1 + $0x7f8] sm:$0xff]
  %v465 = vld [vmem:[%s1 + $0x830] sm:$0xff]
  %v466 = vld [vmem:[%s1 + $0x838] sm:$0xff]
  %v467 = vld [vmem:[%s1 + $0x870] sm:$0xff]
  %v468 = vld [vmem:[%s1 + $0x878] sm:$0xff]
  %v469 = vld [vmem:[%s1 + $0x8b0] sm:$0xff]
  %v470 = vld [vmem:[%s1 + $0x8b8] sm:$0xff]
  %v471 = vld [vmem:[%s1 + $0x8f0] sm:$0xff]
  %v472 = vld [vmem:[%s1 + $0x8f8] sm:$0xff]
  %v473 = vld [vmem:[%s1 + $0x930] sm:$0xff]
  %v474 = vld [vmem:[%s1 + $0x938] sm:$0xff]
  %v475 = vld [vmem:[%s1 + $0x970] sm:$0xff]
  %v476 = vld [vmem:[%s1 + $0x978] sm:$0xff]
  %v477 = vld [vmem:[%s1 + $0x9b0] sm:$0xff]
  %v478 = vld [vmem:[%s1 + $0x9b8] sm:$0xff]
  %v479 = vld [vmem:[%s1 + $0x9f0] sm:$0xff]
  %v480 = vld [vmem:[%s1 + $0x9f8] sm:$0xff]
  %v481 = vld [vmem:[%s1 + $0xa30] sm:$0xff]
  %v482 = vld [vmem:[%s1 + $0xa38] sm:$0xff]
  %v483 = vld [vmem:[%s1 + $0xa70] sm:$0xff]
  %v484 = vld [vmem:[%s1 + $0xa78] sm:$0xff]
  %v485 = vld [vmem:[%s1 + $0xab0] sm:$0xff]
  %v486 = vld [vmem:[%s1 + $0xab8] sm:$0xff]
  %v487 = vld [vmem:[%s1 + $0xaf0] sm:$0xff]
  %v488 = vld [vmem:[%s1 + $0xaf8] sm:$0xff]
  %v489 = vld [vmem:[%s1 + $0xb30] sm:$0xff]
  %v490 = vld [vmem:[%s1 + $0xb38] sm:$0xff]
  %v491 = vld [vmem:[%s1 + $0xb70] sm:$0xff]
  %v492 = vld [vmem:[%s1 + $0xb78] sm:$0xff]
  %v493 = vld [vmem:[%s1 + $0xbb0] sm:$0xff]
  %v494 = vld [vmem:[%s1 + $0xbb8] sm:$0xff]
  %v495 = vld [vmem:[%s1 + $0xbf0] sm:$0xff]
  %v496 = vld [vmem:[%s1 + $0xbf8] sm:$0xff]
  %v497 = vld [vmem:[%s1 + $0xc30] sm:$0xff]
  %v498 = vld [vmem:[%s1 + $0xc38] sm:$0xff]
  %v499 = vld [vmem:[%s1 + $0xc70] sm:$0xff]
  %v500 = vld [vmem:[%s1 + $0xc78] sm:$0xff]
  %v501 = vld [vmem:[%s1 + $0xcb0] sm:$0xff]
  %v502 = vld [vmem:[%s1 + $0xcb8] sm:$0xff]
  %v503 = vld [vmem:[%s1 + $0xcf0] sm:$0xff]
  %v504 = vld [vmem:[%s1 + $0xcf8] sm:$0xff]
  %v505 = vld [vmem:[%s1 + $0xd30] sm:$0xff]
  %v506 = vld [vmem:[%s1 + $0xd38] sm:$0xff]
  %v507 = vld [vmem:[%s1 + $0xd70] sm:$0xff]
  %v508 = vld [vmem:[%s1 + $0xd78] sm:$0xff]
  %v509 = vld [vmem:[%s1 + $0xdb0] sm:$0xff]
  %v510 = vld [vmem:[%s1 + $0xdb8] sm:$0xff]
  %v511 = vld [vmem:[%s1 + $0xdf0] sm:$0xff]
  %v512 = vld [vmem:[%s1 + $0xdf8] sm:$0xff]
  %v513 = vld [vmem:[%s1 + $0xe30] sm:$0xff]
  %v514 = vld [vmem:[%s1 + $0xe38] sm:$0xff]
  %v515 = vld [vmem:[%s1 + $0xe70] sm:$0xff]
  %v516 = vld [vmem:[%s1 + $0xe78] sm:$0xff]
  %v517 = vld [vmem:[%s1 + $0xeb0] sm:$0xff]
  %v518 = vld [vmem:[%s1 + $0xeb8] sm:$0xff]
  %v519 = vld [vmem:[%s1 + $0xef0] sm:$0xff]
  %v520 = vld [vmem:[%s1 + $0xef8] sm:$0xff]
  %v521 = vld [vmem:[%s1 + $0xf30] sm:$0xff]
  %v522 = vld [vmem:[%s1 + $0xf38] sm:$0xff]
  %v523 = vld [vmem:[%s1 + $0xf70] sm:$0xff]
  %v524 = vld [vmem:[%s1 + $0xf78] sm:$0xff]
  %v525 = vld [vmem:[%s1 + $0xfb0] sm:$0xff]
  %v526 = vld [vmem:[%s1 + $0xfb8] sm:$0xff]
  %v527 = vld [vmem:[%s1 + $0xff0] sm:$0xff]
  %v528 = vld [vmem:[%s1 + $0xff8] sm:$0xff]
  %v529 = vld [vmem:[#allocation2] sm:$0xff]
  %v530 = vld [vmem:[#allocation3] sm:$0xff]
  %v532 = vcombine.high %v529, %v529
  %v534 = vunpack.c.l.s4 1983009808
  %v535 = vunpack.c.0.s8 %v534
  %v536 = vlaneseq
  %v537 = vshrl.u32 %v536, 7
  %v538 = vsub.s32 %v535, %v537
  %v539 = vrot.slane %v529, %v538
  %v541 = vunpack.c.l.s4 1983009808
  %v542 = vunpack.c.0.s8 %v541
  %v543 = vlaneseq
  %v544 = vshrl.u32 %v543, 7
  %v545 = vsub.s32 %v542, %v544
  %v546 = vrot.slane %v532, %v545
  %v547 = vcombine.high %v539, %v539
  %v548 = vcombine.high %v546, %v546
  %v553 = vpack.c.bf16 %v539, %v539
  %v554 = vpack.c.bf16 %v547, %v547
  %v555 = vpack.c.bf16 %v546, %v546
  %v556 = vpack.c.bf16 %v548, %v548
  %v557 = vld [vmem:[%s0] sm:$0xff]
  %v558 = vld [vmem:[%s0 + $0x8] sm:$0xff]
  %v559 = vld [vmem:[%s0 + $0x10] sm:$0xff]
  %v560 = vld [vmem:[%s0 + $0x18] sm:$0xff]
  %v945 = vunpack.c.l.b16 %v17
  %v946 = vunpack.c.h.b16 %v17
  %v947 = vunpack.c.l.b16 %v18
  %v948 = vunpack.c.h.b16 %v18
  %v949 = vunpack.c.l.b16 %v19
  %v950 = vunpack.c.h.b16 %v19
  %v951 = vunpack.c.l.b16 %v20
  %v952 = vunpack.c.h.b16 %v20
  %v953 = vunpack.c.l.b16 %v21
  %v954 = vunpack.c.h.b16 %v21
  %v955 = vunpack.c.l.b16 %v22
  %v956 = vunpack.c.h.b16 %v22
  %v957 = vunpack.c.l.b16 %v23
  %v958 = vunpack.c.h.b16 %v23
  %v959 = vunpack.c.l.b16 %v24
  %v960 = vunpack.c.h.b16 %v24
  %v961 = vunpack.c.l.b16 %v25
  %v962 = vunpack.c.h.b16 %v25
  %v963 = vunpack.c.l.b16 %v26
  %v964 = vunpack.c.h.b16 %v26
  %v965 = vunpack.c.l.b16 %v27
  %v966 = vunpack.c.h.b16 %v27
  %v967 = vunpack.c.l.b16 %v28
  %v968 = vunpack.c.h.b16 %v28
  %v969 = vunpack.c.l.b16 %v29
  %v970 = vunpack.c.h.b16 %v29
  %v971 = vunpack.c.l.b16 %v30
  %v972 = vunpack.c.h.b16 %v30
  %v973 = vunpack.c.l.b16 %v31
  %v974 = vunpack.c.h.b16 %v31
  %v975 = vunpack.c.l.b16 %v32
  %v976 = vunpack.c.h.b16 %v32
  %v977 = vunpack.c.l.b16 %v33
  %v978 = vunpack.c.h.b16 %v33
  %v979 = vunpack.c.l.b16 %v34
  %v980 = vunpack.c.h.b16 %v34
  %v981 = vunpack.c.l.b16 %v35
  %v982 = vunpack.c.h.b16 %v35
  %v983 = vunpack.c.l.b16 %v36
  %v984 = vunpack.c.h.b16 %v36
  %v985 = vunpack.c.l.b16 %v37
  %v986 = vunpack.c.h.b16 %v37
  %v987 = vunpack.c.l.b16 %v38
  %v988 = vunpack.c.h.b16 %v38
  %v989 = vunpack.c.l.b16 %v39
  %v990 = vunpack.c.h.b16 %v39
  %v991 = vunpack.c.l.b16 %v40
  %v992 = vunpack.c.h.b16 %v40
  %v993 = vunpack.c.l.b16 %v41
  %v994 = vunpack.c.h.b16 %v41
  %v995 = vunpack.c.l.b16 %v42
  %v996 = vunpack.c.h.b16 %v42
  %v997 = vunpack.c.l.b16 %v43
  %v998 = vunpack.c.h.b16 %v43
  %v999 = vunpack.c.l.b16 %v44
  %v1000 = vunpack.c.h.b16 %v44
  %v1001 = vunpack.c.l.b16 %v45
  %v1002 = vunpack.c.h.b16 %v45
  %v1003 = vunpack.c.l.b16 %v46
  %v1004 = vunpack.c.h.b16 %v46
  %v1005 = vunpack.c.l.b16 %v47
  %v1006 = vunpack.c.h.b16 %v47
  %v1007 = vunpack.c.l.b16 %v48
  %v1008 = vunpack.c.h.b16 %v48
  %v1009 = vunpack.c.l.b16 %v49
  %v1010 = vunpack.c.h.b16 %v49
  %v1011 = vunpack.c.l.b16 %v50
  %v1012 = vunpack.c.h.b16 %v50
  %v1013 = vunpack.c.l.b16 %v51
  %v1014 = vunpack.c.h.b16 %v51
  %v1015 = vunpack.c.l.b16 %v52
  %v1016 = vunpack.c.h.b16 %v52
  %v1017 = vunpack.c.l.b16 %v53
  %v1018 = vunpack.c.h.b16 %v53
  %v1019 = vunpack.c.l.b16 %v54
  %v1020 = vunpack.c.h.b16 %v54
  %v1021 = vunpack.c.l.b16 %v55
  %v1022 = vunpack.c.h.b16 %v55
  %v1023 = vunpack.c.l.b16 %v56
  %v1024 = vunpack.c.h.b16 %v56
  %v1025 = vunpack.c.l.b16 %v57
  %v1026 = vunpack.c.h.b16 %v57
  %v1027 = vunpack.c.l.b16 %v58
  %v1028 = vunpack.c.h.b16 %v58
  %v1029 = vunpack.c.l.b16 %v59
  %v1030 = vunpack.c.h.b16 %v59
  %v1031 = vunpack.c.l.b16 %v60
  %v1032 = vunpack.c.h.b16 %v60
  %v1033 = vunpack.c.l.b16 %v61
  %v1034 = vunpack.c.h.b16 %v61
  %v1035 = vunpack.c.l.b16 %v62
  %v1036 = vunpack.c.h.b16 %v62
  %v1037 = vunpack.c.l.b16 %v63
  %v1038 = vunpack.c.h.b16 %v63
  %v1039 = vunpack.c.l.b16 %v64
  %v1040 = vunpack.c.h.b16 %v64
  %v1041 = vunpack.c.l.b16 %v65
  %v1042 = vunpack.c.h.b16 %v65
  %v1043 = vunpack.c.l.b16 %v66
  %v1044 = vunpack.c.h.b16 %v66
  %v1045 = vunpack.c.l.b16 %v67
  %v1046 = vunpack.c.h.b16 %v67
  %v1047 = vunpack.c.l.b16 %v68
  %v1048 = vunpack.c.h.b16 %v68
  %v1049 = vunpack.c.l.b16 %v69
  %v1050 = vunpack.c.h.b16 %v69
  %v1051 = vunpack.c.l.b16 %v70
  %v1052 = vunpack.c.h.b16 %v70
  %v1053 = vunpack.c.l.b16 %v71
  %v1054 = vunpack.c.h.b16 %v71
  %v1055 = vunpack.c.l.b16 %v72
  %v1056 = vunpack.c.h.b16 %v72
  %v1057 = vunpack.c.l.b16 %v73
  %v1058 = vunpack.c.h.b16 %v73
  %v1059 = vunpack.c.l.b16 %v74
  %v1060 = vunpack.c.h.b16 %v74
  %v1061 = vunpack.c.l.b16 %v75
  %v1062 = vunpack.c.h.b16 %v75
  %v1063 = vunpack.c.l.b16 %v76
  %v1064 = vunpack.c.h.b16 %v76
  %v1065 = vunpack.c.l.b16 %v77
  %v1066 = vunpack.c.h.b16 %v77
  %v1067 = vunpack.c.l.b16 %v78
  %v1068 = vunpack.c.h.b16 %v78
  %v1069 = vunpack.c.l.b16 %v79
  %v1070 = vunpack.c.h.b16 %v79
  %v1071 = vunpack.c.l.b16 %v80
  %v1072 = vunpack.c.h.b16 %v80
  %v1073 = vunpack.c.l.b16 %v81
  %v1074 = vunpack.c.h.b16 %v81
  %v1075 = vunpack.c.l.b16 %v82
  %v1076 = vunpack.c.h.b16 %v82
  %v1077 = vunpack.c.l.b16 %v83
  %v1078 = vunpack.c.h.b16 %v83
  %v1079 = vunpack.c.l.b16 %v84
  %v1080 = vunpack.c.h.b16 %v84
  %v1081 = vunpack.c.l.b16 %v85
  %v1082 = vunpack.c.h.b16 %v85
  %v1083 = vunpack.c.l.b16 %v86
  %v1084 = vunpack.c.h.b16 %v86
  %v1085 = vunpack.c.l.b16 %v87
  %v1086 = vunpack.c.h.b16 %v87
  %v1087 = vunpack.c.l.b16 %v88
  %v1088 = vunpack.c.h.b16 %v88
  %v1089 = vunpack.c.l.b16 %v89
  %v1090 = vunpack.c.h.b16 %v89
  %v1091 = vunpack.c.l.b16 %v90
  %v1092 = vunpack.c.h.b16 %v90
  %v1093 = vunpack.c.l.b16 %v91
  %v1094 = vunpack.c.h.b16 %v91
  %v1095 = vunpack.c.l.b16 %v92
  %v1096 = vunpack.c.h.b16 %v92
  %v1097 = vunpack.c.l.b16 %v93
  %v1098 = vunpack.c.h.b16 %v93
  %v1099 = vunpack.c.l.b16 %v94
  %v1100 = vunpack.c.h.b16 %v94
  %v1101 = vunpack.c.l.b16 %v95
  %v1102 = vunpack.c.h.b16 %v95
  %v1103 = vunpack.c.l.b16 %v96
  %v1104 = vunpack.c.h.b16 %v96
  %v1105 = vunpack.c.l.b16 %v97
  %v1106 = vunpack.c.h.b16 %v97
  %v1107 = vunpack.c.l.b16 %v98
  %v1108 = vunpack.c.h.b16 %v98
  %v1109 = vunpack.c.l.b16 %v99
  %v1110 = vunpack.c.h.b16 %v99
  %v1111 = vunpack.c.l.b16 %v100
  %v1112 = vunpack.c.h.b16 %v100
  %v1113 = vunpack.c.l.b16 %v101
  %v1114 = vunpack.c.h.b16 %v101
  %v1115 = vunpack.c.l.b16 %v102
  %v1116 = vunpack.c.h.b16 %v102
  %v1117 = vunpack.c.l.b16 %v103
  %v1118 = vunpack.c.h.b16 %v103
  %v1119 = vunpack.c.l.b16 %v104
  %v1120 = vunpack.c.h.b16 %v104
  %v1121 = vunpack.c.l.b16 %v105
  %v1122 = vunpack.c.h.b16 %v105
  %v1123 = vunpack.c.l.b16 %v106
  %v1124 = vunpack.c.h.b16 %v106
  %v1125 = vunpack.c.l.b16 %v107
  %v1126 = vunpack.c.h.b16 %v107
  %v1127 = vunpack.c.l.b16 %v108
  %v1128 = vunpack.c.h.b16 %v108
  %v1129 = vunpack.c.l.b16 %v109
  %v1130 = vunpack.c.h.b16 %v109
  %v1131 = vunpack.c.l.b16 %v110
  %v1132 = vunpack.c.h.b16 %v110
  %v1133 = vunpack.c.l.b16 %v111
  %v1134 = vunpack.c.h.b16 %v111
  %v1135 = vunpack.c.l.b16 %v112
  %v1136 = vunpack.c.h.b16 %v112
  %v1137 = vunpack.c.l.b16 %v113
  %v1138 = vunpack.c.h.b16 %v113
  %v1139 = vunpack.c.l.b16 %v114
  %v1140 = vunpack.c.h.b16 %v114
  %v1141 = vunpack.c.l.b16 %v115
  %v1142 = vunpack.c.h.b16 %v115
  %v1143 = vunpack.c.l.b16 %v116
  %v1144 = vunpack.c.h.b16 %v116
  %v1145 = vunpack.c.l.b16 %v117
  %v1146 = vunpack.c.h.b16 %v117
  %v1147 = vunpack.c.l.b16 %v118
  %v1148 = vunpack.c.h.b16 %v118
  %v1149 = vunpack.c.l.b16 %v119
  %v1150 = vunpack.c.h.b16 %v119
  %v1151 = vunpack.c.l.b16 %v120
  %v1152 = vunpack.c.h.b16 %v120
  %v1153 = vunpack.c.l.b16 %v121
  %v1154 = vunpack.c.h.b16 %v121
  %v1155 = vunpack.c.l.b16 %v122
  %v1156 = vunpack.c.h.b16 %v122
  %v1157 = vunpack.c.l.b16 %v123
  %v1158 = vunpack.c.h.b16 %v123
  %v1159 = vunpack.c.l.b16 %v124
  %v1160 = vunpack.c.h.b16 %v124
  %v1161 = vunpack.c.l.b16 %v125
  %v1162 = vunpack.c.h.b16 %v125
  %v1163 = vunpack.c.l.b16 %v126
  %v1164 = vunpack.c.h.b16 %v126
  %v1165 = vunpack.c.l.b16 %v127
  %v1166 = vunpack.c.h.b16 %v127
  %v1167 = vunpack.c.l.b16 %v128
  %v1168 = vunpack.c.h.b16 %v128
  %v1169 = vunpack.c.l.b16 %v129
  %v1170 = vunpack.c.h.b16 %v129
  %v1171 = vunpack.c.l.b16 %v130
  %v1172 = vunpack.c.h.b16 %v130
  %v1173 = vunpack.c.l.b16 %v131
  %v1174 = vunpack.c.h.b16 %v131
  %v1175 = vunpack.c.l.b16 %v132
  %v1176 = vunpack.c.h.b16 %v132
  %v1177 = vunpack.c.l.b16 %v133
  %v1178 = vunpack.c.h.b16 %v133
  %v1179 = vunpack.c.l.b16 %v134
  %v1180 = vunpack.c.h.b16 %v134
  %v1181 = vunpack.c.l.b16 %v135
  %v1182 = vunpack.c.h.b16 %v135
  %v1183 = vunpack.c.l.b16 %v136
  %v1184 = vunpack.c.h.b16 %v136
  %v1185 = vunpack.c.l.b16 %v137
  %v1186 = vunpack.c.h.b16 %v137
  %v1187 = vunpack.c.l.b16 %v138
  %v1188 = vunpack.c.h.b16 %v138
  %v1189 = vunpack.c.l.b16 %v139
  %v1190 = vunpack.c.h.b16 %v139
  %v1191 = vunpack.c.l.b16 %v140
  %v1192 = vunpack.c.h.b16 %v140
  %v1193 = vunpack.c.l.b16 %v141
  %v1194 = vunpack.c.h.b16 %v141
  %v1195 = vunpack.c.l.b16 %v142
  %v1196 = vunpack.c.h.b16 %v142
  %v1197 = vunpack.c.l.b16 %v143
  %v1198 = vunpack.c.h.b16 %v143
  %v1199 = vunpack.c.l.b16 %v144
  %v1200 = vunpack.c.h.b16 %v144
  %v1201 = vunpack.c.l.b16 %v145
  %v1202 = vunpack.c.h.b16 %v145
  %v1203 = vunpack.c.l.b16 %v146
  %v1204 = vunpack.c.h.b16 %v146
  %v1205 = vunpack.c.l.b16 %v147
  %v1206 = vunpack.c.h.b16 %v147
  %v1207 = vunpack.c.l.b16 %v148
  %v1208 = vunpack.c.h.b16 %v148
  %v1209 = vunpack.c.l.b16 %v149
  %v1210 = vunpack.c.h.b16 %v149
  %v1211 = vunpack.c.l.b16 %v150
  %v1212 = vunpack.c.h.b16 %v150
  %v1213 = vunpack.c.l.b16 %v151
  %v1214 = vunpack.c.h.b16 %v151
  %v1215 = vunpack.c.l.b16 %v152
  %v1216 = vunpack.c.h.b16 %v152
  %v1217 = vunpack.c.l.b16 %v153
  %v1218 = vunpack.c.h.b16 %v153
  %v1219 = vunpack.c.l.b16 %v154
  %v1220 = vunpack.c.h.b16 %v154
  %v1221 = vunpack.c.l.b16 %v155
  %v1222 = vunpack.c.h.b16 %v155
  %v1223 = vunpack.c.l.b16 %v156
  %v1224 = vunpack.c.h.b16 %v156
  %v1225 = vunpack.c.l.b16 %v157
  %v1226 = vunpack.c.h.b16 %v157
  %v1227 = vunpack.c.l.b16 %v158
  %v1228 = vunpack.c.h.b16 %v158
  %v1229 = vunpack.c.l.b16 %v159
  %v1230 = vunpack.c.h.b16 %v159
  %v1231 = vunpack.c.l.b16 %v160
  %v1232 = vunpack.c.h.b16 %v160
  %v1233 = vunpack.c.l.b16 %v161
  %v1234 = vunpack.c.h.b16 %v161
  %v1235 = vunpack.c.l.b16 %v162
  %v1236 = vunpack.c.h.b16 %v162
  %v1237 = vunpack.c.l.b16 %v163
  %v1238 = vunpack.c.h.b16 %v163
  %v1239 = vunpack.c.l.b16 %v164
  %v1240 = vunpack.c.h.b16 %v164
  %v1241 = vunpack.c.l.b16 %v165
  %v1242 = vunpack.c.h.b16 %v165
  %v1243 = vunpack.c.l.b16 %v166
  %v1244 = vunpack.c.h.b16 %v166
  %v1245 = vunpack.c.l.b16 %v167
  %v1246 = vunpack.c.h.b16 %v167
  %v1247 = vunpack.c.l.b16 %v168
  %v1248 = vunpack.c.h.b16 %v168
  %v1249 = vunpack.c.l.b16 %v169
  %v1250 = vunpack.c.h.b16 %v169
  %v1251 = vunpack.c.l.b16 %v170
  %v1252 = vunpack.c.h.b16 %v170
  %v1253 = vunpack.c.l.b16 %v171
  %v1254 = vunpack.c.h.b16 %v171
  %v1255 = vunpack.c.l.b16 %v172
  %v1256 = vunpack.c.h.b16 %v172
  %v1257 = vunpack.c.l.b16 %v173
  %v1258 = vunpack.c.h.b16 %v173
  %v1259 = vunpack.c.l.b16 %v174
  %v1260 = vunpack.c.h.b16 %v174
  %v1261 = vunpack.c.l.b16 %v175
  %v1262 = vunpack.c.h.b16 %v175
  %v1263 = vunpack.c.l.b16 %v176
  %v1264 = vunpack.c.h.b16 %v176
  %v1265 = vunpack.c.l.b16 %v177
  %v1266 = vunpack.c.h.b16 %v177
  %v1267 = vunpack.c.l.b16 %v178
  %v1268 = vunpack.c.h.b16 %v178
  %v1269 = vunpack.c.l.b16 %v179
  %v1270 = vunpack.c.h.b16 %v179
  %v1271 = vunpack.c.l.b16 %v180
  %v1272 = vunpack.c.h.b16 %v180
  %v1273 = vunpack.c.l.b16 %v181
  %v1274 = vunpack.c.h.b16 %v181
  %v1275 = vunpack.c.l.b16 %v182
  %v1276 = vunpack.c.h.b16 %v182
  %v1277 = vunpack.c.l.b16 %v183
  %v1278 = vunpack.c.h.b16 %v183
  %v1279 = vunpack.c.l.b16 %v184
  %v1280 = vunpack.c.h.b16 %v184
  %v1281 = vunpack.c.l.b16 %v185
  %v1282 = vunpack.c.h.b16 %v185
  %v1283 = vunpack.c.l.b16 %v186
  %v1284 = vunpack.c.h.b16 %v186
  %v1285 = vunpack.c.l.b16 %v187
  %v1286 = vunpack.c.h.b16 %v187
  %v1287 = vunpack.c.l.b16 %v188
  %v1288 = vunpack.c.h.b16 %v188
  %v1289 = vunpack.c.l.b16 %v189
  %v1290 = vunpack.c.h.b16 %v189
  %v1291 = vunpack.c.l.b16 %v190
  %v1292 = vunpack.c.h.b16 %v190
  %v1293 = vunpack.c.l.b16 %v191
  %v1294 = vunpack.c.h.b16 %v191
  %v1295 = vunpack.c.l.b16 %v192
  %v1296 = vunpack.c.h.b16 %v192
  %v1297 = vunpack.c.l.b16 %v193
  %v1298 = vunpack.c.h.b16 %v193
  %v1299 = vunpack.c.l.b16 %v194
  %v1300 = vunpack.c.h.b16 %v194
  %v1301 = vunpack.c.l.b16 %v195
  %v1302 = vunpack.c.h.b16 %v195
  %v1303 = vunpack.c.l.b16 %v196
  %v1304 = vunpack.c.h.b16 %v196
  %v1305 = vunpack.c.l.b16 %v197
  %v1306 = vunpack.c.h.b16 %v197
  %v1307 = vunpack.c.l.b16 %v198
  %v1308 = vunpack.c.h.b16 %v198
  %v1309 = vunpack.c.l.b16 %v199
  %v1310 = vunpack.c.h.b16 %v199
  %v1311 = vunpack.c.l.b16 %v200
  %v1312 = vunpack.c.h.b16 %v200
  %v1313 = vunpack.c.l.b16 %v201
  %v1314 = vunpack.c.h.b16 %v201
  %v1315 = vunpack.c.l.b16 %v202
  %v1316 = vunpack.c.h.b16 %v202
  %v1317 = vunpack.c.l.b16 %v203
  %v1318 = vunpack.c.h.b16 %v203
  %v1319 = vunpack.c.l.b16 %v204
  %v1320 = vunpack.c.h.b16 %v204
  %v1321 = vunpack.c.l.b16 %v205
  %v1322 = vunpack.c.h.b16 %v205
  %v1323 = vunpack.c.l.b16 %v206
  %v1324 = vunpack.c.h.b16 %v206
  %v1325 = vunpack.c.l.b16 %v207
  %v1326 = vunpack.c.h.b16 %v207
  %v1327 = vunpack.c.l.b16 %v208
  %v1328 = vunpack.c.h.b16 %v208
  %v1329 = vunpack.c.l.b16 %v209
  %v1330 = vunpack.c.h.b16 %v209
  %v1331 = vunpack.c.l.b16 %v210
  %v1332 = vunpack.c.h.b16 %v210
  %v1333 = vunpack.c.l.b16 %v211
  %v1334 = vunpack.c.h.b16 %v211
  %v1335 = vunpack.c.l.b16 %v212
  %v1336 = vunpack.c.h.b16 %v212
  %v1337 = vunpack.c.l.b16 %v213
  %v1338 = vunpack.c.h.b16 %v213
  %v1339 = vunpack.c.l.b16 %v214
  %v1340 = vunpack.c.h.b16 %v214
  %v1341 = vunpack.c.l.b16 %v215
  %v1342 = vunpack.c.h.b16 %v215
  %v1343 = vunpack.c.l.b16 %v216
  %v1344 = vunpack.c.h.b16 %v216
  %v1345 = vunpack.c.l.b16 %v217
  %v1346 = vunpack.c.h.b16 %v217
  %v1347 = vunpack.c.l.b16 %v218
  %v1348 = vunpack.c.h.b16 %v218
  %v1349 = vunpack.c.l.b16 %v219
  %v1350 = vunpack.c.h.b16 %v219
  %v1351 = vunpack.c.l.b16 %v220
  %v1352 = vunpack.c.h.b16 %v220
  %v1353 = vunpack.c.l.b16 %v221
  %v1354 = vunpack.c.h.b16 %v221
  %v1355 = vunpack.c.l.b16 %v222
  %v1356 = vunpack.c.h.b16 %v222
  %v1357 = vunpack.c.l.b16 %v223
  %v1358 = vunpack.c.h.b16 %v223
  %v1359 = vunpack.c.l.b16 %v224
  %v1360 = vunpack.c.h.b16 %v224
  %v1361 = vunpack.c.l.b16 %v225
  %v1362 = vunpack.c.h.b16 %v225
  %v1363 = vunpack.c.l.b16 %v226
  %v1364 = vunpack.c.h.b16 %v226
  %v1365 = vunpack.c.l.b16 %v227
  %v1366 = vunpack.c.h.b16 %v227
  %v1367 = vunpack.c.l.b16 %v228
  %v1368 = vunpack.c.h.b16 %v228
  %v1369 = vunpack.c.l.b16 %v229
  %v1370 = vunpack.c.h.b16 %v229
  %v1371 = vunpack.c.l.b16 %v230
  %v1372 = vunpack.c.h.b16 %v230
  %v1373 = vunpack.c.l.b16 %v231
  %v1374 = vunpack.c.h.b16 %v231
  %v1375 = vunpack.c.l.b16 %v232
  %v1376 = vunpack.c.h.b16 %v232
  %v1377 = vunpack.c.l.b16 %v233
  %v1378 = vunpack.c.h.b16 %v233
  %v1379 = vunpack.c.l.b16 %v234
  %v1380 = vunpack.c.h.b16 %v234
  %v1381 = vunpack.c.l.b16 %v235
  %v1382 = vunpack.c.h.b16 %v235
  %v1383 = vunpack.c.l.b16 %v236
  %v1384 = vunpack.c.h.b16 %v236
  %v1385 = vunpack.c.l.b16 %v237
  %v1386 = vunpack.c.h.b16 %v237
  %v1387 = vunpack.c.l.b16 %v238
  %v1388 = vunpack.c.h.b16 %v238
  %v1389 = vunpack.c.l.b16 %v239
  %v1390 = vunpack.c.h.b16 %v239
  %v1391 = vunpack.c.l.b16 %v240
  %v1392 = vunpack.c.h.b16 %v240
  %v1393 = vunpack.c.l.b16 %v241
  %v1394 = vunpack.c.h.b16 %v241
  %v1395 = vunpack.c.l.b16 %v242
  %v1396 = vunpack.c.h.b16 %v242
  %v1397 = vunpack.c.l.b16 %v243
  %v1398 = vunpack.c.h.b16 %v243
  %v1399 = vunpack.c.l.b16 %v244
  %v1400 = vunpack.c.h.b16 %v244
  %v1401 = vunpack.c.l.b16 %v245
  %v1402 = vunpack.c.h.b16 %v245
  %v1403 = vunpack.c.l.b16 %v246
  %v1404 = vunpack.c.h.b16 %v246
  %v1405 = vunpack.c.l.b16 %v247
  %v1406 = vunpack.c.h.b16 %v247
  %v1407 = vunpack.c.l.b16 %v248
  %v1408 = vunpack.c.h.b16 %v248
  %v1409 = vunpack.c.l.b16 %v249
  %v1410 = vunpack.c.h.b16 %v249
  %v1411 = vunpack.c.l.b16 %v250
  %v1412 = vunpack.c.h.b16 %v250
  %v1413 = vunpack.c.l.b16 %v251
  %v1414 = vunpack.c.h.b16 %v251
  %v1415 = vunpack.c.l.b16 %v252
  %v1416 = vunpack.c.h.b16 %v252
  %v1417 = vunpack.c.l.b16 %v253
  %v1418 = vunpack.c.h.b16 %v253
  %v1419 = vunpack.c.l.b16 %v254
  %v1420 = vunpack.c.h.b16 %v254
  %v1421 = vunpack.c.l.b16 %v255
  %v1422 = vunpack.c.h.b16 %v255
  %v1423 = vunpack.c.l.b16 %v256
  %v1424 = vunpack.c.h.b16 %v256
  %v1425 = vunpack.c.l.b16 %v257
  %v1426 = vunpack.c.h.b16 %v257
  %v1427 = vunpack.c.l.b16 %v258
  %v1428 = vunpack.c.h.b16 %v258
  %v1429 = vunpack.c.l.b16 %v259
  %v1430 = vunpack.c.h.b16 %v259
  %v1431 = vunpack.c.l.b16 %v260
  %v1432 = vunpack.c.h.b16 %v260
  %v1433 = vunpack.c.l.b16 %v261
  %v1434 = vunpack.c.h.b16 %v261
  %v1435 = vunpack.c.l.b16 %v262
  %v1436 = vunpack.c.h.b16 %v262
  %v1437 = vunpack.c.l.b16 %v263
  %v1438 = vunpack.c.h.b16 %v263
  %v1439 = vunpack.c.l.b16 %v264
  %v1440 = vunpack.c.h.b16 %v264
  %v1441 = vunpack.c.l.b16 %v265
  %v1442 = vunpack.c.h.b16 %v265
  %v1443 = vunpack.c.l.b16 %v266
  %v1444 = vunpack.c.h.b16 %v266
  %v1445 = vunpack.c.l.b16 %v267
  %v1446 = vunpack.c.h.b16 %v267
  %v1447 = vunpack.c.l.b16 %v268
  %v1448 = vunpack.c.h.b16 %v268
  %v1449 = vunpack.c.l.b16 %v269
  %v1450 = vunpack.c.h.b16 %v269
  %v1451 = vunpack.c.l.b16 %v270
  %v1452 = vunpack.c.h.b16 %v270
  %v1453 = vunpack.c.l.b16 %v271
  %v1454 = vunpack.c.h.b16 %v271
  %v1455 = vunpack.c.l.b16 %v272
  %v1456 = vunpack.c.h.b16 %v272
  %v1457 = vunpack.c.l.b16 %v273
  %v1458 = vunpack.c.h.b16 %v273
  %v1459 = vunpack.c.l.b16 %v274
  %v1460 = vunpack.c.h.b16 %v274
  %v1461 = vunpack.c.l.b16 %v275
  %v1462 = vunpack.c.h.b16 %v275
  %v1463 = vunpack.c.l.b16 %v276
  %v1464 = vunpack.c.h.b16 %v276
  %v1465 = vunpack.c.l.b16 %v277
  %v1466 = vunpack.c.h.b16 %v277
  %v1467 = vunpack.c.l.b16 %v278
  %v1468 = vunpack.c.h.b16 %v278
  %v1469 = vunpack.c.l.b16 %v279
  %v1470 = vunpack.c.h.b16 %v279
  %v1471 = vunpack.c.l.b16 %v280
  %v1472 = vunpack.c.h.b16 %v280
  %v1473 = vunpack.c.l.b16 %v281
  %v1474 = vunpack.c.h.b16 %v281
  %v1475 = vunpack.c.l.b16 %v282
  %v1476 = vunpack.c.h.b16 %v282
  %v1477 = vunpack.c.l.b16 %v283
  %v1478 = vunpack.c.h.b16 %v283
  %v1479 = vunpack.c.l.b16 %v284
  %v1480 = vunpack.c.h.b16 %v284
  %v1481 = vunpack.c.l.b16 %v285
  %v1482 = vunpack.c.h.b16 %v285
  %v1483 = vunpack.c.l.b16 %v286
  %v1484 = vunpack.c.h.b16 %v286
  %v1485 = vunpack.c.l.b16 %v287
  %v1486 = vunpack.c.h.b16 %v287
  %v1487 = vunpack.c.l.b16 %v288
  %v1488 = vunpack.c.h.b16 %v288
  %v1489 = vunpack.c.l.b16 %v289
  %v1490 = vunpack.c.h.b16 %v289
  %v1491 = vunpack.c.l.b16 %v290
  %v1492 = vunpack.c.h.b16 %v290
  %v1493 = vunpack.c.l.b16 %v291
  %v1494 = vunpack.c.h.b16 %v291
  %v1495 = vunpack.c.l.b16 %v292
  %v1496 = vunpack.c.h.b16 %v292
  %v1497 = vunpack.c.l.b16 %v293
  %v1498 = vunpack.c.h.b16 %v293
  %v1499 = vunpack.c.l.b16 %v294
  %v1500 = vunpack.c.h.b16 %v294
  %v1501 = vunpack.c.l.b16 %v295
  %v1502 = vunpack.c.h.b16 %v295
  %v1503 = vunpack.c.l.b16 %v296
  %v1504 = vunpack.c.h.b16 %v296
  %v1505 = vunpack.c.l.b16 %v297
  %v1506 = vunpack.c.h.b16 %v297
  %v1507 = vunpack.c.l.b16 %v298
  %v1508 = vunpack.c.h.b16 %v298
  %v1509 = vunpack.c.l.b16 %v299
  %v1510 = vunpack.c.h.b16 %v299
  %v1511 = vunpack.c.l.b16 %v300
  %v1512 = vunpack.c.h.b16 %v300
  %v1513 = vunpack.c.l.b16 %v301
  %v1514 = vunpack.c.h.b16 %v301
  %v1515 = vunpack.c.l.b16 %v302
  %v1516 = vunpack.c.h.b16 %v302
  %v1517 = vunpack.c.l.b16 %v303
  %v1518 = vunpack.c.h.b16 %v303
  %v1519 = vunpack.c.l.b16 %v304
  %v1520 = vunpack.c.h.b16 %v304
  %v1521 = vunpack.c.l.b16 %v305
  %v1522 = vunpack.c.h.b16 %v305
  %v1523 = vunpack.c.l.b16 %v306
  %v1524 = vunpack.c.h.b16 %v306
  %v1525 = vunpack.c.l.b16 %v307
  %v1526 = vunpack.c.h.b16 %v307
  %v1527 = vunpack.c.l.b16 %v308
  %v1528 = vunpack.c.h.b16 %v308
  %v1529 = vunpack.c.l.b16 %v309
  %v1530 = vunpack.c.h.b16 %v309
  %v1531 = vunpack.c.l.b16 %v310
  %v1532 = vunpack.c.h.b16 %v310
  %v1533 = vunpack.c.l.b16 %v311
  %v1534 = vunpack.c.h.b16 %v311
  %v1535 = vunpack.c.l.b16 %v312
  %v1536 = vunpack.c.h.b16 %v312
  %v1537 = vunpack.c.l.b16 %v313
  %v1538 = vunpack.c.h.b16 %v313
  %v1539 = vunpack.c.l.b16 %v314
  %v1540 = vunpack.c.h.b16 %v314
  %v1541 = vunpack.c.l.b16 %v315
  %v1542 = vunpack.c.h.b16 %v315
  %v1543 = vunpack.c.l.b16 %v316
  %v1544 = vunpack.c.h.b16 %v316
  %v1545 = vunpack.c.l.b16 %v317
  %v1546 = vunpack.c.h.b16 %v317
  %v1547 = vunpack.c.l.b16 %v318
  %v1548 = vunpack.c.h.b16 %v318
  %v1549 = vunpack.c.l.b16 %v319
  %v1550 = vunpack.c.h.b16 %v319
  %v1551 = vunpack.c.l.b16 %v320
  %v1552 = vunpack.c.h.b16 %v320
  %v1553 = vunpack.c.l.b16 %v321
  %v1554 = vunpack.c.h.b16 %v321
  %v1555 = vunpack.c.l.b16 %v322
  %v1556 = vunpack.c.h.b16 %v322
  %v1557 = vunpack.c.l.b16 %v323
  %v1558 = vunpack.c.h.b16 %v323
  %v1559 = vunpack.c.l.b16 %v324
  %v1560 = vunpack.c.h.b16 %v324
  %v1561 = vunpack.c.l.b16 %v325
  %v1562 = vunpack.c.h.b16 %v325
  %v1563 = vunpack.c.l.b16 %v326
  %v1564 = vunpack.c.h.b16 %v326
  %v1565 = vunpack.c.l.b16 %v327
  %v1566 = vunpack.c.h.b16 %v327
  %v1567 = vunpack.c.l.b16 %v328
  %v1568 = vunpack.c.h.b16 %v328
  %v1569 = vunpack.c.l.b16 %v329
  %v1570 = vunpack.c.h.b16 %v329
  %v1571 = vunpack.c.l.b16 %v330
  %v1572 = vunpack.c.h.b16 %v330
  %v1573 = vunpack.c.l.b16 %v331
  %v1574 = vunpack.c.h.b16 %v331
  %v1575 = vunpack.c.l.b16 %v332
  %v1576 = vunpack.c.h.b16 %v332
  %v1577 = vunpack.c.l.b16 %v333
  %v1578 = vunpack.c.h.b16 %v333
  %v1579 = vunpack.c.l.b16 %v334
  %v1580 = vunpack.c.h.b16 %v334
  %v1581 = vunpack.c.l.b16 %v335
  %v1582 = vunpack.c.h.b16 %v335
  %v1583 = vunpack.c.l.b16 %v336
  %v1584 = vunpack.c.h.b16 %v336
  %v1585 = vunpack.c.l.b16 %v337
  %v1586 = vunpack.c.h.b16 %v337
  %v1587 = vunpack.c.l.b16 %v338
  %v1588 = vunpack.c.h.b16 %v338
  %v1589 = vunpack.c.l.b16 %v339
  %v1590 = vunpack.c.h.b16 %v339
  %v1591 = vunpack.c.l.b16 %v340
  %v1592 = vunpack.c.h.b16 %v340
  %v1593 = vunpack.c.l.b16 %v341
  %v1594 = vunpack.c.h.b16 %v341
  %v1595 = vunpack.c.l.b16 %v342
  %v1596 = vunpack.c.h.b16 %v342
  %v1597 = vunpack.c.l.b16 %v343
  %v1598 = vunpack.c.h.b16 %v343
  %v1599 = vunpack.c.l.b16 %v344
  %v1600 = vunpack.c.h.b16 %v344
  %v1601 = vunpack.c.l.b16 %v345
  %v1602 = vunpack.c.h.b16 %v345
  %v1603 = vunpack.c.l.b16 %v346
  %v1604 = vunpack.c.h.b16 %v346
  %v1605 = vunpack.c.l.b16 %v347
  %v1606 = vunpack.c.h.b16 %v347
  %v1607 = vunpack.c.l.b16 %v348
  %v1608 = vunpack.c.h.b16 %v348
  %v1609 = vunpack.c.l.b16 %v349
  %v1610 = vunpack.c.h.b16 %v349
  %v1611 = vunpack.c.l.b16 %v350
  %v1612 = vunpack.c.h.b16 %v350
  %v1613 = vunpack.c.l.b16 %v351
  %v1614 = vunpack.c.h.b16 %v351
  %v1615 = vunpack.c.l.b16 %v352
  %v1616 = vunpack.c.h.b16 %v352
  %v1617 = vunpack.c.l.b16 %v353
  %v1618 = vunpack.c.h.b16 %v353
  %v1619 = vunpack.c.l.b16 %v354
  %v1620 = vunpack.c.h.b16 %v354
  %v1621 = vunpack.c.l.b16 %v355
  %v1622 = vunpack.c.h.b16 %v355
  %v1623 = vunpack.c.l.b16 %v356
  %v1624 = vunpack.c.h.b16 %v356
  %v1625 = vunpack.c.l.b16 %v357
  %v1626 = vunpack.c.h.b16 %v357
  %v1627 = vunpack.c.l.b16 %v358
  %v1628 = vunpack.c.h.b16 %v358
  %v1629 = vunpack.c.l.b16 %v359
  %v1630 = vunpack.c.h.b16 %v359
  %v1631 = vunpack.c.l.b16 %v360
  %v1632 = vunpack.c.h.b16 %v360
  %v1633 = vunpack.c.l.b16 %v361
  %v1634 = vunpack.c.h.b16 %v361
  %v1635 = vunpack.c.l.b16 %v362
  %v1636 = vunpack.c.h.b16 %v362
  %v1637 = vunpack.c.l.b16 %v363
  %v1638 = vunpack.c.h.b16 %v363
  %v1639 = vunpack.c.l.b16 %v364
  %v1640 = vunpack.c.h.b16 %v364
  %v1641 = vunpack.c.l.b16 %v365
  %v1642 = vunpack.c.h.b16 %v365
  %v1643 = vunpack.c.l.b16 %v366
  %v1644 = vunpack.c.h.b16 %v366
  %v1645 = vunpack.c.l.b16 %v367
  %v1646 = vunpack.c.h.b16 %v367
  %v1647 = vunpack.c.l.b16 %v368
  %v1648 = vunpack.c.h.b16 %v368
  %v1649 = vunpack.c.l.b16 %v369
  %v1650 = vunpack.c.h.b16 %v369
  %v1651 = vunpack.c.l.b16 %v370
  %v1652 = vunpack.c.h.b16 %v370
  %v1653 = vunpack.c.l.b16 %v371
  %v1654 = vunpack.c.h.b16 %v371
  %v1655 = vunpack.c.l.b16 %v372
  %v1656 = vunpack.c.h.b16 %v372
  %v1657 = vunpack.c.l.b16 %v373
  %v1658 = vunpack.c.h.b16 %v373
  %v1659 = vunpack.c.l.b16 %v374
  %v1660 = vunpack.c.h.b16 %v374
  %v1661 = vunpack.c.l.b16 %v375
  %v1662 = vunpack.c.h.b16 %v375
  %v1663 = vunpack.c.l.b16 %v376
  %v1664 = vunpack.c.h.b16 %v376
  %v1665 = vunpack.c.l.b16 %v377
  %v1666 = vunpack.c.h.b16 %v377
  %v1667 = vunpack.c.l.b16 %v378
  %v1668 = vunpack.c.h.b16 %v378
  %v1669 = vunpack.c.l.b16 %v379
  %v1670 = vunpack.c.h.b16 %v379
  %v1671 = vunpack.c.l.b16 %v380
  %v1672 = vunpack.c.h.b16 %v380
  %v1673 = vunpack.c.l.b16 %v381
  %v1674 = vunpack.c.h.b16 %v381
  %v1675 = vunpack.c.l.b16 %v382
  %v1676 = vunpack.c.h.b16 %v382
  %v1677 = vunpack.c.l.b16 %v383
  %v1678 = vunpack.c.h.b16 %v383
  %v1679 = vunpack.c.l.b16 %v384
  %v1680 = vunpack.c.h.b16 %v384
  %v1681 = vunpack.c.l.b16 %v385
  %v1682 = vunpack.c.h.b16 %v385
  %v1683 = vunpack.c.l.b16 %v386
  %v1684 = vunpack.c.h.b16 %v386
  %v1685 = vunpack.c.l.b16 %v387
  %v1686 = vunpack.c.h.b16 %v387
  %v1687 = vunpack.c.l.b16 %v388
  %v1688 = vunpack.c.h.b16 %v388
  %v1689 = vunpack.c.l.b16 %v389
  %v1690 = vunpack.c.h.b16 %v389
  %v1691 = vunpack.c.l.b16 %v390
  %v1692 = vunpack.c.h.b16 %v390
  %v1693 = vunpack.c.l.b16 %v391
  %v1694 = vunpack.c.h.b16 %v391
  %v1695 = vunpack.c.l.b16 %v392
  %v1696 = vunpack.c.h.b16 %v392
  %v1697 = vunpack.c.l.b16 %v393
  %v1698 = vunpack.c.h.b16 %v393
  %v1699 = vunpack.c.l.b16 %v394
  %v1700 = vunpack.c.h.b16 %v394
  %v1701 = vunpack.c.l.b16 %v395
  %v1702 = vunpack.c.h.b16 %v395
  %v1703 = vunpack.c.l.b16 %v396
  %v1704 = vunpack.c.h.b16 %v396
  %v1705 = vunpack.c.l.b16 %v397
  %v1706 = vunpack.c.h.b16 %v397
  %v1707 = vunpack.c.l.b16 %v398
  %v1708 = vunpack.c.h.b16 %v398
  %v1709 = vunpack.c.l.b16 %v399
  %v1710 = vunpack.c.h.b16 %v399
  %v1711 = vunpack.c.l.b16 %v400
  %v1712 = vunpack.c.h.b16 %v400
  %v1713 = vpack.c.b16 %v957, %v945
  %v1714 = vpack.c.b16 %v958, %v946
  %v1715 = vpack.c.b16 %v959, %v947
  %v1716 = vpack.c.b16 %v960, %v948
  %v1717 = vpack.c.b16 %v961, %v949
  %v1718 = vpack.c.b16 %v962, %v950
  %v1719 = vpack.c.b16 %v963, %v951
  %v1720 = vpack.c.b16 %v964, %v952
  %v1721 = vpack.c.b16 %v965, %v953
  %v1722 = vpack.c.b16 %v966, %v954
  %v1723 = vpack.c.b16 %v967, %v955
  %v1724 = vpack.c.b16 %v968, %v956
  %v1725 = vpack.c.b16 %v981, %v969
  %v1726 = vpack.c.b16 %v982, %v970
  %v1727 = vpack.c.b16 %v983, %v971
  %v1728 = vpack.c.b16 %v984, %v972
  %v1729 = vpack.c.b16 %v985, %v973
  %v1730 = vpack.c.b16 %v986, %v974
  %v1731 = vpack.c.b16 %v987, %v975
  %v1732 = vpack.c.b16 %v988, %v976
  %v1733 = vpack.c.b16 %v989, %v977
  %v1734 = vpack.c.b16 %v990, %v978
  %v1735 = vpack.c.b16 %v991, %v979
  %v1736 = vpack.c.b16 %v992, %v980
  %v1737 = vpack.c.b16 %v1005, %v993
  %v1738 = vpack.c.b16 %v1006, %v994
  %v1739 = vpack.c.b16 %v1007, %v995
  %v1740 = vpack.c.b16 %v1008, %v996
  %v1741 = vpack.c.b16 %v1009, %v997
  %v1742 = vpack.c.b16 %v1010, %v998
  %v1743 = vpack.c.b16 %v1011, %v999
  %v1744 = vpack.c.b16 %v1012, %v1000
  %v1745 = vpack.c.b16 %v1013, %v1001
  %v1746 = vpack.c.b16 %v1014, %v1002
  %v1747 = vpack.c.b16 %v1015, %v1003
  %v1748 = vpack.c.b16 %v1016, %v1004
  %v1749 = vpack.c.b16 %v1029, %v1017
  %v1750 = vpack.c.b16 %v1030, %v1018
  %v1751 = vpack.c.b16 %v1031, %v1019
  %v1752 = vpack.c.b16 %v1032, %v1020
  %v1753 = vpack.c.b16 %v1033, %v1021
  %v1754 = vpack.c.b16 %v1034, %v1022
  %v1755 = vpack.c.b16 %v1035, %v1023
  %v1756 = vpack.c.b16 %v1036, %v1024
  %v1757 = vpack.c.b16 %v1037, %v1025
  %v1758 = vpack.c.b16 %v1038, %v1026
  %v1759 = vpack.c.b16 %v1039, %v1027
  %v1760 = vpack.c.b16 %v1040, %v1028
  %v1761 = vpack.c.b16 %v1053, %v1041
  %v1762 = vpack.c.b16 %v1054, %v1042
  %v1763 = vpack.c.b16 %v1055, %v1043
  %v1764 = vpack.c.b16 %v1056, %v1044
  %v1765 = vpack.c.b16 %v1057, %v1045
  %v1766 = vpack.c.b16 %v1058, %v1046
  %v1767 = vpack.c.b16 %v1059, %v1047
  %v1768 = vpack.c.b16 %v1060, %v1048
  %v1769 = vpack.c.b16 %v1061, %v1049
  %v1770 = vpack.c.b16 %v1062, %v1050
  %v1771 = vpack.c.b16 %v1063, %v1051
  %v1772 = vpack.c.b16 %v1064, %v1052
  %v1773 = vpack.c.b16 %v1077, %v1065
  %v1774 = vpack.c.b16 %v1078, %v1066
  %v1775 = vpack.c.b16 %v1079, %v1067
  %v1776 = vpack.c.b16 %v1080, %v1068
  %v1777 = vpack.c.b16 %v1081, %v1069
  %v1778 = vpack.c.b16 %v1082, %v1070
  %v1779 = vpack.c.b16 %v1083, %v1071
  %v1780 = vpack.c.b16 %v1084, %v1072
  %v1781 = vpack.c.b16 %v1085, %v1073
  %v1782 = vpack.c.b16 %v1086, %v1074
  %v1783 = vpack.c.b16 %v1087, %v1075
  %v1784 = vpack.c.b16 %v1088, %v1076
  %v1785 = vpack.c.b16 %v1101, %v1089
  %v1786 = vpack.c.b16 %v1102, %v1090
  %v1787 = vpack.c.b16 %v1103, %v1091
  %v1788 = vpack.c.b16 %v1104, %v1092
  %v1789 = vpack.c.b16 %v1105, %v1093
  %v1790 = vpack.c.b16 %v1106, %v1094
  %v1791 = vpack.c.b16 %v1107, %v1095
  %v1792 = vpack.c.b16 %v1108, %v1096
  %v1793 = vpack.c.b16 %v1109, %v1097
  %v1794 = vpack.c.b16 %v1110, %v1098
  %v1795 = vpack.c.b16 %v1111, %v1099
  %v1796 = vpack.c.b16 %v1112, %v1100
  %v1797 = vpack.c.b16 %v1125, %v1113
  %v1798 = vpack.c.b16 %v1126, %v1114
  %v1799 = vpack.c.b16 %v1127, %v1115
  %v1800 = vpack.c.b16 %v1128, %v1116
  %v1801 = vpack.c.b16 %v1129, %v1117
  %v1802 = vpack.c.b16 %v1130, %v1118
  %v1803 = vpack.c.b16 %v1131, %v1119
  %v1804 = vpack.c.b16 %v1132, %v1120
  %v1805 = vpack.c.b16 %v1133, %v1121
  %v1806 = vpack.c.b16 %v1134, %v1122
  %v1807 = vpack.c.b16 %v1135, %v1123
  %v1808 = vpack.c.b16 %v1136, %v1124
  %v1809 = vpack.c.b16 %v1149, %v1137
  %v1810 = vpack.c.b16 %v1150, %v1138
  %v1811 = vpack.c.b16 %v1151, %v1139
  %v1812 = vpack.c.b16 %v1152, %v1140
  %v1813 = vpack.c.b16 %v1153, %v1141
  %v1814 = vpack.c.b16 %v1154, %v1142
  %v1815 = vpack.c.b16 %v1155, %v1143
  %v1816 = vpack.c.b16 %v1156, %v1144
  %v1817 = vpack.c.b16 %v1157, %v1145
  %v1818 = vpack.c.b16 %v1158, %v1146
  %v1819 = vpack.c.b16 %v1159, %v1147
  %v1820 = vpack.c.b16 %v1160, %v1148
  %v1821 = vpack.c.b16 %v1173, %v1161
  %v1822 = vpack.c.b16 %v1174, %v1162
  %v1823 = vpack.c.b16 %v1175, %v1163
  %v1824 = vpack.c.b16 %v1176, %v1164
  %v1825 = vpack.c.b16 %v1177, %v1165
  %v1826 = vpack.c.b16 %v1178, %v1166
  %v1827 = vpack.c.b16 %v1179, %v1167
  %v1828 = vpack.c.b16 %v1180, %v1168
  %v1829 = vpack.c.b16 %v1181, %v1169
  %v1830 = vpack.c.b16 %v1182, %v1170
  %v1831 = vpack.c.b16 %v1183, %v1171
  %v1832 = vpack.c.b16 %v1184, %v1172
  %v1833 = vpack.c.b16 %v1197, %v1185
  %v1834 = vpack.c.b16 %v1198, %v1186
  %v1835 = vpack.c.b16 %v1199, %v1187
  %v1836 = vpack.c.b16 %v1200, %v1188
  %v1837 = vpack.c.b16 %v1201, %v1189
  %v1838 = vpack.c.b16 %v1202, %v1190
  %v1839 = vpack.c.b16 %v1203, %v1191
  %v1840 = vpack.c.b16 %v1204, %v1192
  %v1841 = vpack.c.b16 %v1205, %v1193
  %v1842 = vpack.c.b16 %v1206, %v1194
  %v1843 = vpack.c.b16 %v1207, %v1195
  %v1844 = vpack.c.b16 %v1208, %v1196
  %v1845 = vpack.c.b16 %v1221, %v1209
  %v1846 = vpack.c.b16 %v1222, %v1210
  %v1847 = vpack.c.b16 %v1223, %v1211
  %v1848 = vpack.c.b16 %v1224, %v1212
  %v1849 = vpack.c.b16 %v1225, %v1213
  %v1850 = vpack.c.b16 %v1226, %v1214
  %v1851 = vpack.c.b16 %v1227, %v1215
  %v1852 = vpack.c.b16 %v1228, %v1216
  %v1853 = vpack.c.b16 %v1229, %v1217
  %v1854 = vpack.c.b16 %v1230, %v1218
  %v1855 = vpack.c.b16 %v1231, %v1219
  %v1856 = vpack.c.b16 %v1232, %v1220
  %v1857 = vpack.c.b16 %v1245, %v1233
  %v1858 = vpack.c.b16 %v1246, %v1234
  %v1859 = vpack.c.b16 %v1247, %v1235
  %v1860 = vpack.c.b16 %v1248, %v1236
  %v1861 = vpack.c.b16 %v1249, %v1237
  %v1862 = vpack.c.b16 %v1250, %v1238
  %v1863 = vpack.c.b16 %v1251, %v1239
  %v1864 = vpack.c.b16 %v1252, %v1240
  %v1865 = vpack.c.b16 %v1253, %v1241
  %v1866 = vpack.c.b16 %v1254, %v1242
  %v1867 = vpack.c.b16 %v1255, %v1243
  %v1868 = vpack.c.b16 %v1256, %v1244
  %v1869 = vpack.c.b16 %v1269, %v1257
  %v1870 = vpack.c.b16 %v1270, %v1258
  %v1871 = vpack.c.b16 %v1271, %v1259
  %v1872 = vpack.c.b16 %v1272, %v1260
  %v1873 = vpack.c.b16 %v1273, %v1261
  %v1874 = vpack.c.b16 %v1274, %v1262
  %v1875 = vpack.c.b16 %v1275, %v1263
  %v1876 = vpack.c.b16 %v1276, %v1264
  %v1877 = vpack.c.b16 %v1277, %v1265
  %v1878 = vpack.c.b16 %v1278, %v1266
  %v1879 = vpack.c.b16 %v1279, %v1267
  %v1880 = vpack.c.b16 %v1280, %v1268
  %v1881 = vpack.c.b16 %v1293, %v1281
  %v1882 = vpack.c.b16 %v1294, %v1282
  %v1883 = vpack.c.b16 %v1295, %v1283
  %v1884 = vpack.c.b16 %v1296, %v1284
  %v1885 = vpack.c.b16 %v1297, %v1285
  %v1886 = vpack.c.b16 %v1298, %v1286
  %v1887 = vpack.c.b16 %v1299, %v1287
  %v1888 = vpack.c.b16 %v1300, %v1288
  %v1889 = vpack.c.b16 %v1301, %v1289
  %v1890 = vpack.c.b16 %v1302, %v1290
  %v1891 = vpack.c.b16 %v1303, %v1291
  %v1892 = vpack.c.b16 %v1304, %v1292
  %v1893 = vpack.c.b16 %v1317, %v1305
  %v1894 = vpack.c.b16 %v1318, %v1306
  %v1895 = vpack.c.b16 %v1319, %v1307
  %v1896 = vpack.c.b16 %v1320, %v1308
  %v1897 = vpack.c.b16 %v1321, %v1309
  %v1898 = vpack.c.b16 %v1322, %v1310
  %v1899 = vpack.c.b16 %v1323, %v1311
  %v1900 = vpack.c.b16 %v1324, %v1312
  %v1901 = vpack.c.b16 %v1325, %v1313
  %v1902 = vpack.c.b16 %v1326, %v1314
  %v1903 = vpack.c.b16 %v1327, %v1315
  %v1904 = vpack.c.b16 %v1328, %v1316
  %v1905 = vpack.c.b16 %v1341, %v1329
  %v1906 = vpack.c.b16 %v1342, %v1330
  %v1907 = vpack.c.b16 %v1343, %v1331
  %v1908 = vpack.c.b16 %v1344, %v1332
  %v1909 = vpack.c.b16 %v1345, %v1333
  %v1910 = vpack.c.b16 %v1346, %v1334
  %v1911 = vpack.c.b16 %v1347, %v1335
  %v1912 = vpack.c.b16 %v1348, %v1336
  %v1913 = vpack.c.b16 %v1349, %v1337
  %v1914 = vpack.c.b16 %v1350, %v1338
  %v1915 = vpack.c.b16 %v1351, %v1339
  %v1916 = vpack.c.b16 %v1352, %v1340
  %v1917 = vpack.c.b16 %v1365, %v1353
  %v1918 = vpack.c.b16 %v1366, %v1354
  %v1919 = vpack.c.b16 %v1367, %v1355
  %v1920 = vpack.c.b16 %v1368, %v1356
  %v1921 = vpack.c.b16 %v1369, %v1357
  %v1922 = vpack.c.b16 %v1370, %v1358
  %v1923 = vpack.c.b16 %v1371, %v1359
  %v1924 = vpack.c.b16 %v1372, %v1360
  %v1925 = vpack.c.b16 %v1373, %v1361
  %v1926 = vpack.c.b16 %v1374, %v1362
  %v1927 = vpack.c.b16 %v1375, %v1363
  %v1928 = vpack.c.b16 %v1376, %v1364
  %v1929 = vpack.c.b16 %v1389, %v1377
  %v1930 = vpack.c.b16 %v1390, %v1378
  %v1931 = vpack.c.b16 %v1391, %v1379
  %v1932 = vpack.c.b16 %v1392, %v1380
  %v1933 = vpack.c.b16 %v1393, %v1381
  %v1934 = vpack.c.b16 %v1394, %v1382
  %v1935 = vpack.c.b16 %v1395, %v1383
  %v1936 = vpack.c.b16 %v1396, %v1384
  %v1937 = vpack.c.b16 %v1397, %v1385
  %v1938 = vpack.c.b16 %v1398, %v1386
  %v1939 = vpack.c.b16 %v1399, %v1387
  %v1940 = vpack.c.b16 %v1400, %v1388
  %v1941 = vpack.c.b16 %v1413, %v1401
  %v1942 = vpack.c.b16 %v1414, %v1402
  %v1943 = vpack.c.b16 %v1415, %v1403
  %v1944 = vpack.c.b16 %v1416, %v1404
  %v1945 = vpack.c.b16 %v1417, %v1405
  %v1946 = vpack.c.b16 %v1418, %v1406
  %v1947 = vpack.c.b16 %v1419, %v1407
  %v1948 = vpack.c.b16 %v1420, %v1408
  %v1949 = vpack.c.b16 %v1421, %v1409
  %v1950 = vpack.c.b16 %v1422, %v1410
  %v1951 = vpack.c.b16 %v1423, %v1411
  %v1952 = vpack.c.b16 %v1424, %v1412
  %v1953 = vpack.c.b16 %v1437, %v1425
  %v1954 = vpack.c.b16 %v1438, %v1426
  %v1955 = vpack.c.b16 %v1439, %v1427
  %v1956 = vpack.c.b16 %v1440, %v1428
  %v1957 = vpack.c.b16 %v1441, %v1429
  %v1958 = vpack.c.b16 %v1442, %v1430
  %v1959 = vpack.c.b16 %v1443, %v1431
  %v1960 = vpack.c.b16 %v1444, %v1432
  %v1961 = vpack.c.b16 %v1445, %v1433
  %v1962 = vpack.c.b16 %v1446, %v1434
  %v1963 = vpack.c.b16 %v1447, %v1435
  %v1964 = vpack.c.b16 %v1448, %v1436
  %v1965 = vpack.c.b16 %v1461, %v1449
  %v1966 = vpack.c.b16 %v1462, %v1450
  %v1967 = vpack.c.b16 %v1463, %v1451
  %v1968 = vpack.c.b16 %v1464, %v1452
  %v1969 = vpack.c.b16 %v1465, %v1453
  %v1970 = vpack.c.b16 %v1466, %v1454
  %v1971 = vpack.c.b16 %v1467, %v1455
  %v1972 = vpack.c.b16 %v1468, %v1456
  %v1973 = vpack.c.b16 %v1469, %v1457
  %v1974 = vpack.c.b16 %v1470, %v1458
  %v1975 = vpack.c.b16 %v1471, %v1459
  %v1976 = vpack.c.b16 %v1472, %v1460
  %v1977 = vpack.c.b16 %v1485, %v1473
  %v1978 = vpack.c.b16 %v1486, %v1474
  %v1979 = vpack.c.b16 %v1487, %v1475
  %v1980 = vpack.c.b16 %v1488, %v1476
  %v1981 = vpack.c.b16 %v1489, %v1477
  %v1982 = vpack.c.b16 %v1490, %v1478
  %v1983 = vpack.c.b16 %v1491, %v1479
  %v1984 = vpack.c.b16 %v1492, %v1480
  %v1985 = vpack.c.b16 %v1493, %v1481
  %v1986 = vpack.c.b16 %v1494, %v1482
  %v1987 = vpack.c.b16 %v1495, %v1483
  %v1988 = vpack.c.b16 %v1496, %v1484
  %v1989 = vpack.c.b16 %v1509, %v1497
  %v1990 = vpack.c.b16 %v1510, %v1498
  %v1991 = vpack.c.b16 %v1511, %v1499
  %v1992 = vpack.c.b16 %v1512, %v1500
  %v1993 = vpack.c.b16 %v1513, %v1501
  %v1994 = vpack.c.b16 %v1514, %v1502
  %v1995 = vpack.c.b16 %v1515, %v1503
  %v1996 = vpack.c.b16 %v1516, %v1504
  %v1997 = vpack.c.b16 %v1517, %v1505
  %v1998 = vpack.c.b16 %v1518, %v1506
  %v1999 = vpack.c.b16 %v1519, %v1507
  %v2000 = vpack.c.b16 %v1520, %v1508
  %v2001 = vpack.c.b16 %v1533, %v1521
  %v2002 = vpack.c.b16 %v1534, %v1522
  %v2003 = vpack.c.b16 %v1535, %v1523
  %v2004 = vpack.c.b16 %v1536, %v1524
  %v2005 = vpack.c.b16 %v1537, %v1525
  %v2006 = vpack.c.b16 %v1538, %v1526
  %v2007 = vpack.c.b16 %v1539, %v1527
  %v2008 = vpack.c.b16 %v1540, %v1528
  %v2009 = vpack.c.b16 %v1541, %v1529
  %v2010 = vpack.c.b16 %v1542, %v1530
  %v2011 = vpack.c.b16 %v1543, %v1531
  %v2012 = vpack.c.b16 %v1544, %v1532
  %v2013 = vpack.c.b16 %v1557, %v1545
  %v2014 = vpack.c.b16 %v1558, %v1546
  %v2015 = vpack.c.b16 %v1559, %v1547
  %v2016 = vpack.c.b16 %v1560, %v1548
  %v2017 = vpack.c.b16 %v1561, %v1549
  %v2018 = vpack.c.b16 %v1562, %v1550
  %v2019 = vpack.c.b16 %v1563, %v1551
  %v2020 = vpack.c.b16 %v1564, %v1552
  %v2021 = vpack.c.b16 %v1565, %v1553
  %v2022 = vpack.c.b16 %v1566, %v1554
  %v2023 = vpack.c.b16 %v1567, %v1555
  %v2024 = vpack.c.b16 %v1568, %v1556
  %v2025 = vpack.c.b16 %v1581, %v1569
  %v2026 = vpack.c.b16 %v1582, %v1570
  %v2027 = vpack.c.b16 %v1583, %v1571
  %v2028 = vpack.c.b16 %v1584, %v1572
  %v2029 = vpack.c.b16 %v1585, %v1573
  %v2030 = vpack.c.b16 %v1586, %v1574
  %v2031 = vpack.c.b16 %v1587, %v1575
  %v2032 = vpack.c.b16 %v1588, %v1576
  %v2033 = vpack.c.b16 %v1589, %v1577
  %v2034 = vpack.c.b16 %v1590, %v1578
  %v2035 = vpack.c.b16 %v1591, %v1579
  %v2036 = vpack.c.b16 %v1592, %v1580
  %v2037 = vpack.c.b16 %v1605, %v1593
  %v2038 = vpack.c.b16 %v1606, %v1594
  %v2039 = vpack.c.b16 %v1607, %v1595
  %v2040 = vpack.c.b16 %v1608, %v1596
  %v2041 = vpack.c.b16 %v1609, %v1597
  %v2042 = vpack.c.b16 %v1610, %v1598
  %v2043 = vpack.c.b16 %v1611, %v1599
  %v2044 = vpack.c.b16 %v1612, %v1600
  %v2045 = vpack.c.b16 %v1613, %v1601
  %v2046 = vpack.c.b16 %v1614, %v1602
  %v2047 = vpack.c.b16 %v1615, %v1603
  %v2048 = vpack.c.b16 %v1616, %v1604
  %v2049 = vpack.c.b16 %v1629, %v1617
  %v2050 = vpack.c.b16 %v1630, %v1618
  %v2051 = vpack.c.b16 %v1631, %v1619
  %v2052 = vpack.c.b16 %v1632, %v1620
  %v2053 = vpack.c.b16 %v1633, %v1621
  %v2054 = vpack.c.b16 %v1634, %v1622
  %v2055 = vpack.c.b16 %v1635, %v1623
  %v2056 = vpack.c.b16 %v1636, %v1624
  %v2057 = vpack.c.b16 %v1637, %v1625
  %v2058 = vpack.c.b16 %v1638, %v1626
  %v2059 = vpack.c.b16 %v1639, %v1627
  %v2060 = vpack.c.b16 %v1640, %v1628
  %v2061 = vpack.c.b16 %v1653, %v1641
  %v2062 = vpack.c.b16 %v1654, %v1642
  %v2063 = vpack.c.b16 %v1655, %v1643
  %v2064 = vpack.c.b16 %v1656, %v1644
  %v2065 = vpack.c.b16 %v1657, %v1645
  %v2066 = vpack.c.b16 %v1658, %v1646
  %v2067 = vpack.c.b16 %v1659, %v1647
  %v2068 = vpack.c.b16 %v1660, %v1648
  %v2069 = vpack.c.b16 %v1661, %v1649
  %v2070 = vpack.c.b16 %v1662, %v1650
  %v2071 = vpack.c.b16 %v1663, %v1651
  %v2072 = vpack.c.b16 %v1664, %v1652
  %v2073 = vpack.c.b16 %v1677, %v1665
  %v2074 = vpack.c.b16 %v1678, %v1666
  %v2075 = vpack.c.b16 %v1679, %v1667
  %v2076 = vpack.c.b16 %v1680, %v1668
  %v2077 = vpack.c.b16 %v1681, %v1669
  %v2078 = vpack.c.b16 %v1682, %v1670
  %v2079 = vpack.c.b16 %v1683, %v1671
  %v2080 = vpack.c.b16 %v1684, %v1672
  %v2081 = vpack.c.b16 %v1685, %v1673
  %v2082 = vpack.c.b16 %v1686, %v1674
  %v2083 = vpack.c.b16 %v1687, %v1675
  %v2084 = vpack.c.b16 %v1688, %v1676
  %v2085 = vpack.c.b16 %v1701, %v1689
  %v2086 = vpack.c.b16 %v1702, %v1690
  %v2087 = vpack.c.b16 %v1703, %v1691
  %v2088 = vpack.c.b16 %v1704, %v1692
  %v2089 = vpack.c.b16 %v1705, %v1693
  %v2090 = vpack.c.b16 %v1706, %v1694
  %v2091 = vpack.c.b16 %v1707, %v1695
  %v2092 = vpack.c.b16 %v1708, %v1696
  %v2093 = vpack.c.b16 %v1709, %v1697
  %v2094 = vpack.c.b16 %v1710, %v1698
  %v2095 = vpack.c.b16 %v1711, %v1699
  %v2096 = vpack.c.b16 %v1712, %v1700
  %2481 = vmatprep.subr.bf16.mxu0 %v1714
  %2482 = vmatpush1.bf16.msra.mxu0 %v1713
  %2483 = vmatprep.subr.bf16.mxu0 %v1726
  %2484 = vmatpush1.bf16.msra.mxu0 %v1725
  %2485 = vmatprep.subr.bf16.mxu0 %v1738
  %2486 = vmatpush1.bf16.msra.mxu0 %v1737
  %2487 = vmatprep.subr.bf16.mxu0 %v1750
  %2488 = vmatpush1.bf16.msra.mxu0 %v1749
  %2489 = vmatprep.subr.bf16.mxu0 %v1762
  %2490 = vmatpush1.bf16.msra.mxu0 %v1761
  %2491 = vmatprep.subr.bf16.mxu0 %v1774
  %2492 = vmatpush1.bf16.msra.mxu0 %v1773
  %2493 = vmatprep.subr.bf16.mxu0 %v1786
  %2494 = vmatpush1.bf16.msra.mxu0 %v1785
  %2495 = vmatprep.subr.bf16.mxu0 %v1798
  %2496 = vmatpush1.bf16.msra.mxu0 %v1797
  %2497 = vmatprep.subr.bf16.mxu0 %v1810
  %2498 = vmatpush1.bf16.msra.mxu0 %v1809
  %2499 = vmatprep.subr.bf16.mxu0 %v1822
  %2500 = vmatpush1.bf16.msra.mxu0 %v1821
  %2501 = vmatprep.subr.bf16.mxu0 %v1834
  %2502 = vmatpush1.bf16.msra.mxu0 %v1833
  %2503 = vmatprep.subr.bf16.mxu0 %v1846
  %2504 = vmatpush1.bf16.msra.mxu0 %v1845
  %2505 = vmatprep.subr.bf16.mxu0 %v1858
  %2506 = vmatpush1.bf16.msra.mxu0 %v1857
  %2507 = vmatprep.subr.bf16.mxu0 %v1870
  %2508 = vmatpush1.bf16.msra.mxu0 %v1869
  %2509 = vmatprep.subr.bf16.mxu0 %v1882
  %2510 = vmatpush1.bf16.msra.mxu0 %v1881
  %2511 = vmatprep.subr.bf16.mxu0 %v1894
  %2512 = vmatpush1.bf16.msra.mxu0 %v1893
  %2513 = vmatprep.mubr.bf16.mxu0 %v554
  %2514 = vmatmul.mubr.bf16.gmra.mrb[0].mxu0 %v553
  %v2515 = vpop.f32.mrb[0].mxu0
  %v2516 = vadd.f32 0.0, %v2515
  %v2517 = vpop.f32.mrb[0].mxu0
  %v2518 = vadd.f32 0.0, %v2517
  %v2519 = vpop.f32.mrb[0].mxu0
  %v2520 = vpop.f32.mrb[0].mxu0
  %2521 = vdwg.mxu0
  %2522 = vmatprep.subr.bf16.mxu0 %v1906
  %2523 = vmatpush1.bf16.msra.mxu0 %v1905
  %2524 = vmatprep.subr.bf16.mxu0 %v1918
  %2525 = vmatpush1.bf16.msra.mxu0 %v1917
  %2526 = vmatprep.subr.bf16.mxu0 %v1930
  %2527 = vmatpush1.bf16.msra.mxu0 %v1929
  %2528 = vmatprep.subr.bf16.mxu0 %v1942
  %2529 = vmatpush1.bf16.msra.mxu0 %v1941
  %2530 = vmatprep.subr.bf16.mxu0 %v1954
  %2531 = vmatpush1.bf16.msra.mxu0 %v1953
  %2532 = vmatprep.subr.bf16.mxu0 %v1966
  %2533 = vmatpush1.bf16.msra.mxu0 %v1965
  %2534 = vmatprep.subr.bf16.mxu0 %v1978
  %2535 = vmatpush1.bf16.msra.mxu0 %v1977
  %2536 = vmatprep.subr.bf16.mxu0 %v1990
  %2537 = vmatpush1.bf16.msra.mxu0 %v1989
  %2538 = vmatprep.subr.bf16.mxu0 %v2002
  %2539 = vmatpush1.bf16.msra.mxu0 %v2001
  %2540 = vmatprep.subr.bf16.mxu0 %v2014
  %2541 = vmatpush1.bf16.msra.mxu0 %v2013
  %2542 = vmatprep.subr.bf16.mxu0 %v2026
  %2543 = vmatpush1.bf16.msra.mxu0 %v2025
  %2544 = vmatprep.subr.bf16.mxu0 %v2038
  %2545 = vmatpush1.bf16.msra.mxu0 %v2037
  %2546 = vmatprep.subr.bf16.mxu0 %v2050
  %2547 = vmatpush1.bf16.msra.mxu0 %v2049
  %2548 = vmatprep.subr.bf16.mxu0 %v2062
  %2549 = vmatpush1.bf16.msra.mxu0 %v2061
  %2550 = vmatprep.subr.bf16.mxu0 %v2074
  %2551 = vmatpush1.bf16.msra.mxu0 %v2073
  %2552 = vmatprep.subr.bf16.mxu0 %v2086
  %2553 = vmatpush1.bf16.msra.mxu0 %v2085
  %2554 = vmatprep.mubr.bf16.mxu0 %v556
  %2555 = vmatmul.mubr.bf16.gmra.mrb[0].mxu0 %v555
  %v2556 = vpop.f32.mrb[0].mxu0
  %v2557 = vadd.f32 %v2516, %v2556
  %v2558 = vpop.f32.mrb[0].mxu0
  %v2559 = vadd.f32 %v2518, %v2558
  %v2560 = vpop.f32.mrb[0].mxu0
  %v2561 = vpop.f32.mrb[0].mxu0
  %2562 = vdwg.mxu0
  %2563 = vmatprep.subr.bf16.mxu0 %v1716
  %2564 = vmatpush1.bf16.msra.mxu0 %v1715
  %2565 = vmatprep.subr.bf16.mxu0 %v1728
  %2566 = vmatpush1.bf16.msra.mxu0 %v1727
  %2567 = vmatprep.subr.bf16.mxu0 %v1740
  %2568 = vmatpush1.bf16.msra.mxu0 %v1739
  %2569 = vmatprep.subr.bf16.mxu0 %v1752
  %2570 = vmatpush1.bf16.msra.mxu0 %v1751
  %2571 = vmatprep.subr.bf16.mxu0 %v1764
  %2572 = vmatpush1.bf16.msra.mxu0 %v1763
  %2573 = vmatprep.subr.bf16.mxu0 %v1776
  %2574 = vmatpush1.bf16.msra.mxu0 %v1775
  %2575 = vmatprep.subr.bf16.mxu0 %v1788
  %2576 = vmatpush1.bf16.msra.mxu0 %v1787
  %2577 = vmatprep.subr.bf16.mxu0 %v1800
  %2578 = vmatpush1.bf16.msra.mxu0 %v1799
  %2579 = vmatprep.subr.bf16.mxu0 %v1812
  %2580 = vmatpush1.bf16.msra.mxu0 %v1811
  %2581 = vmatprep.subr.bf16.mxu0 %v1824
  %2582 = vmatpush1.bf16.msra.mxu0 %v1823
  %2583 = vmatprep.subr.bf16.mxu0 %v1836
  %2584 = vmatpush1.bf16.msra.mxu0 %v1835
  %2585 = vmatprep.subr.bf16.mxu0 %v1848
  %2586 = vmatpush1.bf16.msra.mxu0 %v1847
  %2587 = vmatprep.subr.bf16.mxu0 %v1860
  %2588 = vmatpush1.bf16.msra.mxu0 %v1859
  %2589 = vmatprep.subr.bf16.mxu0 %v1872
  %2590 = vmatpush1.bf16.msra.mxu0 %v1871
  %2591 = vmatprep.subr.bf16.mxu0 %v1884
  %2592 = vmatpush1.bf16.msra.mxu0 %v1883
  %2593 = vmatprep.subr.bf16.mxu0 %v1896
  %2594 = vmatpush1.bf16.msra.mxu0 %v1895
  %2595 = vmatprep.mubr.bf16.mxu0 %v554
  %2596 = vmatmul.mubr.bf16.gmra.mrb[0].mxu0 %v553
  %v2597 = vpop.f32.mrb[0].mxu0
  %v2598 = vadd.f32 0.0, %v2597
  %v2599 = vpop.f32.mrb[0].mxu0
  %v2600 = vadd.f32 0.0, %v2599
  %v2601 = vpop.f32.mrb[0].mxu0
  %v2602 = vpop.f32.mrb[0].mxu0
  %2603 = vdwg.mxu0
  %2604 = vmatprep.subr.bf16.mxu0 %v1908
  %2605 = vmatpush1.bf16.msra.mxu0 %v1907
  %2606 = vmatprep.subr.bf16.mxu0 %v1920
  %2607 = vmatpush1.bf16.msra.mxu0 %v1919
  %2608 = vmatprep.subr.bf16.mxu0 %v1932
  %2609 = vmatpush1.bf16.msra.mxu0 %v1931
  %2610 = vmatprep.subr.bf16.mxu0 %v1944
  %2611 = vmatpush1.bf16.msra.mxu0 %v1943
  %2612 = vmatprep.subr.bf16.mxu0 %v1956
  %2613 = vmatpush1.bf16.msra.mxu0 %v1955
  %2614 = vmatprep.subr.bf16.mxu0 %v1968
  %2615 = vmatpush1.bf16.msra.mxu0 %v1967
  %2616 = vmatprep.subr.bf16.mxu0 %v1980
  %2617 = vmatpush1.bf16.msra.mxu0 %v1979
  %2618 = vmatprep.subr.bf16.mxu0 %v1992
  %2619 = vmatpush1.bf16.msra.mxu0 %v1991
  %2620 = vmatprep.subr.bf16.mxu0 %v2004
  %2621 = vmatpush1.bf16.msra.mxu0 %v2003
  %2622 = vmatprep.subr.bf16.mxu0 %v2016
  %2623 = vmatpush1.bf16.msra.mxu0 %v2015
  %2624 = vmatprep.subr.bf16.mxu0 %v2028
  %2625 = vmatpush1.bf16.msra.mxu0 %v2027
  %2626 = vmatprep.subr.bf16.mxu0 %v2040
  %2627 = vmatpush1.bf16.msra.mxu0 %v2039
  %2628 = vmatprep.subr.bf16.mxu0 %v2052
  %2629 = vmatpush1.bf16.msra.mxu0 %v2051
  %2630 = vmatprep.subr.bf16.mxu0 %v2064
  %2631 = vmatpush1.bf16.msra.mxu0 %v2063
  %2632 = vmatprep.subr.bf16.mxu0 %v2076
  %2633 = vmatpush1.bf16.msra.mxu0 %v2075
  %2634 = vmatprep.subr.bf16.mxu0 %v2088
  %2635 = vmatpush1.bf16.msra.mxu0 %v2087
  %2636 = vmatprep.mubr.bf16.mxu0 %v556
  %2637 = vmatmul.mubr.bf16.gmra.mrb[0].mxu0 %v555
  %v2638 = vpop.f32.mrb[0].mxu0
  %v2639 = vadd.f32 %v2598, %v2638
  %v2640 = vpop.f32.mrb[0].mxu0
  %v2641 = vadd.f32 %v2600, %v2640
  %v2642 = vpop.f32.mrb[0].mxu0
  %v2643 = vpop.f32.mrb[0].mxu0
  %2644 = vdwg.mxu0
  %2645 = vmatprep.subr.bf16.mxu0 %v1718
  %2646 = vmatpush1.bf16.msra.mxu0 %v1717
  %2647 = vmatprep.subr.bf16.mxu0 %v1730
  %2648 = vmatpush1.bf16.msra.mxu0 %v1729
  %2649 = vmatprep.subr.bf16.mxu0 %v1742
  %2650 = vmatpush1.bf16.msra.mxu0 %v1741
  %2651 = vmatprep.subr.bf16.mxu0 %v1754
  %2652 = vmatpush1.bf16.msra.mxu0 %v1753
  %2653 = vmatprep.subr.bf16.mxu0 %v1766
  %2654 = vmatpush1.bf16.msra.mxu0 %v1765
  %2655 = vmatprep.subr.bf16.mxu0 %v1778
  %2656 = vmatpush1.bf16.msra.mxu0 %v1777
  %2657 = vmatprep.subr.bf16.mxu0 %v1790
  %2658 = vmatpush1.bf16.msra.mxu0 %v1789
  %2659 = vmatprep.subr.bf16.mxu0 %v1802
  %2660 = vmatpush1.bf16.msra.mxu0 %v1801
  %2661 = vmatprep.subr.bf16.mxu0 %v1814
  %2662 = vmatpush1.bf16.msra.mxu0 %v1813
  %2663 = vmatprep.subr.bf16.mxu0 %v1826
  %2664 = vmatpush1.bf16.msra.mxu0 %v1825
  %2665 = vmatprep.subr.bf16.mxu0 %v1838
  %2666 = vmatpush1.bf16.msra.mxu0 %v1837
  %2667 = vmatprep.subr.bf16.mxu0 %v1850
  %2668 = vmatpush1.bf16.msra.mxu0 %v1849
  %2669 = vmatprep.subr.bf16.mxu0 %v1862
  %2670 = vmatpush1.bf16.msra.mxu0 %v1861
  %2671 = vmatprep.subr.bf16.mxu0 %v1874
  %2672 = vmatpush1.bf16.msra.mxu0 %v1873
  %2673 = vmatprep.subr.bf16.mxu0 %v1886
  %2674 = vmatpush1.bf16.msra.mxu0 %v1885
  %2675 = vmatprep.subr.bf16.mxu0 %v1898
  %2676 = vmatpush1.bf16.msra.mxu0 %v1897
  %2677 = vmatprep.mubr.bf16.mxu0 %v554
  %2678 = vmatmul.mubr.bf16.gmra.mrb[0].mxu0 %v553
  %v2679 = vpop.f32.mrb[0].mxu0
  %v2680 = vadd.f32 0.0, %v2679
  %v2681 = vpop.f32.mrb[0].mxu0
  %v2682 = vadd.f32 0.0, %v2681
  %v2683 = vpop.f32.mrb[0].mxu0
  %v2684 = vpop.f32.mrb[0].mxu0
  %2685 = vdwg.mxu0
  %2686 = vmatprep.subr.bf16.mxu0 %v1910
  %2687 = vmatpush1.bf16.msra.mxu0 %v1909
  %2688 = vmatprep.subr.bf16.mxu0 %v1922
  %2689 = vmatpush1.bf16.msra.mxu0 %v1921
  %2690 = vmatprep.subr.bf16.mxu0 %v1934
  %2691 = vmatpush1.bf16.msra.mxu0 %v1933
  %2692 = vmatprep.subr.bf16.mxu0 %v1946
  %2693 = vmatpush1.bf16.msra.mxu0 %v1945
  %2694 = vmatprep.subr.bf16.mxu0 %v1958
  %2695 = vmatpush1.bf16.msra.mxu0 %v1957
  %2696 = vmatprep.subr.bf16.mxu0 %v1970
  %2697 = vmatpush1.bf16.msra.mxu0 %v1969
  %2698 = vmatprep.subr.bf16.mxu0 %v1982
  %2699 = vmatpush1.bf16.msra.mxu0 %v1981
  %2700 = vmatprep.subr.bf16.mxu0 %v1994
  %2701 = vmatpush1.bf16.msra.mxu0 %v1993
  %2702 = vmatprep.subr.bf16.mxu0 %v2006
  %2703 = vmatpush1.bf16.msra.mxu0 %v2005
  %2704 = vmatprep.subr.bf16.mxu0 %v2018
  %2705 = vmatpush1.bf16.msra.mxu0 %v2017
  %2706 = vmatprep.subr.bf16.mxu0 %v2030
  %2707 = vmatpush1.bf16.msra.mxu0 %v2029
  %2708 = vmatprep.subr.bf16.mxu0 %v2042
  %2709 = vmatpush1.bf16.msra.mxu0 %v2041
  %2710 = vmatprep.subr.bf16.mxu0 %v2054
  %2711 = vmatpush1.bf16.msra.mxu0 %v2053
  %2712 = vmatprep.subr.bf16.mxu0 %v2066
  %2713 = vmatpush1.bf16.msra.mxu0 %v2065
  %2714 = vmatprep.subr.bf16.mxu0 %v2078
  %2715 = vmatpush1.bf16.msra.mxu0 %v2077
  %2716 = vmatprep.subr.bf16.mxu0 %v2090
  %2717 = vmatpush1.bf16.msra.mxu0 %v2089
  %2718 = vmatprep.mubr.bf16.mxu0 %v556
  %2719 = vmatmul.mubr.bf16.gmra.mrb[0].mxu0 %v555
  %v2720 = vpop.f32.mrb[0].mxu0
  %v2721 = vadd.f32 %v2680, %v2720
  %v2722 = vpop.f32.mrb[0].mxu0
  %v2723 = vadd.f32 %v2682, %v2722
  %v2724 = vpop.f32.mrb[0].mxu0
  %v2725 = vpop.f32.mrb[0].mxu0
  %2726 = vdwg.mxu0
  %2727 = vmatprep.subr.bf16.mxu0 %v1720
  %2728 = vmatpush1.bf16.msra.mxu0 %v1719
  %2729 = vmatprep.subr.bf16.mxu0 %v1732
  %2730 = vmatpush1.bf16.msra.mxu0 %v1731
  %2731 = vmatprep.subr.bf16.mxu0 %v1744
  %2732 = vmatpush1.bf16.msra.mxu0 %v1743
  %2733 = vmatprep.subr.bf16.mxu0 %v1756
  %2734 = vmatpush1.bf16.msra.mxu0 %v1755
  %2735 = vmatprep.subr.bf16.mxu0 %v1768
  %2736 = vmatpush1.bf16.msra.mxu0 %v1767
  %2737 = vmatprep.subr.bf16.mxu0 %v1780
  %2738 = vmatpush1.bf16.msra.mxu0 %v1779
  %2739 = vmatprep.subr.bf16.mxu0 %v1792
  %2740 = vmatpush1.bf16.msra.mxu0 %v1791
  %2741 = vmatprep.subr.bf16.mxu0 %v1804
  %2742 = vmatpush1.bf16.msra.mxu0 %v1803
  %2743 = vmatprep.subr.bf16.mxu0 %v1816
  %2744 = vmatpush1.bf16.msra.mxu0 %v1815
  %2745 = vmatprep.subr.bf16.mxu0 %v1828
  %2746 = vmatpush1.bf16.msra.mxu0 %v1827
  %2747 = vmatprep.subr.bf16.mxu0 %v1840
  %2748 = vmatpush1.bf16.msra.mxu0 %v1839
  %2749 = vmatprep.subr.bf16.mxu0 %v1852
  %2750 = vmatpush1.bf16.msra.mxu0 %v1851
  %2751 = vmatprep.subr.bf16.mxu0 %v1864
  %2752 = vmatpush1.bf16.msra.mxu0 %v1863
  %2753 = vmatprep.subr.bf16.mxu0 %v1876
  %2754 = vmatpush1.bf16.msra.mxu0 %v1875
  %2755 = vmatprep.subr.bf16.mxu0 %v1888
  %2756 = vmatpush1.bf16.msra.mxu0 %v1887
  %2757 = vmatprep.subr.bf16.mxu0 %v1900
  %2758 = vmatpush1.bf16.msra.mxu0 %v1899
  %2759 = vmatprep.mubr.bf16.mxu0 %v554
  %2760 = vmatmul.mubr.bf16.gmra.mrb[0].mxu0 %v553
  %v2761 = vpop.f32.mrb[0].mxu0
  %v2762 = vadd.f32 0.0, %v2761
  %v2763 = vpop.f32.mrb[0].mxu0
  %v2764 = vadd.f32 0.0, %v2763
  %v2765 = vpop.f32.mrb[0].mxu0
  %v2766 = vpop.f32.mrb[0].mxu0
  %2767 = vdwg.mxu0
  %2768 = vmatprep.subr.bf16.mxu0 %v1912
  %2769 = vmatpush1.bf16.msra.mxu0 %v1911
  %2770 = vmatprep.subr.bf16.mxu0 %v1924
  %2771 = vmatpush1.bf16.msra.mxu0 %v1923
  %2772 = vmatprep.subr.bf16.mxu0 %v1936
  %2773 = vmatpush1.bf16.msra.mxu0 %v1935
  %2774 = vmatprep.subr.bf16.mxu0 %v1948
  %2775 = vmatpush1.bf16.msra.mxu0 %v1947
  %2776 = vmatprep.subr.bf16.mxu0 %v1960
  %2777 = vmatpush1.bf16.msra.mxu0 %v1959
  %2778 = vmatprep.subr.bf16.mxu0 %v1972
  %2779 = vmatpush1.bf16.msra.mxu0 %v1971
  %2780 = vmatprep.subr.bf16.mxu0 %v1984
  %2781 = vmatpush1.bf16.msra.mxu0 %v1983
  %2782 = vmatprep.subr.bf16.mxu0 %v1996
  %2783 = vmatpush1.bf16.msra.mxu0 %v1995
  %2784 = vmatprep.subr.bf16.mxu0 %v2008
  %2785 = vmatpush1.bf16.msra.mxu0 %v2007
  %2786 = vmatprep.subr.bf16.mxu0 %v2020
  %2787 = vmatpush1.bf16.msra.mxu0 %v2019
  %2788 = vmatprep.subr.bf16.mxu0 %v2032
  %2789 = vmatpush1.bf16.msra.mxu0 %v2031
  %2790 = vmatprep.subr.bf16.mxu0 %v2044
  %2791 = vmatpush1.bf16.msra.mxu0 %v2043
  %2792 = vmatprep.subr.bf16.mxu0 %v2056
  %2793 = vmatpush1.bf16.msra.mxu0 %v2055
  %2794 = vmatprep.subr.bf16.mxu0 %v2068
  %2795 = vmatpush1.bf16.msra.mxu0 %v2067
  %2796 = vmatprep.subr.bf16.mxu0 %v2080
  %2797 = vmatpush1.bf16.msra.mxu0 %v2079
  %2798 = vmatprep.subr.bf16.mxu0 %v2092
  %2799 = vmatpush1.bf16.msra.mxu0 %v2091
  %2800 = vmatprep.mubr.bf16.mxu0 %v556
  %2801 = vmatmul.mubr.bf16.gmra.mrb[0].mxu0 %v555
  %v2802 = vpop.f32.mrb[0].mxu0
  %v2803 = vadd.f32 %v2762, %v2802
  %v2804 = vpop.f32.mrb[0].mxu0
  %v2805 = vadd.f32 %v2764, %v2804
  %v2806 = vpop.f32.mrb[0].mxu0
  %v2807 = vpop.f32.mrb[0].mxu0
  %2808 = vdwg.mxu0
  %2809 = vmatprep.subr.bf16.mxu0 %v1722
  %2810 = vmatpush1.bf16.msra.mxu0 %v1721
  %2811 = vmatprep.subr.bf16.mxu0 %v1734
  %2812 = vmatpush1.bf16.msra.mxu0 %v1733
  %2813 = vmatprep.subr.bf16.mxu0 %v1746
  %2814 = vmatpush1.bf16.msra.mxu0 %v1745
  %2815 = vmatprep.subr.bf16.mxu0 %v1758
  %2816 = vmatpush1.bf16.msra.mxu0 %v1757
  %2817 = vmatprep.subr.bf16.mxu0 %v1770
  %2818 = vmatpush1.bf16.msra.mxu0 %v1769
  %2819 = vmatprep.subr.bf16.mxu0 %v1782
  %2820 = vmatpush1.bf16.msra.mxu0 %v1781
  %2821 = vmatprep.subr.bf16.mxu0 %v1794
  %2822 = vmatpush1.bf16.msra.mxu0 %v1793
  %2823 = vmatprep.subr.bf16.mxu0 %v1806
  %2824 = vmatpush1.bf16.msra.mxu0 %v1805
  %2825 = vmatprep.subr.bf16.mxu0 %v1818
  %2826 = vmatpush1.bf16.msra.mxu0 %v1817
  %2827 = vmatprep.subr.bf16.mxu0 %v1830
  %2828 = vmatpush1.bf16.msra.mxu0 %v1829
  %2829 = vmatprep.subr.bf16.mxu0 %v1842
  %2830 = vmatpush1.bf16.msra.mxu0 %v1841
  %2831 = vmatprep.subr.bf16.mxu0 %v1854
  %2832 = vmatpush1.bf16.msra.mxu0 %v1853
  %2833 = vmatprep.subr.bf16.mxu0 %v1866
  %2834 = vmatpush1.bf16.msra.mxu0 %v1865
  %2835 = vmatprep.subr.bf16.mxu0 %v1878
  %2836 = vmatpush1.bf16.msra.mxu0 %v1877
  %2837 = vmatprep.subr.bf16.mxu0 %v1890
  %2838 = vmatpush1.bf16.msra.mxu0 %v1889
  %2839 = vmatprep.subr.bf16.mxu0 %v1902
  %2840 = vmatpush1.bf16.msra.mxu0 %v1901
  %2841 = vmatprep.mubr.bf16.mxu0 %v554
  %2842 = vmatmul.mubr.bf16.gmra.mrb[0].mxu0 %v553
  %v2843 = vpop.f32.mrb[0].mxu0
  %v2844 = vadd.f32 0.0, %v2843
  %v2845 = vpop.f32.mrb[0].mxu0
  %v2846 = vadd.f32 0.0, %v2845
  %v2847 = vpop.f32.mrb[0].mxu0
  %v2848 = vpop.f32.mrb[0].mxu0
  %2849 = vdwg.mxu0
  %2850 = vmatprep.subr.bf16.mxu0 %v1914
  %2851 = vmatpush1.bf16.msra.mxu0 %v1913
  %2852 = vmatprep.subr.bf16.mxu0 %v1926
  %2853 = vmatpush1.bf16.msra.mxu0 %v1925
  %2854 = vmatprep.subr.bf16.mxu0 %v1938
  %2855 = vmatpush1.bf16.msra.mxu0 %v1937
  %2856 = vmatprep.subr.bf16.mxu0 %v1950
  %2857 = vmatpush1.bf16.msra.mxu0 %v1949
  %2858 = vmatprep.subr.bf16.mxu0 %v1962
  %2859 = vmatpush1.bf16.msra.mxu0 %v1961
  %2860 = vmatprep.subr.bf16.mxu0 %v1974
  %2861 = vmatpush1.bf16.msra.mxu0 %v1973
  %2862 = vmatprep.subr.bf16.mxu0 %v1986
  %2863 = vmatpush1.bf16.msra.mxu0 %v1985
  %2864 = vmatprep.subr.bf16.mxu0 %v1998
  %2865 = vmatpush1.bf16.msra.mxu0 %v1997
  %2866 = vmatprep.subr.bf16.mxu0 %v2010
  %2867 = vmatpush1.bf16.msra.mxu0 %v2009
  %2868 = vmatprep.subr.bf16.mxu0 %v2022
  %2869 = vmatpush1.bf16.msra.mxu0 %v2021
  %2870 = vmatprep.subr.bf16.mxu0 %v2034
  %2871 = vmatpush1.bf16.msra.mxu0 %v2033
  %2872 = vmatprep.subr.bf16.mxu0 %v2046
  %2873 = vmatpush1.bf16.msra.mxu0 %v2045
  %2874 = vmatprep.subr.bf16.mxu0 %v2058
  %2875 = vmatpush1.bf16.msra.mxu0 %v2057
  %2876 = vmatprep.subr.bf16.mxu0 %v2070
  %2877 = vmatpush1.bf16.msra.mxu0 %v2069
  %2878 = vmatprep.subr.bf16.mxu0 %v2082
  %2879 = vmatpush1.bf16.msra.mxu0 %v2081
  %2880 = vmatprep.subr.bf16.mxu0 %v2094
  %2881 = vmatpush1.bf16.msra.mxu0 %v2093
  %2882 = vmatprep.mubr.bf16.mxu0 %v556
  %2883 = vmatmul.mubr.bf16.gmra.mrb[0].mxu0 %v555
  %v2884 = vpop.f32.mrb[0].mxu0
  %v2885 = vadd.f32 %v2844, %v2884
  %v2886 = vpop.f32.mrb[0].mxu0
  %v2887 = vadd.f32 %v2846, %v2886
  %v2888 = vpop.f32.mrb[0].mxu0
  %v2889 = vpop.f32.mrb[0].mxu0
  %2890 = vdwg.mxu0
  %2891 = vmatprep.subr.bf16.mxu0 %v1724
  %2892 = vmatpush1.bf16.msra.mxu0 %v1723
  %2893 = vmatprep.subr.bf16.mxu0 %v1736
  %2894 = vmatpush1.bf16.msra.mxu0 %v1735
  %2895 = vmatprep.subr.bf16.mxu0 %v1748
  %2896 = vmatpush1.bf16.msra.mxu0 %v1747
  %2897 = vmatprep.subr.bf16.mxu0 %v1760
  %2898 = vmatpush1.bf16.msra.mxu0 %v1759
  %2899 = vmatprep.subr.bf16.mxu0 %v1772
  %2900 = vmatpush1.bf16.msra.mxu0 %v1771
  %2901 = vmatprep.subr.bf16.mxu0 %v1784
  %2902 = vmatpush1.bf16.msra.mxu0 %v1783
  %2903 = vmatprep.subr.bf16.mxu0 %v1796
  %2904 = vmatpush1.bf16.msra.mxu0 %v1795
  %2905 = vmatprep.subr.bf16.mxu0 %v1808
  %2906 = vmatpush1.bf16.msra.mxu0 %v1807
  %2907 = vmatprep.subr.bf16.mxu0 %v1820
  %2908 = vmatpush1.bf16.msra.mxu0 %v1819
  %2909 = vmatprep.subr.bf16.mxu0 %v1832
  %2910 = vmatpush1.bf16.msra.mxu0 %v1831
  %2911 = vmatprep.subr.bf16.mxu0 %v1844
  %2912 = vmatpush1.bf16.msra.mxu0 %v1843
  %2913 = vmatprep.subr.bf16.mxu0 %v1856
  %2914 = vmatpush1.bf16.msra.mxu0 %v1855
  %2915 = vmatprep.subr.bf16.mxu0 %v1868
  %2916 = vmatpush1.bf16.msra.mxu0 %v1867
  %2917 = vmatprep.subr.bf16.mxu0 %v1880
  %2918 = vmatpush1.bf16.msra.mxu0 %v1879
  %2919 = vmatprep.subr.bf16.mxu0 %v1892
  %2920 = vmatpush1.bf16.msra.mxu0 %v1891
  %2921 = vmatprep.subr.bf16.mxu0 %v1904
  %2922 = vmatpush1.bf16.msra.mxu0 %v1903
  %2923 = vmatprep.mubr.bf16.mxu0 %v554
  %2924 = vmatmul.mubr.bf16.gmra.mrb[0].mxu0 %v553
  %v2925 = vpop.f32.mrb[0].mxu0
  %v2926 = vadd.f32 0.0, %v2925
  %v2927 = vpop.f32.mrb[0].mxu0
  %v2928 = vadd.f32 0.0, %v2927
  %v2929 = vpop.f32.mrb[0].mxu0
  %v2930 = vpop.f32.mrb[0].mxu0
  %2931 = vdwg.mxu0
  %2932 = vmatprep.subr.bf16.mxu0 %v1916
  %2933 = vmatpush1.bf16.msra.mxu0 %v1915
  %2934 = vmatprep.subr.bf16.mxu0 %v1928
  %2935 = vmatpush1.bf16.msra.mxu0 %v1927
  %2936 = vmatprep.subr.bf16.mxu0 %v1940
  %2937 = vmatpush1.bf16.msra.mxu0 %v1939
  %2938 = vmatprep.subr.bf16.mxu0 %v1952
  %2939 = vmatpush1.bf16.msra.mxu0 %v1951
  %2940 = vmatprep.subr.bf16.mxu0 %v1964
  %2941 = vmatpush1.bf16.msra.mxu0 %v1963
  %2942 = vmatprep.subr.bf16.mxu0 %v1976
  %2943 = vmatpush1.bf16.msra.mxu0 %v1975
  %2944 = vmatprep.subr.bf16.mxu0 %v1988
  %2945 = vmatpush1.bf16.msra.mxu0 %v1987
  %2946 = vmatprep.subr.bf16.mxu0 %v2000
  %2947 = vmatpush1.bf16.msra.mxu0 %v1999
  %2948 = vmatprep.subr.bf16.mxu0 %v2012
  %2949 = vmatpush1.bf16.msra.mxu0 %v2011
  %2950 = vmatprep.subr.bf16.mxu0 %v2024
  %2951 = vmatpush1.bf16.msra.mxu0 %v2023
  %2952 = vmatprep.subr.bf16.mxu0 %v2036
  %2953 = vmatpush1.bf16.msra.mxu0 %v2035
  %2954 = vmatprep.subr.bf16.mxu0 %v2048
  %2955 = vmatpush1.bf16.msra.mxu0 %v2047
  %2956 = vmatprep.subr.bf16.mxu0 %v2060
  %2957 = vmatpush1.bf16.msra.mxu0 %v2059
  %2958 = vmatprep.subr.bf16.mxu0 %v2072
  %2959 = vmatpush1.bf16.msra.mxu0 %v2071
  %2960 = vmatprep.subr.bf16.mxu0 %v2084
  %2961 = vmatpush1.bf16.msra.mxu0 %v2083
  %2962 = vmatprep.subr.bf16.mxu0 %v2096
  %2963 = vmatpush1.bf16.msra.mxu0 %v2095
  %2964 = vmatprep.mubr.bf16.mxu0 %v556
  %2965 = vmatmul.mubr.bf16.gmra.mrb[0].mxu0 %v555
  %v2966 = vpop.f32.mrb[0].mxu0
  %v2967 = vadd.f32 %v2926, %v2966
  %v2968 = vpop.f32.mrb[0].mxu0
  %v2969 = vadd.f32 %v2928, %v2968
  %v2970 = vpop.f32.mrb[0].mxu0
  %v2971 = vpop.f32.mrb[0].mxu0
  %2972 = vdwg.mxu0
  %v2985 = vcombine.low %v2557, %v2559
  %v2986 = vcombine.low %v2639, %v2641
  %v2988 = vunpack.c.l.s4 1983009808
  %v2989 = vunpack.c.0.s8 %v2988
  %v2990 = vlaneseq
  %v2991 = vshrl.u32 %v2990, 7
  %v2992 = vsub.s32 %v2989, %v2991
  %v2993 = vrot.slane %v2985, %v2992
  %v2995 = vunpack.c.l.s4 1983009808
  %v2996 = vunpack.c.0.s8 %v2995
  %v2997 = vlaneseq
  %v2998 = vshrl.u32 %v2997, 7
  %v2999 = vsub.s32 %v2996, %v2998
  %v3000 = vrot.slane %v2986, %v2999
  %v3001 = vcombine.low %v2993, %v3000
  %v3002 = vcombine.low %v2721, %v2723
  %v3003 = vcombine.low %v2803, %v2805
  %v3005 = vunpack.c.l.s4 1983009808
  %v3006 = vunpack.c.0.s8 %v3005
  %v3007 = vlaneseq
  %v3008 = vshrl.u32 %v3007, 7
  %v3009 = vsub.s32 %v3006, %v3008
  %v3010 = vrot.slane %v3002, %v3009
  %v3012 = vunpack.c.l.s4 1983009808
  %v3013 = vunpack.c.0.s8 %v3012
  %v3014 = vlaneseq
  %v3015 = vshrl.u32 %v3014, 7
  %v3016 = vsub.s32 %v3013, %v3015
  %v3017 = vrot.slane %v3003, %v3016
  %v3018 = vcombine.low %v3010, %v3017
  %v3019 = vcombine.low %v2885, %v2887
  %v3020 = vcombine.low %v2967, %v2969
  %v3022 = vunpack.c.l.s4 1983009808
  %v3023 = vunpack.c.0.s8 %v3022
  %v3024 = vlaneseq
  %v3025 = vshrl.u32 %v3024, 7
  %v3026 = vsub.s32 %v3023, %v3025
  %v3027 = vrot.slane %v3019, %v3026
  %v3029 = vunpack.c.l.s4 1983009808
  %v3030 = vunpack.c.0.s8 %v3029
  %v3031 = vlaneseq
  %v3032 = vshrl.u32 %v3031, 7
  %v3033 = vsub.s32 %v3030, %v3032
  %v3034 = vrot.slane %v3020, %v3033
  %v3035 = vcombine.low %v3027, %v3034
  %v3039 = vadd.f32 %v557, %v3001
  %v3040 = vadd.f32 %v558, %v3018
  %v3041 = vadd.f32 %v559, %v3035
  %v3170 = vunpack.c.l.b16 %v401
  %v3171 = vunpack.c.h.b16 %v401
  %v3172 = vunpack.c.l.b16 %v402
  %v3173 = vunpack.c.h.b16 %v402
  %v3174 = vunpack.c.l.b16 %v403
  %v3175 = vunpack.c.h.b16 %v403
  %v3176 = vunpack.c.l.b16 %v404
  %v3177 = vunpack.c.h.b16 %v404
  %v3178 = vunpack.c.l.b16 %v405
  %v3179 = vunpack.c.h.b16 %v405
  %v3180 = vunpack.c.l.b16 %v406
  %v3181 = vunpack.c.h.b16 %v406
  %v3182 = vunpack.c.l.b16 %v407
  %v3183 = vunpack.c.h.b16 %v407
  %v3184 = vunpack.c.l.b16 %v408
  %v3185 = vunpack.c.h.b16 %v408
  %v3186 = vunpack.c.l.b16 %v409
  %v3187 = vunpack.c.h.b16 %v409
  %v3188 = vunpack.c.l.b16 %v410
  %v3189 = vunpack.c.h.b16 %v410
  %v3190 = vunpack.c.l.b16 %v411
  %v3191 = vunpack.c.h.b16 %v411
  %v3192 = vunpack.c.l.b16 %v412
  %v3193 = vunpack.c.h.b16 %v412
  %v3194 = vunpack.c.l.b16 %v413
  %v3195 = vunpack.c.h.b16 %v413
  %v3196 = vunpack.c.l.b16 %v414
  %v3197 = vunpack.c.h.b16 %v414
  %v3198 = vunpack.c.l.b16 %v415
  %v3199 = vunpack.c.h.b16 %v415
  %v3200 = vunpack.c.l.b16 %v416
  %v3201 = vunpack.c.h.b16 %v416
  %v3202 = vunpack.c.l.b16 %v417
  %v3203 = vunpack.c.h.b16 %v417
  %v3204 = vunpack.c.l.b16 %v418
  %v3205 = vunpack.c.h.b16 %v418
  %v3206 = vunpack.c.l.b16 %v419
  %v3207 = vunpack.c.h.b16 %v419
  %v3208 = vunpack.c.l.b16 %v420
  %v3209 = vunpack.c.h.b16 %v420
  %v3210 = vunpack.c.l.b16 %v421
  %v3211 = vunpack.c.h.b16 %v421
  %v3212 = vunpack.c.l.b16 %v422
  %v3213 = vunpack.c.h.b16 %v422
  %v3214 = vunpack.c.l.b16 %v423
  %v3215 = vunpack.c.h.b16 %v423
  %v3216 = vunpack.c.l.b16 %v424
  %v3217 = vunpack.c.h.b16 %v424
  %v3218 = vunpack.c.l.b16 %v425
  %v3219 = vunpack.c.h.b16 %v425
  %v3220 = vunpack.c.l.b16 %v426
  %v3221 = vunpack.c.h.b16 %v426
  %v3222 = vunpack.c.l.b16 %v427
  %v3223 = vunpack.c.h.b16 %v427
  %v3224 = vunpack.c.l.b16 %v428
  %v3225 = vunpack.c.h.b16 %v428
  %v3226 = vunpack.c.l.b16 %v429
  %v3227 = vunpack.c.h.b16 %v429
  %v3228 = vunpack.c.l.b16 %v430
  %v3229 = vunpack.c.h.b16 %v430
  %v3230 = vunpack.c.l.b16 %v431
  %v3231 = vunpack.c.h.b16 %v431
  %v3232 = vunpack.c.l.b16 %v432
  %v3233 = vunpack.c.h.b16 %v432
  %v3234 = vunpack.c.l.b16 %v433
  %v3235 = vunpack.c.h.b16 %v433
  %v3236 = vunpack.c.l.b16 %v434
  %v3237 = vunpack.c.h.b16 %v434
  %v3238 = vunpack.c.l.b16 %v435
  %v3239 = vunpack.c.h.b16 %v435
  %v3240 = vunpack.c.l.b16 %v436
  %v3241 = vunpack.c.h.b16 %v436
  %v3242 = vunpack.c.l.b16 %v437
  %v3243 = vunpack.c.h.b16 %v437
  %v3244 = vunpack.c.l.b16 %v438
  %v3245 = vunpack.c.h.b16 %v438
  %v3246 = vunpack.c.l.b16 %v439
  %v3247 = vunpack.c.h.b16 %v439
  %v3248 = vunpack.c.l.b16 %v440
  %v3249 = vunpack.c.h.b16 %v440
  %v3250 = vunpack.c.l.b16 %v441
  %v3251 = vunpack.c.h.b16 %v441
  %v3252 = vunpack.c.l.b16 %v442
  %v3253 = vunpack.c.h.b16 %v442
  %v3254 = vunpack.c.l.b16 %v443
  %v3255 = vunpack.c.h.b16 %v443
  %v3256 = vunpack.c.l.b16 %v444
  %v3257 = vunpack.c.h.b16 %v444
  %v3258 = vunpack.c.l.b16 %v445
  %v3259 = vunpack.c.h.b16 %v445
  %v3260 = vunpack.c.l.b16 %v446
  %v3261 = vunpack.c.h.b16 %v446
  %v3262 = vunpack.c.l.b16 %v447
  %v3263 = vunpack.c.h.b16 %v447
  %v3264 = vunpack.c.l.b16 %v448
  %v3265 = vunpack.c.h.b16 %v448
  %v3266 = vunpack.c.l.b16 %v449
  %v3267 = vunpack.c.h.b16 %v449
  %v3268 = vunpack.c.l.b16 %v450
  %v3269 = vunpack.c.h.b16 %v450
  %v3270 = vunpack.c.l.b16 %v451
  %v3271 = vunpack.c.h.b16 %v451
  %v3272 = vunpack.c.l.b16 %v452
  %v3273 = vunpack.c.h.b16 %v452
  %v3274 = vunpack.c.l.b16 %v453
  %v3275 = vunpack.c.h.b16 %v453
  %v3276 = vunpack.c.l.b16 %v454
  %v3277 = vunpack.c.h.b16 %v454
  %v3278 = vunpack.c.l.b16 %v455
  %v3279 = vunpack.c.h.b16 %v455
  %v3280 = vunpack.c.l.b16 %v456
  %v3281 = vunpack.c.h.b16 %v456
  %v3282 = vunpack.c.l.b16 %v457
  %v3283 = vunpack.c.h.b16 %v457
  %v3284 = vunpack.c.l.b16 %v458
  %v3285 = vunpack.c.h.b16 %v458
  %v3286 = vunpack.c.l.b16 %v459
  %v3287 = vunpack.c.h.b16 %v459
  %v3288 = vunpack.c.l.b16 %v460
  %v3289 = vunpack.c.h.b16 %v460
  %v3290 = vunpack.c.l.b16 %v461
  %v3291 = vunpack.c.h.b16 %v461
  %v3292 = vunpack.c.l.b16 %v462
  %v3293 = vunpack.c.h.b16 %v462
  %v3294 = vunpack.c.l.b16 %v463
  %v3295 = vunpack.c.h.b16 %v463
  %v3296 = vunpack.c.l.b16 %v464
  %v3297 = vunpack.c.h.b16 %v464
  %v3298 = vunpack.c.l.b16 %v465
  %v3299 = vunpack.c.h.b16 %v465
  %v3300 = vunpack.c.l.b16 %v466
  %v3301 = vunpack.c.h.b16 %v466
  %v3302 = vunpack.c.l.b16 %v467
  %v3303 = vunpack.c.h.b16 %v467
  %v3304 = vunpack.c.l.b16 %v468
  %v3305 = vunpack.c.h.b16 %v468
  %v3306 = vunpack.c.l.b16 %v469
  %v3307 = vunpack.c.h.b16 %v469
  %v3308 = vunpack.c.l.b16 %v470
  %v3309 = vunpack.c.h.b16 %v470
  %v3310 = vunpack.c.l.b16 %v471
  %v3311 = vunpack.c.h.b16 %v471
  %v3312 = vunpack.c.l.b16 %v472
  %v3313 = vunpack.c.h.b16 %v472
  %v3314 = vunpack.c.l.b16 %v473
  %v3315 = vunpack.c.h.b16 %v473
  %v3316 = vunpack.c.l.b16 %v474
  %v3317 = vunpack.c.h.b16 %v474
  %v3318 = vunpack.c.l.b16 %v475
  %v3319 = vunpack.c.h.b16 %v475
  %v3320 = vunpack.c.l.b16 %v476
  %v3321 = vunpack.c.h.b16 %v476
  %v3322 = vunpack.c.l.b16 %v477
  %v3323 = vunpack.c.h.b16 %v477
  %v3324 = vunpack.c.l.b16 %v478
  %v3325 = vunpack.c.h.b16 %v478
  %v3326 = vunpack.c.l.b16 %v479
  %v3327 = vunpack.c.h.b16 %v479
  %v3328 = vunpack.c.l.b16 %v480
  %v3329 = vunpack.c.h.b16 %v480
  %v3330 = vunpack.c.l.b16 %v481
  %v3331 = vunpack.c.h.b16 %v481
  %v3332 = vunpack.c.l.b16 %v482
  %v3333 = vunpack.c.h.b16 %v482
  %v3334 = vunpack.c.l.b16 %v483
  %v3335 = vunpack.c.h.b16 %v483
  %v3336 = vunpack.c.l.b16 %v484
  %v3337 = vunpack.c.h.b16 %v484
  %v3338 = vunpack.c.l.b16 %v485
  %v3339 = vunpack.c.h.b16 %v485
  %v3340 = vunpack.c.l.b16 %v486
  %v3341 = vunpack.c.h.b16 %v486
  %v3342 = vunpack.c.l.b16 %v487
  %v3343 = vunpack.c.h.b16 %v487
  %v3344 = vunpack.c.l.b16 %v488
  %v3345 = vunpack.c.h.b16 %v488
  %v3346 = vunpack.c.l.b16 %v489
  %v3347 = vunpack.c.h.b16 %v489
  %v3348 = vunpack.c.l.b16 %v490
  %v3349 = vunpack.c.h.b16 %v490
  %v3350 = vunpack.c.l.b16 %v491
  %v3351 = vunpack.c.h.b16 %v491
  %v3352 = vunpack.c.l.b16 %v492
  %v3353 = vunpack.c.h.b16 %v492
  %v3354 = vunpack.c.l.b16 %v493
  %v3355 = vunpack.c.h.b16 %v493
  %v3356 = vunpack.c.l.b16 %v494
  %v3357 = vunpack.c.h.b16 %v494
  %v3358 = vunpack.c.l.b16 %v495
  %v3359 = vunpack.c.h.b16 %v495
  %v3360 = vunpack.c.l.b16 %v496
  %v3361 = vunpack.c.h.b16 %v496
  %v3362 = vunpack.c.l.b16 %v497
  %v3363 = vunpack.c.h.b16 %v497
  %v3364 = vunpack.c.l.b16 %v498
  %v3365 = vunpack.c.h.b16 %v498
  %v3366 = vunpack.c.l.b16 %v499
  %v3367 = vunpack.c.h.b16 %v499
  %v3368 = vunpack.c.l.b16 %v500
  %v3369 = vunpack.c.h.b16 %v500
  %v3370 = vunpack.c.l.b16 %v501
  %v3371 = vunpack.c.h.b16 %v501
  %v3372 = vunpack.c.l.b16 %v502
  %v3373 = vunpack.c.h.b16 %v502
  %v3374 = vunpack.c.l.b16 %v503
  %v3375 = vunpack.c.h.b16 %v503
  %v3376 = vunpack.c.l.b16 %v504
  %v3377 = vunpack.c.h.b16 %v504
  %v3378 = vunpack.c.l.b16 %v505
  %v3379 = vunpack.c.h.b16 %v505
  %v3380 = vunpack.c.l.b16 %v506
  %v3381 = vunpack.c.h.b16 %v506
  %v3382 = vunpack.c.l.b16 %v507
  %v3383 = vunpack.c.h.b16 %v507
  %v3384 = vunpack.c.l.b16 %v508
  %v3385 = vunpack.c.h.b16 %v508
  %v3386 = vunpack.c.l.b16 %v509
  %v3387 = vunpack.c.h.b16 %v509
  %v3388 = vunpack.c.l.b16 %v510
  %v3389 = vunpack.c.h.b16 %v510
  %v3390 = vunpack.c.l.b16 %v511
  %v3391 = vunpack.c.h.b16 %v511
  %v3392 = vunpack.c.l.b16 %v512
  %v3393 = vunpack.c.h.b16 %v512
  %v3394 = vunpack.c.l.b16 %v513
  %v3395 = vunpack.c.h.b16 %v513
  %v3396 = vunpack.c.l.b16 %v514
  %v3397 = vunpack.c.h.b16 %v514
  %v3398 = vunpack.c.l.b16 %v515
  %v3399 = vunpack.c.h.b16 %v515
  %v3400 = vunpack.c.l.b16 %v516
  %v3401 = vunpack.c.h.b16 %v516
  %v3402 = vunpack.c.l.b16 %v517
  %v3403 = vunpack.c.h.b16 %v517
  %v3404 = vunpack.c.l.b16 %v518
  %v3405 = vunpack.c.h.b16 %v518
  %v3406 = vunpack.c.l.b16 %v519
  %v3407 = vunpack.c.h.b16 %v519
  %v3408 = vunpack.c.l.b16 %v520
  %v3409 = vunpack.c.h.b16 %v520
  %v3410 = vunpack.c.l.b16 %v521
  %v3411 = vunpack.c.h.b16 %v521
  %v3412 = vunpack.c.l.b16 %v522
  %v3413 = vunpack.c.h.b16 %v522
  %v3414 = vunpack.c.l.b16 %v523
  %v3415 = vunpack.c.h.b16 %v523
  %v3416 = vunpack.c.l.b16 %v524
  %v3417 = vunpack.c.h.b16 %v524
  %v3418 = vunpack.c.l.b16 %v525
  %v3419 = vunpack.c.h.b16 %v525
  %v3420 = vunpack.c.l.b16 %v526
  %v3421 = vunpack.c.h.b16 %v526
  %v3422 = vunpack.c.l.b16 %v527
  %v3423 = vunpack.c.h.b16 %v527
  %v3424 = vunpack.c.l.b16 %v528
  %v3425 = vunpack.c.h.b16 %v528
  %v3426 = vpack.c.b16 %v3174, %v3170
  %v3427 = vpack.c.b16 %v3175, %v3171
  %v3428 = vpack.c.b16 %v3176, %v3172
  %v3429 = vpack.c.b16 %v3177, %v3173
  %v3430 = vpack.c.b16 %v3182, %v3178
  %v3431 = vpack.c.b16 %v3183, %v3179
  %v3432 = vpack.c.b16 %v3184, %v3180
  %v3433 = vpack.c.b16 %v3185, %v3181
  %v3434 = vpack.c.b16 %v3190, %v3186
  %v3435 = vpack.c.b16 %v3191, %v3187
  %v3436 = vpack.c.b16 %v3192, %v3188
  %v3437 = vpack.c.b16 %v3193, %v3189
  %v3438 = vpack.c.b16 %v3198, %v3194
  %v3439 = vpack.c.b16 %v3199, %v3195
  %v3440 = vpack.c.b16 %v3200, %v3196
  %v3441 = vpack.c.b16 %v3201, %v3197
  %v3442 = vpack.c.b16 %v3206, %v3202
  %v3443 = vpack.c.b16 %v3207, %v3203
  %v3444 = vpack.c.b16 %v3208, %v3204
  %v3445 = vpack.c.b16 %v3209, %v3205
  %v3446 = vpack.c.b16 %v3214, %v3210
  %v3447 = vpack.c.b16 %v3215, %v3211
  %v3448 = vpack.c.b16 %v3216, %v3212
  %v3449 = vpack.c.b16 %v3217, %v3213
  %v3450 = vpack.c.b16 %v3222, %v3218
  %v3451 = vpack.c.b16 %v3223, %v3219
  %v3452 = vpack.c.b16 %v3224, %v3220
  %v3453 = vpack.c.b16 %v3225, %v3221
  %v3454 = vpack.c.b16 %v3230, %v3226
  %v3455 = vpack.c.b16 %v3231, %v3227
  %v3456 = vpack.c.b16 %v3232, %v3228
  %v3457 = vpack.c.b16 %v3233, %v3229
  %v3458 = vpack.c.b16 %v3238, %v3234
  %v3459 = vpack.c.b16 %v3239, %v3235
  %v3460 = vpack.c.b16 %v3240, %v3236
  %v3461 = vpack.c.b16 %v3241, %v3237
  %v3462 = vpack.c.b16 %v3246, %v3242
  %v3463 = vpack.c.b16 %v3247, %v3243
  %v3464 = vpack.c.b16 %v3248, %v3244
  %v3465 = vpack.c.b16 %v3249, %v3245
  %v3466 = vpack.c.b16 %v3254, %v3250
  %v3467 = vpack.c.b16 %v3255, %v3251
  %v3468 = vpack.c.b16 %v3256, %v3252
  %v3469 = vpack.c.b16 %v3257, %v3253
  %v3470 = vpack.c.b16 %v3262, %v3258
  %v3471 = vpack.c.b16 %v3263, %v3259
  %v3472 = vpack.c.b16 %v3264, %v3260
  %v3473 = vpack.c.b16 %v3265, %v3261
  %v3474 = vpack.c.b16 %v3270, %v3266
  %v3475 = vpack.c.b16 %v3271, %v3267
  %v3476 = vpack.c.b16 %v3272, %v3268
  %v3477 = vpack.c.b16 %v3273, %v3269
  %v3478 = vpack.c.b16 %v3278, %v3274
  %v3479 = vpack.c.b16 %v3279, %v3275
  %v3480 = vpack.c.b16 %v3280, %v3276
  %v3481 = vpack.c.b16 %v3281, %v3277
  %v3482 = vpack.c.b16 %v3286, %v3282
  %v3483 = vpack.c.b16 %v3287, %v3283
  %v3484 = vpack.c.b16 %v3288, %v3284
  %v3485 = vpack.c.b16 %v3289, %v3285
  %v3486 = vpack.c.b16 %v3294, %v3290
  %v3487 = vpack.c.b16 %v3295, %v3291
  %v3488 = vpack.c.b16 %v3296, %v3292
  %v3489 = vpack.c.b16 %v3297, %v3293
  %v3490 = vpack.c.b16 %v3302, %v3298
  %v3491 = vpack.c.b16 %v3303, %v3299
  %v3492 = vpack.c.b16 %v3304, %v3300
  %v3493 = vpack.c.b16 %v3305, %v3301
  %v3494 = vpack.c.b16 %v3310, %v3306
  %v3495 = vpack.c.b16 %v3311, %v3307
  %v3496 = vpack.c.b16 %v3312, %v3308
  %v3497 = vpack.c.b16 %v3313, %v3309
  %v3498 = vpack.c.b16 %v3318, %v3314
  %v3499 = vpack.c.b16 %v3319, %v3315
  %v3500 = vpack.c.b16 %v3320, %v3316
  %v3501 = vpack.c.b16 %v3321, %v3317
  %v3502 = vpack.c.b16 %v3326, %v3322
  %v3503 = vpack.c.b16 %v3327, %v3323
  %v3504 = vpack.c.b16 %v3328, %v3324
  %v3505 = vpack.c.b16 %v3329, %v3325
  %v3506 = vpack.c.b16 %v3334, %v3330
  %v3507 = vpack.c.b16 %v3335, %v3331
  %v3508 = vpack.c.b16 %v3336, %v3332
  %v3509 = vpack.c.b16 %v3337, %v3333
  %v3510 = vpack.c.b16 %v3342, %v3338
  %v3511 = vpack.c.b16 %v3343, %v3339
  %v3512 = vpack.c.b16 %v3344, %v3340
  %v3513 = vpack.c.b16 %v3345, %v3341
  %v3514 = vpack.c.b16 %v3350, %v3346
  %v3515 = vpack.c.b16 %v3351, %v3347
  %v3516 = vpack.c.b16 %v3352, %v3348
  %v3517 = vpack.c.b16 %v3353, %v3349
  %v3518 = vpack.c.b16 %v3358, %v3354
  %v3519 = vpack.c.b16 %v3359, %v3355
  %v3520 = vpack.c.b16 %v3360, %v3356
  %v3521 = vpack.c.b16 %v3361, %v3357
  %v3522 = vpack.c.b16 %v3366, %v3362
  %v3523 = vpack.c.b16 %v3367, %v3363
  %v3524 = vpack.c.b16 %v3368, %v3364
  %v3525 = vpack.c.b16 %v3369, %v3365
  %v3526 = vpack.c.b16 %v3374, %v3370
  %v3527 = vpack.c.b16 %v3375, %v3371
  %v3528 = vpack.c.b16 %v3376, %v3372
  %v3529 = vpack.c.b16 %v3377, %v3373
  %v3530 = vpack.c.b16 %v3382, %v3378
  %v3531 = vpack.c.b16 %v3383, %v3379
  %v3532 = vpack.c.b16 %v3384, %v3380
  %v3533 = vpack.c.b16 %v3385, %v3381
  %v3534 = vpack.c.b16 %v3390, %v3386
  %v3535 = vpack.c.b16 %v3391, %v3387
  %v3536 = vpack.c.b16 %v3392, %v3388
  %v3537 = vpack.c.b16 %v3393, %v3389
  %v3538 = vpack.c.b16 %v3398, %v3394
  %v3539 = vpack.c.b16 %v3399, %v3395
  %v3540 = vpack.c.b16 %v3400, %v3396
  %v3541 = vpack.c.b16 %v3401, %v3397
  %v3542 = vpack.c.b16 %v3406, %v3402
  %v3543 = vpack.c.b16 %v3407, %v3403
  %v3544 = vpack.c.b16 %v3408, %v3404
  %v3545 = vpack.c.b16 %v3409, %v3405
  %v3546 = vpack.c.b16 %v3414, %v3410
  %v3547 = vpack.c.b16 %v3415, %v3411
  %v3548 = vpack.c.b16 %v3416, %v3412
  %v3549 = vpack.c.b16 %v3417, %v3413
  %v3550 = vpack.c.b16 %v3422, %v3418
  %v3551 = vpack.c.b16 %v3423, %v3419
  %v3552 = vpack.c.b16 %v3424, %v3420
  %v3553 = vpack.c.b16 %v3425, %v3421
  %3682 = vmatprep.subr.bf16.mxu0 %v3427
  %3683 = vmatpush1.bf16.msra.mxu0 %v3426
  %3684 = vmatprep.subr.bf16.mxu0 %v3431
  %3685 = vmatpush1.bf16.msra.mxu0 %v3430
  %3686 = vmatprep.subr.bf16.mxu0 %v3435
  %3687 = vmatpush1.bf16.msra.mxu0 %v3434
  %3688 = vmatprep.subr.bf16.mxu0 %v3439
  %3689 = vmatpush1.bf16.msra.mxu0 %v3438
  %3690 = vmatprep.subr.bf16.mxu0 %v3443
  %3691 = vmatpush1.bf16.msra.mxu0 %v3442
  %3692 = vmatprep.subr.bf16.mxu0 %v3447
  %3693 = vmatpush1.bf16.msra.mxu0 %v3446
  %3694 = vmatprep.subr.bf16.mxu0 %v3451
  %3695 = vmatpush1.bf16.msra.mxu0 %v3450
  %3696 = vmatprep.subr.bf16.mxu0 %v3455
  %3697 = vmatpush1.bf16.msra.mxu0 %v3454
  %3698 = vmatprep.subr.bf16.mxu0 %v3459
  %3699 = vmatpush1.bf16.msra.mxu0 %v3458
  %3700 = vmatprep.subr.bf16.mxu0 %v3463
  %3701 = vmatpush1.bf16.msra.mxu0 %v3462
  %3702 = vmatprep.subr.bf16.mxu0 %v3467
  %3703 = vmatpush1.bf16.msra.mxu0 %v3466
  %3704 = vmatprep.subr.bf16.mxu0 %v3471
  %3705 = vmatpush1.bf16.msra.mxu0 %v3470
  %3706 = vmatprep.subr.bf16.mxu0 %v3475
  %3707 = vmatpush1.bf16.msra.mxu0 %v3474
  %3708 = vmatprep.subr.bf16.mxu0 %v3479
  %3709 = vmatpush1.bf16.msra.mxu0 %v3478
  %3710 = vmatprep.subr.bf16.mxu0 %v3483
  %3711 = vmatpush1.bf16.msra.mxu0 %v3482
  %3712 = vmatprep.subr.bf16.mxu0 %v3487
  %3713 = vmatpush1.bf16.msra.mxu0 %v3486
  %3714 = vmatprep.mubr.bf16.mxu0 %v554
  %3715 = vmatmul.mubr.bf16.gmra.mrb[0].mxu0 %v553
  %v3716 = vpop.f32.mrb[0].mxu0
  %v3717 = vadd.f32 0.0, %v3716
  %v3718 = vpop.f32.mrb[0].mxu0
  %v3719 = vadd.f32 0.0, %v3718
  %v3720 = vpop.f32.mrb[0].mxu0
  %v3721 = vpop.f32.mrb[0].mxu0
  %3722 = vdwg.mxu0
  %3723 = vmatprep.subr.bf16.mxu0 %v3491
  %3724 = vmatpush1.bf16.msra.mxu0 %v3490
  %3725 = vmatprep.subr.bf16.mxu0 %v3495
  %3726 = vmatpush1.bf16.msra.mxu0 %v3494
  %3727 = vmatprep.subr.bf16.mxu0 %v3499
  %3728 = vmatpush1.bf16.msra.mxu0 %v3498
  %3729 = vmatprep.subr.bf16.mxu0 %v3503
  %3730 = vmatpush1.bf16.msra.mxu0 %v3502
  %3731 = vmatprep.subr.bf16.mxu0 %v3507
  %3732 = vmatpush1.bf16.msra.mxu0 %v3506
  %3733 = vmatprep.subr.bf16.mxu0 %v3511
  %3734 = vmatpush1.bf16.msra.mxu0 %v3510
  %3735 = vmatprep.subr.bf16.mxu0 %v3515
  %3736 = vmatpush1.bf16.msra.mxu0 %v3514
  %3737 = vmatprep.subr.bf16.mxu0 %v3519
  %3738 = vmatpush1.bf16.msra.mxu0 %v3518
  %3739 = vmatprep.subr.bf16.mxu0 %v3523
  %3740 = vmatpush1.bf16.msra.mxu0 %v3522
  %3741 = vmatprep.subr.bf16.mxu0 %v3527
  %3742 = vmatpush1.bf16.msra.mxu0 %v3526
  %3743 = vmatprep.subr.bf16.mxu0 %v3531
  %3744 = vmatpush1.bf16.msra.mxu0 %v3530
  %3745 = vmatprep.subr.bf16.mxu0 %v3535
  %3746 = vmatpush1.bf16.msra.mxu0 %v3534
  %3747 = vmatprep.subr.bf16.mxu0 %v3539
  %3748 = vmatpush1.bf16.msra.mxu0 %v3538
  %3749 = vmatprep.subr.bf16.mxu0 %v3543
  %3750 = vmatpush1.bf16.msra.mxu0 %v3542
  %3751 = vmatprep.subr.bf16.mxu0 %v3547
  %3752 = vmatpush1.bf16.msra.mxu0 %v3546
  %3753 = vmatprep.subr.bf16.mxu0 %v3551
  %3754 = vmatpush1.bf16.msra.mxu0 %v3550
  %3755 = vmatprep.mubr.bf16.mxu0 %v556
  %3756 = vmatmul.mubr.bf16.gmra.mrb[0].mxu0 %v555
  %v3757 = vpop.f32.mrb[0].mxu0
  %v3758 = vadd.f32 %v3717, %v3757
  %v3759 = vpop.f32.mrb[0].mxu0
  %v3760 = vadd.f32 %v3719, %v3759
  %v3761 = vpop.f32.mrb[0].mxu0
  %v3762 = vpop.f32.mrb[0].mxu0
  %3763 = vdwg.mxu0
  %3764 = vmatprep.subr.bf16.mxu0 %v3429
  %3765 = vmatpush1.bf16.msra.mxu0 %v3428
  %3766 = vmatprep.subr.bf16.mxu0 %v3433
  %3767 = vmatpush1.bf16.msra.mxu0 %v3432
  %3768 = vmatprep.subr.bf16.mxu0 %v3437
  %3769 = vmatpush1.bf16.msra.mxu0 %v3436
  %3770 = vmatprep.subr.bf16.mxu0 %v3441
  %3771 = vmatpush1.bf16.msra.mxu0 %v3440
  %3772 = vmatprep.subr.bf16.mxu0 %v3445
  %3773 = vmatpush1.bf16.msra.mxu0 %v3444
  %3774 = vmatprep.subr.bf16.mxu0 %v3449
  %3775 = vmatpush1.bf16.msra.mxu0 %v3448
  %3776 = vmatprep.subr.bf16.mxu0 %v3453
  %3777 = vmatpush1.bf16.msra.mxu0 %v3452
  %3778 = vmatprep.subr.bf16.mxu0 %v3457
  %3779 = vmatpush1.bf16.msra.mxu0 %v3456
  %3780 = vmatprep.subr.bf16.mxu0 %v3461
  %3781 = vmatpush1.bf16.msra.mxu0 %v3460
  %3782 = vmatprep.subr.bf16.mxu0 %v3465
  %3783 = vmatpush1.bf16.msra.mxu0 %v3464
  %3784 = vmatprep.subr.bf16.mxu0 %v3469
  %3785 = vmatpush1.bf16.msra.mxu0 %v3468
  %3786 = vmatprep.subr.bf16.mxu0 %v3473
  %3787 = vmatpush1.bf16.msra.mxu0 %v3472
  %3788 = vmatprep.subr.bf16.mxu0 %v3477
  %3789 = vmatpush1.bf16.msra.mxu0 %v3476
  %3790 = vmatprep.subr.bf16.mxu0 %v3481
  %3791 = vmatpush1.bf16.msra.mxu0 %v3480
  %3792 = vmatprep.subr.bf16.mxu0 %v3485
  %3793 = vmatpush1.bf16.msra.mxu0 %v3484
  %3794 = vmatprep.subr.bf16.mxu0 %v3489
  %3795 = vmatpush1.bf16.msra.mxu0 %v3488
  %3796 = vmatprep.mubr.bf16.mxu0 %v554
  %3797 = vmatmul.mubr.bf16.gmra.mrb[0].mxu0 %v553
  %v3798 = vpop.f32.mrb[0].mxu0
  %v3799 = vadd.f32 0.0, %v3798
  %v3800 = vpop.f32.mrb[0].mxu0
  %v3801 = vadd.f32 0.0, %v3800
  %v3802 = vpop.f32.mrb[0].mxu0
  %v3803 = vpop.f32.mrb[0].mxu0
  %3804 = vdwg.mxu0
  %3805 = vmatprep.subr.bf16.mxu0 %v3493
  %3806 = vmatpush1.bf16.msra.mxu0 %v3492
  %3807 = vmatprep.subr.bf16.mxu0 %v3497
  %3808 = vmatpush1.bf16.msra.mxu0 %v3496
  %3809 = vmatprep.subr.bf16.mxu0 %v3501
  %3810 = vmatpush1.bf16.msra.mxu0 %v3500
  %3811 = vmatprep.subr.bf16.mxu0 %v3505
  %3812 = vmatpush1.bf16.msra.mxu0 %v3504
  %3813 = vmatprep.subr.bf16.mxu0 %v3509
  %3814 = vmatpush1.bf16.msra.mxu0 %v3508
  %3815 = vmatprep.subr.bf16.mxu0 %v3513
  %3816 = vmatpush1.bf16.msra.mxu0 %v3512
  %3817 = vmatprep.subr.bf16.mxu0 %v3517
  %3818 = vmatpush1.bf16.msra.mxu0 %v3516
  %3819 = vmatprep.subr.bf16.mxu0 %v3521
  %3820 = vmatpush1.bf16.msra.mxu0 %v3520
  %3821 = vmatprep.subr.bf16.mxu0 %v3525
  %3822 = vmatpush1.bf16.msra.mxu0 %v3524
  %3823 = vmatprep.subr.bf16.mxu0 %v3529
  %3824 = vmatpush1.bf16.msra.mxu0 %v3528
  %3825 = vmatprep.subr.bf16.mxu0 %v3533
  %3826 = vmatpush1.bf16.msra.mxu0 %v3532
  %3827 = vmatprep.subr.bf16.mxu0 %v3537
  %3828 = vmatpush1.bf16.msra.mxu0 %v3536
  %3829 = vmatprep.subr.bf16.mxu0 %v3541
  %3830 = vmatpush1.bf16.msra.mxu0 %v3540
  %3831 = vmatprep.subr.bf16.mxu0 %v3545
  %3832 = vmatpush1.bf16.msra.mxu0 %v3544
  %3833 = vmatprep.subr.bf16.mxu0 %v3549
  %3834 = vmatpush1.bf16.msra.mxu0 %v3548
  %3835 = vmatprep.subr.bf16.mxu0 %v3553
  %3836 = vmatpush1.bf16.msra.mxu0 %v3552
  %3837 = vmatprep.mubr.bf16.mxu0 %v556
  %3838 = vmatmul.mubr.bf16.gmra.mrb[0].mxu0 %v555
  %v3839 = vpop.f32.mrb[0].mxu0
  %v3840 = vadd.f32 %v3799, %v3839
  %v3841 = vpop.f32.mrb[0].mxu0
  %v3842 = vadd.f32 %v3801, %v3841
  %v3843 = vpop.f32.mrb[0].mxu0
  %v3844 = vpop.f32.mrb[0].mxu0
  %3845 = vdwg.mxu0
  %v3850 = vcombine.low %v3758, %v3760
  %v3851 = vcombine.low %v3840, %v3842
  %v3853 = vunpack.c.l.s4 1983009808
  %v3854 = vunpack.c.0.s8 %v3853
  %v3855 = vlaneseq
  %v3856 = vshrl.u32 %v3855, 7
  %v3857 = vsub.s32 %v3854, %v3856
  %v3858 = vrot.slane %v3850, %v3857
  %v3860 = vunpack.c.l.s4 1983009808
  %v3861 = vunpack.c.0.s8 %v3860
  %v3862 = vlaneseq
  %v3863 = vshrl.u32 %v3862, 7
  %v3864 = vsub.s32 %v3861, %v3863
  %v3865 = vrot.slane %v3851, %v3864
  %v3866 = vcombine.low %v3858, %v3865
  %v3868 = vadd.f32 %v560, %v3866
  %v3869 = vmul.f32 %v3039, 0.5
  %v3870 = vtanh.pop %v3869
  %v3871 = vadd.f32 %v3870, 1.0
  %v3872 = vmul.f32 %v3871, 0.5
  %v3873 = vmul.f32 %v3040, 0.5
  %v3874 = vtanh.pop %v3873
  %v3875 = vadd.f32 %v3874, 1.0
  %v3876 = vmul.f32 %v3875, 0.5
  %v3877 = vtanh.pop %v3041
  %v3878 = vmul.f32 %v3876, %v530
  %v3879 = vmul.f32 %v3872, %v3877
  %v3880 = vadd.f32 %v3878, %v3879
  %v3881 = vmul.f32 %v3868, 0.5
  %v3882 = vtanh.pop %v3881
  %v3883 = vadd.f32 %v3882, 1.0
  %v3884 = vmul.f32 %v3883, 0.5
  %v3885 = vtanh.pop %v3880
  %v3886 = vmul.f32 %v3884, %v3885
  %3887 = vst [vmem:[%s2] sm:$0xff] %v3886
  %v3889 = vcombine.high %v3886, %v3886
  %v3891 = vunpack.c.l.s4 1983009808
  %v3892 = vunpack.c.0.s8 %v3891
  %v3893 = vlaneseq
  %v3894 = vshrl.u32 %v3893, 7
  %v3895 = vsub.s32 %v3892, %v3894
  %v3896 = vrot.slane %v3886, %v3895
  %v3898 = vunpack.c.l.s4 1983009808
  %v3899 = vunpack.c.0.s8 %v3898
  %v3900 = vlaneseq
  %v3901 = vshrl.u32 %v3900, 7
  %v3902 = vsub.s32 %v3899, %v3901
  %v3903 = vrot.slane %v3889, %v3902
  %v3904 = vcombine.high %v3896, %v3896
  %v3905 = vcombine.high %v3903, %v3903
  %v3910 = vpack.c.bf16 %v3896, %v3896
  %v3911 = vpack.c.bf16 %v3904, %v3904
  %v3912 = vpack.c.bf16 %v3903, %v3903
  %v3913 = vpack.c.bf16 %v3905, %v3905
  %s3914 = scalar_lea.vmem %s0, 32
  %v3915 = vld [vmem:[%s3914] sm:$0xff]
  %v3916 = vld [vmem:[%s3914 + $0x8] sm:$0xff]
  %v3917 = vld [vmem:[%s3914 + $0x10] sm:$0xff]
  %v3918 = vld [vmem:[%s3914 + $0x18] sm:$0xff]
  %3919 = vmatprep.subr.bf16.mxu0 %v1714
  %3920 = vmatpush1.bf16.msra.mxu0 %v1713
  %3921 = vmatprep.subr.bf16.mxu0 %v1726
  %3922 = vmatpush1.bf16.msra.mxu0 %v1725
  %3923 = vmatprep.subr.bf16.mxu0 %v1738
  %3924 = vmatpush1.bf16.msra.mxu0 %v1737
  %3925 = vmatprep.subr.bf16.mxu0 %v1750
  %3926 = vmatpush1.bf16.msra.mxu0 %v1749
  %3927 = vmatprep.subr.bf16.mxu0 %v1762
  %3928 = vmatpush1.bf16.msra.mxu0 %v1761
  %3929 = vmatprep.subr.bf16.mxu0 %v1774
  %3930 = vmatpush1.bf16.msra.mxu0 %v1773
  %3931 = vmatprep.subr.bf16.mxu0 %v1786
  %3932 = vmatpush1.bf16.msra.mxu0 %v1785
  %3933 = vmatprep.subr.bf16.mxu0 %v1798
  %3934 = vmatpush1.bf16.msra.mxu0 %v1797
  %3935 = vmatprep.subr.bf16.mxu0 %v1810
  %3936 = vmatpush1.bf16.msra.mxu0 %v1809
  %3937 = vmatprep.subr.bf16.mxu0 %v1822
  %3938 = vmatpush1.bf16.msra.mxu0 %v1821
  %3939 = vmatprep.subr.bf16.mxu0 %v1834
  %3940 = vmatpush1.bf16.msra.mxu0 %v1833
  %3941 = vmatprep.subr.bf16.mxu0 %v1846
  %3942 = vmatpush1.bf16.msra.mxu0 %v1845
  %3943 = vmatprep.subr.bf16.mxu0 %v1858
  %3944 = vmatpush1.bf16.msra.mxu0 %v1857
  %3945 = vmatprep.subr.bf16.mxu0 %v1870
  %3946 = vmatpush1.bf16.msra.mxu0 %v1869
  %3947 = vmatprep.subr.bf16.mxu0 %v1882
  %3948 = vmatpush1.bf16.msra.mxu0 %v1881
  %3949 = vmatprep.subr.bf16.mxu0 %v1894
  %3950 = vmatpush1.bf16.msra.mxu0 %v1893
  %3951 = vmatprep.mubr.bf16.mxu0 %v3911
  %3952 = vmatmul.mubr.bf16.gmra.mrb[0].mxu0 %v3910
  %v3953 = vpop.f32.mrb[0].mxu0
  %v3954 = vadd.f32 0.0, %v3953
  %v3955 = vpop.f32.mrb[0].mxu0
  %v3956 = vadd.f32 0.0, %v3955
  %v3957 = vpop.f32.mrb[0].mxu0
  %v3958 = vpop.f32.mrb[0].mxu0
  %3959 = vdwg.mxu0
  %3960 = vmatprep.subr.bf16.mxu0 %v1906
  %3961 = vmatpush1.bf16.msra.mxu0 %v1905
  %3962 = vmatprep.subr.bf16.mxu0 %v1918
  %3963 = vmatpush1.bf16.msra.mxu0 %v1917
  %3964 = vmatprep.subr.bf16.mxu0 %v1930
  %3965 = vmatpush1.bf16.msra.mxu0 %v1929
  %3966 = vmatprep.subr.bf16.mxu0 %v1942
  %3967 = vmatpush1.bf16.msra.mxu0 %v1941
  %3968 = vmatprep.subr.bf16.mxu0 %v1954
  %3969 = vmatpush1.bf16.msra.mxu0 %v1953
  %3970 = vmatprep.subr.bf16.mxu0 %v1966
  %3971 = vmatpush1.bf16.msra.mxu0 %v1965
  %3972 = vmatprep.subr.bf16.mxu0 %v1978
  %3973 = vmatpush1.bf16.msra.mxu0 %v1977
  %3974 = vmatprep.subr.bf16.mxu0 %v1990
  %3975 = vmatpush1.bf16.msra.mxu0 %v1989
  %3976 = vmatprep.subr.bf16.mxu0 %v2002
  %3977 = vmatpush1.bf16.msra.mxu0 %v2001
  %3978 = vmatprep.subr.bf16.mxu0 %v2014
  %3979 = vmatpush1.bf16.msra.mxu0 %v2013
  %3980 = vmatprep.subr.bf16.mxu0 %v2026
  %3981 = vmatpush1.bf16.msra.mxu0 %v2025
  %3982 = vmatprep.subr.bf16.mxu0 %v2038
  %3983 = vmatpush1.bf16.msra.mxu0 %v2037
  %3984 = vmatprep.subr.bf16.mxu0 %v2050
  %3985 = vmatpush1.bf16.msra.mxu0 %v2049
  %3986 = vmatprep.subr.bf16.mxu0 %v2062
  %3987 = vmatpush1.bf16.msra.mxu0 %v2061
  %3988 = vmatprep.subr.bf16.mxu0 %v2074
  %3989 = vmatpush1.bf16.msra.mxu0 %v2073
  %3990 = vmatprep.subr.bf16.mxu0 %v2086
  %3991 = vmatpush1.bf16.msra.mxu0 %v2085
  %3992 = vmatprep.mubr.bf16.mxu0 %v3913
  %3993 = vmatmul.mubr.bf16.gmra.mrb[0].mxu0 %v3912
  %v3994 = vpop.f32.mrb[0].mxu0
  %v3995 = vadd.f32 %v3954, %v3994
  %v3996 = vpop.f32.mrb[0].mxu0
  %v3997 = vadd.f32 %v3956, %v3996
  %v3998 = vpop.f32.mrb[0].mxu0
  %v3999 = vpop.f32.mrb[0].mxu0
  %4000 = vdwg.mxu0
  %4001 = vmatprep.subr.bf16.mxu0 %v1716
  %4002 = vmatpush1.bf16.msra.mxu0 %v1715
  %4003 = vmatprep.subr.bf16.mxu0 %v1728
  %4004 = vmatpush1.bf16.msra.mxu0 %v1727
  %4005 = vmatprep.subr.bf16.mxu0 %v1740
  %4006 = vmatpush1.bf16.msra.mxu0 %v1739
  %4007 = vmatprep.subr.bf16.mxu0 %v1752
  %4008 = vmatpush1.bf16.msra.mxu0 %v1751
  %4009 = vmatprep.subr.bf16.mxu0 %v1764
  %4010 = vmatpush1.bf16.msra.mxu0 %v1763
  %4011 = vmatprep.subr.bf16.mxu0 %v1776
  %4012 = vmatpush1.bf16.msra.mxu0 %v1775
  %4013 = vmatprep.subr.bf16.mxu0 %v1788
  %4014 = vmatpush1.bf16.msra.mxu0 %v1787
  %4015 = vmatprep.subr.bf16.mxu0 %v1800
  %4016 = vmatpush1.bf16.msra.mxu0 %v1799
  %4017 = vmatprep.subr.bf16.mxu0 %v1812
  %4018 = vmatpush1.bf16.msra.mxu0 %v1811
  %4019 = vmatprep.subr.bf16.mxu0 %v1824
  %4020 = vmatpush1.bf16.msra.mxu0 %v1823
  %4021 = vmatprep.subr.bf16.mxu0 %v1836
  %4022 = vmatpush1.bf16.msra.mxu0 %v1835
  %4023 = vmatprep.subr.bf16.mxu0 %v1848
  %4024 = vmatpush1.bf16.msra.mxu0 %v1847
  %4025 = vmatprep.subr.bf16.mxu0 %v1860
  %4026 = vmatpush1.bf16.msra.mxu0 %v1859
  %4027 = vmatprep.subr.bf16.mxu0 %v1872
  %4028 = vmatpush1.bf16.msra.mxu0 %v1871
  %4029 = vmatprep.subr.bf16.mxu0 %v1884
  %4030 = vmatpush1.bf16.msra.mxu0 %v1883
  %4031 = vmatprep.subr.bf16.mxu0 %v1896
  %4032 = vmatpush1.bf16.msra.mxu0 %v1895
  %4033 = vmatprep.mubr.bf16.mxu0 %v3911
  %4034 = vmatmul.mubr.bf16.gmra.mrb[0].mxu0 %v3910
  %v4035 = vpop.f32.mrb[0].mxu0
  %v4036 = vadd.f32 0.0, %v4035
  %v4037 = vpop.f32.mrb[0].mxu0
  %v4038 = vadd.f32 0.0, %v4037
  %v4039 = vpop.f32.mrb[0].mxu0
  %v4040 = vpop.f32.mrb[0].mxu0
  %4041 = vdwg.mxu0
  %4042 = vmatprep.subr.bf16.mxu0 %v1908
  %4043 = vmatpush1.bf16.msra.mxu0 %v1907
  %4044 = vmatprep.subr.bf16.mxu0 %v1920
  %4045 = vmatpush1.bf16.msra.mxu0 %v1919
  %4046 = vmatprep.subr.bf16.mxu0 %v1932
  %4047 = vmatpush1.bf16.msra.mxu0 %v1931
  %4048 = vmatprep.subr.bf16.mxu0 %v1944
  %4049 = vmatpush1.bf16.msra.mxu0 %v1943
  %4050 = vmatprep.subr.bf16.mxu0 %v1956
  %4051 = vmatpush1.bf16.msra.mxu0 %v1955
  %4052 = vmatprep.subr.bf16.mxu0 %v1968
  %4053 = vmatpush1.bf16.msra.mxu0 %v1967
  %4054 = vmatprep.subr.bf16.mxu0 %v1980
  %4055 = vmatpush1.bf16.msra.mxu0 %v1979
  %4056 = vmatprep.subr.bf16.mxu0 %v1992
  %4057 = vmatpush1.bf16.msra.mxu0 %v1991
  %4058 = vmatprep.subr.bf16.mxu0 %v2004
  %4059 = vmatpush1.bf16.msra.mxu0 %v2003
  %4060 = vmatprep.subr.bf16.mxu0 %v2016
  %4061 = vmatpush1.bf16.msra.mxu0 %v2015
  %4062 = vmatprep.subr.bf16.mxu0 %v2028
  %4063 = vmatpush1.bf16.msra.mxu0 %v2027
  %4064 = vmatprep.subr.bf16.mxu0 %v2040
  %4065 = vmatpush1.bf16.msra.mxu0 %v2039
  %4066 = vmatprep.subr.bf16.mxu0 %v2052
  %4067 = vmatpush1.bf16.msra.mxu0 %v2051
  %4068 = vmatprep.subr.bf16.mxu0 %v2064
  %4069 = vmatpush1.bf16.msra.mxu0 %v2063
  %4070 = vmatprep.subr.bf16.mxu0 %v2076
  %4071 = vmatpush1.bf16.msra.mxu0 %v2075
  %4072 = vmatprep.subr.bf16.mxu0 %v2088
  %4073 = vmatpush1.bf16.msra.mxu0 %v2087
  %4074 = vmatprep.mubr.bf16.mxu0 %v3913
  %4075 = vmatmul.mubr.bf16.gmra.mrb[0].mxu0 %v3912
  %v4076 = vpop.f32.mrb[0].mxu0
  %v4077 = vadd.f32 %v4036, %v4076
  %v4078 = vpop.f32.mrb[0].mxu0
  %v4079 = vadd.f32 %v4038, %v4078
  %v4080 = vpop.f32.mrb[0].mxu0
  %v4081 = vpop.f32.mrb[0].mxu0
  %4082 = vdwg.mxu0
  %4083 = vmatprep.subr.bf16.mxu0 %v1718
  %4084 = vmatpush1.bf16.msra.mxu0 %v1717
  %4085 = vmatprep.subr.bf16.mxu0 %v1730
  %4086 = vmatpush1.bf16.msra.mxu0 %v1729
  %4087 = vmatprep.subr.bf16.mxu0 %v1742
  %4088 = vmatpush1.bf16.msra.mxu0 %v1741
  %4089 = vmatprep.subr.bf16.mxu0 %v1754
  %4090 = vmatpush1.bf16.msra.mxu0 %v1753
  %4091 = vmatprep.subr.bf16.mxu0 %v1766
  %4092 = vmatpush1.bf16.msra.mxu0 %v1765
  %4093 = vmatprep.subr.bf16.mxu0 %v1778
  %4094 = vmatpush1.bf16.msra.mxu0 %v1777
  %4095 = vmatprep.subr.bf16.mxu0 %v1790
  %4096 = vmatpush1.bf16.msra.mxu0 %v1789
  %4097 = vmatprep.subr.bf16.mxu0 %v1802
  %4098 = vmatpush1.bf16.msra.mxu0 %v1801
  %4099 = vmatprep.subr.bf16.mxu0 %v1814
  %4100 = vmatpush1.bf16.msra.mxu0 %v1813
  %4101 = vmatprep.subr.bf16.mxu0 %v1826
  %4102 = vmatpush1.bf16.msra.mxu0 %v1825
  %4103 = vmatprep.subr.bf16.mxu0 %v1838
  %4104 = vmatpush1.bf16.msra.mxu0 %v1837
  %4105 = vmatprep.subr.bf16.mxu0 %v1850
  %4106 = vmatpush1.bf16.msra.mxu0 %v1849
  %4107 = vmatprep.subr.bf16.mxu0 %v1862
  %4108 = vmatpush1.bf16.msra.mxu0 %v1861
  %4109 = vmatprep.subr.bf16.mxu0 %v1874
  %4110 = vmatpush1.bf16.msra.mxu0 %v1873
  %4111 = vmatprep.subr.bf16.mxu0 %v1886
  %4112 = vmatpush1.bf16.msra.mxu0 %v1885
  %4113 = vmatprep.subr.bf16.mxu0 %v1898
  %4114 = vmatpush1.bf16.msra.mxu0 %v1897
  %4115 = vmatprep.mubr.bf16.mxu0 %v3911
  %4116 = vmatmul.mubr.bf16.gmra.mrb[0].mxu0 %v3910
  %v4117 = vpop.f32.mrb[0].mxu0
  %v4118 = vadd.f32 0.0, %v4117
  %v4119 = vpop.f32.mrb[0].mxu0
  %v4120 = vadd.f32 0.0, %v4119
  %v4121 = vpop.f32.mrb[0].mxu0
  %v4122 = vpop.f32.mrb[0].mxu0
  %4123 = vdwg.mxu0
  %4124 = vmatprep.subr.bf16.mxu0 %v1910
  %4125 = vmatpush1.bf16.msra.mxu0 %v1909
  %4126 = vmatprep.subr.bf16.mxu0 %v1922
  %4127 = vmatpush1.bf16.msra.mxu0 %v1921
  %4128 = vmatprep.subr.bf16.mxu0 %v1934
  %4129 = vmatpush1.bf16.msra.mxu0 %v1933
  %4130 = vmatprep.subr.bf16.mxu0 %v1946
  %4131 = vmatpush1.bf16.msra.mxu0 %v1945
  %4132 = vmatprep.subr.bf16.mxu0 %v1958
  %4133 = vmatpush1.bf16.msra.mxu0 %v1957
  %4134 = vmatprep.subr.bf16.mxu0 %v1970
  %4135 = vmatpush1.bf16.msra.mxu0 %v1969
  %4136 = vmatprep.subr.bf16.mxu0 %v1982
  %4137 = vmatpush1.bf16.msra.mxu0 %v1981
  %4138 = vmatprep.subr.bf16.mxu0 %v1994
  %4139 = vmatpush1.bf16.msra.mxu0 %v1993
  %4140 = vmatprep.subr.bf16.mxu0 %v2006
  %4141 = vmatpush1.bf16.msra.mxu0 %v2005
  %4142 = vmatprep.subr.bf16.mxu0 %v2018
  %4143 = vmatpush1.bf16.msra.mxu0 %v2017
  %4144 = vmatprep.subr.bf16.mxu0 %v2030
  %4145 = vmatpush1.bf16.msra.mxu0 %v2029
  %4146 = vmatprep.subr.bf16.mxu0 %v2042
  %4147 = vmatpush1.bf16.msra.mxu0 %v2041
  %4148 = vmatprep.subr.bf16.mxu0 %v2054
  %4149 = vmatpush1.bf16.msra.mxu0 %v2053
  %4150 = vmatprep.subr.bf16.mxu0 %v2066
  %4151 = vmatpush1.bf16.msra.mxu0 %v2065
  %4152 = vmatprep.subr.bf16.mxu0 %v2078
  %4153 = vmatpush1.bf16.msra.mxu0 %v2077
  %4154 = vmatprep.subr.bf16.mxu0 %v2090
  %4155 = vmatpush1.bf16.msra.mxu0 %v2089
  %4156 = vmatprep.mubr.bf16.mxu0 %v3913
  %4157 = vmatmul.mubr.bf16.gmra.mrb[0].mxu0 %v3912
  %v4158 = vpop.f32.mrb[0].mxu0
  %v4159 = vadd.f32 %v4118, %v4158
  %v4160 = vpop.f32.mrb[0].mxu0
  %v4161 = vadd.f32 %v4120, %v4160
  %v4162 = vpop.f32.mrb[0].mxu0
  %v4163 = vpop.f32.mrb[0].mxu0
  %4164 = vdwg.mxu0
  %4165 = vmatprep.subr.bf16.mxu0 %v1720
  %4166 = vmatpush1.bf16.msra.mxu0 %v1719
  %4167 = vmatprep.subr.bf16.mxu0 %v1732
  %4168 = vmatpush1.bf16.msra.mxu0 %v1731
  %4169 = vmatprep.subr.bf16.mxu0 %v1744
  %4170 = vmatpush1.bf16.msra.mxu0 %v1743
  %4171 = vmatprep.subr.bf16.mxu0 %v1756
  %4172 = vmatpush1.bf16.msra.mxu0 %v1755
  %4173 = vmatprep.subr.bf16.mxu0 %v1768
  %4174 = vmatpush1.bf16.msra.mxu0 %v1767
  %4175 = vmatprep.subr.bf16.mxu0 %v1780
  %4176 = vmatpush1.bf16.msra.mxu0 %v1779
  %4177 = vmatprep.subr.bf16.mxu0 %v1792
  %4178 = vmatpush1.bf16.msra.mxu0 %v1791
  %4179 = vmatprep.subr.bf16.mxu0 %v1804
  %4180 = vmatpush1.bf16.msra.mxu0 %v1803
  %4181 = vmatprep.subr.bf16.mxu0 %v1816
  %4182 = vmatpush1.bf16.msra.mxu0 %v1815
  %4183 = vmatprep.subr.bf16.mxu0 %v1828
  %4184 = vmatpush1.bf16.msra.mxu0 %v1827
  %4185 = vmatprep.subr.bf16.mxu0 %v1840
  %4186 = vmatpush1.bf16.msra.mxu0 %v1839
  %4187 = vmatprep.subr.bf16.mxu0 %v1852
  %4188 = vmatpush1.bf16.msra.mxu0 %v1851
  %4189 = vmatprep.subr.bf16.mxu0 %v1864
  %4190 = vmatpush1.bf16.msra.mxu0 %v1863
  %4191 = vmatprep.subr.bf16.mxu0 %v1876
  %4192 = vmatpush1.bf16.msra.mxu0 %v1875
  %4193 = vmatprep.subr.bf16.mxu0 %v1888
  %4194 = vmatpush1.bf16.msra.mxu0 %v1887
  %4195 = vmatprep.subr.bf16.mxu0 %v1900
  %4196 = vmatpush1.bf16.msra.mxu0 %v1899
  %4197 = vmatprep.mubr.bf16.mxu0 %v3911
  %4198 = vmatmul.mubr.bf16.gmra.mrb[0].mxu0 %v3910
  %v4199 = vpop.f32.mrb[0].mxu0
  %v4200 = vadd.f32 0.0, %v4199
  %v4201 = vpop.f32.mrb[0].mxu0
  %v4202 = vadd.f32 0.0, %v4201
  %v4203 = vpop.f32.mrb[0].mxu0
  %v4204 = vpop.f32.mrb[0].mxu0
  %4205 = vdwg.mxu0
  %4206 = vmatprep.subr.bf16.mxu0 %v1912
  %4207 = vmatpush1.bf16.msra.mxu0 %v1911
  %4208 = vmatprep.subr.bf16.mxu0 %v1924
  %4209 = vmatpush1.bf16.msra.mxu0 %v1923
  %4210 = vmatprep.subr.bf16.mxu0 %v1936
  %4211 = vmatpush1.bf16.msra.mxu0 %v1935
  %4212 = vmatprep.subr.bf16.mxu0 %v1948
  %4213 = vmatpush1.bf16.msra.mxu0 %v1947
  %4214 = vmatprep.subr.bf16.mxu0 %v1960
  %4215 = vmatpush1.bf16.msra.mxu0 %v1959
  %4216 = vmatprep.subr.bf16.mxu0 %v1972
  %4217 = vmatpush1.bf16.msra.mxu0 %v1971
  %4218 = vmatprep.subr.bf16.mxu0 %v1984
  %4219 = vmatpush1.bf16.msra.mxu0 %v1983
  %4220 = vmatprep.subr.bf16.mxu0 %v1996
  %4221 = vmatpush1.bf16.msra.mxu0 %v1995
  %4222 = vmatprep.subr.bf16.mxu0 %v2008
  %4223 = vmatpush1.bf16.msra.mxu0 %v2007
  %4224 = vmatprep.subr.bf16.mxu0 %v2020
  %4225 = vmatpush1.bf16.msra.mxu0 %v2019
  %4226 = vmatprep.subr.bf16.mxu0 %v2032
  %4227 = vmatpush1.bf16.msra.mxu0 %v2031
  %4228 = vmatprep.subr.bf16.mxu0 %v2044
  %4229 = vmatpush1.bf16.msra.mxu0 %v2043
  %4230 = vmatprep.subr.bf16.mxu0 %v2056
  %4231 = vmatpush1.bf16.msra.mxu0 %v2055
  %4232 = vmatprep.subr.bf16.mxu0 %v2068
  %4233 = vmatpush1.bf16.msra.mxu0 %v2067
  %4234 = vmatprep.subr.bf16.mxu0 %v2080
  %4235 = vmatpush1.bf16.msra.mxu0 %v2079
  %4236 = vmatprep.subr.bf16.mxu0 %v2092
  %4237 = vmatpush1.bf16.msra.mxu0 %v2091
  %4238 = vmatprep.mubr.bf16.mxu0 %v3913
  %4239 = vmatmul.mubr.bf16.gmra.mrb[0].mxu0 %v3912
  %v4240 = vpop.f32.mrb[0].mxu0
  %v4241 = vadd.f32 %v4200, %v4240
  %v4242 = vpop.f32.mrb[0].mxu0
  %v4243 = vadd.f32 %v4202, %v4242
  %v4244 = vpop.f32.mrb[0].mxu0
  %v4245 = vpop.f32.mrb[0].mxu0
  %4246 = vdwg.mxu0
  %4247 = vmatprep.subr.bf16.mxu0 %v1722
  %4248 = vmatpush1.bf16.msra.mxu0 %v1721
  %4249 = vmatprep.subr.bf16.mxu0 %v1734
  %4250 = vmatpush1.bf16.msra.mxu0 %v1733
  %4251 = vmatprep.subr.bf16.mxu0 %v1746
  %4252 = vmatpush1.bf16.msra.mxu0 %v1745
  %4253 = vmatprep.subr.bf16.mxu0 %v1758
  %4254 = vmatpush1.bf16.msra.mxu0 %v1757
  %4255 = vmatprep.subr.bf16.mxu0 %v1770
  %4256 = vmatpush1.bf16.msra.mxu0 %v1769
  %4257 = vmatprep.subr.bf16.mxu0 %v1782
  %4258 = vmatpush1.bf16.msra.mxu0 %v1781
  %4259 = vmatprep.subr.bf16.mxu0 %v1794
  %4260 = vmatpush1.bf16.msra.mxu0 %v1793
  %4261 = vmatprep.subr.bf16.mxu0 %v1806
  %4262 = vmatpush1.bf16.msra.mxu0 %v1805
  %4263 = vmatprep.subr.bf16.mxu0 %v1818
  %4264 = vmatpush1.bf16.msra.mxu0 %v1817
  %4265 = vmatprep.subr.bf16.mxu0 %v1830
  %4266 = vmatpush1.bf16.msra.mxu0 %v1829
  %4267 = vmatprep.subr.bf16.mxu0 %v1842
  %4268 = vmatpush1.bf16.msra.mxu0 %v1841
  %4269 = vmatprep.subr.bf16.mxu0 %v1854
  %4270 = vmatpush1.bf16.msra.mxu0 %v1853
  %4271 = vmatprep.subr.bf16.mxu0 %v1866
  %4272 = vmatpush1.bf16.msra.mxu0 %v1865
  %4273 = vmatprep.subr.bf16.mxu0 %v1878
  %4274 = vmatpush1.bf16.msra.mxu0 %v1877
  %4275 = vmatprep.subr.bf16.mxu0 %v1890
  %4276 = vmatpush1.bf16.msra.mxu0 %v1889
  %4277 = vmatprep.subr.bf16.mxu0 %v1902
  %4278 = vmatpush1.bf16.msra.mxu0 %v1901
  %4279 = vmatprep.mubr.bf16.mxu0 %v3911
  %4280 = vmatmul.mubr.bf16.gmra.mrb[0].mxu0 %v3910
  %v4281 = vpop.f32.mrb[0].mxu0
  %v4282 = vadd.f32 0.0, %v4281
  %v4283 = vpop.f32.mrb[0].mxu0
  %v4284 = vadd.f32 0.0, %v4283
  %v4285 = vpop.f32.mrb[0].mxu0
  %v4286 = vpop.f32.mrb[0].mxu0
  %4287 = vdwg.mxu0
  %4288 = vmatprep.subr.bf16.mxu0 %v1914
  %4289 = vmatpush1.bf16.msra.mxu0 %v1913
  %4290 = vmatprep.subr.bf16.mxu0 %v1926
  %4291 = vmatpush1.bf16.msra.mxu0 %v1925
  %4292 = vmatprep.subr.bf16.mxu0 %v1938
  %4293 = vmatpush1.bf16.msra.mxu0 %v1937
  %4294 = vmatprep.subr.bf16.mxu0 %v1950
  %4295 = vmatpush1.bf16.msra.mxu0 %v1949
  %4296 = vmatprep.subr.bf16.mxu0 %v1962
  %4297 = vmatpush1.bf16.msra.mxu0 %v1961
  %4298 = vmatprep.subr.bf16.mxu0 %v1974
  %4299 = vmatpush1.bf16.msra.mxu0 %v1973
  %4300 = vmatprep.subr.bf16.mxu0 %v1986
  %4301 = vmatpush1.bf16.msra.mxu0 %v1985
  %4302 = vmatprep.subr.bf16.mxu0 %v1998
  %4303 = vmatpush1.bf16.msra.mxu0 %v1997
  %4304 = vmatprep.subr.bf16.mxu0 %v2010
  %4305 = vmatpush1.bf16.msra.mxu0 %v2009
  %4306 = vmatprep.subr.bf16.mxu0 %v2022
  %4307 = vmatpush1.bf16.msra.mxu0 %v2021
  %4308 = vmatprep.subr.bf16.mxu0 %v2034
  %4309 = vmatpush1.bf16.msra.mxu0 %v2033
  %4310 = vmatprep.subr.bf16.mxu0 %v2046
  %4311 = vmatpush1.bf16.msra.mxu0 %v2045
  %4312 = vmatprep.subr.bf16.mxu0 %v2058
  %4313 = vmatpush1.bf16.msra.mxu0 %v2057
  %4314 = vmatprep.subr.bf16.mxu0 %v2070
  %4315 = vmatpush1.bf16.msra.mxu0 %v2069
  %4316 = vmatprep.subr.bf16.mxu0 %v2082
  %4317 = vmatpush1.bf16.msra.mxu0 %v2081
  %4318 = vmatprep.subr.bf16.mxu0 %v2094
  %4319 = vmatpush1.bf16.msra.mxu0 %v2093
  %4320 = vmatprep.mubr.bf16.mxu0 %v3913
  %4321 = vmatmul.mubr.bf16.gmra.mrb[0].mxu0 %v3912
  %v4322 = vpop.f32.mrb[0].mxu0
  %v4323 = vadd.f32 %v4282, %v4322
  %v4324 = vpop.f32.mrb[0].mxu0
  %v4325 = vadd.f32 %v4284, %v4324
  %v4326 = vpop.f32.mrb[0].mxu0
  %v4327 = vpop.f32.mrb[0].mxu0
  %4328 = vdwg.mxu0
  %4329 = vmatprep.subr.bf16.mxu0 %v1724
  %4330 = vmatpush1.bf16.msra.mxu0 %v1723
  %4331 = vmatprep.subr.bf16.mxu0 %v1736
  %4332 = vmatpush1.bf16.msra.mxu0 %v1735
  %4333 = vmatprep.subr.bf16.mxu0 %v1748
  %4334 = vmatpush1.bf16.msra.mxu0 %v1747
  %4335 = vmatprep.subr.bf16.mxu0 %v1760
  %4336 = vmatpush1.bf16.msra.mxu0 %v1759
  %4337 = vmatprep.subr.bf16.mxu0 %v1772
  %4338 = vmatpush1.bf16.msra.mxu0 %v1771
  %4339 = vmatprep.subr.bf16.mxu0 %v1784
  %4340 = vmatpush1.bf16.msra.mxu0 %v1783
  %4341 = vmatprep.subr.bf16.mxu0 %v1796
  %4342 = vmatpush1.bf16.msra.mxu0 %v1795
  %4343 = vmatprep.subr.bf16.mxu0 %v1808
  %4344 = vmatpush1.bf16.msra.mxu0 %v1807
  %4345 = vmatprep.subr.bf16.mxu0 %v1820
  %4346 = vmatpush1.bf16.msra.mxu0 %v1819
  %4347 = vmatprep.subr.bf16.mxu0 %v1832
  %4348 = vmatpush1.bf16.msra.mxu0 %v1831
  %4349 = vmatprep.subr.bf16.mxu0 %v1844
  %4350 = vmatpush1.bf16.msra.mxu0 %v1843
  %4351 = vmatprep.subr.bf16.mxu0 %v1856
  %4352 = vmatpush1.bf16.msra.mxu0 %v1855
  %4353 = vmatprep.subr.bf16.mxu0 %v1868
  %4354 = vmatpush1.bf16.msra.mxu0 %v1867
  %4355 = vmatprep.subr.bf16.mxu0 %v1880
  %4356 = vmatpush1.bf16.msra.mxu0 %v1879
  %4357 = vmatprep.subr.bf16.mxu0 %v1892
  %4358 = vmatpush1.bf16.msra.mxu0 %v1891
  %4359 = vmatprep.subr.bf16.mxu0 %v1904
  %4360 = vmatpush1.bf16.msra.mxu0 %v1903
  %4361 = vmatprep.mubr.bf16.mxu0 %v3911
  %4362 = vmatmul.mubr.bf16.gmra.mrb[0].mxu0 %v3910
  %v4363 = vpop.f32.mrb[0].mxu0
  %v4364 = vadd.f32 0.0, %v4363
  %v4365 = vpop.f32.mrb[0].mxu0
  %v4366 = vadd.f32 0.0, %v4365
  %v4367 = vpop.f32.mrb[0].mxu0
  %v4368 = vpop.f32.mrb[0].mxu0
  %4369 = vdwg.mxu0
  %4370 = vmatprep.subr.bf16.mxu0 %v1916
  %4371 = vmatpush1.bf16.msra.mxu0 %v1915
  %4372 = vmatprep.subr.bf16.mxu0 %v1928
  %4373 = vmatpush1.bf16.msra.mxu0 %v1927
  %4374 = vmatprep.subr.bf16.mxu0 %v1940
  %4375 = vmatpush1.bf16.msra.mxu0 %v1939
  %4376 = vmatprep.subr.bf16.mxu0 %v1952
  %4377 = vmatpush1.bf16.msra.mxu0 %v1951
  %4378 = vmatprep.subr.bf16.mxu0 %v1964
  %4379 = vmatpush1.bf16.msra.mxu0 %v1963
  %4380 = vmatprep.subr.bf16.mxu0 %v1976
  %4381 = vmatpush1.bf16.msra.mxu0 %v1975
  %4382 = vmatprep.subr.bf16.mxu0 %v1988
  %4383 = vmatpush1.bf16.msra.mxu0 %v1987
  %4384 = vmatprep.subr.bf16.mxu0 %v2000
  %4385 = vmatpush1.bf16.msra.mxu0 %v1999
  %4386 = vmatprep.subr.bf16.mxu0 %v2012
  %4387 = vmatpush1.bf16.msra.mxu0 %v2011
  %4388 = vmatprep.subr.bf16.mxu0 %v2024
  %4389 = vmatpush1.bf16.msra.mxu0 %v2023
  %4390 = vmatprep.subr.bf16.mxu0 %v2036
  %4391 = vmatpush1.bf16.msra.mxu0 %v2035
  %4392 = vmatprep.subr.bf16.mxu0 %v2048
  %4393 = vmatpush1.bf16.msra.mxu0 %v2047
  %4394 = vmatprep.subr.bf16.mxu0 %v2060
  %4395 = vmatpush1.bf16.msra.mxu0 %v2059
  %4396 = vmatprep.subr.bf16.mxu0 %v2072
  %4397 = vmatpush1.bf16.msra.mxu0 %v2071
  %4398 = vmatprep.subr.bf16.mxu0 %v2084
  %4399 = vmatpush1.bf16.msra.mxu0 %v2083
  %4400 = vmatprep.subr.bf16.mxu0 %v2096
  %4401 = vmatpush1.bf16.msra.mxu0 %v2095
  %4402 = vmatprep.mubr.bf16.mxu0 %v3913
  %4403 = vmatmul.mubr.bf16.gmra.mrb[0].mxu0 %v3912
  %v4404 = vpop.f32.mrb[0].mxu0
  %v4405 = vadd.f32 %v4364, %v4404
  %v4406 = vpop.f32.mrb[0].mxu0
  %v4407 = vadd.f32 %v4366, %v4406
  %v4408 = vpop.f32.mrb[0].mxu0
  %v4409 = vpop.f32.mrb[0].mxu0
  %4410 = vdwg.mxu0
  %v4423 = vcombine.low %v3995, %v3997
  %v4424 = vcombine.low %v4077, %v4079
  %v4426 = vunpack.c.l.s4 1983009808
  %v4427 = vunpack.c.0.s8 %v4426
  %v4428 = vlaneseq
  %v4429 = vshrl.u32 %v4428, 7
  %v4430 = vsub.s32 %v4427, %v4429
  %v4431 = vrot.slane %v4423, %v4430
  %v4433 = vunpack.c.l.s4 1983009808
  %v4434 = vunpack.c.0.s8 %v4433
  %v4435 = vlaneseq
  %v4436 = vshrl.u32 %v4435, 7
  %v4437 = vsub.s32 %v4434, %v4436
  %v4438 = vrot.slane %v4424, %v4437
  %v4439 = vcombine.low %v4431, %v4438
  %v4440 = vcombine.low %v4159, %v4161
  %v4441 = vcombine.low %v4241, %v4243
  %v4443 = vunpack.c.l.s4 1983009808
  %v4444 = vunpack.c.0.s8 %v4443
  %v4445 = vlaneseq
  %v4446 = vshrl.u32 %v4445, 7
  %v4447 = vsub.s32 %v4444, %v4446
  %v4448 = vrot.slane %v4440, %v4447
  %v4450 = vunpack.c.l.s4 1983009808
  %v4451 = vunpack.c.0.s8 %v4450
  %v4452 = vlaneseq
  %v4453 = vshrl.u32 %v4452, 7
  %v4454 = vsub.s32 %v4451, %v4453
  %v4455 = vrot.slane %v4441, %v4454
  %v4456 = vcombine.low %v4448, %v4455
  %v4457 = vcombine.low %v4323, %v4325
  %v4458 = vcombine.low %v4405, %v4407
  %v4460 = vunpack.c.l.s4 1983009808
  %v4461 = vunpack.c.0.s8 %v4460
  %v4462 = vlaneseq
  %v4463 = vshrl.u32 %v4462, 7
  %v4464 = vsub.s32 %v4461, %v4463
  %v4465 = vrot.slane %v4457, %v4464
  %v4467 = vunpack.c.l.s4 1983009808
  %v4468 = vunpack.c.0.s8 %v4467
  %v4469 = vlaneseq
  %v4470 = vshrl.u32 %v4469, 7
  %v4471 = vsub.s32 %v4468, %v4470
  %v4472 = vrot.slane %v4458, %v4471
  %v4473 = vcombine.low %v4465, %v4472
  %v4477 = vadd.f32 %v3915, %v4439
  %v4478 = vadd.f32 %v3916, %v4456
  %v4479 = vadd.f32 %v3917, %v4473
  %4480 = vmatprep.subr.bf16.mxu0 %v3427
  %4481 = vmatpush1.bf16.msra.mxu0 %v3426
  %4482 = vmatprep.subr.bf16.mxu0 %v3431
  %4483 = vmatpush1.bf16.msra.mxu0 %v3430
  %4484 = vmatprep.subr.bf16.mxu0 %v3435
  %4485 = vmatpush1.bf16.msra.mxu0 %v3434
  %4486 = vmatprep.subr.bf16.mxu0 %v3439
  %4487 = vmatpush1.bf16.msra.mxu0 %v3438
  %4488 = vmatprep.subr.bf16.mxu0 %v3443
  %4489 = vmatpush1.bf16.msra.mxu0 %v3442
  %4490 = vmatprep.subr.bf16.mxu0 %v3447
  %4491 = vmatpush1.bf16.msra.mxu0 %v3446
  %4492 = vmatprep.subr.bf16.mxu0 %v3451
  %4493 = vmatpush1.bf16.msra.mxu0 %v3450
  %4494 = vmatprep.subr.bf16.mxu0 %v3455
  %4495 = vmatpush1.bf16.msra.mxu0 %v3454
  %4496 = vmatprep.subr.bf16.mxu0 %v3459
  %4497 = vmatpush1.bf16.msra.mxu0 %v3458
  %4498 = vmatprep.subr.bf16.mxu0 %v3463
  %4499 = vmatpush1.bf16.msra.mxu0 %v3462
  %4500 = vmatprep.subr.bf16.mxu0 %v3467
  %4501 = vmatpush1.bf16.msra.mxu0 %v3466
  %4502 = vmatprep.subr.bf16.mxu0 %v3471
  %4503 = vmatpush1.bf16.msra.mxu0 %v3470
  %4504 = vmatprep.subr.bf16.mxu0 %v3475
  %4505 = vmatpush1.bf16.msra.mxu0 %v3474
  %4506 = vmatprep.subr.bf16.mxu0 %v3479
  %4507 = vmatpush1.bf16.msra.mxu0 %v3478
  %4508 = vmatprep.subr.bf16.mxu0 %v3483
  %4509 = vmatpush1.bf16.msra.mxu0 %v3482
  %4510 = vmatprep.subr.bf16.mxu0 %v3487
  %4511 = vmatpush1.bf16.msra.mxu0 %v3486
  %4512 = vmatprep.mubr.bf16.mxu0 %v3911
  %4513 = vmatmul.mubr.bf16.gmra.mrb[0].mxu0 %v3910
  %v4514 = vpop.f32.mrb[0].mxu0
  %v4515 = vadd.f32 0.0, %v4514
  %v4516 = vpop.f32.mrb[0].mxu0
  %v4517 = vadd.f32 0.0, %v4516
  %v4518 = vpop.f32.mrb[0].mxu0
  %v4519 = vpop.f32.mrb[0].mxu0
  %4520 = vdwg.mxu0
  %4521 = vmatprep.subr.bf16.mxu0 %v3491
  %4522 = vmatpush1.bf16.msra.mxu0 %v3490
  %4523 = vmatprep.subr.bf16.mxu0 %v3495
  %4524 = vmatpush1.bf16.msra.mxu0 %v3494
  %4525 = vmatprep.subr.bf16.mxu0 %v3499
  %4526 = vmatpush1.bf16.msra.mxu0 %v3498
  %4527 = vmatprep.subr.bf16.mxu0 %v3503
  %4528 = vmatpush1.bf16.msra.mxu0 %v3502
  %4529 = vmatprep.subr.bf16.mxu0 %v3507
  %4530 = vmatpush1.bf16.msra.mxu0 %v3506
  %4531 = vmatprep.subr.bf16.mxu0 %v3511
  %4532 = vmatpush1.bf16.msra.mxu0 %v3510
  %4533 = vmatprep.subr.bf16.mxu0 %v3515
  %4534 = vmatpush1.bf16.msra.mxu0 %v3514
  %4535 = vmatprep.subr.bf16.mxu0 %v3519
  %4536 = vmatpush1.bf16.msra.mxu0 %v3518
  %4537 = vmatprep.subr.bf16.mxu0 %v3523
  %4538 = vmatpush1.bf16.msra.mxu0 %v3522
  %4539 = vmatprep.subr.bf16.mxu0 %v3527
  %4540 = vmatpush1.bf16.msra.mxu0 %v3526
  %4541 = vmatprep.subr.bf16.mxu0 %v3531
  %4542 = vmatpush1.bf16.msra.mxu0 %v3530
  %4543 = vmatprep.subr.bf16.mxu0 %v3535
  %4544 = vmatpush1.bf16.msra.mxu0 %v3534
  %4545 = vmatprep.subr.bf16.mxu0 %v3539
  %4546 = vmatpush1.bf16.msra.mxu0 %v3538
  %4547 = vmatprep.subr.bf16.mxu0 %v3543
  %4548 = vmatpush1.bf16.msra.mxu0 %v3542
  %4549 = vmatprep.subr.bf16.mxu0 %v3547
  %4550 = vmatpush1.bf16.msra.mxu0 %v3546
  %4551 = vmatprep.subr.bf16.mxu0 %v3551
  %4552 = vmatpush1.bf16.msra.mxu0 %v3550
  %4553 = vmatprep.mubr.bf16.mxu0 %v3913
  %4554 = vmatmul.mubr.bf16.gmra.mrb[0].mxu0 %v3912
  %v4555 = vpop.f32.mrb[0].mxu0
  %v4556 = vadd.f32 %v4515, %v4555
  %v4557 = vpop.f32.mrb[0].mxu0
  %v4558 = vadd.f32 %v4517, %v4557
  %v4559 = vpop.f32.mrb[0].mxu0
  %v4560 = vpop.f32.mrb[0].mxu0
  %4561 = vdwg.mxu0
  %4562 = vmatprep.subr.bf16.mxu0 %v3429
  %4563 = vmatpush1.bf16.msra.mxu0 %v3428
  %4564 = vmatprep.subr.bf16.mxu0 %v3433
  %4565 = vmatpush1.bf16.msra.mxu0 %v3432
  %4566 = vmatprep.subr.bf16.mxu0 %v3437
  %4567 = vmatpush1.bf16.msra.mxu0 %v3436
  %4568 = vmatprep.subr.bf16.mxu0 %v3441
  %4569 = vmatpush1.bf16.msra.mxu0 %v3440
  %4570 = vmatprep.subr.bf16.mxu0 %v3445
  %4571 = vmatpush1.bf16.msra.mxu0 %v3444
  %4572 = vmatprep.subr.bf16.mxu0 %v3449
  %4573 = vmatpush1.bf16.msra.mxu0 %v3448
  %4574 = vmatprep.subr.bf16.mxu0 %v3453
  %4575 = vmatpush1.bf16.msra.mxu0 %v3452
  %4576 = vmatprep.subr.bf16.mxu0 %v3457
  %4577 = vmatpush1.bf16.msra.mxu0 %v3456
  %4578 = vmatprep.subr.bf16.mxu0 %v3461
  %4579 = vmatpush1.bf16.msra.mxu0 %v3460
  %4580 = vmatprep.subr.bf16.mxu0 %v3465
  %4581 = vmatpush1.bf16.msra.mxu0 %v3464
  %4582 = vmatprep.subr.bf16.mxu0 %v3469
  %4583 = vmatpush1.bf16.msra.mxu0 %v3468
  %4584 = vmatprep.subr.bf16.mxu0 %v3473
  %4585 = vmatpush1.bf16.msra.mxu0 %v3472
  %4586 = vmatprep.subr.bf16.mxu0 %v3477
  %4587 = vmatpush1.bf16.msra.mxu0 %v3476
  %4588 = vmatprep.subr.bf16.mxu0 %v3481
  %4589 = vmatpush1.bf16.msra.mxu0 %v3480
  %4590 = vmatprep.subr.bf16.mxu0 %v3485
  %4591 = vmatpush1.bf16.msra.mxu0 %v3484
  %4592 = vmatprep.subr.bf16.mxu0 %v3489
  %4593 = vmatpush1.bf16.msra.mxu0 %v3488
  %4594 = vmatprep.mubr.bf16.mxu0 %v3911
  %4595 = vmatmul.mubr.bf16.gmra.mrb[0].mxu0 %v3910
  %v4596 = vpop.f32.mrb[0].mxu0
  %v4597 = vadd.f32 0.0, %v4596
  %v4598 = vpop.f32.mrb[0].mxu0
  %v4599 = vadd.f32 0.0, %v4598
  %v4600 = vpop.f32.mrb[0].mxu0
  %v4601 = vpop.f32.mrb[0].mxu0
  %4602 = vdwg.mxu0
  %4603 = vmatprep.subr.bf16.mxu0 %v3493
  %4604 = vmatpush1.bf16.msra.mxu0 %v3492
  %4605 = vmatprep.subr.bf16.mxu0 %v3497
  %4606 = vmatpush1.bf16.msra.mxu0 %v3496
  %4607 = vmatprep.subr.bf16.mxu0 %v3501
  %4608 = vmatpush1.bf16.msra.mxu0 %v3500
  %4609 = vmatprep.subr.bf16.mxu0 %v3505
  %4610 = vmatpush1.bf16.msra.mxu0 %v3504
  %4611 = vmatprep.subr.bf16.mxu0 %v3509
  %4612 = vmatpush1.bf16.msra.mxu0 %v3508
  %4613 = vmatprep.subr.bf16.mxu0 %v3513
  %4614 = vmatpush1.bf16.msra.mxu0 %v3512
  %4615 = vmatprep.subr.bf16.mxu0 %v3517
  %4616 = vmatpush1.bf16.msra.mxu0 %v3516
  %4617 = vmatprep.subr.bf16.mxu0 %v3521
  %4618 = vmatpush1.bf16.msra.mxu0 %v3520
  %4619 = vmatprep.subr.bf16.mxu0 %v3525
  %4620 = vmatpush1.bf16.msra.mxu0 %v3524
  %4621 = vmatprep.subr.bf16.mxu0 %v3529
  %4622 = vmatpush1.bf16.msra.mxu0 %v3528
  %4623 = vmatprep.subr.bf16.mxu0 %v3533
  %4624 = vmatpush1.bf16.msra.mxu0 %v3532
  %4625 = vmatprep.subr.bf16.mxu0 %v3537
  %4626 = vmatpush1.bf16.msra.mxu0 %v3536
  %4627 = vmatprep.subr.bf16.mxu0 %v3541
  %4628 = vmatpush1.bf16.msra.mxu0 %v3540
  %4629 = vmatprep.subr.bf16.mxu0 %v3545
  %4630 = vmatpush1.bf16.msra.mxu0 %v3544
  %4631 = vmatprep.subr.bf16.mxu0 %v3549
  %4632 = vmatpush1.bf16.msra.mxu0 %v3548
  %4633 = vmatprep.subr.bf16.mxu0 %v3553
  %4634 = vmatpush1.bf16.msra.mxu0 %v3552
  %4635 = vmatprep.mubr.bf16.mxu0 %v3913
  %4636 = vmatmul.mubr.bf16.gmra.mrb[0].mxu0 %v3912
  %v4637 = vpop.f32.mrb[0].mxu0
  %v4638 = vadd.f32 %v4597, %v4637
  %v4639 = vpop.f32.mrb[0].mxu0
  %v4640 = vadd.f32 %v4599, %v4639
  %v4641 = vpop.f32.mrb[0].mxu0
  %v4642 = vpop.f32.mrb[0].mxu0
  %4643 = vdwg.mxu0
  %v4648 = vcombine.low %v4556, %v4558
  %v4649 = vcombine.low %v4638, %v4640
  %v4651 = vunpack.c.l.s4 1983009808
  %v4652 = vunpack.c.0.s8 %v4651
  %v4653 = vlaneseq
  %v4654 = vshrl.u32 %v4653, 7
  %v4655 = vsub.s32 %v4652, %v4654
  %v4656 = vrot.slane %v4648, %v4655
  %v4658 = vunpack.c.l.s4 1983009808
  %v4659 = vunpack.c.0.s8 %v4658
  %v4660 = vlaneseq
  %v4661 = vshrl.u32 %v4660, 7
  %v4662 = vsub.s32 %v4659, %v4661
  %v4663 = vrot.slane %v4649, %v4662
  %v4664 = vcombine.low %v4656, %v4663
  %v4666 = vadd.f32 %v3918, %v4664
  %v4667 = vmul.f32 %v4477, 0.5
  %v4668 = vtanh.pop %v4667
  %v4669 = vadd.f32 %v4668, 1.0
  %v4670 = vmul.f32 %v4669, 0.5
  %v4671 = vmul.f32 %v4478, 0.5
  %v4672 = vtanh.pop %v4671
  %v4673 = vadd.f32 %v4672, 1.0
  %v4674 = vmul.f32 %v4673, 0.5
  %v4675 = vtanh.pop %v4479
  %v4676 = vmul.f32 %v4674, %v3880
  %v4677 = vmul.f32 %v4670, %v4675
  %v4678 = vadd.f32 %v4676, %v4677
  %v4679 = vmul.f32 %v4666, 0.5
  %v4680 = vtanh.pop %v4679
  %v4681 = vadd.f32 %v4680, 1.0
  %v4682 = vmul.f32 %v4681, 0.5
  %v4683 = vtanh.pop %v4678
  %v4684 = vmul.f32 %v4682, %v4683
  %s4685 = scalar_lea.vmem %s2, 8
  %4686 = vst [vmem:[%s4685] sm:$0xff] %v4684
  %v4688 = vcombine.high %v4684, %v4684
  %v4690 = vunpack.c.l.s4 1983009808
  %v4691 = vunpack.c.0.s8 %v4690
  %v4692 = vlaneseq
  %v4693 = vshrl.u32 %v4692, 7
  %v4694 = vsub.s32 %v4691, %v4693
  %v4695 = vrot.slane %v4684, %v4694
  %v4697 = vunpack.c.l.s4 1983009808
  %v4698 = vunpack.c.0.s8 %v4697
  %v4699 = vlaneseq
  %v4700 = vshrl.u32 %v4699, 7
  %v4701 = vsub.s32 %v4698, %v4700
  %v4702 = vrot.slane %v4688, %v4701
  %v4703 = vcombine.high %v4695, %v4695
  %v4704 = vcombine.high %v4702, %v4702
  %v4709 = vpack.c.bf16 %v4695, %v4695
  %v4710 = vpack.c.bf16 %v4703, %v4703
  %v4711 = vpack.c.bf16 %v4702, %v4702
  %v4712 = vpack.c.bf16 %v4704, %v4704
  %s4713 = scalar_lea.vmem %s0, 64
  %v4714 = vld [vmem:[%s4713] sm:$0xff]
  %v4715 = vld [vmem:[%s4713 + $0x8] sm:$0xff]
  %v4716 = vld [vmem:[%s4713 + $0x10] sm:$0xff]
  %v4717 = vld [vmem:[%s4713 + $0x18] sm:$0xff]
  %4718 = vmatprep.subr.bf16.mxu0 %v1714
  %4719 = vmatpush1.bf16.msra.mxu0 %v1713
  %4720 = vmatprep.subr.bf16.mxu0 %v1726
  %4721 = vmatpush1.bf16.msra.mxu0 %v1725
  %4722 = vmatprep.subr.bf16.mxu0 %v1738
  %4723 = vmatpush1.bf16.msra.mxu0 %v1737
  %4724 = vmatprep.subr.bf16.mxu0 %v1750
  %4725 = vmatpush1.bf16.msra.mxu0 %v1749
  %4726 = vmatprep.subr.bf16.mxu0 %v1762
  %4727 = vmatpush1.bf16.msra.mxu0 %v1761
  %4728 = vmatprep.subr.bf16.mxu0 %v1774
  %4729 = vmatpush1.bf16.msra.mxu0 %v1773
  %4730 = vmatprep.subr.bf16.mxu0 %v1786
  %4731 = vmatpush1.bf16.msra.mxu0 %v1785
  %4732 = vmatprep.subr.bf16.mxu0 %v1798
  %4733 = vmatpush1.bf16.msra.mxu0 %v1797
  %4734 = vmatprep.subr.bf16.mxu0 %v1810
  %4735 = vmatpush1.bf16.msra.mxu0 %v1809
  %4736 = vmatprep.subr.bf16.mxu0 %v1822
  %4737 = vmatpush1.bf16.msra.mxu0 %v1821
  %4738 = vmatprep.subr.bf16.mxu0 %v1834
  %4739 = vmatpush1.bf16.msra.mxu0 %v1833
  %4740 = vmatprep.subr.bf16.mxu0 %v1846
  %4741 = vmatpush1.bf16.msra.mxu0 %v1845
  %4742 = vmatprep.subr.bf16.mxu0 %v1858
  %4743 = vmatpush1.bf16.msra.mxu0 %v1857
  %4744 = vmatprep.subr.bf16.mxu0 %v1870
  %4745 = vmatpush1.bf16.msra.mxu0 %v1869
  %4746 = vmatprep.subr.bf16.mxu0 %v1882
  %4747 = vmatpush1.bf16.msra.mxu0 %v1881
  %4748 = vmatprep.subr.bf16.mxu0 %v1894
  %4749 = vmatpush1.bf16.msra.mxu0 %v1893
  %4750 = vmatprep.mubr.bf16.mxu0 %v4710
  %4751 = vmatmul.mubr.bf16.gmra.mrb[0].mxu0 %v4709
  %v4752 = vpop.f32.mrb[0].mxu0
  %v4753 = vadd.f32 0.0, %v4752
  %v4754 = vpop.f32.mrb[0].mxu0
  %v4755 = vadd.f32 0.0, %v4754
  %v4756 = vpop.f32.mrb[0].mxu0
  %v4757 = vpop.f32.mrb[0].mxu0
  %4758 = vdwg.mxu0
  %4759 = vmatprep.subr.bf16.mxu0 %v1906
  %4760 = vmatpush1.bf16.msra.mxu0 %v1905
  %4761 = vmatprep.subr.bf16.mxu0 %v1918
  %4762 = vmatpush1.bf16.msra.mxu0 %v1917
  %4763 = vmatprep.subr.bf16.mxu0 %v1930
  %4764 = vmatpush1.bf16.msra.mxu0 %v1929
  %4765 = vmatprep.subr.bf16.mxu0 %v1942
  %4766 = vmatpush1.bf16.msra.mxu0 %v1941
  %4767 = vmatprep.subr.bf16.mxu0 %v1954
  %4768 = vmatpush1.bf16.msra.mxu0 %v1953
  %4769 = vmatprep.subr.bf16.mxu0 %v1966
  %4770 = vmatpush1.bf16.msra.mxu0 %v1965
  %4771 = vmatprep.subr.bf16.mxu0 %v1978
  %4772 = vmatpush1.bf16.msra.mxu0 %v1977
  %4773 = vmatprep.subr.bf16.mxu0 %v1990
  %4774 = vmatpush1.bf16.msra.mxu0 %v1989
  %4775 = vmatprep.subr.bf16.mxu0 %v2002
  %4776 = vmatpush1.bf16.msra.mxu0 %v2001
  %4777 = vmatprep.subr.bf16.mxu0 %v2014
  %4778 = vmatpush1.bf16.msra.mxu0 %v2013
  %4779 = vmatprep.subr.bf16.mxu0 %v2026
  %4780 = vmatpush1.bf16.msra.mxu0 %v2025
  %4781 = vmatprep.subr.bf16.mxu0 %v2038
  %4782 = vmatpush1.bf16.msra.mxu0 %v2037
  %4783 = vmatprep.subr.bf16.mxu0 %v2050
  %4784 = vmatpush1.bf16.msra.mxu0 %v2049
  %4785 = vmatprep.subr.bf16.mxu0 %v2062
  %4786 = vmatpush1.bf16.msra.mxu0 %v2061
  %4787 = vmatprep.subr.bf16.mxu0 %v2074
  %4788 = vmatpush1.bf16.msra.mxu0 %v2073
  %4789 = vmatprep.subr.bf16.mxu0 %v2086
  %4790 = vmatpush1.bf16.msra.mxu0 %v2085
  %4791 = vmatprep.mubr.bf16.mxu0 %v4712
  %4792 = vmatmul.mubr.bf16.gmra.mrb[0].mxu0 %v4711
  %v4793 = vpop.f32.mrb[0].mxu0
  %v4794 = vadd.f32 %v4753, %v4793
  %v4795 = vpop.f32.mrb[0].mxu0
  %v4796 = vadd.f32 %v4755, %v4795
  %v4797 = vpop.f32.mrb[0].mxu0
  %v4798 = vpop.f32.mrb[0].mxu0
  %4799 = vdwg.mxu0
  %4800 = vmatprep.subr.bf16.mxu0 %v1716
  %4801 = vmatpush1.bf16.msra.mxu0 %v1715
  %4802 = vmatprep.subr.bf16.mxu0 %v1728
  %4803 = vmatpush1.bf16.msra.mxu0 %v1727
  %4804 = vmatprep.subr.bf16.mxu0 %v1740
  %4805 = vmatpush1.bf16.msra.mxu0 %v1739
  %4806 = vmatprep.subr.bf16.mxu0 %v1752
  %4807 = vmatpush1.bf16.msra.mxu0 %v1751
  %4808 = vmatprep.subr.bf16.mxu0 %v1764
  %4809 = vmatpush1.bf16.msra.mxu0 %v1763
  %4810 = vmatprep.subr.bf16.mxu0 %v1776
  %4811 = vmatpush1.bf16.msra.mxu0 %v1775
  %4812 = vmatprep.subr.bf16.mxu0 %v1788
  %4813 = vmatpush1.bf16.msra.mxu0 %v1787
  %4814 = vmatprep.subr.bf16.mxu0 %v1800
  %4815 = vmatpush1.bf16.msra.mxu0 %v1799
  %4816 = vmatprep.subr.bf16.mxu0 %v1812
  %4817 = vmatpush1.bf16.msra.mxu0 %v1811
  %4818 = vmatprep.subr.bf16.mxu0 %v1824
  %4819 = vmatpush1.bf16.msra.mxu0 %v1823
  %4820 = vmatprep.subr.bf16.mxu0 %v1836
  %4821 = vmatpush1.bf16.msra.mxu0 %v1835
  %4822 = vmatprep.subr.bf16.mxu0 %v1848
  %4823 = vmatpush1.bf16.msra.mxu0 %v1847
  %4824 = vmatprep.subr.bf16.mxu0 %v1860
  %4825 = vmatpush1.bf16.msra.mxu0 %v1859
  %4826 = vmatprep.subr.bf16.mxu0 %v1872
  %4827 = vmatpush1.bf16.msra.mxu0 %v1871
  %4828 = vmatprep.subr.bf16.mxu0 %v1884
  %4829 = vmatpush1.bf16.msra.mxu0 %v1883
  %4830 = vmatprep.subr.bf16.mxu0 %v1896
  %4831 = vmatpush1.bf16.msra.mxu0 %v1895
  %4832 = vmatprep.mubr.bf16.mxu0 %v4710
  %4833 = vmatmul.mubr.bf16.gmra.mrb[0].mxu0 %v4709
  %v4834 = vpop.f32.mrb[0].mxu0
  %v4835 = vadd.f32 0.0, %v4834
  %v4836 = vpop.f32.mrb[0].mxu0
  %v4837 = vadd.f32 0.0, %v4836
  %v4838 = vpop.f32.mrb[0].mxu0
  %v4839 = vpop.f32.mrb[0].mxu0
  %4840 = vdwg.mxu0
  %4841 = vmatprep.subr.bf16.mxu0 %v1908
  %4842 = vmatpush1.bf16.msra.mxu0 %v1907
  %4843 = vmatprep.subr.bf16.mxu0 %v1920
  %4844 = vmatpush1.bf16.msra.mxu0 %v1919
  %4845 = vmatprep.subr.bf16.mxu0 %v1932
  %4846 = vmatpush1.bf16.msra.mxu0 %v1931
  %4847 = vmatprep.subr.bf16.mxu0 %v1944
  %4848 = vmatpush1.bf16.msra.mxu0 %v1943
  %4849 = vmatprep.subr.bf16.mxu0 %v1956
  %4850 = vmatpush1.bf16.msra.mxu0 %v1955
  %4851 = vmatprep.subr.bf16.mxu0 %v1968
  %4852 = vmatpush1.bf16.msra.mxu0 %v1967
  %4853 = vmatprep.subr.bf16.mxu0 %v1980
  %4854 = vmatpush1.bf16.msra.mxu0 %v1979
  %4855 = vmatprep.subr.bf16.mxu0 %v1992
  %4856 = vmatpush1.bf16.msra.mxu0 %v1991
  %4857 = vmatprep.subr.bf16.mxu0 %v2004
  %4858 = vmatpush1.bf16.msra.mxu0 %v2003
  %4859 = vmatprep.subr.bf16.mxu0 %v2016
  %4860 = vmatpush1.bf16.msra.mxu0 %v2015
  %4861 = vmatprep.subr.bf16.mxu0 %v2028
  %4862 = vmatpush1.bf16.msra.mxu0 %v2027
  %4863 = vmatprep.subr.bf16.mxu0 %v2040
  %4864 = vmatpush1.bf16.msra.mxu0 %v2039
  %4865 = vmatprep.subr.bf16.mxu0 %v2052
  %4866 = vmatpush1.bf16.msra.mxu0 %v2051
  %4867 = vmatprep.subr.bf16.mxu0 %v2064
  %4868 = vmatpush1.bf16.msra.mxu0 %v2063
  %4869 = vmatprep.subr.bf16.mxu0 %v2076
  %4870 = vmatpush1.bf16.msra.mxu0 %v2075
  %4871 = vmatprep.subr.bf16.mxu0 %v2088
  %4872 = vmatpush1.bf16.msra.mxu0 %v2087
  %4873 = vmatprep.mubr.bf16.mxu0 %v4712
  %4874 = vmatmul.mubr.bf16.gmra.mrb[0].mxu0 %v4711
  %v4875 = vpop.f32.mrb[0].mxu0
  %v4876 = vadd.f32 %v4835, %v4875
  %v4877 = vpop.f32.mrb[0].mxu0
  %v4878 = vadd.f32 %v4837, %v4877
  %v4879 = vpop.f32.mrb[0].mxu0
  %v4880 = vpop.f32.mrb[0].mxu0
  %4881 = vdwg.mxu0
  %4882 = vmatprep.subr.bf16.mxu0 %v1718
  %4883 = vmatpush1.bf16.msra.mxu0 %v1717
  %4884 = vmatprep.subr.bf16.mxu0 %v1730
  %4885 = vmatpush1.bf16.msra.mxu0 %v1729
  %4886 = vmatprep.subr.bf16.mxu0 %v1742
  %4887 = vmatpush1.bf16.msra.mxu0 %v1741
  %4888 = vmatprep.subr.bf16.mxu0 %v1754
  %4889 = vmatpush1.bf16.msra.mxu0 %v1753
  %4890 = vmatprep.subr.bf16.mxu0 %v1766
  %4891 = vmatpush1.bf16.msra.mxu0 %v1765
  %4892 = vmatprep.subr.bf16.mxu0 %v1778
  %4893 = vmatpush1.bf16.msra.mxu0 %v1777
  %4894 = vmatprep.subr.bf16.mxu0 %v1790
  %4895 = vmatpush1.bf16.msra.mxu0 %v1789
  %4896 = vmatprep.subr.bf16.mxu0 %v1802
  %4897 = vmatpush1.bf16.msra.mxu0 %v1801
  %4898 = vmatprep.subr.bf16.mxu0 %v1814
  %4899 = vmatpush1.bf16.msra.mxu0 %v1813
  %4900 = vmatprep.subr.bf16.mxu0 %v1826
  %4901 = vmatpush1.bf16.msra.mxu0 %v1825
  %4902 = vmatprep.subr.bf16.mxu0 %v1838
  %4903 = vmatpush1.bf16.msra.mxu0 %v1837
  %4904 = vmatprep.subr.bf16.mxu0 %v1850
  %4905 = vmatpush1.bf16.msra.mxu0 %v1849
  %4906 = vmatprep.subr.bf16.mxu0 %v1862
  %4907 = vmatpush1.bf16.msra.mxu0 %v1861
  %4908 = vmatprep.subr.bf16.mxu0 %v1874
  %4909 = vmatpush1.bf16.msra.mxu0 %v1873
  %4910 = vmatprep.subr.bf16.mxu0 %v1886
  %4911 = vmatpush1.bf16.msra.mxu0 %v1885
  %4912 = vmatprep.subr.bf16.mxu0 %v1898
  %4913 = vmatpush1.bf16.msra.mxu0 %v1897
  %4914 = vmatprep.mubr.bf16.mxu0 %v4710
  %4915 = vmatmul.mubr.bf16.gmra.mrb[0].mxu0 %v4709
  %v4916 = vpop.f32.mrb[0].mxu0
  %v4917 = vadd.f32 0.0, %v4916
  %v4918 = vpop.f32.mrb[0].mxu0
  %v4919 = vadd.f32 0.0, %v4918
  %v4920 = vpop.f32.mrb[0].mxu0
  %v4921 = vpop.f32.mrb[0].mxu0
  %4922 = vdwg.mxu0
  %4923 = vmatprep.subr.bf16.mxu0 %v1910
  %4924 = vmatpush1.bf16.msra.mxu0 %v1909
  %4925 = vmatprep.subr.bf16.mxu0 %v1922
  %4926 = vmatpush1.bf16.msra.mxu0 %v1921
  %4927 = vmatprep.subr.bf16.mxu0 %v1934
  %4928 = vmatpush1.bf16.msra.mxu0 %v1933
  %4929 = vmatprep.subr.bf16.mxu0 %v1946
  %4930 = vmatpush1.bf16.msra.mxu0 %v1945
  %4931 = vmatprep.subr.bf16.mxu0 %v1958
  %4932 = vmatpush1.bf16.msra.mxu0 %v1957
  %4933 = vmatprep.subr.bf16.mxu0 %v1970
  %4934 = vmatpush1.bf16.msra.mxu0 %v1969
  %4935 = vmatprep.subr.bf16.mxu0 %v1982
  %4936 = vmatpush1.bf16.msra.mxu0 %v1981
  %4937 = vmatprep.subr.bf16.mxu0 %v1994
  %4938 = vmatpush1.bf16.msra.mxu0 %v1993
  %4939 = vmatprep.subr.bf16.mxu0 %v2006
  %4940 = vmatpush1.bf16.msra.mxu0 %v2005
  %4941 = vmatprep.subr.bf16.mxu0 %v2018
  %4942 = vmatpush1.bf16.msra.mxu0 %v2017
  %4943 = vmatprep.subr.bf16.mxu0 %v2030
  %4944 = vmatpush1.bf16.msra.mxu0 %v2029
  %4945 = vmatprep.subr.bf16.mxu0 %v2042
  %4946 = vmatpush1.bf16.msra.mxu0 %v2041
  %4947 = vmatprep.subr.bf16.mxu0 %v2054
  %4948 = vmatpush1.bf16.msra.mxu0 %v2053
  %4949 = vmatprep.subr.bf16.mxu0 %v2066
  %4950 = vmatpush1.bf16.msra.mxu0 %v2065
  %4951 = vmatprep.subr.bf16.mxu0 %v2078
  %4952 = vmatpush1.bf16.msra.mxu0 %v2077
  %4953 = vmatprep.subr.bf16.mxu0 %v2090
  %4954 = vmatpush1.bf16.msra.mxu0 %v2089
  %4955 = vmatprep.mubr.bf16.mxu0 %v4712
  %4956 = vmatmul.mubr.bf16.gmra.mrb[0].mxu0 %v4711
  %v4957 = vpop.f32.mrb[0].mxu0
  %v4958 = vadd.f32 %v4917, %v4957
  %v4959 = vpop.f32.mrb[0].mxu0
  %v4960 = vadd.f32 %v4919, %v4959
  %v4961 = vpop.f32.mrb[0].mxu0
  %v4962 = vpop.f32.mrb[0].mxu0
  %4963 = vdwg.mxu0
  %4964 = vmatprep.subr.bf16.mxu0 %v1720
  %4965 = vmatpush1.bf16.msra.mxu0 %v1719
  %4966 = vmatprep.subr.bf16.mxu0 %v1732
  %4967 = vmatpush1.bf16.msra.mxu0 %v1731
  %4968 = vmatprep.subr.bf16.mxu0 %v1744
  %4969 = vmatpush1.bf16.msra.mxu0 %v1743
  %4970 = vmatprep.subr.bf16.mxu0 %v1756
  %4971 = vmatpush1.bf16.msra.mxu0 %v1755
  %4972 = vmatprep.subr.bf16.mxu0 %v1768
  %4973 = vmatpush1.bf16.msra.mxu0 %v1767
  %4974 = vmatprep.subr.bf16.mxu0 %v1780
  %4975 = vmatpush1.bf16.msra.mxu0 %v1779
  %4976 = vmatprep.subr.bf16.mxu0 %v1792
  %4977 = vmatpush1.bf16.msra.mxu0 %v1791
  %4978 = vmatprep.subr.bf16.mxu0 %v1804
  %4979 = vmatpush1.bf16.msra.mxu0 %v1803
  %4980 = vmatprep.subr.bf16.mxu0 %v1816
  %4981 = vmatpush1.bf16.msra.mxu0 %v1815
  %4982 = vmatprep.subr.bf16.mxu0 %v1828
  %4983 = vmatpush1.bf16.msra.mxu0 %v1827
  %4984 = vmatprep.subr.bf16.mxu0 %v1840
  %4985 = vmatpush1.bf16.msra.mxu0 %v1839
  %4986 = vmatprep.subr.bf16.mxu0 %v1852
  %4987 = vmatpush1.bf16.msra.mxu0 %v1851
  %4988 = vmatprep.subr.bf16.mxu0 %v1864
  %4989 = vmatpush1.bf16.msra.mxu0 %v1863
  %4990 = vmatprep.subr.bf16.mxu0 %v1876
  %4991 = vmatpush1.bf16.msra.mxu0 %v1875
  %4992 = vmatprep.subr.bf16.mxu0 %v1888
  %4993 = vmatpush1.bf16.msra.mxu0 %v1887
  %4994 = vmatprep.subr.bf16.mxu0 %v1900
  %4995 = vmatpush1.bf16.msra.mxu0 %v1899
  %4996 = vmatprep.mubr.bf16.mxu0 %v4710
  %4997 = vmatmul.mubr.bf16.gmra.mrb[0].mxu0 %v4709
  %v4998 = vpop.f32.mrb[0].mxu0
  %v4999 = vadd.f32 0.0, %v4998
  %v5000 = vpop.f32.mrb[0].mxu0
  %v5001 = vadd.f32 0.0, %v5000
  %v5002 = vpop.f32.mrb[0].mxu0
  %v5003 = vpop.f32.mrb[0].mxu0
  %5004 = vdwg.mxu0
  %5005 = vmatprep.subr.bf16.mxu0 %v1912
  %5006 = vmatpush1.bf16.msra.mxu0 %v1911
  %5007 = vmatprep.subr.bf16.mxu0 %v1924
  %5008 = vmatpush1.bf16.msra.mxu0 %v1923
  %5009 = vmatprep.subr.bf16.mxu0 %v1936
  %5010 = vmatpush1.bf16.msra.mxu0 %v1935
  %5011 = vmatprep.subr.bf16.mxu0 %v1948
  %5012 = vmatpush1.bf16.msra.mxu0 %v1947
  %5013 = vmatprep.subr.bf16.mxu0 %v1960
  %5014 = vmatpush1.bf16.msra.mxu0 %v1959
  %5015 = vmatprep.subr.bf16.mxu0 %v1972
  %5016 = vmatpush1.bf16.msra.mxu0 %v1971
  %5017 = vmatprep.subr.bf16.mxu0 %v1984
  %5018 = vmatpush1.bf16.msra.mxu0 %v1983
  %5019 = vmatprep.subr.bf16.mxu0 %v1996
  %5020 = vmatpush1.bf16.msra.mxu0 %v1995
  %5021 = vmatprep.subr.bf16.mxu0 %v2008
  %5022 = vmatpush1.bf16.msra.mxu0 %v2007
  %5023 = vmatprep.subr.bf16.mxu0 %v2020
  %5024 = vmatpush1.bf16.msra.mxu0 %v2019
  %5025 = vmatprep.subr.bf16.mxu0 %v2032
  %5026 = vmatpush1.bf16.msra.mxu0 %v2031
  %5027 = vmatprep.subr.bf16.mxu0 %v2044
  %5028 = vmatpush1.bf16.msra.mxu0 %v2043
  %5029 = vmatprep.subr.bf16.mxu0 %v2056
  %5030 = vmatpush1.bf16.msra.mxu0 %v2055
  %5031 = vmatprep.subr.bf16.mxu0 %v2068
  %5032 = vmatpush1.bf16.msra.mxu0 %v2067
  %5033 = vmatprep.subr.bf16.mxu0 %v2080
  %5034 = vmatpush1.bf16.msra.mxu0 %v2079
  %5035 = vmatprep.subr.bf16.mxu0 %v2092
  %5036 = vmatpush1.bf16.msra.mxu0 %v2091
  %5037 = vmatprep.mubr.bf16.mxu0 %v4712
  %5038 = vmatmul.mubr.bf16.gmra.mrb[0].mxu0 %v4711
  %v5039 = vpop.f32.mrb[0].mxu0
  %v5040 = vadd.f32 %v4999, %v5039
  %v5041 = vpop.f32.mrb[0].mxu0
  %v5042 = vadd.f32 %v5001, %v5041
  %v5043 = vpop.f32.mrb[0].mxu0
  %v5044 = vpop.f32.mrb[0].mxu0
  %5045 = vdwg.mxu0
  %5046 = vmatprep.subr.bf16.mxu0 %v1722
  %5047 = vmatpush1.bf16.msra.mxu0 %v1721
  %5048 = vmatprep.subr.bf16.mxu0 %v1734
  %5049 = vmatpush1.bf16.msra.mxu0 %v1733
  %5050 = vmatprep.subr.bf16.mxu0 %v1746
  %5051 = vmatpush1.bf16.msra.mxu0 %v1745
  %5052 = vmatprep.subr.bf16.mxu0 %v1758
  %5053 = vmatpush1.bf16.msra.mxu0 %v1757
  %5054 = vmatprep.subr.bf16.mxu0 %v1770
  %5055 = vmatpush1.bf16.msra.mxu0 %v1769
  %5056 = vmatprep.subr.bf16.mxu0 %v1782
  %5057 = vmatpush1.bf16.msra.mxu0 %v1781
  %5058 = vmatprep.subr.bf16.mxu0 %v1794
  %5059 = vmatpush1.bf16.msra.mxu0 %v1793
  %5060 = vmatprep.subr.bf16.mxu0 %v1806
  %5061 = vmatpush1.bf16.msra.mxu0 %v1805
  %5062 = vmatprep.subr.bf16.mxu0 %v1818
  %5063 = vmatpush1.bf16.msra.mxu0 %v1817
  %5064 = vmatprep.subr.bf16.mxu0 %v1830
  %5065 = vmatpush1.bf16.msra.mxu0 %v1829
  %5066 = vmatprep.subr.bf16.mxu0 %v1842
  %5067 = vmatpush1.bf16.msra.mxu0 %v1841
  %5068 = vmatprep.subr.bf16.mxu0 %v1854
  %5069 = vmatpush1.bf16.msra.mxu0 %v1853
  %5070 = vmatprep.subr.bf16.mxu0 %v1866
  %5071 = vmatpush1.bf16.msra.mxu0 %v1865
  %5072 = vmatprep.subr.bf16.mxu0 %v1878
  %5073 = vmatpush1.bf16.msra.mxu0 %v1877
  %5074 = vmatprep.subr.bf16.mxu0 %v1890
  %5075 = vmatpush1.bf16.msra.mxu0 %v1889
  %5076 = vmatprep.subr.bf16.mxu0 %v1902
  %5077 = vmatpush1.bf16.msra.mxu0 %v1901
  %5078 = vmatprep.mubr.bf16.mxu0 %v4710
  %5079 = vmatmul.mubr.bf16.gmra.mrb[0].mxu0 %v4709
  %v5080 = vpop.f32.mrb[0].mxu0
  %v5081 = vadd.f32 0.0, %v5080
  %v5082 = vpop.f32.mrb[0].mxu0
  %v5083 = vadd.f32 0.0, %v5082
  %v5084 = vpop.f32.mrb[0].mxu0
  %v5085 = vpop.f32.mrb[0].mxu0
  %5086 = vdwg.mxu0
  %5087 = vmatprep.subr.bf16.mxu0 %v1914
  %5088 = vmatpush1.bf16.msra.mxu0 %v1913
  %5089 = vmatprep.subr.bf16.mxu0 %v1926
  %5090 = vmatpush1.bf16.msra.mxu0 %v1925
  %5091 = vmatprep.subr.bf16.mxu0 %v1938
  %5092 = vmatpush1.bf16.msra.mxu0 %v1937
  %5093 = vmatprep.subr.bf16.mxu0 %v1950
  %5094 = vmatpush1.bf16.msra.mxu0 %v1949
  %5095 = vmatprep.subr.bf16.mxu0 %v1962
  %5096 = vmatpush1.bf16.msra.mxu0 %v1961
  %5097 = vmatprep.subr.bf16.mxu0 %v1974
  %5098 = vmatpush1.bf16.msra.mxu0 %v1973
  %5099 = vmatprep.subr.bf16.mxu0 %v1986
  %5100 = vmatpush1.bf16.msra.mxu0 %v1985
  %5101 = vmatprep.subr.bf16.mxu0 %v1998
  %5102 = vmatpush1.bf16.msra.mxu0 %v1997
  %5103 = vmatprep.subr.bf16.mxu0 %v2010
  %5104 = vmatpush1.bf16.msra.mxu0 %v2009
  %5105 = vmatprep.subr.bf16.mxu0 %v2022
  %5106 = vmatpush1.bf16.msra.mxu0 %v2021
  %5107 = vmatprep.subr.bf16.mxu0 %v2034
  %5108 = vmatpush1.bf16.msra.mxu0 %v2033
  %5109 = vmatprep.subr.bf16.mxu0 %v2046
  %5110 = vmatpush1.bf16.msra.mxu0 %v2045
  %5111 = vmatprep.subr.bf16.mxu0 %v2058
  %5112 = vmatpush1.bf16.msra.mxu0 %v2057
  %5113 = vmatprep.subr.bf16.mxu0 %v2070
  %5114 = vmatpush1.bf16.msra.mxu0 %v2069
  %5115 = vmatprep.subr.bf16.mxu0 %v2082
  %5116 = vmatpush1.bf16.msra.mxu0 %v2081
  %5117 = vmatprep.subr.bf16.mxu0 %v2094
  %5118 = vmatpush1.bf16.msra.mxu0 %v2093
  %5119 = vmatprep.mubr.bf16.mxu0 %v4712
  %5120 = vmatmul.mubr.bf16.gmra.mrb[0].mxu0 %v4711
  %v5121 = vpop.f32.mrb[0].mxu0
  %v5122 = vadd.f32 %v5081, %v5121
  %v5123 = vpop.f32.mrb[0].mxu0
  %v5124 = vadd.f32 %v5083, %v5123
  %v5125 = vpop.f32.mrb[0].mxu0
  %v5126 = vpop.f32.mrb[0].mxu0
  %5127 = vdwg.mxu0
  %5128 = vmatprep.subr.bf16.mxu0 %v1724
  %5129 = vmatpush1.bf16.msra.mxu0 %v1723
  %5130 = vmatprep.subr.bf16.mxu0 %v1736
  %5131 = vmatpush1.bf16.msra.mxu0 %v1735
  %5132 = vmatprep.subr.bf16.mxu0 %v1748
  %5133 = vmatpush1.bf16.msra.mxu0 %v1747
  %5134 = vmatprep.subr.bf16.mxu0 %v1760
  %5135 = vmatpush1.bf16.msra.mxu0 %v1759
  %5136 = vmatprep.subr.bf16.mxu0 %v1772
  %5137 = vmatpush1.bf16.msra.mxu0 %v1771
  %5138 = vmatprep.subr.bf16.mxu0 %v1784
  %5139 = vmatpush1.bf16.msra.mxu0 %v1783
  %5140 = vmatprep.subr.bf16.mxu0 %v1796
  %5141 = vmatpush1.bf16.msra.mxu0 %v1795
  %5142 = vmatprep.subr.bf16.mxu0 %v1808
  %5143 = vmatpush1.bf16.msra.mxu0 %v1807
  %5144 = vmatprep.subr.bf16.mxu0 %v1820
  %5145 = vmatpush1.bf16.msra.mxu0 %v1819
  %5146 = vmatprep.subr.bf16.mxu0 %v1832
  %5147 = vmatpush1.bf16.msra.mxu0 %v1831
  %5148 = vmatprep.subr.bf16.mxu0 %v1844
  %5149 = vmatpush1.bf16.msra.mxu0 %v1843
  %5150 = vmatprep.subr.bf16.mxu0 %v1856
  %5151 = vmatpush1.bf16.msra.mxu0 %v1855
  %5152 = vmatprep.subr.bf16.mxu0 %v1868
  %5153 = vmatpush1.bf16.msra.mxu0 %v1867
  %5154 = vmatprep.subr.bf16.mxu0 %v1880
  %5155 = vmatpush1.bf16.msra.mxu0 %v1879
  %5156 = vmatprep.subr.bf16.mxu0 %v1892
  %5157 = vmatpush1.bf16.msra.mxu0 %v1891
  %5158 = vmatprep.subr.bf16.mxu0 %v1904
  %5159 = vmatpush1.bf16.msra.mxu0 %v1903
  %5160 = vmatprep.mubr.bf16.mxu0 %v4710
  %5161 = vmatmul.mubr.bf16.gmra.mrb[0].mxu0 %v4709
  %v5162 = vpop.f32.mrb[0].mxu0
  %v5163 = vadd.f32 0.0, %v5162
  %v5164 = vpop.f32.mrb[0].mxu0
  %v5165 = vadd.f32 0.0, %v5164
  %v5166 = vpop.f32.mrb[0].mxu0
  %v5167 = vpop.f32.mrb[0].mxu0
  %5168 = vdwg.mxu0
  %5169 = vmatprep.subr.bf16.mxu0 %v1916
  %5170 = vmatpush1.bf16.msra.mxu0 %v1915
  %5171 = vmatprep.subr.bf16.mxu0 %v1928
  %5172 = vmatpush1.bf16.msra.mxu0 %v1927
  %5173 = vmatprep.subr.bf16.mxu0 %v1940
  %5174 = vmatpush1.bf16.msra.mxu0 %v1939
  %5175 = vmatprep.subr.bf16.mxu0 %v1952
  %5176 = vmatpush1.bf16.msra.mxu0 %v1951
  %5177 = vmatprep.subr.bf16.mxu0 %v1964
  %5178 = vmatpush1.bf16.msra.mxu0 %v1963
  %5179 = vmatprep.subr.bf16.mxu0 %v1976
  %5180 = vmatpush1.bf16.msra.mxu0 %v1975
  %5181 = vmatprep.subr.bf16.mxu0 %v1988
  %5182 = vmatpush1.bf16.msra.mxu0 %v1987
  %5183 = vmatprep.subr.bf16.mxu0 %v2000
  %5184 = vmatpush1.bf16.msra.mxu0 %v1999
  %5185 = vmatprep.subr.bf16.mxu0 %v2012
  %5186 = vmatpush1.bf16.msra.mxu0 %v2011
  %5187 = vmatprep.subr.bf16.mxu0 %v2024
  %5188 = vmatpush1.bf16.msra.mxu0 %v2023
  %5189 = vmatprep.subr.bf16.mxu0 %v2036
  %5190 = vmatpush1.bf16.msra.mxu0 %v2035
  %5191 = vmatprep.subr.bf16.mxu0 %v2048
  %5192 = vmatpush1.bf16.msra.mxu0 %v2047
  %5193 = vmatprep.subr.bf16.mxu0 %v2060
  %5194 = vmatpush1.bf16.msra.mxu0 %v2059
  %5195 = vmatprep.subr.bf16.mxu0 %v2072
  %5196 = vmatpush1.bf16.msra.mxu0 %v2071
  %5197 = vmatprep.subr.bf16.mxu0 %v2084
  %5198 = vmatpush1.bf16.msra.mxu0 %v2083
  %5199 = vmatprep.subr.bf16.mxu0 %v2096
  %5200 = vmatpush1.bf16.msra.mxu0 %v2095
  %5201 = vmatprep.mubr.bf16.mxu0 %v4712
  %5202 = vmatmul.mubr.bf16.gmra.mrb[0].mxu0 %v4711
  %v5203 = vpop.f32.mrb[0].mxu0
  %v5204 = vadd.f32 %v5163, %v5203
  %v5205 = vpop.f32.mrb[0].mxu0
  %v5206 = vadd.f32 %v5165, %v5205
  %v5207 = vpop.f32.mrb[0].mxu0
  %v5208 = vpop.f32.mrb[0].mxu0
  %5209 = vdwg.mxu0
  %v5222 = vcombine.low %v4794, %v4796
  %v5223 = vcombine.low %v4876, %v4878
  %v5225 = vunpack.c.l.s4 1983009808
  %v5226 = vunpack.c.0.s8 %v5225
  %v5227 = vlaneseq
  %v5228 = vshrl.u32 %v5227, 7
  %v5229 = vsub.s32 %v5226, %v5228
  %v5230 = vrot.slane %v5222, %v5229
  %v5232 = vunpack.c.l.s4 1983009808
  %v5233 = vunpack.c.0.s8 %v5232
  %v5234 = vlaneseq
  %v5235 = vshrl.u32 %v5234, 7
  %v5236 = vsub.s32 %v5233, %v5235
  %v5237 = vrot.slane %v5223, %v5236
  %v5238 = vcombine.low %v5230, %v5237
  %v5239 = vcombine.low %v4958, %v4960
  %v5240 = vcombine.low %v5040, %v5042
  %v5242 = vunpack.c.l.s4 1983009808
  %v5243 = vunpack.c.0.s8 %v5242
  %v5244 = vlaneseq
  %v5245 = vshrl.u32 %v5244, 7
  %v5246 = vsub.s32 %v5243, %v5245
  %v5247 = vrot.slane %v5239, %v5246
  %v5249 = vunpack.c.l.s4 1983009808
  %v5250 = vunpack.c.0.s8 %v5249
  %v5251 = vlaneseq
  %v5252 = vshrl.u32 %v5251, 7
  %v5253 = vsub.s32 %v5250, %v5252
  %v5254 = vrot.slane %v5240, %v5253
  %v5255 = vcombine.low %v5247, %v5254
  %v5256 = vcombine.low %v5122, %v5124
  %v5257 = vcombine.low %v5204, %v5206
  %v5259 = vunpack.c.l.s4 1983009808
  %v5260 = vunpack.c.0.s8 %v5259
  %v5261 = vlaneseq
  %v5262 = vshrl.u32 %v5261, 7
  %v5263 = vsub.s32 %v5260, %v5262
  %v5264 = vrot.slane %v5256, %v5263
  %v5266 = vunpack.c.l.s4 1983009808
  %v5267 = vunpack.c.0.s8 %v5266
  %v5268 = vlaneseq
  %v5269 = vshrl.u32 %v5268, 7
  %v5270 = vsub.s32 %v5267, %v5269
  %v5271 = vrot.slane %v5257, %v5270
  %v5272 = vcombine.low %v5264, %v5271
  %v5276 = vadd.f32 %v4714, %v5238
  %v5277 = vadd.f32 %v4715, %v5255
  %v5278 = vadd.f32 %v4716, %v5272
  %5279 = vmatprep.subr.bf16.mxu0 %v3427
  %5280 = vmatpush1.bf16.msra.mxu0 %v3426
  %5281 = vmatprep.subr.bf16.mxu0 %v3431
  %5282 = vmatpush1.bf16.msra.mxu0 %v3430
  %5283 = vmatprep.subr.bf16.mxu0 %v3435
  %5284 = vmatpush1.bf16.msra.mxu0 %v3434
  %5285 = vmatprep.subr.bf16.mxu0 %v3439
  %5286 = vmatpush1.bf16.msra.mxu0 %v3438
  %5287 = vmatprep.subr.bf16.mxu0 %v3443
  %5288 = vmatpush1.bf16.msra.mxu0 %v3442
  %5289 = vmatprep.subr.bf16.mxu0 %v3447
  %5290 = vmatpush1.bf16.msra.mxu0 %v3446
  %5291 = vmatprep.subr.bf16.mxu0 %v3451
  %5292 = vmatpush1.bf16.msra.mxu0 %v3450
  %5293 = vmatprep.subr.bf16.mxu0 %v3455
  %5294 = vmatpush1.bf16.msra.mxu0 %v3454
  %5295 = vmatprep.subr.bf16.mxu0 %v3459
  %5296 = vmatpush1.bf16.msra.mxu0 %v3458
  %5297 = vmatprep.subr.bf16.mxu0 %v3463
  %5298 = vmatpush1.bf16.msra.mxu0 %v3462
  %5299 = vmatprep.subr.bf16.mxu0 %v3467
  %5300 = vmatpush1.bf16.msra.mxu0 %v3466
  %5301 = vmatprep.subr.bf16.mxu0 %v3471
  %5302 = vmatpush1.bf16.msra.mxu0 %v3470
  %5303 = vmatprep.subr.bf16.mxu0 %v3475
  %5304 = vmatpush1.bf16.msra.mxu0 %v3474
  %5305 = vmatprep.subr.bf16.mxu0 %v3479
  %5306 = vmatpush1.bf16.msra.mxu0 %v3478
  %5307 = vmatprep.subr.bf16.mxu0 %v3483
  %5308 = vmatpush1.bf16.msra.mxu0 %v3482
  %5309 = vmatprep.subr.bf16.mxu0 %v3487
  %5310 = vmatpush1.bf16.msra.mxu0 %v3486
  %5311 = vmatprep.mubr.bf16.mxu0 %v4710
  %5312 = vmatmul.mubr.bf16.gmra.mrb[0].mxu0 %v4709
  %v5313 = vpop.f32.mrb[0].mxu0
  %v5314 = vadd.f32 0.0, %v5313
  %v5315 = vpop.f32.mrb[0].mxu0
  %v5316 = vadd.f32 0.0, %v5315
  %v5317 = vpop.f32.mrb[0].mxu0
  %v5318 = vpop.f32.mrb[0].mxu0
  %5319 = vdwg.mxu0
  %5320 = vmatprep.subr.bf16.mxu0 %v3491
  %5321 = vmatpush1.bf16.msra.mxu0 %v3490
  %5322 = vmatprep.subr.bf16.mxu0 %v3495
  %5323 = vmatpush1.bf16.msra.mxu0 %v3494
  %5324 = vmatprep.subr.bf16.mxu0 %v3499
  %5325 = vmatpush1.bf16.msra.mxu0 %v3498
  %5326 = vmatprep.subr.bf16.mxu0 %v3503
  %5327 = vmatpush1.bf16.msra.mxu0 %v3502
  %5328 = vmatprep.subr.bf16.mxu0 %v3507
  %5329 = vmatpush1.bf16.msra.mxu0 %v3506
  %5330 = vmatprep.subr.bf16.mxu0 %v3511
  %5331 = vmatpush1.bf16.msra.mxu0 %v3510
  %5332 = vmatprep.subr.bf16.mxu0 %v3515
  %5333 = vmatpush1.bf16.msra.mxu0 %v3514
  %5334 = vmatprep.subr.bf16.mxu0 %v3519
  %5335 = vmatpush1.bf16.msra.mxu0 %v3518
  %5336 = vmatprep.subr.bf16.mxu0 %v3523
  %5337 = vmatpush1.bf16.msra.mxu0 %v3522
  %5338 = vmatprep.subr.bf16.mxu0 %v3527
  %5339 = vmatpush1.bf16.msra.mxu0 %v3526
  %5340 = vmatprep.subr.bf16.mxu0 %v3531
  %5341 = vmatpush1.bf16.msra.mxu0 %v3530
  %5342 = vmatprep.subr.bf16.mxu0 %v3535
  %5343 = vmatpush1.bf16.msra.mxu0 %v3534
  %5344 = vmatprep.subr.bf16.mxu0 %v3539
  %5345 = vmatpush1.bf16.msra.mxu0 %v3538
  %5346 = vmatprep.subr.bf16.mxu0 %v3543
  %5347 = vmatpush1.bf16.msra.mxu0 %v3542
  %5348 = vmatprep.subr.bf16.mxu0 %v3547
  %5349 = vmatpush1.bf16.msra.mxu0 %v3546
  %5350 = vmatprep.subr.bf16.mxu0 %v3551
  %5351 = vmatpush1.bf16.msra.mxu0 %v3550
  %5352 = vmatprep.mubr.bf16.mxu0 %v4712
  %5353 = vmatmul.mubr.bf16.gmra.mrb[0].mxu0 %v4711
  %v5354 = vpop.f32.mrb[0].mxu0
  %v5355 = vadd.f32 %v5314, %v5354
  %v5356 = vpop.f32.mrb[0].mxu0
  %v5357 = vadd.f32 %v5316, %v5356
  %v5358 = vpop.f32.mrb[0].mxu0
  %v5359 = vpop.f32.mrb[0].mxu0
  %5360 = vdwg.mxu0
  %5361 = vmatprep.subr.bf16.mxu0 %v3429
  %5362 = vmatpush1.bf16.msra.mxu0 %v3428
  %5363 = vmatprep.subr.bf16.mxu0 %v3433
  %5364 = vmatpush1.bf16.msra.mxu0 %v3432
  %5365 = vmatprep.subr.bf16.mxu0 %v3437
  %5366 = vmatpush1.bf16.msra.mxu0 %v3436
  %5367 = vmatprep.subr.bf16.mxu0 %v3441
  %5368 = vmatpush1.bf16.msra.mxu0 %v3440
  %5369 = vmatprep.subr.bf16.mxu0 %v3445
  %5370 = vmatpush1.bf16.msra.mxu0 %v3444
  %5371 = vmatprep.subr.bf16.mxu0 %v3449
  %5372 = vmatpush1.bf16.msra.mxu0 %v3448
  %5373 = vmatprep.subr.bf16.mxu0 %v3453
  %5374 = vmatpush1.bf16.msra.mxu0 %v3452
  %5375 = vmatprep.subr.bf16.mxu0 %v3457
  %5376 = vmatpush1.bf16.msra.mxu0 %v3456
  %5377 = vmatprep.subr.bf16.mxu0 %v3461
  %5378 = vmatpush1.bf16.msra.mxu0 %v3460
  %5379 = vmatprep.subr.bf16.mxu0 %v3465
  %5380 = vmatpush1.bf16.msra.mxu0 %v3464
  %5381 = vmatprep.subr.bf16.mxu0 %v3469
  %5382 = vmatpush1.bf16.msra.mxu0 %v3468
  %5383 = vmatprep.subr.bf16.mxu0 %v3473
  %5384 = vmatpush1.bf16.msra.mxu0 %v3472
  %5385 = vmatprep.subr.bf16.mxu0 %v3477
  %5386 = vmatpush1.bf16.msra.mxu0 %v3476
  %5387 = vmatprep.subr.bf16.mxu0 %v3481
  %5388 = vmatpush1.bf16.msra.mxu0 %v3480
  %5389 = vmatprep.subr.bf16.mxu0 %v3485
  %5390 = vmatpush1.bf16.msra.mxu0 %v3484
  %5391 = vmatprep.subr.bf16.mxu0 %v3489
  %5392 = vmatpush1.bf16.msra.mxu0 %v3488
  %5393 = vmatprep.mubr.bf16.mxu0 %v4710
  %5394 = vmatmul.mubr.bf16.gmra.mrb[0].mxu0 %v4709
  %v5395 = vpop.f32.mrb[0].mxu0
  %v5396 = vadd.f32 0.0, %v5395
  %v5397 = vpop.f32.mrb[0].mxu0
  %v5398 = vadd.f32 0.0, %v5397
  %v5399 = vpop.f32.mrb[0].mxu0
  %v5400 = vpop.f32.mrb[0].mxu0
  %5401 = vdwg.mxu0
  %5402 = vmatprep.subr.bf16.mxu0 %v3493
  %5403 = vmatpush1.bf16.msra.mxu0 %v3492
  %5404 = vmatprep.subr.bf16.mxu0 %v3497
  %5405 = vmatpush1.bf16.msra.mxu0 %v3496
  %5406 = vmatprep.subr.bf16.mxu0 %v3501
  %5407 = vmatpush1.bf16.msra.mxu0 %v3500
  %5408 = vmatprep.subr.bf16.mxu0 %v3505
  %5409 = vmatpush1.bf16.msra.mxu0 %v3504
  %5410 = vmatprep.subr.bf16.mxu0 %v3509
  %5411 = vmatpush1.bf16.msra.mxu0 %v3508
  %5412 = vmatprep.subr.bf16.mxu0 %v3513
  %5413 = vmatpush1.bf16.msra.mxu0 %v3512
  %5414 = vmatprep.subr.bf16.mxu0 %v3517
  %5415 = vmatpush1.bf16.msra.mxu0 %v3516
  %5416 = vmatprep.subr.bf16.mxu0 %v3521
  %5417 = vmatpush1.bf16.msra.mxu0 %v3520
  %5418 = vmatprep.subr.bf16.mxu0 %v3525
  %5419 = vmatpush1.bf16.msra.mxu0 %v3524
  %5420 = vmatprep.subr.bf16.mxu0 %v3529
  %5421 = vmatpush1.bf16.msra.mxu0 %v3528
  %5422 = vmatprep.subr.bf16.mxu0 %v3533
  %5423 = vmatpush1.bf16.msra.mxu0 %v3532
  %5424 = vmatprep.subr.bf16.mxu0 %v3537
  %5425 = vmatpush1.bf16.msra.mxu0 %v3536
  %5426 = vmatprep.subr.bf16.mxu0 %v3541
  %5427 = vmatpush1.bf16.msra.mxu0 %v3540
  %5428 = vmatprep.subr.bf16.mxu0 %v3545
  %5429 = vmatpush1.bf16.msra.mxu0 %v3544
  %5430 = vmatprep.subr.bf16.mxu0 %v3549
  %5431 = vmatpush1.bf16.msra.mxu0 %v3548
  %5432 = vmatprep.subr.bf16.mxu0 %v3553
  %5433 = vmatpush1.bf16.msra.mxu0 %v3552
  %5434 = vmatprep.mubr.bf16.mxu0 %v4712
  %5435 = vmatmul.mubr.bf16.gmra.mrb[0].mxu0 %v4711
  %v5436 = vpop.f32.mrb[0].mxu0
  %v5437 = vadd.f32 %v5396, %v5436
  %v5438 = vpop.f32.mrb[0].mxu0
  %v5439 = vadd.f32 %v5398, %v5438
  %v5440 = vpop.f32.mrb[0].mxu0
  %v5441 = vpop.f32.mrb[0].mxu0
  %5442 = vdwg.mxu0
  %v5447 = vcombine.low %v5355, %v5357
  %v5448 = vcombine.low %v5437, %v5439
  %v5450 = vunpack.c.l.s4 1983009808
  %v5451 = vunpack.c.0.s8 %v5450
  %v5452 = vlaneseq
  %v5453 = vshrl.u32 %v5452, 7
  %v5454 = vsub.s32 %v5451, %v5453
  %v5455 = vrot.slane %v5447, %v5454
  %v5457 = vunpack.c.l.s4 1983009808
  %v5458 = vunpack.c.0.s8 %v5457
  %v5459 = vlaneseq
  %v5460 = vshrl.u32 %v5459, 7
  %v5461 = vsub.s32 %v5458, %v5460
  %v5462 = vrot.slane %v5448, %v5461
  %v5463 = vcombine.low %v5455, %v5462
  %v5465 = vadd.f32 %v4717, %v5463
  %v5466 = vmul.f32 %v5276, 0.5
  %v5467 = vtanh.pop %v5466
  %v5468 = vadd.f32 %v5467, 1.0
  %v5469 = vmul.f32 %v5468, 0.5
  %v5470 = vmul.f32 %v5277, 0.5
  %v5471 = vtanh.pop %v5470
  %v5472 = vadd.f32 %v5471, 1.0
  %v5473 = vmul.f32 %v5472, 0.5
  %v5474 = vtanh.pop %v5278
  %v5475 = vmul.f32 %v5473, %v4678
  %v5476 = vmul.f32 %v5469, %v5474
  %v5477 = vadd.f32 %v5475, %v5476
  %v5478 = vmul.f32 %v5465, 0.5
  %v5479 = vtanh.pop %v5478
  %v5480 = vadd.f32 %v5479, 1.0
  %v5481 = vmul.f32 %v5480, 0.5
  %v5482 = vtanh.pop %v5477
  %v5483 = vmul.f32 %v5481, %v5482
  %s5484 = scalar_lea.vmem %s2, 16
  %5485 = vst [vmem:[%s5484] sm:$0xff] %v5483
  %v5487 = vcombine.high %v5483, %v5483
  %v5489 = vunpack.c.l.s4 1983009808
  %v5490 = vunpack.c.0.s8 %v5489
  %v5491 = vlaneseq
  %v5492 = vshrl.u32 %v5491, 7
  %v5493 = vsub.s32 %v5490, %v5492
  %v5494 = vrot.slane %v5483, %v5493
  %v5496 = vunpack.c.l.s4 1983009808
  %v5497 = vunpack.c.0.s8 %v5496
  %v5498 = vlaneseq
  %v5499 = vshrl.u32 %v5498, 7
  %v5500 = vsub.s32 %v5497, %v5499
  %v5501 = vrot.slane %v5487, %v5500
  %v5502 = vcombine.high %v5494, %v5494
  %v5503 = vcombine.high %v5501, %v5501
  %v5508 = vpack.c.bf16 %v5494, %v5494
  %v5509 = vpack.c.bf16 %v5502, %v5502
  %v5510 = vpack.c.bf16 %v5501, %v5501
  %v5511 = vpack.c.bf16 %v5503, %v5503
  %s5512 = scalar_lea.vmem %s0, 96
  %v5513 = vld [vmem:[%s5512] sm:$0xff]
  %v5514 = vld [vmem:[%s5512 + $0x8] sm:$0xff]
  %v5515 = vld [vmem:[%s5512 + $0x10] sm:$0xff]
  %v5516 = vld [vmem:[%s5512 + $0x18] sm:$0xff]
  %5517 = vmatprep.subr.bf16.mxu0 %v1714
  %5518 = vmatpush1.bf16.msra.mxu0 %v1713
  %5519 = vmatprep.subr.bf16.mxu0 %v1726
  %5520 = vmatpush1.bf16.msra.mxu0 %v1725
  %5521 = vmatprep.subr.bf16.mxu0 %v1738
  %5522 = vmatpush1.bf16.msra.mxu0 %v1737
  %5523 = vmatprep.subr.bf16.mxu0 %v1750
  %5524 = vmatpush1.bf16.msra.mxu0 %v1749
  %5525 = vmatprep.subr.bf16.mxu0 %v1762
  %5526 = vmatpush1.bf16.msra.mxu0 %v1761
  %5527 = vmatprep.subr.bf16.mxu0 %v1774
  %5528 = vmatpush1.bf16.msra.mxu0 %v1773
  %5529 = vmatprep.subr.bf16.mxu0 %v1786
  %5530 = vmatpush1.bf16.msra.mxu0 %v1785
  %5531 = vmatprep.subr.bf16.mxu0 %v1798
  %5532 = vmatpush1.bf16.msra.mxu0 %v1797
  %5533 = vmatprep.subr.bf16.mxu0 %v1810
  %5534 = vmatpush1.bf16.msra.mxu0 %v1809
  %5535 = vmatprep.subr.bf16.mxu0 %v1822
  %5536 = vmatpush1.bf16.msra.mxu0 %v1821
  %5537 = vmatprep.subr.bf16.mxu0 %v1834
  %5538 = vmatpush1.bf16.msra.mxu0 %v1833
  %5539 = vmatprep.subr.bf16.mxu0 %v1846
  %5540 = vmatpush1.bf16.msra.mxu0 %v1845
  %5541 = vmatprep.subr.bf16.mxu0 %v1858
  %5542 = vmatpush1.bf16.msra.mxu0 %v1857
  %5543 = vmatprep.subr.bf16.mxu0 %v1870
  %5544 = vmatpush1.bf16.msra.mxu0 %v1869
  %5545 = vmatprep.subr.bf16.mxu0 %v1882
  %5546 = vmatpush1.bf16.msra.mxu0 %v1881
  %5547 = vmatprep.subr.bf16.mxu0 %v1894
  %5548 = vmatpush1.bf16.msra.mxu0 %v1893
  %5549 = vmatprep.mubr.bf16.mxu0 %v5509
  %5550 = vmatmul.mubr.bf16.gmra.mrb[0].mxu0 %v5508
  %v5551 = vpop.f32.mrb[0].mxu0
  %v5552 = vadd.f32 0.0, %v5551
  %v5553 = vpop.f32.mrb[0].mxu0
  %v5554 = vadd.f32 0.0, %v5553
  %v5555 = vpop.f32.mrb[0].mxu0
  %v5556 = vpop.f32.mrb[0].mxu0
  %5557 = vdwg.mxu0
  %5558 = vmatprep.subr.bf16.mxu0 %v1906
  %5559 = vmatpush1.bf16.msra.mxu0 %v1905
  %5560 = vmatprep.subr.bf16.mxu0 %v1918
  %5561 = vmatpush1.bf16.msra.mxu0 %v1917
  %5562 = vmatprep.subr.bf16.mxu0 %v1930
  %5563 = vmatpush1.bf16.msra.mxu0 %v1929
  %5564 = vmatprep.subr.bf16.mxu0 %v1942
  %5565 = vmatpush1.bf16.msra.mxu0 %v1941
  %5566 = vmatprep.subr.bf16.mxu0 %v1954
  %5567 = vmatpush1.bf16.msra.mxu0 %v1953
  %5568 = vmatprep.subr.bf16.mxu0 %v1966
  %5569 = vmatpush1.bf16.msra.mxu0 %v1965
  %5570 = vmatprep.subr.bf16.mxu0 %v1978
  %5571 = vmatpush1.bf16.msra.mxu0 %v1977
  %5572 = vmatprep.subr.bf16.mxu0 %v1990
  %5573 = vmatpush1.bf16.msra.mxu0 %v1989
  %5574 = vmatprep.subr.bf16.mxu0 %v2002
  %5575 = vmatpush1.bf16.msra.mxu0 %v2001
  %5576 = vmatprep.subr.bf16.mxu0 %v2014
  %5577 = vmatpush1.bf16.msra.mxu0 %v2013
  %5578 = vmatprep.subr.bf16.mxu0 %v2026
  %5579 = vmatpush1.bf16.msra.mxu0 %v2025
  %5580 = vmatprep.subr.bf16.mxu0 %v2038
  %5581 = vmatpush1.bf16.msra.mxu0 %v2037
  %5582 = vmatprep.subr.bf16.mxu0 %v2050
  %5583 = vmatpush1.bf16.msra.mxu0 %v2049
  %5584 = vmatprep.subr.bf16.mxu0 %v2062
  %5585 = vmatpush1.bf16.msra.mxu0 %v2061
  %5586 = vmatprep.subr.bf16.mxu0 %v2074
  %5587 = vmatpush1.bf16.msra.mxu0 %v2073
  %5588 = vmatprep.subr.bf16.mxu0 %v2086
  %5589 = vmatpush1.bf16.msra.mxu0 %v2085
  %5590 = vmatprep.mubr.bf16.mxu0 %v5511
  %5591 = vmatmul.mubr.bf16.gmra.mrb[0].mxu0 %v5510
  %v5592 = vpop.f32.mrb[0].mxu0
  %v5593 = vadd.f32 %v5552, %v5592
  %v5594 = vpop.f32.mrb[0].mxu0
  %v5595 = vadd.f32 %v5554, %v5594
  %v5596 = vpop.f32.mrb[0].mxu0
  %v5597 = vpop.f32.mrb[0].mxu0
  %5598 = vdwg.mxu0
  %5599 = vmatprep.subr.bf16.mxu0 %v1716
  %5600 = vmatpush1.bf16.msra.mxu0 %v1715
  %5601 = vmatprep.subr.bf16.mxu0 %v1728
  %5602 = vmatpush1.bf16.msra.mxu0 %v1727
  %5603 = vmatprep.subr.bf16.mxu0 %v1740
  %5604 = vmatpush1.bf16.msra.mxu0 %v1739
  %5605 = vmatprep.subr.bf16.mxu0 %v1752
  %5606 = vmatpush1.bf16.msra.mxu0 %v1751
  %5607 = vmatprep.subr.bf16.mxu0 %v1764
  %5608 = vmatpush1.bf16.msra.mxu0 %v1763
  %5609 = vmatprep.subr.bf16.mxu0 %v1776
  %5610 = vmatpush1.bf16.msra.mxu0 %v1775
  %5611 = vmatprep.subr.bf16.mxu0 %v1788
  %5612 = vmatpush1.bf16.msra.mxu0 %v1787
  %5613 = vmatprep.subr.bf16.mxu0 %v1800
  %5614 = vmatpush1.bf16.msra.mxu0 %v1799
  %5615 = vmatprep.subr.bf16.mxu0 %v1812
  %5616 = vmatpush1.bf16.msra.mxu0 %v1811
  %5617 = vmatprep.subr.bf16.mxu0 %v1824
  %5618 = vmatpush1.bf16.msra.mxu0 %v1823
  %5619 = vmatprep.subr.bf16.mxu0 %v1836
  %5620 = vmatpush1.bf16.msra.mxu0 %v1835
  %5621 = vmatprep.subr.bf16.mxu0 %v1848
  %5622 = vmatpush1.bf16.msra.mxu0 %v1847
  %5623 = vmatprep.subr.bf16.mxu0 %v1860
  %5624 = vmatpush1.bf16.msra.mxu0 %v1859
  %5625 = vmatprep.subr.bf16.mxu0 %v1872
  %5626 = vmatpush1.bf16.msra.mxu0 %v1871
  %5627 = vmatprep.subr.bf16.mxu0 %v1884
  %5628 = vmatpush1.bf16.msra.mxu0 %v1883
  %5629 = vmatprep.subr.bf16.mxu0 %v1896
  %5630 = vmatpush1.bf16.msra.mxu0 %v1895
  %5631 = vmatprep.mubr.bf16.mxu0 %v5509
  %5632 = vmatmul.mubr.bf16.gmra.mrb[0].mxu0 %v5508
  %v5633 = vpop.f32.mrb[0].mxu0
  %v5634 = vadd.f32 0.0, %v5633
  %v5635 = vpop.f32.mrb[0].mxu0
  %v5636 = vadd.f32 0.0, %v5635
  %v5637 = vpop.f32.mrb[0].mxu0
  %v5638 = vpop.f32.mrb[0].mxu0
  %5639 = vdwg.mxu0
  %5640 = vmatprep.subr.bf16.mxu0 %v1908
  %5641 = vmatpush1.bf16.msra.mxu0 %v1907
  %5642 = vmatprep.subr.bf16.mxu0 %v1920
  %5643 = vmatpush1.bf16.msra.mxu0 %v1919
  %5644 = vmatprep.subr.bf16.mxu0 %v1932
  %5645 = vmatpush1.bf16.msra.mxu0 %v1931
  %5646 = vmatprep.subr.bf16.mxu0 %v1944
  %5647 = vmatpush1.bf16.msra.mxu0 %v1943
  %5648 = vmatprep.subr.bf16.mxu0 %v1956
  %5649 = vmatpush1.bf16.msra.mxu0 %v1955
  %5650 = vmatprep.subr.bf16.mxu0 %v1968
  %5651 = vmatpush1.bf16.msra.mxu0 %v1967
  %5652 = vmatprep.subr.bf16.mxu0 %v1980
  %5653 = vmatpush1.bf16.msra.mxu0 %v1979
  %5654 = vmatprep.subr.bf16.mxu0 %v1992
  %5655 = vmatpush1.bf16.msra.mxu0 %v1991
  %5656 = vmatprep.subr.bf16.mxu0 %v2004
  %5657 = vmatpush1.bf16.msra.mxu0 %v2003
  %5658 = vmatprep.subr.bf16.mxu0 %v2016
  %5659 = vmatpush1.bf16.msra.mxu0 %v2015
  %5660 = vmatprep.subr.bf16.mxu0 %v2028
  %5661 = vmatpush1.bf16.msra.mxu0 %v2027
  %5662 = vmatprep.subr.bf16.mxu0 %v2040
  %5663 = vmatpush1.bf16.msra.mxu0 %v2039
  %5664 = vmatprep.subr.bf16.mxu0 %v2052
  %5665 = vmatpush1.bf16.msra.mxu0 %v2051
  %5666 = vmatprep.subr.bf16.mxu0 %v2064
  %5667 = vmatpush1.bf16.msra.mxu0 %v2063
  %5668 = vmatprep.subr.bf16.mxu0 %v2076
  %5669 = vmatpush1.bf16.msra.mxu0 %v2075
  %5670 = vmatprep.subr.bf16.mxu0 %v2088
  %5671 = vmatpush1.bf16.msra.mxu0 %v2087
  %5672 = vmatprep.mubr.bf16.mxu0 %v5511
  %5673 = vmatmul.mubr.bf16.gmra.mrb[0].mxu0 %v5510
  %v5674 = vpop.f32.mrb[0].mxu0
  %v5675 = vadd.f32 %v5634, %v5674
  %v5676 = vpop.f32.mrb[0].mxu0
  %v5677 = vadd.f32 %v5636, %v5676
  %v5678 = vpop.f32.mrb[0].mxu0
  %v5679 = vpop.f32.mrb[0].mxu0
  %5680 = vdwg.mxu0
  %5681 = vmatprep.subr.bf16.mxu0 %v1718
  %5682 = vmatpush1.bf16.msra.mxu0 %v1717
  %5683 = vmatprep.subr.bf16.mxu0 %v1730
  %5684 = vmatpush1.bf16.msra.mxu0 %v1729
  %5685 = vmatprep.subr.bf16.mxu0 %v1742
  %5686 = vmatpush1.bf16.msra.mxu0 %v1741
  %5687 = vmatprep.subr.bf16.mxu0 %v1754
  %5688 = vmatpush1.bf16.msra.mxu0 %v1753
  %5689 = vmatprep.subr.bf16.mxu0 %v1766
  %5690 = vmatpush1.bf16.msra.mxu0 %v1765
  %5691 = vmatprep.subr.bf16.mxu0 %v1778
  %5692 = vmatpush1.bf16.msra.mxu0 %v1777
  %5693 = vmatprep.subr.bf16.mxu0 %v1790
  %5694 = vmatpush1.bf16.msra.mxu0 %v1789
  %5695 = vmatprep.subr.bf16.mxu0 %v1802
  %5696 = vmatpush1.bf16.msra.mxu0 %v1801
  %5697 = vmatprep.subr.bf16.mxu0 %v1814
  %5698 = vmatpush1.bf16.msra.mxu0 %v1813
  %5699 = vmatprep.subr.bf16.mxu0 %v1826
  %5700 = vmatpush1.bf16.msra.mxu0 %v1825
  %5701 = vmatprep.subr.bf16.mxu0 %v1838
  %5702 = vmatpush1.bf16.msra.mxu0 %v1837
  %5703 = vmatprep.subr.bf16.mxu0 %v1850
  %5704 = vmatpush1.bf16.msra.mxu0 %v1849
  %5705 = vmatprep.subr.bf16.mxu0 %v1862
  %5706 = vmatpush1.bf16.msra.mxu0 %v1861
  %5707 = vmatprep.subr.bf16.mxu0 %v1874
  %5708 = vmatpush1.bf16.msra.mxu0 %v1873
  %5709 = vmatprep.subr.bf16.mxu0 %v1886
  %5710 = vmatpush1.bf16.msra.mxu0 %v1885
  %5711 = vmatprep.subr.bf16.mxu0 %v1898
  %5712 = vmatpush1.bf16.msra.mxu0 %v1897
  %5713 = vmatprep.mubr.bf16.mxu0 %v5509
  %5714 = vmatmul.mubr.bf16.gmra.mrb[0].mxu0 %v5508
  %v5715 = vpop.f32.mrb[0].mxu0
  %v5716 = vadd.f32 0.0, %v5715
  %v5717 = vpop.f32.mrb[0].mxu0
  %v5718 = vadd.f32 0.0, %v5717
  %v5719 = vpop.f32.mrb[0].mxu0
  %v5720 = vpop.f32.mrb[0].mxu0
  %5721 = vdwg.mxu0
  %5722 = vmatprep.subr.bf16.mxu0 %v1910
  %5723 = vmatpush1.bf16.msra.mxu0 %v1909
  %5724 = vmatprep.subr.bf16.mxu0 %v1922
  %5725 = vmatpush1.bf16.msra.mxu0 %v1921
  %5726 = vmatprep.subr.bf16.mxu0 %v1934
  %5727 = vmatpush1.bf16.msra.mxu0 %v1933
  %5728 = vmatprep.subr.bf16.mxu0 %v1946
  %5729 = vmatpush1.bf16.msra.mxu0 %v1945
  %5730 = vmatprep.subr.bf16.mxu0 %v1958
  %5731 = vmatpush1.bf16.msra.mxu0 %v1957
  %5732 = vmatprep.subr.bf16.mxu0 %v1970
  %5733 = vmatpush1.bf16.msra.mxu0 %v1969
  %5734 = vmatprep.subr.bf16.mxu0 %v1982
  %5735 = vmatpush1.bf16.msra.mxu0 %v1981
  %5736 = vmatprep.subr.bf16.mxu0 %v1994
  %5737 = vmatpush1.bf16.msra.mxu0 %v1993
  %5738 = vmatprep.subr.bf16.mxu0 %v2006
  %5739 = vmatpush1.bf16.msra.mxu0 %v2005
  %5740 = vmatprep.subr.bf16.mxu0 %v2018
  %5741 = vmatpush1.bf16.msra.mxu0 %v2017
  %5742 = vmatprep.subr.bf16.mxu0 %v2030
  %5743 = vmatpush1.bf16.msra.mxu0 %v2029
  %5744 = vmatprep.subr.bf16.mxu0 %v2042
  %5745 = vmatpush1.bf16.msra.mxu0 %v2041
  %5746 = vmatprep.subr.bf16.mxu0 %v2054
  %5747 = vmatpush1.bf16.msra.mxu0 %v2053
  %5748 = vmatprep.subr.bf16.mxu0 %v2066
  %5749 = vmatpush1.bf16.msra.mxu0 %v2065
  %5750 = vmatprep.subr.bf16.mxu0 %v2078
  %5751 = vmatpush1.bf16.msra.mxu0 %v2077
  %5752 = vmatprep.subr.bf16.mxu0 %v2090
  %5753 = vmatpush1.bf16.msra.mxu0 %v2089
  %5754 = vmatprep.mubr.bf16.mxu0 %v5511
  %5755 = vmatmul.mubr.bf16.gmra.mrb[0].mxu0 %v5510
  %v5756 = vpop.f32.mrb[0].mxu0
  %v5757 = vadd.f32 %v5716, %v5756
  %v5758 = vpop.f32.mrb[0].mxu0
  %v5759 = vadd.f32 %v5718, %v5758
  %v5760 = vpop.f32.mrb[0].mxu0
  %v5761 = vpop.f32.mrb[0].mxu0
  %5762 = vdwg.mxu0
  %5763 = vmatprep.subr.bf16.mxu0 %v1720
  %5764 = vmatpush1.bf16.msra.mxu0 %v1719
  %5765 = vmatprep.subr.bf16.mxu0 %v1732
  %5766 = vmatpush1.bf16.msra.mxu0 %v1731
  %5767 = vmatprep.subr.bf16.mxu0 %v1744
  %5768 = vmatpush1.bf16.msra.mxu0 %v1743
  %5769 = vmatprep.subr.bf16.mxu0 %v1756
  %5770 = vmatpush1.bf16.msra.mxu0 %v1755
  %5771 = vmatprep.subr.bf16.mxu0 %v1768
  %5772 = vmatpush1.bf16.msra.mxu0 %v1767
  %5773 = vmatprep.subr.bf16.mxu0 %v1780
  %5774 = vmatpush1.bf16.msra.mxu0 %v1779
  %5775 = vmatprep.subr.bf16.mxu0 %v1792
  %5776 = vmatpush1.bf16.msra.mxu0 %v1791
  %5777 = vmatprep.subr.bf16.mxu0 %v1804
  %5778 = vmatpush1.bf16.msra.mxu0 %v1803
  %5779 = vmatprep.subr.bf16.mxu0 %v1816
  %5780 = vmatpush1.bf16.msra.mxu0 %v1815
  %5781 = vmatprep.subr.bf16.mxu0 %v1828
  %5782 = vmatpush1.bf16.msra.mxu0 %v1827
  %5783 = vmatprep.subr.bf16.mxu0 %v1840
  %5784 = vmatpush1.bf16.msra.mxu0 %v1839
  %5785 = vmatprep.subr.bf16.mxu0 %v1852
  %5786 = vmatpush1.bf16.msra.mxu0 %v1851
  %5787 = vmatprep.subr.bf16.mxu0 %v1864
  %5788 = vmatpush1.bf16.msra.mxu0 %v1863
  %5789 = vmatprep.subr.bf16.mxu0 %v1876
  %5790 = vmatpush1.bf16.msra.mxu0 %v1875
  %5791 = vmatprep.subr.bf16.mxu0 %v1888
  %5792 = vmatpush1.bf16.msra.mxu0 %v1887
  %5793 = vmatprep.subr.bf16.mxu0 %v1900
  %5794 = vmatpush1.bf16.msra.mxu0 %v1899
  %5795 = vmatprep.mubr.bf16.mxu0 %v5509
  %5796 = vmatmul.mubr.bf16.gmra.mrb[0].mxu0 %v5508
  %v5797 = vpop.f32.mrb[0].mxu0
  %v5798 = vadd.f32 0.0, %v5797
  %v5799 = vpop.f32.mrb[0].mxu0
  %v5800 = vadd.f32 0.0, %v5799
  %v5801 = vpop.f32.mrb[0].mxu0
  %v5802 = vpop.f32.mrb[0].mxu0
  %5803 = vdwg.mxu0
  %5804 = vmatprep.subr.bf16.mxu0 %v1912
  %5805 = vmatpush1.bf16.msra.mxu0 %v1911
  %5806 = vmatprep.subr.bf16.mxu0 %v1924
  %5807 = vmatpush1.bf16.msra.mxu0 %v1923
  %5808 = vmatprep.subr.bf16.mxu0 %v1936
  %5809 = vmatpush1.bf16.msra.mxu0 %v1935
  %5810 = vmatprep.subr.bf16.mxu0 %v1948
  %5811 = vmatpush1.bf16.msra.mxu0 %v1947
  %5812 = vmatprep.subr.bf16.mxu0 %v1960
  %5813 = vmatpush1.bf16.msra.mxu0 %v1959
  %5814 = vmatprep.subr.bf16.mxu0 %v1972
  %5815 = vmatpush1.bf16.msra.mxu0 %v1971
  %5816 = vmatprep.subr.bf16.mxu0 %v1984
  %5817 = vmatpush1.bf16.msra.mxu0 %v1983
  %5818 = vmatprep.subr.bf16.mxu0 %v1996
  %5819 = vmatpush1.bf16.msra.mxu0 %v1995
  %5820 = vmatprep.subr.bf16.mxu0 %v2008
  %5821 = vmatpush1.bf16.msra.mxu0 %v2007
  %5822 = vmatprep.subr.bf16.mxu0 %v2020
  %5823 = vmatpush1.bf16.msra.mxu0 %v2019
  %5824 = vmatprep.subr.bf16.mxu0 %v2032
  %5825 = vmatpush1.bf16.msra.mxu0 %v2031
  %5826 = vmatprep.subr.bf16.mxu0 %v2044
  %5827 = vmatpush1.bf16.msra.mxu0 %v2043
  %5828 = vmatprep.subr.bf16.mxu0 %v2056
  %5829 = vmatpush1.bf16.msra.mxu0 %v2055
  %5830 = vmatprep.subr.bf16.mxu0 %v2068
  %5831 = vmatpush1.bf16.msra.mxu0 %v2067
  %5832 = vmatprep.subr.bf16.mxu0 %v2080
  %5833 = vmatpush1.bf16.msra.mxu0 %v2079
  %5834 = vmatprep.subr.bf16.mxu0 %v2092
  %5835 = vmatpush1.bf16.msra.mxu0 %v2091
  %5836 = vmatprep.mubr.bf16.mxu0 %v5511
  %5837 = vmatmul.mubr.bf16.gmra.mrb[0].mxu0 %v5510
  %v5838 = vpop.f32.mrb[0].mxu0
  %v5839 = vadd.f32 %v5798, %v5838
  %v5840 = vpop.f32.mrb[0].mxu0
  %v5841 = vadd.f32 %v5800, %v5840
  %v5842 = vpop.f32.mrb[0].mxu0
  %v5843 = vpop.f32.mrb[0].mxu0
  %5844 = vdwg.mxu0
  %5845 = vmatprep.subr.bf16.mxu0 %v1722
  %5846 = vmatpush1.bf16.msra.mxu0 %v1721
  %5847 = vmatprep.subr.bf16.mxu0 %v1734
  %5848 = vmatpush1.bf16.msra.mxu0 %v1733
  %5849 = vmatprep.subr.bf16.mxu0 %v1746
  %5850 = vmatpush1.bf16.msra.mxu0 %v1745
  %5851 = vmatprep.subr.bf16.mxu0 %v1758
  %5852 = vmatpush1.bf16.msra.mxu0 %v1757
  %5853 = vmatprep.subr.bf16.mxu0 %v1770
  %5854 = vmatpush1.bf16.msra.mxu0 %v1769
  %5855 = vmatprep.subr.bf16.mxu0 %v1782
  %5856 = vmatpush1.bf16.msra.mxu0 %v1781
  %5857 = vmatprep.subr.bf16.mxu0 %v1794
  %5858 = vmatpush1.bf16.msra.mxu0 %v1793
  %5859 = vmatprep.subr.bf16.mxu0 %v1806
  %5860 = vmatpush1.bf16.msra.mxu0 %v1805
  %5861 = vmatprep.subr.bf16.mxu0 %v1818
  %5862 = vmatpush1.bf16.msra.mxu0 %v1817
  %5863 = vmatprep.subr.bf16.mxu0 %v1830
  %5864 = vmatpush1.bf16.msra.mxu0 %v1829
  %5865 = vmatprep.subr.bf16.mxu0 %v1842
  %5866 = vmatpush1.bf16.msra.mxu0 %v1841
  %5867 = vmatprep.subr.bf16.mxu0 %v1854
  %5868 = vmatpush1.bf16.msra.mxu0 %v1853
  %5869 = vmatprep.subr.bf16.mxu0 %v1866
  %5870 = vmatpush1.bf16.msra.mxu0 %v1865
  %5871 = vmatprep.subr.bf16.mxu0 %v1878
  %5872 = vmatpush1.bf16.msra.mxu0 %v1877
  %5873 = vmatprep.subr.bf16.mxu0 %v1890
  %5874 = vmatpush1.bf16.msra.mxu0 %v1889
  %5875 = vmatprep.subr.bf16.mxu0 %v1902
  %5876 = vmatpush1.bf16.msra.mxu0 %v1901
  %5877 = vmatprep.mubr.bf16.mxu0 %v5509
  %5878 = vmatmul.mubr.bf16.gmra.mrb[0].mxu0 %v5508
  %v5879 = vpop.f32.mrb[0].mxu0
  %v5880 = vadd.f32 0.0, %v5879
  %v5881 = vpop.f32.mrb[0].mxu0
  %v5882 = vadd.f32 0.0, %v5881
  %v5883 = vpop.f32.mrb[0].mxu0
  %v5884 = vpop.f32.mrb[0].mxu0
  %5885 = vdwg.mxu0
  %5886 = vmatprep.subr.bf16.mxu0 %v1914
  %5887 = vmatpush1.bf16.msra.mxu0 %v1913
  %5888 = vmatprep.subr.bf16.mxu0 %v1926
  %5889 = vmatpush1.bf16.msra.mxu0 %v1925
  %5890 = vmatprep.subr.bf16.mxu0 %v1938
  %5891 = vmatpush1.bf16.msra.mxu0 %v1937
  %5892 = vmatprep.subr.bf16.mxu0 %v1950
  %5893 = vmatpush1.bf16.msra.mxu0 %v1949
  %5894 = vmatprep.subr.bf16.mxu0 %v1962
  %5895 = vmatpush1.bf16.msra.mxu0 %v1961
  %5896 = vmatprep.subr.bf16.mxu0 %v1974
  %5897 = vmatpush1.bf16.msra.mxu0 %v1973
  %5898 = vmatprep.subr.bf16.mxu0 %v1986
  %5899 = vmatpush1.bf16.msra.mxu0 %v1985
  %5900 = vmatprep.subr.bf16.mxu0 %v1998
  %5901 = vmatpush1.bf16.msra.mxu0 %v1997
  %5902 = vmatprep.subr.bf16.mxu0 %v2010
  %5903 = vmatpush1.bf16.msra.mxu0 %v2009
  %5904 = vmatprep.subr.bf16.mxu0 %v2022
  %5905 = vmatpush1.bf16.msra.mxu0 %v2021
  %5906 = vmatprep.subr.bf16.mxu0 %v2034
  %5907 = vmatpush1.bf16.msra.mxu0 %v2033
  %5908 = vmatprep.subr.bf16.mxu0 %v2046
  %5909 = vmatpush1.bf16.msra.mxu0 %v2045
  %5910 = vmatprep.subr.bf16.mxu0 %v2058
  %5911 = vmatpush1.bf16.msra.mxu0 %v2057
  %5912 = vmatprep.subr.bf16.mxu0 %v2070
  %5913 = vmatpush1.bf16.msra.mxu0 %v2069
  %5914 = vmatprep.subr.bf16.mxu0 %v2082
  %5915 = vmatpush1.bf16.msra.mxu0 %v2081
  %5916 = vmatprep.subr.bf16.mxu0 %v2094
  %5917 = vmatpush1.bf16.msra.mxu0 %v2093
  %5918 = vmatprep.mubr.bf16.mxu0 %v5511
  %5919 = vmatmul.mubr.bf16.gmra.mrb[0].mxu0 %v5510
  %v5920 = vpop.f32.mrb[0].mxu0
  %v5921 = vadd.f32 %v5880, %v5920
  %v5922 = vpop.f32.mrb[0].mxu0
  %v5923 = vadd.f32 %v5882, %v5922
  %v5924 = vpop.f32.mrb[0].mxu0
  %v5925 = vpop.f32.mrb[0].mxu0
  %5926 = vdwg.mxu0
  %5927 = vmatprep.subr.bf16.mxu0 %v1724
  %5928 = vmatpush1.bf16.msra.mxu0 %v1723
  %5929 = vmatprep.subr.bf16.mxu0 %v1736
  %5930 = vmatpush1.bf16.msra.mxu0 %v1735
  %5931 = vmatprep.subr.bf16.mxu0 %v1748
  %5932 = vmatpush1.bf16.msra.mxu0 %v1747
  %5933 = vmatprep.subr.bf16.mxu0 %v1760
  %5934 = vmatpush1.bf16.msra.mxu0 %v1759
  %5935 = vmatprep.subr.bf16.mxu0 %v1772
  %5936 = vmatpush1.bf16.msra.mxu0 %v1771
  %5937 = vmatprep.subr.bf16.mxu0 %v1784
  %5938 = vmatpush1.bf16.msra.mxu0 %v1783
  %5939 = vmatprep.subr.bf16.mxu0 %v1796
  %5940 = vmatpush1.bf16.msra.mxu0 %v1795
  %5941 = vmatprep.subr.bf16.mxu0 %v1808
  %5942 = vmatpush1.bf16.msra.mxu0 %v1807
  %5943 = vmatprep.subr.bf16.mxu0 %v1820
  %5944 = vmatpush1.bf16.msra.mxu0 %v1819
  %5945 = vmatprep.subr.bf16.mxu0 %v1832
  %5946 = vmatpush1.bf16.msra.mxu0 %v1831
  %5947 = vmatprep.subr.bf16.mxu0 %v1844
  %5948 = vmatpush1.bf16.msra.mxu0 %v1843
  %5949 = vmatprep.subr.bf16.mxu0 %v1856
  %5950 = vmatpush1.bf16.msra.mxu0 %v1855
  %5951 = vmatprep.subr.bf16.mxu0 %v1868
  %5952 = vmatpush1.bf16.msra.mxu0 %v1867
  %5953 = vmatprep.subr.bf16.mxu0 %v1880
  %5954 = vmatpush1.bf16.msra.mxu0 %v1879
  %5955 = vmatprep.subr.bf16.mxu0 %v1892
  %5956 = vmatpush1.bf16.msra.mxu0 %v1891
  %5957 = vmatprep.subr.bf16.mxu0 %v1904
  %5958 = vmatpush1.bf16.msra.mxu0 %v1903
  %5959 = vmatprep.mubr.bf16.mxu0 %v5509
  %5960 = vmatmul.mubr.bf16.gmra.mrb[0].mxu0 %v5508
  %v5961 = vpop.f32.mrb[0].mxu0
  %v5962 = vadd.f32 0.0, %v5961
  %v5963 = vpop.f32.mrb[0].mxu0
  %v5964 = vadd.f32 0.0, %v5963
  %v5965 = vpop.f32.mrb[0].mxu0
  %v5966 = vpop.f32.mrb[0].mxu0
  %5967 = vdwg.mxu0
  %5968 = vmatprep.subr.bf16.mxu0 %v1916
  %5969 = vmatpush1.bf16.msra.mxu0 %v1915
  %5970 = vmatprep.subr.bf16.mxu0 %v1928
  %5971 = vmatpush1.bf16.msra.mxu0 %v1927
  %5972 = vmatprep.subr.bf16.mxu0 %v1940
  %5973 = vmatpush1.bf16.msra.mxu0 %v1939
  %5974 = vmatprep.subr.bf16.mxu0 %v1952
  %5975 = vmatpush1.bf16.msra.mxu0 %v1951
  %5976 = vmatprep.subr.bf16.mxu0 %v1964
  %5977 = vmatpush1.bf16.msra.mxu0 %v1963
  %5978 = vmatprep.subr.bf16.mxu0 %v1976
  %5979 = vmatpush1.bf16.msra.mxu0 %v1975
  %5980 = vmatprep.subr.bf16.mxu0 %v1988
  %5981 = vmatpush1.bf16.msra.mxu0 %v1987
  %5982 = vmatprep.subr.bf16.mxu0 %v2000
  %5983 = vmatpush1.bf16.msra.mxu0 %v1999
  %5984 = vmatprep.subr.bf16.mxu0 %v2012
  %5985 = vmatpush1.bf16.msra.mxu0 %v2011
  %5986 = vmatprep.subr.bf16.mxu0 %v2024
  %5987 = vmatpush1.bf16.msra.mxu0 %v2023
  %5988 = vmatprep.subr.bf16.mxu0 %v2036
  %5989 = vmatpush1.bf16.msra.mxu0 %v2035
  %5990 = vmatprep.subr.bf16.mxu0 %v2048
  %5991 = vmatpush1.bf16.msra.mxu0 %v2047
  %5992 = vmatprep.subr.bf16.mxu0 %v2060
  %5993 = vmatpush1.bf16.msra.mxu0 %v2059
  %5994 = vmatprep.subr.bf16.mxu0 %v2072
  %5995 = vmatpush1.bf16.msra.mxu0 %v2071
  %5996 = vmatprep.subr.bf16.mxu0 %v2084
  %5997 = vmatpush1.bf16.msra.mxu0 %v2083
  %5998 = vmatprep.subr.bf16.mxu0 %v2096
  %5999 = vmatpush1.bf16.msra.mxu0 %v2095
  %6000 = vmatprep.mubr.bf16.mxu0 %v5511
  %6001 = vmatmul.mubr.bf16.gmra.mrb[0].mxu0 %v5510
  %v6002 = vpop.f32.mrb[0].mxu0
  %v6003 = vadd.f32 %v5962, %v6002
  %v6004 = vpop.f32.mrb[0].mxu0
  %v6005 = vadd.f32 %v5964, %v6004
  %v6006 = vpop.f32.mrb[0].mxu0
  %v6007 = vpop.f32.mrb[0].mxu0
  %6008 = vdwg.mxu0
  %v6021 = vcombine.low %v5593, %v5595
  %v6022 = vcombine.low %v5675, %v5677
  %v6024 = vunpack.c.l.s4 1983009808
  %v6025 = vunpack.c.0.s8 %v6024
  %v6026 = vlaneseq
  %v6027 = vshrl.u32 %v6026, 7
  %v6028 = vsub.s32 %v6025, %v6027
  %v6029 = vrot.slane %v6021, %v6028
  %v6031 = vunpack.c.l.s4 1983009808
  %v6032 = vunpack.c.0.s8 %v6031
  %v6033 = vlaneseq
  %v6034 = vshrl.u32 %v6033, 7
  %v6035 = vsub.s32 %v6032, %v6034
  %v6036 = vrot.slane %v6022, %v6035
  %v6037 = vcombine.low %v6029, %v6036
  %v6038 = vcombine.low %v5757, %v5759
  %v6039 = vcombine.low %v5839, %v5841
  %v6041 = vunpack.c.l.s4 1983009808
  %v6042 = vunpack.c.0.s8 %v6041
  %v6043 = vlaneseq
  %v6044 = vshrl.u32 %v6043, 7
  %v6045 = vsub.s32 %v6042, %v6044
  %v6046 = vrot.slane %v6038, %v6045
  %v6048 = vunpack.c.l.s4 1983009808
  %v6049 = vunpack.c.0.s8 %v6048
  %v6050 = vlaneseq
  %v6051 = vshrl.u32 %v6050, 7
  %v6052 = vsub.s32 %v6049, %v6051
  %v6053 = vrot.slane %v6039, %v6052
  %v6054 = vcombine.low %v6046, %v6053
  %v6055 = vcombine.low %v5921, %v5923
  %v6056 = vcombine.low %v6003, %v6005
  %v6058 = vunpack.c.l.s4 1983009808
  %v6059 = vunpack.c.0.s8 %v6058
  %v6060 = vlaneseq
  %v6061 = vshrl.u32 %v6060, 7
  %v6062 = vsub.s32 %v6059, %v6061
  %v6063 = vrot.slane %v6055, %v6062
  %v6065 = vunpack.c.l.s4 1983009808
  %v6066 = vunpack.c.0.s8 %v6065
  %v6067 = vlaneseq
  %v6068 = vshrl.u32 %v6067, 7
  %v6069 = vsub.s32 %v6066, %v6068
  %v6070 = vrot.slane %v6056, %v6069
  %v6071 = vcombine.low %v6063, %v6070
  %v6075 = vadd.f32 %v5513, %v6037
  %v6076 = vadd.f32 %v5514, %v6054
  %v6077 = vadd.f32 %v5515, %v6071
  %6078 = vmatprep.subr.bf16.mxu0 %v3427
  %6079 = vmatpush1.bf16.msra.mxu0 %v3426
  %6080 = vmatprep.subr.bf16.mxu0 %v3431
  %6081 = vmatpush1.bf16.msra.mxu0 %v3430
  %6082 = vmatprep.subr.bf16.mxu0 %v3435
  %6083 = vmatpush1.bf16.msra.mxu0 %v3434
  %6084 = vmatprep.subr.bf16.mxu0 %v3439
  %6085 = vmatpush1.bf16.msra.mxu0 %v3438
  %6086 = vmatprep.subr.bf16.mxu0 %v3443
  %6087 = vmatpush1.bf16.msra.mxu0 %v3442
  %6088 = vmatprep.subr.bf16.mxu0 %v3447
  %6089 = vmatpush1.bf16.msra.mxu0 %v3446
  %6090 = vmatprep.subr.bf16.mxu0 %v3451
  %6091 = vmatpush1.bf16.msra.mxu0 %v3450
  %6092 = vmatprep.subr.bf16.mxu0 %v3455
  %6093 = vmatpush1.bf16.msra.mxu0 %v3454
  %6094 = vmatprep.subr.bf16.mxu0 %v3459
  %6095 = vmatpush1.bf16.msra.mxu0 %v3458
  %6096 = vmatprep.subr.bf16.mxu0 %v3463
  %6097 = vmatpush1.bf16.msra.mxu0 %v3462
  %6098 = vmatprep.subr.bf16.mxu0 %v3467
  %6099 = vmatpush1.bf16.msra.mxu0 %v3466
  %6100 = vmatprep.subr.bf16.mxu0 %v3471
  %6101 = vmatpush1.bf16.msra.mxu0 %v3470
  %6102 = vmatprep.subr.bf16.mxu0 %v3475
  %6103 = vmatpush1.bf16.msra.mxu0 %v3474
  %6104 = vmatprep.subr.bf16.mxu0 %v3479
  %6105 = vmatpush1.bf16.msra.mxu0 %v3478
  %6106 = vmatprep.subr.bf16.mxu0 %v3483
  %6107 = vmatpush1.bf16.msra.mxu0 %v3482
  %6108 = vmatprep.subr.bf16.mxu0 %v3487
  %6109 = vmatpush1.bf16.msra.mxu0 %v3486
  %6110 = vmatprep.mubr.bf16.mxu0 %v5509
  %6111 = vmatmul.mubr.bf16.gmra.mrb[0].mxu0 %v5508
  %v6112 = vpop.f32.mrb[0].mxu0
  %v6113 = vadd.f32 0.0, %v6112
  %v6114 = vpop.f32.mrb[0].mxu0
  %v6115 = vadd.f32 0.0, %v6114
  %v6116 = vpop.f32.mrb[0].mxu0
  %v6117 = vpop.f32.mrb[0].mxu0
  %6118 = vdwg.mxu0
  %6119 = vmatprep.subr.bf16.mxu0 %v3491
  %6120 = vmatpush1.bf16.msra.mxu0 %v3490
  %6121 = vmatprep.subr.bf16.mxu0 %v3495
  %6122 = vmatpush1.bf16.msra.mxu0 %v3494
  %6123 = vmatprep.subr.bf16.mxu0 %v3499
  %6124 = vmatpush1.bf16.msra.mxu0 %v3498
  %6125 = vmatprep.subr.bf16.mxu0 %v3503
  %6126 = vmatpush1.bf16.msra.mxu0 %v3502
  %6127 = vmatprep.subr.bf16.mxu0 %v3507
  %6128 = vmatpush1.bf16.msra.mxu0 %v3506
  %6129 = vmatprep.subr.bf16.mxu0 %v3511
  %6130 = vmatpush1.bf16.msra.mxu0 %v3510
  %6131 = vmatprep.subr.bf16.mxu0 %v3515
  %6132 = vmatpush1.bf16.msra.mxu0 %v3514
  %6133 = vmatprep.subr.bf16.mxu0 %v3519
  %6134 = vmatpush1.bf16.msra.mxu0 %v3518
  %6135 = vmatprep.subr.bf16.mxu0 %v3523
  %6136 = vmatpush1.bf16.msra.mxu0 %v3522
  %6137 = vmatprep.subr.bf16.mxu0 %v3527
  %6138 = vmatpush1.bf16.msra.mxu0 %v3526
  %6139 = vmatprep.subr.bf16.mxu0 %v3531
  %6140 = vmatpush1.bf16.msra.mxu0 %v3530
  %6141 = vmatprep.subr.bf16.mxu0 %v3535
  %6142 = vmatpush1.bf16.msra.mxu0 %v3534
  %6143 = vmatprep.subr.bf16.mxu0 %v3539
  %6144 = vmatpush1.bf16.msra.mxu0 %v3538
  %6145 = vmatprep.subr.bf16.mxu0 %v3543
  %6146 = vmatpush1.bf16.msra.mxu0 %v3542
  %6147 = vmatprep.subr.bf16.mxu0 %v3547
  %6148 = vmatpush1.bf16.msra.mxu0 %v3546
  %6149 = vmatprep.subr.bf16.mxu0 %v3551
  %6150 = vmatpush1.bf16.msra.mxu0 %v3550
  %6151 = vmatprep.mubr.bf16.mxu0 %v5511
  %6152 = vmatmul.mubr.bf16.gmra.mrb[0].mxu0 %v5510
  %v6153 = vpop.f32.mrb[0].mxu0
  %v6154 = vadd.f32 %v6113, %v6153
  %v6155 = vpop.f32.mrb[0].mxu0
  %v6156 = vadd.f32 %v6115, %v6155
  %v6157 = vpop.f32.mrb[0].mxu0
  %v6158 = vpop.f32.mrb[0].mxu0
  %6159 = vdwg.mxu0
  %6160 = vmatprep.subr.bf16.mxu0 %v3429
  %6161 = vmatpush1.bf16.msra.mxu0 %v3428
  %6162 = vmatprep.subr.bf16.mxu0 %v3433
  %6163 = vmatpush1.bf16.msra.mxu0 %v3432
  %6164 = vmatprep.subr.bf16.mxu0 %v3437
  %6165 = vmatpush1.bf16.msra.mxu0 %v3436
  %6166 = vmatprep.subr.bf16.mxu0 %v3441
  %6167 = vmatpush1.bf16.msra.mxu0 %v3440
  %6168 = vmatprep.subr.bf16.mxu0 %v3445
  %6169 = vmatpush1.bf16.msra.mxu0 %v3444
  %6170 = vmatprep.subr.bf16.mxu0 %v3449
  %6171 = vmatpush1.bf16.msra.mxu0 %v3448
  %6172 = vmatprep.subr.bf16.mxu0 %v3453
  %6173 = vmatpush1.bf16.msra.mxu0 %v3452
  %6174 = vmatprep.subr.bf16.mxu0 %v3457
  %6175 = vmatpush1.bf16.msra.mxu0 %v3456
  %6176 = vmatprep.subr.bf16.mxu0 %v3461
  %6177 = vmatpush1.bf16.msra.mxu0 %v3460
  %6178 = vmatprep.subr.bf16.mxu0 %v3465
  %6179 = vmatpush1.bf16.msra.mxu0 %v3464
  %6180 = vmatprep.subr.bf16.mxu0 %v3469
  %6181 = vmatpush1.bf16.msra.mxu0 %v3468
  %6182 = vmatprep.subr.bf16.mxu0 %v3473
  %6183 = vmatpush1.bf16.msra.mxu0 %v3472
  %6184 = vmatprep.subr.bf16.mxu0 %v3477
  %6185 = vmatpush1.bf16.msra.mxu0 %v3476
  %6186 = vmatprep.subr.bf16.mxu0 %v3481
  %6187 = vmatpush1.bf16.msra.mxu0 %v3480
  %6188 = vmatprep.subr.bf16.mxu0 %v3485
  %6189 = vmatpush1.bf16.msra.mxu0 %v3484
  %6190 = vmatprep.subr.bf16.mxu0 %v3489
  %6191 = vmatpush1.bf16.msra.mxu0 %v3488
  %6192 = vmatprep.mubr.bf16.mxu0 %v5509
  %6193 = vmatmul.mubr.bf16.gmra.mrb[0].mxu0 %v5508
  %v6194 = vpop.f32.mrb[0].mxu0
  %v6195 = vadd.f32 0.0, %v6194
  %v6196 = vpop.f32.mrb[0].mxu0
  %v6197 = vadd.f32 0.0, %v6196
  %v6198 = vpop.f32.mrb[0].mxu0
  %v6199 = vpop.f32.mrb[0].mxu0
  %6200 = vdwg.mxu0
  %6201 = vmatprep.subr.bf16.mxu0 %v3493
  %6202 = vmatpush1.bf16.msra.mxu0 %v3492
  %6203 = vmatprep.subr.bf16.mxu0 %v3497
  %6204 = vmatpush1.bf16.msra.mxu0 %v3496
  %6205 = vmatprep.subr.bf16.mxu0 %v3501
  %6206 = vmatpush1.bf16.msra.mxu0 %v3500
  %6207 = vmatprep.subr.bf16.mxu0 %v3505
  %6208 = vmatpush1.bf16.msra.mxu0 %v3504
  %6209 = vmatprep.subr.bf16.mxu0 %v3509
  %6210 = vmatpush1.bf16.msra.mxu0 %v3508
  %6211 = vmatprep.subr.bf16.mxu0 %v3513
  %6212 = vmatpush1.bf16.msra.mxu0 %v3512
  %6213 = vmatprep.subr.bf16.mxu0 %v3517
  %6214 = vmatpush1.bf16.msra.mxu0 %v3516
  %6215 = vmatprep.subr.bf16.mxu0 %v3521
  %6216 = vmatpush1.bf16.msra.mxu0 %v3520
  %6217 = vmatprep.subr.bf16.mxu0 %v3525
  %6218 = vmatpush1.bf16.msra.mxu0 %v3524
  %6219 = vmatprep.subr.bf16.mxu0 %v3529
  %6220 = vmatpush1.bf16.msra.mxu0 %v3528
  %6221 = vmatprep.subr.bf16.mxu0 %v3533
  %6222 = vmatpush1.bf16.msra.mxu0 %v3532
  %6223 = vmatprep.subr.bf16.mxu0 %v3537
  %6224 = vmatpush1.bf16.msra.mxu0 %v3536
  %6225 = vmatprep.subr.bf16.mxu0 %v3541
  %6226 = vmatpush1.bf16.msra.mxu0 %v3540
  %6227 = vmatprep.subr.bf16.mxu0 %v3545
  %6228 = vmatpush1.bf16.msra.mxu0 %v3544
  %6229 = vmatprep.subr.bf16.mxu0 %v3549
  %6230 = vmatpush1.bf16.msra.mxu0 %v3548
  %6231 = vmatprep.subr.bf16.mxu0 %v3553
  %6232 = vmatpush1.bf16.msra.mxu0 %v3552
  %6233 = vmatprep.mubr.bf16.mxu0 %v5511
  %6234 = vmatmul.mubr.bf16.gmra.mrb[0].mxu0 %v5510
  %v6235 = vpop.f32.mrb[0].mxu0
  %v6236 = vadd.f32 %v6195, %v6235
  %v6237 = vpop.f32.mrb[0].mxu0
  %v6238 = vadd.f32 %v6197, %v6237
  %v6239 = vpop.f32.mrb[0].mxu0
  %v6240 = vpop.f32.mrb[0].mxu0
  %6241 = vdwg.mxu0
  %v6246 = vcombine.low %v6154, %v6156
  %v6247 = vcombine.low %v6236, %v6238
  %v6249 = vunpack.c.l.s4 1983009808
  %v6250 = vunpack.c.0.s8 %v6249
  %v6251 = vlaneseq
  %v6252 = vshrl.u32 %v6251, 7
  %v6253 = vsub.s32 %v6250, %v6252
  %v6254 = vrot.slane %v6246, %v6253
  %v6256 = vunpack.c.l.s4 1983009808
  %v6257 = vunpack.c.0.s8 %v6256
  %v6258 = vlaneseq
  %v6259 = vshrl.u32 %v6258, 7
  %v6260 = vsub.s32 %v6257, %v6259
  %v6261 = vrot.slane %v6247, %v6260
  %v6262 = vcombine.low %v6254, %v6261
  %v6264 = vadd.f32 %v5516, %v6262
  %v6265 = vmul.f32 %v6075, 0.5
  %v6266 = vtanh.pop %v6265
  %v6267 = vadd.f32 %v6266, 1.0
  %v6268 = vmul.f32 %v6267, 0.5
  %v6269 = vmul.f32 %v6076, 0.5
  %v6270 = vtanh.pop %v6269
  %v6271 = vadd.f32 %v6270, 1.0
  %v6272 = vmul.f32 %v6271, 0.5
  %v6273 = vtanh.pop %v6077
  %v6274 = vmul.f32 %v6272, %v5477
  %v6275 = vmul.f32 %v6268, %v6273
  %v6276 = vadd.f32 %v6274, %v6275
  %v6277 = vmul.f32 %v6264, 0.5
  %v6278 = vtanh.pop %v6277
  %v6279 = vadd.f32 %v6278, 1.0
  %v6280 = vmul.f32 %v6279, 0.5
  %v6281 = vtanh.pop %v6276
  %v6282 = vmul.f32 %v6280, %v6281
  %s6283 = scalar_lea.vmem %s2, 24
  %6284 = vst [vmem:[%s6283] sm:$0xff] %v6282
  %v6286 = vcombine.high %v6282, %v6282
  %v6288 = vunpack.c.l.s4 1983009808
  %v6289 = vunpack.c.0.s8 %v6288
  %v6290 = vlaneseq
  %v6291 = vshrl.u32 %v6290, 7
  %v6292 = vsub.s32 %v6289, %v6291
  %v6293 = vrot.slane %v6282, %v6292
  %v6295 = vunpack.c.l.s4 1983009808
  %v6296 = vunpack.c.0.s8 %v6295
  %v6297 = vlaneseq
  %v6298 = vshrl.u32 %v6297, 7
  %v6299 = vsub.s32 %v6296, %v6298
  %v6300 = vrot.slane %v6286, %v6299
  %v6301 = vcombine.high %v6293, %v6293
  %v6302 = vcombine.high %v6300, %v6300
  %v6307 = vpack.c.bf16 %v6293, %v6293
  %v6308 = vpack.c.bf16 %v6301, %v6301
  %v6309 = vpack.c.bf16 %v6300, %v6300
  %v6310 = vpack.c.bf16 %v6302, %v6302
  %s6311 = scalar_lea.vmem %s0, 128
  %v6312 = vld [vmem:[%s6311] sm:$0xff]
  %v6313 = vld [vmem:[%s6311 + $0x8] sm:$0xff]
  %v6314 = vld [vmem:[%s6311 + $0x10] sm:$0xff]
  %v6315 = vld [vmem:[%s6311 + $0x18] sm:$0xff]
  %6316 = vmatprep.subr.bf16.mxu0 %v1714
  %6317 = vmatpush1.bf16.msra.mxu0 %v1713
  %6318 = vmatprep.subr.bf16.mxu0 %v1726
  %6319 = vmatpush1.bf16.msra.mxu0 %v1725
  %6320 = vmatprep.subr.bf16.mxu0 %v1738
  %6321 = vmatpush1.bf16.msra.mxu0 %v1737
  %6322 = vmatprep.subr.bf16.mxu0 %v1750
  %6323 = vmatpush1.bf16.msra.mxu0 %v1749
  %6324 = vmatprep.subr.bf16.mxu0 %v1762
  %6325 = vmatpush1.bf16.msra.mxu0 %v1761
  %6326 = vmatprep.subr.bf16.mxu0 %v1774
  %6327 = vmatpush1.bf16.msra.mxu0 %v1773
  %6328 = vmatprep.subr.bf16.mxu0 %v1786
  %6329 = vmatpush1.bf16.msra.mxu0 %v1785
  %6330 = vmatprep.subr.bf16.mxu0 %v1798
  %6331 = vmatpush1.bf16.msra.mxu0 %v1797
  %6332 = vmatprep.subr.bf16.mxu0 %v1810
  %6333 = vmatpush1.bf16.msra.mxu0 %v1809
  %6334 = vmatprep.subr.bf16.mxu0 %v1822
  %6335 = vmatpush1.bf16.msra.mxu0 %v1821
  %6336 = vmatprep.subr.bf16.mxu0 %v1834
  %6337 = vmatpush1.bf16.msra.mxu0 %v1833
  %6338 = vmatprep.subr.bf16.mxu0 %v1846
  %6339 = vmatpush1.bf16.msra.mxu0 %v1845
  %6340 = vmatprep.subr.bf16.mxu0 %v1858
  %6341 = vmatpush1.bf16.msra.mxu0 %v1857
  %6342 = vmatprep.subr.bf16.mxu0 %v1870
  %6343 = vmatpush1.bf16.msra.mxu0 %v1869
  %6344 = vmatprep.subr.bf16.mxu0 %v1882
  %6345 = vmatpush1.bf16.msra.mxu0 %v1881
  %6346 = vmatprep.subr.bf16.mxu0 %v1894
  %6347 = vmatpush1.bf16.msra.mxu0 %v1893
  %6348 = vmatprep.mubr.bf16.mxu0 %v6308
  %6349 = vmatmul.mubr.bf16.gmra.mrb[0].mxu0 %v6307
  %v6350 = vpop.f32.mrb[0].mxu0
  %v6351 = vadd.f32 0.0, %v6350
  %v6352 = vpop.f32.mrb[0].mxu0
  %v6353 = vadd.f32 0.0, %v6352
  %v6354 = vpop.f32.mrb[0].mxu0
  %v6355 = vpop.f32.mrb[0].mxu0
  %6356 = vdwg.mxu0
  %6357 = vmatprep.subr.bf16.mxu0 %v1906
  %6358 = vmatpush1.bf16.msra.mxu0 %v1905
  %6359 = vmatprep.subr.bf16.mxu0 %v1918
  %6360 = vmatpush1.bf16.msra.mxu0 %v1917
  %6361 = vmatprep.subr.bf16.mxu0 %v1930
  %6362 = vmatpush1.bf16.msra.mxu0 %v1929
  %6363 = vmatprep.subr.bf16.mxu0 %v1942
  %6364 = vmatpush1.bf16.msra.mxu0 %v1941
  %6365 = vmatprep.subr.bf16.mxu0 %v1954
  %6366 = vmatpush1.bf16.msra.mxu0 %v1953
  %6367 = vmatprep.subr.bf16.mxu0 %v1966
  %6368 = vmatpush1.bf16.msra.mxu0 %v1965
  %6369 = vmatprep.subr.bf16.mxu0 %v1978
  %6370 = vmatpush1.bf16.msra.mxu0 %v1977
  %6371 = vmatprep.subr.bf16.mxu0 %v1990
  %6372 = vmatpush1.bf16.msra.mxu0 %v1989
  %6373 = vmatprep.subr.bf16.mxu0 %v2002
  %6374 = vmatpush1.bf16.msra.mxu0 %v2001
  %6375 = vmatprep.subr.bf16.mxu0 %v2014
  %6376 = vmatpush1.bf16.msra.mxu0 %v2013
  %6377 = vmatprep.subr.bf16.mxu0 %v2026
  %6378 = vmatpush1.bf16.msra.mxu0 %v2025
  %6379 = vmatprep.subr.bf16.mxu0 %v2038
  %6380 = vmatpush1.bf16.msra.mxu0 %v2037
  %6381 = vmatprep.subr.bf16.mxu0 %v2050
  %6382 = vmatpush1.bf16.msra.mxu0 %v2049
  %6383 = vmatprep.subr.bf16.mxu0 %v2062
  %6384 = vmatpush1.bf16.msra.mxu0 %v2061
  %6385 = vmatprep.subr.bf16.mxu0 %v2074
  %6386 = vmatpush1.bf16.msra.mxu0 %v2073
  %6387 = vmatprep.subr.bf16.mxu0 %v2086
  %6388 = vmatpush1.bf16.msra.mxu0 %v2085
  %6389 = vmatprep.mubr.bf16.mxu0 %v6310
  %6390 = vmatmul.mubr.bf16.gmra.mrb[0].mxu0 %v6309
  %v6391 = vpop.f32.mrb[0].mxu0
  %v6392 = vadd.f32 %v6351, %v6391
  %v6393 = vpop.f32.mrb[0].mxu0
  %v6394 = vadd.f32 %v6353, %v6393
  %v6395 = vpop.f32.mrb[0].mxu0
  %v6396 = vpop.f32.mrb[0].mxu0
  %6397 = vdwg.mxu0
  %6398 = vmatprep.subr.bf16.mxu0 %v1716
  %6399 = vmatpush1.bf16.msra.mxu0 %v1715
  %6400 = vmatprep.subr.bf16.mxu0 %v1728
  %6401 = vmatpush1.bf16.msra.mxu0 %v1727
  %6402 = vmatprep.subr.bf16.mxu0 %v1740
  %6403 = vmatpush1.bf16.msra.mxu0 %v1739
  %6404 = vmatprep.subr.bf16.mxu0 %v1752
  %6405 = vmatpush1.bf16.msra.mxu0 %v1751
  %6406 = vmatprep.subr.bf16.mxu0 %v1764
  %6407 = vmatpush1.bf16.msra.mxu0 %v1763
  %6408 = vmatprep.subr.bf16.mxu0 %v1776
  %6409 = vmatpush1.bf16.msra.mxu0 %v1775
  %6410 = vmatprep.subr.bf16.mxu0 %v1788
  %6411 = vmatpush1.bf16.msra.mxu0 %v1787
  %6412 = vmatprep.subr.bf16.mxu0 %v1800
  %6413 = vmatpush1.bf16.msra.mxu0 %v1799
  %6414 = vmatprep.subr.bf16.mxu0 %v1812
  %6415 = vmatpush1.bf16.msra.mxu0 %v1811
  %6416 = vmatprep.subr.bf16.mxu0 %v1824
  %6417 = vmatpush1.bf16.msra.mxu0 %v1823
  %6418 = vmatprep.subr.bf16.mxu0 %v1836
  %6419 = vmatpush1.bf16.msra.mxu0 %v1835
  %6420 = vmatprep.subr.bf16.mxu0 %v1848
  %6421 = vmatpush1.bf16.msra.mxu0 %v1847
  %6422 = vmatprep.subr.bf16.mxu0 %v1860
  %6423 = vmatpush1.bf16.msra.mxu0 %v1859
  %6424 = vmatprep.subr.bf16.mxu0 %v1872
  %6425 = vmatpush1.bf16.msra.mxu0 %v1871
  %6426 = vmatprep.subr.bf16.mxu0 %v1884
  %6427 = vmatpush1.bf16.msra.mxu0 %v1883
  %6428 = vmatprep.subr.bf16.mxu0 %v1896
  %6429 = vmatpush1.bf16.msra.mxu0 %v1895
  %6430 = vmatprep.mubr.bf16.mxu0 %v6308
  %6431 = vmatmul.mubr.bf16.gmra.mrb[0].mxu0 %v6307
  %v6432 = vpop.f32.mrb[0].mxu0
  %v6433 = vadd.f32 0.0, %v6432
  %v6434 = vpop.f32.mrb[0].mxu0
  %v6435 = vadd.f32 0.0, %v6434
  %v6436 = vpop.f32.mrb[0].mxu0
  %v6437 = vpop.f32.mrb[0].mxu0
  %6438 = vdwg.mxu0
  %6439 = vmatprep.subr.bf16.mxu0 %v1908
  %6440 = vmatpush1.bf16.msra.mxu0 %v1907
  %6441 = vmatprep.subr.bf16.mxu0 %v1920
  %6442 = vmatpush1.bf16.msra.mxu0 %v1919
  %6443 = vmatprep.subr.bf16.mxu0 %v1932
  %6444 = vmatpush1.bf16.msra.mxu0 %v1931
  %6445 = vmatprep.subr.bf16.mxu0 %v1944
  %6446 = vmatpush1.bf16.msra.mxu0 %v1943
  %6447 = vmatprep.subr.bf16.mxu0 %v1956
  %6448 = vmatpush1.bf16.msra.mxu0 %v1955
  %6449 = vmatprep.subr.bf16.mxu0 %v1968
  %6450 = vmatpush1.bf16.msra.mxu0 %v1967
  %6451 = vmatprep.subr.bf16.mxu0 %v1980
  %6452 = vmatpush1.bf16.msra.mxu0 %v1979
  %6453 = vmatprep.subr.bf16.mxu0 %v1992
  %6454 = vmatpush1.bf16.msra.mxu0 %v1991
  %6455 = vmatprep.subr.bf16.mxu0 %v2004
  %6456 = vmatpush1.bf16.msra.mxu0 %v2003
  %6457 = vmatprep.subr.bf16.mxu0 %v2016
  %6458 = vmatpush1.bf16.msra.mxu0 %v2015
  %6459 = vmatprep.subr.bf16.mxu0 %v2028
  %6460 = vmatpush1.bf16.msra.mxu0 %v2027
  %6461 = vmatprep.subr.bf16.mxu0 %v2040
  %6462 = vmatpush1.bf16.msra.mxu0 %v2039
  %6463 = vmatprep.subr.bf16.mxu0 %v2052
  %6464 = vmatpush1.bf16.msra.mxu0 %v2051
  %6465 = vmatprep.subr.bf16.mxu0 %v2064
  %6466 = vmatpush1.bf16.msra.mxu0 %v2063
  %6467 = vmatprep.subr.bf16.mxu0 %v2076
  %6468 = vmatpush1.bf16.msra.mxu0 %v2075
  %6469 = vmatprep.subr.bf16.mxu0 %v2088
  %6470 = vmatpush1.bf16.msra.mxu0 %v2087
  %6471 = vmatprep.mubr.bf16.mxu0 %v6310
  %6472 = vmatmul.mubr.bf16.gmra.mrb[0].mxu0 %v6309
  %v6473 = vpop.f32.mrb[0].mxu0
  %v6474 = vadd.f32 %v6433, %v6473
  %v6475 = vpop.f32.mrb[0].mxu0
  %v6476 = vadd.f32 %v6435, %v6475
  %v6477 = vpop.f32.mrb[0].mxu0
  %v6478 = vpop.f32.mrb[0].mxu0
  %6479 = vdwg.mxu0
  %6480 = vmatprep.subr.bf16.mxu0 %v1718
  %6481 = vmatpush1.bf16.msra.mxu0 %v1717
  %6482 = vmatprep.subr.bf16.mxu0 %v1730
  %6483 = vmatpush1.bf16.msra.mxu0 %v1729
  %6484 = vmatprep.subr.bf16.mxu0 %v1742
  %6485 = vmatpush1.bf16.msra.mxu0 %v1741
  %6486 = vmatprep.subr.bf16.mxu0 %v1754
  %6487 = vmatpush1.bf16.msra.mxu0 %v1753
  %6488 = vmatprep.subr.bf16.mxu0 %v1766
  %6489 = vmatpush1.bf16.msra.mxu0 %v1765
  %6490 = vmatprep.subr.bf16.mxu0 %v1778
  %6491 = vmatpush1.bf16.msra.mxu0 %v1777
  %6492 = vmatprep.subr.bf16.mxu0 %v1790
  %6493 = vmatpush1.bf16.msra.mxu0 %v1789
  %6494 = vmatprep.subr.bf16.mxu0 %v1802
  %6495 = vmatpush1.bf16.msra.mxu0 %v1801
  %6496 = vmatprep.subr.bf16.mxu0 %v1814
  %6497 = vmatpush1.bf16.msra.mxu0 %v1813
  %6498 = vmatprep.subr.bf16.mxu0 %v1826
  %6499 = vmatpush1.bf16.msra.mxu0 %v1825
  %6500 = vmatprep.subr.bf16.mxu0 %v1838
  %6501 = vmatpush1.bf16.msra.mxu0 %v1837
  %6502 = vmatprep.subr.bf16.mxu0 %v1850
  %6503 = vmatpush1.bf16.msra.mxu0 %v1849
  %6504 = vmatprep.subr.bf16.mxu0 %v1862
  %6505 = vmatpush1.bf16.msra.mxu0 %v1861
  %6506 = vmatprep.subr.bf16.mxu0 %v1874
  %6507 = vmatpush1.bf16.msra.mxu0 %v1873
  %6508 = vmatprep.subr.bf16.mxu0 %v1886
  %6509 = vmatpush1.bf16.msra.mxu0 %v1885
  %6510 = vmatprep.subr.bf16.mxu0 %v1898
  %6511 = vmatpush1.bf16.msra.mxu0 %v1897
  %6512 = vmatprep.mubr.bf16.mxu0 %v6308
  %6513 = vmatmul.mubr.bf16.gmra.mrb[0].mxu0 %v6307
  %v6514 = vpop.f32.mrb[0].mxu0
  %v6515 = vadd.f32 0.0, %v6514
  %v6516 = vpop.f32.mrb[0].mxu0
  %v6517 = vadd.f32 0.0, %v6516
  %v6518 = vpop.f32.mrb[0].mxu0
  %v6519 = vpop.f32.mrb[0].mxu0
  %6520 = vdwg.mxu0
  %6521 = vmatprep.subr.bf16.mxu0 %v1910
  %6522 = vmatpush1.bf16.msra.mxu0 %v1909
  %6523 = vmatprep.subr.bf16.mxu0 %v1922
  %6524 = vmatpush1.bf16.msra.mxu0 %v1921
  %6525 = vmatprep.subr.bf16.mxu0 %v1934
  %6526 = vmatpush1.bf16.msra.mxu0 %v1933
  %6527 = vmatprep.subr.bf16.mxu0 %v1946
  %6528 = vmatpush1.bf16.msra.mxu0 %v1945
  %6529 = vmatprep.subr.bf16.mxu0 %v1958
  %6530 = vmatpush1.bf16.msra.mxu0 %v1957
  %6531 = vmatprep.subr.bf16.mxu0 %v1970
  %6532 = vmatpush1.bf16.msra.mxu0 %v1969
  %6533 = vmatprep.subr.bf16.mxu0 %v1982
  %6534 = vmatpush1.bf16.msra.mxu0 %v1981
  %6535 = vmatprep.subr.bf16.mxu0 %v1994
  %6536 = vmatpush1.bf16.msra.mxu0 %v1993
  %6537 = vmatprep.subr.bf16.mxu0 %v2006
  %6538 = vmatpush1.bf16.msra.mxu0 %v2005
  %6539 = vmatprep.subr.bf16.mxu0 %v2018
  %6540 = vmatpush1.bf16.msra.mxu0 %v2017
  %6541 = vmatprep.subr.bf16.mxu0 %v2030
  %6542 = vmatpush1.bf16.msra.mxu0 %v2029
  %6543 = vmatprep.subr.bf16.mxu0 %v2042
  %6544 = vmatpush1.bf16.msra.mxu0 %v2041
  %6545 = vmatprep.subr.bf16.mxu0 %v2054
  %6546 = vmatpush1.bf16.msra.mxu0 %v2053
  %6547 = vmatprep.subr.bf16.mxu0 %v2066
  %6548 = vmatpush1.bf16.msra.mxu0 %v2065
  %6549 = vmatprep.subr.bf16.mxu0 %v2078
  %6550 = vmatpush1.bf16.msra.mxu0 %v2077
  %6551 = vmatprep.subr.bf16.mxu0 %v2090
  %6552 = vmatpush1.bf16.msra.mxu0 %v2089
  %6553 = vmatprep.mubr.bf16.mxu0 %v6310
  %6554 = vmatmul.mubr.bf16.gmra.mrb[0].mxu0 %v6309
  %v6555 = vpop.f32.mrb[0].mxu0
  %v6556 = vadd.f32 %v6515, %v6555
  %v6557 = vpop.f32.mrb[0].mxu0
  %v6558 = vadd.f32 %v6517, %v6557
  %v6559 = vpop.f32.mrb[0].mxu0
  %v6560 = vpop.f32.mrb[0].mxu0
  %6561 = vdwg.mxu0
  %6562 = vmatprep.subr.bf16.mxu0 %v1720
  %6563 = vmatpush1.bf16.msra.mxu0 %v1719
  %6564 = vmatprep.subr.bf16.mxu0 %v1732
  %6565 = vmatpush1.bf16.msra.mxu0 %v1731
  %6566 = vmatprep.subr.bf16.mxu0 %v1744
  %6567 = vmatpush1.bf16.msra.mxu0 %v1743
  %6568 = vmatprep.subr.bf16.mxu0 %v1756
  %6569 = vmatpush1.bf16.msra.mxu0 %v1755
  %6570 = vmatprep.subr.bf16.mxu0 %v1768
  %6571 = vmatpush1.bf16.msra.mxu0 %v1767
  %6572 = vmatprep.subr.bf16.mxu0 %v1780
  %6573 = vmatpush1.bf16.msra.mxu0 %v1779
  %6574 = vmatprep.subr.bf16.mxu0 %v1792
  %6575 = vmatpush1.bf16.msra.mxu0 %v1791
  %6576 = vmatprep.subr.bf16.mxu0 %v1804
  %6577 = vmatpush1.bf16.msra.mxu0 %v1803
  %6578 = vmatprep.subr.bf16.mxu0 %v1816
  %6579 = vmatpush1.bf16.msra.mxu0 %v1815
  %6580 = vmatprep.subr.bf16.mxu0 %v1828
  %6581 = vmatpush1.bf16.msra.mxu0 %v1827
  %6582 = vmatprep.subr.bf16.mxu0 %v1840
  %6583 = vmatpush1.bf16.msra.mxu0 %v1839
  %6584 = vmatprep.subr.bf16.mxu0 %v1852
  %6585 = vmatpush1.bf16.msra.mxu0 %v1851
  %6586 = vmatprep.subr.bf16.mxu0 %v1864
  %6587 = vmatpush1.bf16.msra.mxu0 %v1863
  %6588 = vmatprep.subr.bf16.mxu0 %v1876
  %6589 = vmatpush1.bf16.msra.mxu0 %v1875
  %6590 = vmatprep.subr.bf16.mxu0 %v1888
  %6591 = vmatpush1.bf16.msra.mxu0 %v1887
  %6592 = vmatprep.subr.bf16.mxu0 %v1900
  %6593 = vmatpush1.bf16.msra.mxu0 %v1899
  %6594 = vmatprep.mubr.bf16.mxu0 %v6308
  %6595 = vmatmul.mubr.bf16.gmra.mrb[0].mxu0 %v6307
  %v6596 = vpop.f32.mrb[0].mxu0
  %v6597 = vadd.f32 0.0, %v6596
  %v6598 = vpop.f32.mrb[0].mxu0
  %v6599 = vadd.f32 0.0, %v6598
  %v6600 = vpop.f32.mrb[0].mxu0
  %v6601 = vpop.f32.mrb[0].mxu0
  %6602 = vdwg.mxu0
  %6603 = vmatprep.subr.bf16.mxu0 %v1912
  %6604 = vmatpush1.bf16.msra.mxu0 %v1911
  %6605 = vmatprep.subr.bf16.mxu0 %v1924
  %6606 = vmatpush1.bf16.msra.mxu0 %v1923
  %6607 = vmatprep.subr.bf16.mxu0 %v1936
  %6608 = vmatpush1.bf16.msra.mxu0 %v1935
  %6609 = vmatprep.subr.bf16.mxu0 %v1948
  %6610 = vmatpush1.bf16.msra.mxu0 %v1947
  %6611 = vmatprep.subr.bf16.mxu0 %v1960
  %6612 = vmatpush1.bf16.msra.mxu0 %v1959
  %6613 = vmatprep.subr.bf16.mxu0 %v1972
  %6614 = vmatpush1.bf16.msra.mxu0 %v1971
  %6615 = vmatprep.subr.bf16.mxu0 %v1984
  %6616 = vmatpush1.bf16.msra.mxu0 %v1983
  %6617 = vmatprep.subr.bf16.mxu0 %v1996
  %6618 = vmatpush1.bf16.msra.mxu0 %v1995
  %6619 = vmatprep.subr.bf16.mxu0 %v2008
  %6620 = vmatpush1.bf16.msra.mxu0 %v2007
  %6621 = vmatprep.subr.bf16.mxu0 %v2020
  %6622 = vmatpush1.bf16.msra.mxu0 %v2019
  %6623 = vmatprep.subr.bf16.mxu0 %v2032
  %6624 = vmatpush1.bf16.msra.mxu0 %v2031
  %6625 = vmatprep.subr.bf16.mxu0 %v2044
  %6626 = vmatpush1.bf16.msra.mxu0 %v2043
  %6627 = vmatprep.subr.bf16.mxu0 %v2056
  %6628 = vmatpush1.bf16.msra.mxu0 %v2055
  %6629 = vmatprep.subr.bf16.mxu0 %v2068
  %6630 = vmatpush1.bf16.msra.mxu0 %v2067
  %6631 = vmatprep.subr.bf16.mxu0 %v2080
  %6632 = vmatpush1.bf16.msra.mxu0 %v2079
  %6633 = vmatprep.subr.bf16.mxu0 %v2092
  %6634 = vmatpush1.bf16.msra.mxu0 %v2091
  %6635 = vmatprep.mubr.bf16.mxu0 %v6310
  %6636 = vmatmul.mubr.bf16.gmra.mrb[0].mxu0 %v6309
  %v6637 = vpop.f32.mrb[0].mxu0
  %v6638 = vadd.f32 %v6597, %v6637
  %v6639 = vpop.f32.mrb[0].mxu0
  %v6640 = vadd.f32 %v6599, %v6639
  %v6641 = vpop.f32.mrb[0].mxu0
  %v6642 = vpop.f32.mrb[0].mxu0
  %6643 = vdwg.mxu0
  %6644 = vmatprep.subr.bf16.mxu0 %v1722
  %6645 = vmatpush1.bf16.msra.mxu0 %v1721
  %6646 = vmatprep.subr.bf16.mxu0 %v1734
  %6647 = vmatpush1.bf16.msra.mxu0 %v1733
  %6648 = vmatprep.subr.bf16.mxu0 %v1746
  %6649 = vmatpush1.bf16.msra.mxu0 %v1745
  %6650 = vmatprep.subr.bf16.mxu0 %v1758
  %6651 = vmatpush1.bf16.msra.mxu0 %v1757
  %6652 = vmatprep.subr.bf16.mxu0 %v1770
  %6653 = vmatpush1.bf16.msra.mxu0 %v1769
  %6654 = vmatprep.subr.bf16.mxu0 %v1782
  %6655 = vmatpush1.bf16.msra.mxu0 %v1781
  %6656 = vmatprep.subr.bf16.mxu0 %v1794
  %6657 = vmatpush1.bf16.msra.mxu0 %v1793
  %6658 = vmatprep.subr.bf16.mxu0 %v1806
  %6659 = vmatpush1.bf16.msra.mxu0 %v1805
  %6660 = vmatprep.subr.bf16.mxu0 %v1818
  %6661 = vmatpush1.bf16.msra.mxu0 %v1817
  %6662 = vmatprep.subr.bf16.mxu0 %v1830
  %6663 = vmatpush1.bf16.msra.mxu0 %v1829
  %6664 = vmatprep.subr.bf16.mxu0 %v1842
  %6665 = vmatpush1.bf16.msra.mxu0 %v1841
  %6666 = vmatprep.subr.bf16.mxu0 %v1854
  %6667 = vmatpush1.bf16.msra.mxu0 %v1853
  %6668 = vmatprep.subr.bf16.mxu0 %v1866
  %6669 = vmatpush1.bf16.msra.mxu0 %v1865
  %6670 = vmatprep.subr.bf16.mxu0 %v1878
  %6671 = vmatpush1.bf16.msra.mxu0 %v1877
  %6672 = vmatprep.subr.bf16.mxu0 %v1890
  %6673 = vmatpush1.bf16.msra.mxu0 %v1889
  %6674 = vmatprep.subr.bf16.mxu0 %v1902
  %6675 = vmatpush1.bf16.msra.mxu0 %v1901
  %6676 = vmatprep.mubr.bf16.mxu0 %v6308
  %6677 = vmatmul.mubr.bf16.gmra.mrb[0].mxu0 %v6307
  %v6678 = vpop.f32.mrb[0].mxu0
  %v6679 = vadd.f32 0.0, %v6678
  %v6680 = vpop.f32.mrb[0].mxu0
  %v6681 = vadd.f32 0.0, %v6680
  %v6682 = vpop.f32.mrb[0].mxu0
  %v6683 = vpop.f32.mrb[0].mxu0
  %6684 = vdwg.mxu0
  %6685 = vmatprep.subr.bf16.mxu0 %v1914
  %6686 = vmatpush1.bf16.msra.mxu0 %v1913
  %6687 = vmatprep.subr.bf16.mxu0 %v1926
  %6688 = vmatpush1.bf16.msra.mxu0 %v1925
  %6689 = vmatprep.subr.bf16.mxu0 %v1938
  %6690 = vmatpush1.bf16.msra.mxu0 %v1937
  %6691 = vmatprep.subr.bf16.mxu0 %v1950
  %6692 = vmatpush1.bf16.msra.mxu0 %v1949
  %6693 = vmatprep.subr.bf16.mxu0 %v1962
  %6694 = vmatpush1.bf16.msra.mxu0 %v1961
  %6695 = vmatprep.subr.bf16.mxu0 %v1974
  %6696 = vmatpush1.bf16.msra.mxu0 %v1973
  %6697 = vmatprep.subr.bf16.mxu0 %v1986
  %6698 = vmatpush1.bf16.msra.mxu0 %v1985
  %6699 = vmatprep.subr.bf16.mxu0 %v1998
  %6700 = vmatpush1.bf16.msra.mxu0 %v1997
  %6701 = vmatprep.subr.bf16.mxu0 %v2010
  %6702 = vmatpush1.bf16.msra.mxu0 %v2009
  %6703 = vmatprep.subr.bf16.mxu0 %v2022
  %6704 = vmatpush1.bf16.msra.mxu0 %v2021
  %6705 = vmatprep.subr.bf16.mxu0 %v2034
  %6706 = vmatpush1.bf16.msra.mxu0 %v2033
  %6707 = vmatprep.subr.bf16.mxu0 %v2046
  %6708 = vmatpush1.bf16.msra.mxu0 %v2045
  %6709 = vmatprep.subr.bf16.mxu0 %v2058
  %6710 = vmatpush1.bf16.msra.mxu0 %v2057
  %6711 = vmatprep.subr.bf16.mxu0 %v2070
  %6712 = vmatpush1.bf16.msra.mxu0 %v2069
  %6713 = vmatprep.subr.bf16.mxu0 %v2082
  %6714 = vmatpush1.bf16.msra.mxu0 %v2081
  %6715 = vmatprep.subr.bf16.mxu0 %v2094
  %6716 = vmatpush1.bf16.msra.mxu0 %v2093
  %6717 = vmatprep.mubr.bf16.mxu0 %v6310
  %6718 = vmatmul.mubr.bf16.gmra.mrb[0].mxu0 %v6309
  %v6719 = vpop.f32.mrb[0].mxu0
  %v6720 = vadd.f32 %v6679, %v6719
  %v6721 = vpop.f32.mrb[0].mxu0
  %v6722 = vadd.f32 %v6681, %v6721
  %v6723 = vpop.f32.mrb[0].mxu0
  %v6724 = vpop.f32.mrb[0].mxu0
  %6725 = vdwg.mxu0
  %6726 = vmatprep.subr.bf16.mxu0 %v1724
  %6727 = vmatpush1.bf16.msra.mxu0 %v1723
  %6728 = vmatprep.subr.bf16.mxu0 %v1736
  %6729 = vmatpush1.bf16.msra.mxu0 %v1735
  %6730 = vmatprep.subr.bf16.mxu0 %v1748
  %6731 = vmatpush1.bf16.msra.mxu0 %v1747
  %6732 = vmatprep.subr.bf16.mxu0 %v1760
  %6733 = vmatpush1.bf16.msra.mxu0 %v1759
  %6734 = vmatprep.subr.bf16.mxu0 %v1772
  %6735 = vmatpush1.bf16.msra.mxu0 %v1771
  %6736 = vmatprep.subr.bf16.mxu0 %v1784
  %6737 = vmatpush1.bf16.msra.mxu0 %v1783
  %6738 = vmatprep.subr.bf16.mxu0 %v1796
  %6739 = vmatpush1.bf16.msra.mxu0 %v1795
  %6740 = vmatprep.subr.bf16.mxu0 %v1808
  %6741 = vmatpush1.bf16.msra.mxu0 %v1807
  %6742 = vmatprep.subr.bf16.mxu0 %v1820
  %6743 = vmatpush1.bf16.msra.mxu0 %v1819
  %6744 = vmatprep.subr.bf16.mxu0 %v1832
  %6745 = vmatpush1.bf16.msra.mxu0 %v1831
  %6746 = vmatprep.subr.bf16.mxu0 %v1844
  %6747 = vmatpush1.bf16.msra.mxu0 %v1843
  %6748 = vmatprep.subr.bf16.mxu0 %v1856
  %6749 = vmatpush1.bf16.msra.mxu0 %v1855
  %6750 = vmatprep.subr.bf16.mxu0 %v1868
  %6751 = vmatpush1.bf16.msra.mxu0 %v1867
  %6752 = vmatprep.subr.bf16.mxu0 %v1880
  %6753 = vmatpush1.bf16.msra.mxu0 %v1879
  %6754 = vmatprep.subr.bf16.mxu0 %v1892
  %6755 = vmatpush1.bf16.msra.mxu0 %v1891
  %6756 = vmatprep.subr.bf16.mxu0 %v1904
  %6757 = vmatpush1.bf16.msra.mxu0 %v1903
  %6758 = vmatprep.mubr.bf16.mxu0 %v6308
  %6759 = vmatmul.mubr.bf16.gmra.mrb[0].mxu0 %v6307
  %v6760 = vpop.f32.mrb[0].mxu0
  %v6761 = vadd.f32 0.0, %v6760
  %v6762 = vpop.f32.mrb[0].mxu0
  %v6763 = vadd.f32 0.0, %v6762
  %v6764 = vpop.f32.mrb[0].mxu0
  %v6765 = vpop.f32.mrb[0].mxu0
  %6766 = vdwg.mxu0
  %6767 = vmatprep.subr.bf16.mxu0 %v1916
  %6768 = vmatpush1.bf16.msra.mxu0 %v1915
  %6769 = vmatprep.subr.bf16.mxu0 %v1928
  %6770 = vmatpush1.bf16.msra.mxu0 %v1927
  %6771 = vmatprep.subr.bf16.mxu0 %v1940
  %6772 = vmatpush1.bf16.msra.mxu0 %v1939
  %6773 = vmatprep.subr.bf16.mxu0 %v1952
  %6774 = vmatpush1.bf16.msra.mxu0 %v1951
  %6775 = vmatprep.subr.bf16.mxu0 %v1964
  %6776 = vmatpush1.bf16.msra.mxu0 %v1963
  %6777 = vmatprep.subr.bf16.mxu0 %v1976
  %6778 = vmatpush1.bf16.msra.mxu0 %v1975
  %6779 = vmatprep.subr.bf16.mxu0 %v1988
  %6780 = vmatpush1.bf16.msra.mxu0 %v1987
  %6781 = vmatprep.subr.bf16.mxu0 %v2000
  %6782 = vmatpush1.bf16.msra.mxu0 %v1999
  %6783 = vmatprep.subr.bf16.mxu0 %v2012
  %6784 = vmatpush1.bf16.msra.mxu0 %v2011
  %6785 = vmatprep.subr.bf16.mxu0 %v2024
  %6786 = vmatpush1.bf16.msra.mxu0 %v2023
  %6787 = vmatprep.subr.bf16.mxu0 %v2036
  %6788 = vmatpush1.bf16.msra.mxu0 %v2035
  %6789 = vmatprep.subr.bf16.mxu0 %v2048
  %6790 = vmatpush1.bf16.msra.mxu0 %v2047
  %6791 = vmatprep.subr.bf16.mxu0 %v2060
  %6792 = vmatpush1.bf16.msra.mxu0 %v2059
  %6793 = vmatprep.subr.bf16.mxu0 %v2072
  %6794 = vmatpush1.bf16.msra.mxu0 %v2071
  %6795 = vmatprep.subr.bf16.mxu0 %v2084
  %6796 = vmatpush1.bf16.msra.mxu0 %v2083
  %6797 = vmatprep.subr.bf16.mxu0 %v2096
  %6798 = vmatpush1.bf16.msra.mxu0 %v2095
  %6799 = vmatprep.mubr.bf16.mxu0 %v6310
  %6800 = vmatmul.mubr.bf16.gmra.mrb[0].mxu0 %v6309
  %v6801 = vpop.f32.mrb[0].mxu0
  %v6802 = vadd.f32 %v6761, %v6801
  %v6803 = vpop.f32.mrb[0].mxu0
  %v6804 = vadd.f32 %v6763, %v6803
  %v6805 = vpop.f32.mrb[0].mxu0
  %v6806 = vpop.f32.mrb[0].mxu0
  %6807 = vdwg.mxu0
  %v6820 = vcombine.low %v6392, %v6394
  %v6821 = vcombine.low %v6474, %v6476
  %v6823 = vunpack.c.l.s4 1983009808
  %v6824 = vunpack.c.0.s8 %v6823
  %v6825 = vlaneseq
  %v6826 = vshrl.u32 %v6825, 7
  %v6827 = vsub.s32 %v6824, %v6826
  %v6828 = vrot.slane %v6820, %v6827
  %v6830 = vunpack.c.l.s4 1983009808
  %v6831 = vunpack.c.0.s8 %v6830
  %v6832 = vlaneseq
  %v6833 = vshrl.u32 %v6832, 7
  %v6834 = vsub.s32 %v6831, %v6833
  %v6835 = vrot.slane %v6821, %v6834
  %v6836 = vcombine.low %v6828, %v6835
  %v6837 = vcombine.low %v6556, %v6558
  %v6838 = vcombine.low %v6638, %v6640
  %v6840 = vunpack.c.l.s4 1983009808
  %v6841 = vunpack.c.0.s8 %v6840
  %v6842 = vlaneseq
  %v6843 = vshrl.u32 %v6842, 7
  %v6844 = vsub.s32 %v6841, %v6843
  %v6845 = vrot.slane %v6837, %v6844
  %v6847 = vunpack.c.l.s4 1983009808
  %v6848 = vunpack.c.0.s8 %v6847
  %v6849 = vlaneseq
  %v6850 = vshrl.u32 %v6849, 7
  %v6851 = vsub.s32 %v6848, %v6850
  %v6852 = vrot.slane %v6838, %v6851
  %v6853 = vcombine.low %v6845, %v6852
  %v6854 = vcombine.low %v6720, %v6722
  %v6855 = vcombine.low %v6802, %v6804
  %v6857 = vunpack.c.l.s4 1983009808
  %v6858 = vunpack.c.0.s8 %v6857
  %v6859 = vlaneseq
  %v6860 = vshrl.u32 %v6859, 7
  %v6861 = vsub.s32 %v6858, %v6860
  %v6862 = vrot.slane %v6854, %v6861
  %v6864 = vunpack.c.l.s4 1983009808
  %v6865 = vunpack.c.0.s8 %v6864
  %v6866 = vlaneseq
  %v6867 = vshrl.u32 %v6866, 7
  %v6868 = vsub.s32 %v6865, %v6867
  %v6869 = vrot.slane %v6855, %v6868
  %v6870 = vcombine.low %v6862, %v6869
  %v6874 = vadd.f32 %v6312, %v6836
  %v6875 = vadd.f32 %v6313, %v6853
  %v6876 = vadd.f32 %v6314, %v6870
  %6877 = vmatprep.subr.bf16.mxu0 %v3427
  %6878 = vmatpush1.bf16.msra.mxu0 %v3426
  %6879 = vmatprep.subr.bf16.mxu0 %v3431
  %6880 = vmatpush1.bf16.msra.mxu0 %v3430
  %6881 = vmatprep.subr.bf16.mxu0 %v3435
  %6882 = vmatpush1.bf16.msra.mxu0 %v3434
  %6883 = vmatprep.subr.bf16.mxu0 %v3439
  %6884 = vmatpush1.bf16.msra.mxu0 %v3438
  %6885 = vmatprep.subr.bf16.mxu0 %v3443
  %6886 = vmatpush1.bf16.msra.mxu0 %v3442
  %6887 = vmatprep.subr.bf16.mxu0 %v3447
  %6888 = vmatpush1.bf16.msra.mxu0 %v3446
  %6889 = vmatprep.subr.bf16.mxu0 %v3451
  %6890 = vmatpush1.bf16.msra.mxu0 %v3450
  %6891 = vmatprep.subr.bf16.mxu0 %v3455
  %6892 = vmatpush1.bf16.msra.mxu0 %v3454
  %6893 = vmatprep.subr.bf16.mxu0 %v3459
  %6894 = vmatpush1.bf16.msra.mxu0 %v3458
  %6895 = vmatprep.subr.bf16.mxu0 %v3463
  %6896 = vmatpush1.bf16.msra.mxu0 %v3462
  %6897 = vmatprep.subr.bf16.mxu0 %v3467
  %6898 = vmatpush1.bf16.msra.mxu0 %v3466
  %6899 = vmatprep.subr.bf16.mxu0 %v3471
  %6900 = vmatpush1.bf16.msra.mxu0 %v3470
  %6901 = vmatprep.subr.bf16.mxu0 %v3475
  %6902 = vmatpush1.bf16.msra.mxu0 %v3474
  %6903 = vmatprep.subr.bf16.mxu0 %v3479
  %6904 = vmatpush1.bf16.msra.mxu0 %v3478
  %6905 = vmatprep.subr.bf16.mxu0 %v3483
  %6906 = vmatpush1.bf16.msra.mxu0 %v3482
  %6907 = vmatprep.subr.bf16.mxu0 %v3487
  %6908 = vmatpush1.bf16.msra.mxu0 %v3486
  %6909 = vmatprep.mubr.bf16.mxu0 %v6308
  %6910 = vmatmul.mubr.bf16.gmra.mrb[0].mxu0 %v6307
  %v6911 = vpop.f32.mrb[0].mxu0
  %v6912 = vadd.f32 0.0, %v6911
  %v6913 = vpop.f32.mrb[0].mxu0
  %v6914 = vadd.f32 0.0, %v6913
  %v6915 = vpop.f32.mrb[0].mxu0
  %v6916 = vpop.f32.mrb[0].mxu0
  %6917 = vdwg.mxu0
  %6918 = vmatprep.subr.bf16.mxu0 %v3491
  %6919 = vmatpush1.bf16.msra.mxu0 %v3490
  %6920 = vmatprep.subr.bf16.mxu0 %v3495
  %6921 = vmatpush1.bf16.msra.mxu0 %v3494
  %6922 = vmatprep.subr.bf16.mxu0 %v3499
  %6923 = vmatpush1.bf16.msra.mxu0 %v3498
  %6924 = vmatprep.subr.bf16.mxu0 %v3503
  %6925 = vmatpush1.bf16.msra.mxu0 %v3502
  %6926 = vmatprep.subr.bf16.mxu0 %v3507
  %6927 = vmatpush1.bf16.msra.mxu0 %v3506
  %6928 = vmatprep.subr.bf16.mxu0 %v3511
  %6929 = vmatpush1.bf16.msra.mxu0 %v3510
  %6930 = vmatprep.subr.bf16.mxu0 %v3515
  %6931 = vmatpush1.bf16.msra.mxu0 %v3514
  %6932 = vmatprep.subr.bf16.mxu0 %v3519
  %6933 = vmatpush1.bf16.msra.mxu0 %v3518
  %6934 = vmatprep.subr.bf16.mxu0 %v3523
  %6935 = vmatpush1.bf16.msra.mxu0 %v3522
  %6936 = vmatprep.subr.bf16.mxu0 %v3527
  %6937 = vmatpush1.bf16.msra.mxu0 %v3526
  %6938 = vmatprep.subr.bf16.mxu0 %v3531
  %6939 = vmatpush1.bf16.msra.mxu0 %v3530
  %6940 = vmatprep.subr.bf16.mxu0 %v3535
  %6941 = vmatpush1.bf16.msra.mxu0 %v3534
  %6942 = vmatprep.subr.bf16.mxu0 %v3539
  %6943 = vmatpush1.bf16.msra.mxu0 %v3538
  %6944 = vmatprep.subr.bf16.mxu0 %v3543
  %6945 = vmatpush1.bf16.msra.mxu0 %v3542
  %6946 = vmatprep.subr.bf16.mxu0 %v3547
  %6947 = vmatpush1.bf16.msra.mxu0 %v3546
  %6948 = vmatprep.subr.bf16.mxu0 %v3551
  %6949 = vmatpush1.bf16.msra.mxu0 %v3550
  %6950 = vmatprep.mubr.bf16.mxu0 %v6310
  %6951 = vmatmul.mubr.bf16.gmra.mrb[0].mxu0 %v6309
  %v6952 = vpop.f32.mrb[0].mxu0
  %v6953 = vadd.f32 %v6912, %v6952
  %v6954 = vpop.f32.mrb[0].mxu0
  %v6955 = vadd.f32 %v6914, %v6954
  %v6956 = vpop.f32.mrb[0].mxu0
  %v6957 = vpop.f32.mrb[0].mxu0
  %6958 = vdwg.mxu0
  %6959 = vmatprep.subr.bf16.mxu0 %v3429
  %6960 = vmatpush1.bf16.msra.mxu0 %v3428
  %6961 = vmatprep.subr.bf16.mxu0 %v3433
  %6962 = vmatpush1.bf16.msra.mxu0 %v3432
  %6963 = vmatprep.subr.bf16.mxu0 %v3437
  %6964 = vmatpush1.bf16.msra.mxu0 %v3436
  %6965 = vmatprep.subr.bf16.mxu0 %v3441
  %6966 = vmatpush1.bf16.msra.mxu0 %v3440
  %6967 = vmatprep.subr.bf16.mxu0 %v3445
  %6968 = vmatpush1.bf16.msra.mxu0 %v3444
  %6969 = vmatprep.subr.bf16.mxu0 %v3449
  %6970 = vmatpush1.bf16.msra.mxu0 %v3448
  %6971 = vmatprep.subr.bf16.mxu0 %v3453
  %6972 = vmatpush1.bf16.msra.mxu0 %v3452
  %6973 = vmatprep.subr.bf16.mxu0 %v3457
  %6974 = vmatpush1.bf16.msra.mxu0 %v3456
  %6975 = vmatprep.subr.bf16.mxu0 %v3461
  %6976 = vmatpush1.bf16.msra.mxu0 %v3460
  %6977 = vmatprep.subr.bf16.mxu0 %v3465
  %6978 = vmatpush1.bf16.msra.mxu0 %v3464
  %6979 = vmatprep.subr.bf16.mxu0 %v3469
  %6980 = vmatpush1.bf16.msra.mxu0 %v3468
  %6981 = vmatprep.subr.bf16.mxu0 %v3473
  %6982 = vmatpush1.bf16.msra.mxu0 %v3472
  %6983 = vmatprep.subr.bf16.mxu0 %v3477
  %6984 = vmatpush1.bf16.msra.mxu0 %v3476
  %6985 = vmatprep.subr.bf16.mxu0 %v3481
  %6986 = vmatpush1.bf16.msra.mxu0 %v3480
  %6987 = vmatprep.subr.bf16.mxu0 %v3485
  %6988 = vmatpush1.bf16.msra.mxu0 %v3484
  %6989 = vmatprep.subr.bf16.mxu0 %v3489
  %6990 = vmatpush1.bf16.msra.mxu0 %v3488
  %6991 = vmatprep.mubr.bf16.mxu0 %v6308
  %6992 = vmatmul.mubr.bf16.gmra.mrb[0].mxu0 %v6307
  %v6993 = vpop.f32.mrb[0].mxu0
  %v6994 = vadd.f32 0.0, %v6993
  %v6995 = vpop.f32.mrb[0].mxu0
  %v6996 = vadd.f32 0.0, %v6995
  %v6997 = vpop.f32.mrb[0].mxu0
  %v6998 = vpop.f32.mrb[0].mxu0
  %6999 = vdwg.mxu0
  %7000 = vmatprep.subr.bf16.mxu0 %v3493
  %7001 = vmatpush1.bf16.msra.mxu0 %v3492
  %7002 = vmatprep.subr.bf16.mxu0 %v3497
  %7003 = vmatpush1.bf16.msra.mxu0 %v3496
  %7004 = vmatprep.subr.bf16.mxu0 %v3501
  %7005 = vmatpush1.bf16.msra.mxu0 %v3500
  %7006 = vmatprep.subr.bf16.mxu0 %v3505
  %7007 = vmatpush1.bf16.msra.mxu0 %v3504
  %7008 = vmatprep.subr.bf16.mxu0 %v3509
  %7009 = vmatpush1.bf16.msra.mxu0 %v3508
  %7010 = vmatprep.subr.bf16.mxu0 %v3513
  %7011 = vmatpush1.bf16.msra.mxu0 %v3512
  %7012 = vmatprep.subr.bf16.mxu0 %v3517
  %7013 = vmatpush1.bf16.msra.mxu0 %v3516
  %7014 = vmatprep.subr.bf16.mxu0 %v3521
  %7015 = vmatpush1.bf16.msra.mxu0 %v3520
  %7016 = vmatprep.subr.bf16.mxu0 %v3525
  %7017 = vmatpush1.bf16.msra.mxu0 %v3524
  %7018 = vmatprep.subr.bf16.mxu0 %v3529
  %7019 = vmatpush1.bf16.msra.mxu0 %v3528
  %7020 = vmatprep.subr.bf16.mxu0 %v3533
  %7021 = vmatpush1.bf16.msra.mxu0 %v3532
  %7022 = vmatprep.subr.bf16.mxu0 %v3537
  %7023 = vmatpush1.bf16.msra.mxu0 %v3536
  %7024 = vmatprep.subr.bf16.mxu0 %v3541
  %7025 = vmatpush1.bf16.msra.mxu0 %v3540
  %7026 = vmatprep.subr.bf16.mxu0 %v3545
  %7027 = vmatpush1.bf16.msra.mxu0 %v3544
  %7028 = vmatprep.subr.bf16.mxu0 %v3549
  %7029 = vmatpush1.bf16.msra.mxu0 %v3548
  %7030 = vmatprep.subr.bf16.mxu0 %v3553
  %7031 = vmatpush1.bf16.msra.mxu0 %v3552
  %7032 = vmatprep.mubr.bf16.mxu0 %v6310
  %7033 = vmatmul.mubr.bf16.gmra.mrb[0].mxu0 %v6309
  %v7034 = vpop.f32.mrb[0].mxu0
  %v7035 = vadd.f32 %v6994, %v7034
  %v7036 = vpop.f32.mrb[0].mxu0
  %v7037 = vadd.f32 %v6996, %v7036
  %v7038 = vpop.f32.mrb[0].mxu0
  %v7039 = vpop.f32.mrb[0].mxu0
  %7040 = vdwg.mxu0
  %v7045 = vcombine.low %v6953, %v6955
  %v7046 = vcombine.low %v7035, %v7037
  %v7048 = vunpack.c.l.s4 1983009808
  %v7049 = vunpack.c.0.s8 %v7048
  %v7050 = vlaneseq
  %v7051 = vshrl.u32 %v7050, 7
  %v7052 = vsub.s32 %v7049, %v7051
  %v7053 = vrot.slane %v7045, %v7052
  %v7055 = vunpack.c.l.s4 1983009808
  %v7056 = vunpack.c.0.s8 %v7055
  %v7057 = vlaneseq
  %v7058 = vshrl.u32 %v7057, 7
  %v7059 = vsub.s32 %v7056, %v7058
  %v7060 = vrot.slane %v7046, %v7059
  %v7061 = vcombine.low %v7053, %v7060
  %v7063 = vadd.f32 %v6315, %v7061
  %v7064 = vmul.f32 %v6874, 0.5
  %v7065 = vtanh.pop %v7064
  %v7066 = vadd.f32 %v7065, 1.0
  %v7067 = vmul.f32 %v7066, 0.5
  %v7068 = vmul.f32 %v6875, 0.5
  %v7069 = vtanh.pop %v7068
  %v7070 = vadd.f32 %v7069, 1.0
  %v7071 = vmul.f32 %v7070, 0.5
  %v7072 = vtanh.pop %v6876
  %v7073 = vmul.f32 %v7071, %v6276
  %v7074 = vmul.f32 %v7067, %v7072
  %v7075 = vadd.f32 %v7073, %v7074
  %v7076 = vmul.f32 %v7063, 0.5
  %v7077 = vtanh.pop %v7076
  %v7078 = vadd.f32 %v7077, 1.0
  %v7079 = vmul.f32 %v7078, 0.5
  %v7080 = vtanh.pop %v7075
  %v7081 = vmul.f32 %v7079, %v7080
  %s7082 = scalar_lea.vmem %s2, 32
  %7083 = vst [vmem:[%s7082] sm:$0xff] %v7081
  %v7085 = vcombine.high %v7081, %v7081
  %v7087 = vunpack.c.l.s4 1983009808
  %v7088 = vunpack.c.0.s8 %v7087
  %v7089 = vlaneseq
  %v7090 = vshrl.u32 %v7089, 7
  %v7091 = vsub.s32 %v7088, %v7090
  %v7092 = vrot.slane %v7081, %v7091
  %v7094 = vunpack.c.l.s4 1983009808
  %v7095 = vunpack.c.0.s8 %v7094
  %v7096 = vlaneseq
  %v7097 = vshrl.u32 %v7096, 7
  %v7098 = vsub.s32 %v7095, %v7097
  %v7099 = vrot.slane %v7085, %v7098
  %v7100 = vcombine.high %v7092, %v7092
  %v7101 = vcombine.high %v7099, %v7099
  %v7106 = vpack.c.bf16 %v7092, %v7092
  %v7107 = vpack.c.bf16 %v7100, %v7100
  %v7108 = vpack.c.bf16 %v7099, %v7099
  %v7109 = vpack.c.bf16 %v7101, %v7101
  %s7110 = scalar_lea.vmem %s0, 160
  %v7111 = vld [vmem:[%s7110] sm:$0xff]
  %v7112 = vld [vmem:[%s7110 + $0x8] sm:$0xff]
  %v7113 = vld [vmem:[%s7110 + $0x10] sm:$0xff]
  %v7114 = vld [vmem:[%s7110 + $0x18] sm:$0xff]
  %7115 = vmatprep.subr.bf16.mxu0 %v1714
  %7116 = vmatpush1.bf16.msra.mxu0 %v1713
  %7117 = vmatprep.subr.bf16.mxu0 %v1726
  %7118 = vmatpush1.bf16.msra.mxu0 %v1725
  %7119 = vmatprep.subr.bf16.mxu0 %v1738
  %7120 = vmatpush1.bf16.msra.mxu0 %v1737
  %7121 = vmatprep.subr.bf16.mxu0 %v1750
  %7122 = vmatpush1.bf16.msra.mxu0 %v1749
  %7123 = vmatprep.subr.bf16.mxu0 %v1762
  %7124 = vmatpush1.bf16.msra.mxu0 %v1761
  %7125 = vmatprep.subr.bf16.mxu0 %v1774
  %7126 = vmatpush1.bf16.msra.mxu0 %v1773
  %7127 = vmatprep.subr.bf16.mxu0 %v1786
  %7128 = vmatpush1.bf16.msra.mxu0 %v1785
  %7129 = vmatprep.subr.bf16.mxu0 %v1798
  %7130 = vmatpush1.bf16.msra.mxu0 %v1797
  %7131 = vmatprep.subr.bf16.mxu0 %v1810
  %7132 = vmatpush1.bf16.msra.mxu0 %v1809
  %7133 = vmatprep.subr.bf16.mxu0 %v1822
  %7134 = vmatpush1.bf16.msra.mxu0 %v1821
  %7135 = vmatprep.subr.bf16.mxu0 %v1834
  %7136 = vmatpush1.bf16.msra.mxu0 %v1833
  %7137 = vmatprep.subr.bf16.mxu0 %v1846
  %7138 = vmatpush1.bf16.msra.mxu0 %v1845
  %7139 = vmatprep.subr.bf16.mxu0 %v1858
  %7140 = vmatpush1.bf16.msra.mxu0 %v1857
  %7141 = vmatprep.subr.bf16.mxu0 %v1870
  %7142 = vmatpush1.bf16.msra.mxu0 %v1869
  %7143 = vmatprep.subr.bf16.mxu0 %v1882
  %7144 = vmatpush1.bf16.msra.mxu0 %v1881
  %7145 = vmatprep.subr.bf16.mxu0 %v1894
  %7146 = vmatpush1.bf16.msra.mxu0 %v1893
  %7147 = vmatprep.mubr.bf16.mxu0 %v7107
  %7148 = vmatmul.mubr.bf16.gmra.mrb[0].mxu0 %v7106
  %v7149 = vpop.f32.mrb[0].mxu0
  %v7150 = vadd.f32 0.0, %v7149
  %v7151 = vpop.f32.mrb[0].mxu0
  %v7152 = vadd.f32 0.0, %v7151
  %v7153 = vpop.f32.mrb[0].mxu0
  %v7154 = vpop.f32.mrb[0].mxu0
  %7155 = vdwg.mxu0
  %7156 = vmatprep.subr.bf16.mxu0 %v1906
  %7157 = vmatpush1.bf16.msra.mxu0 %v1905
  %7158 = vmatprep.subr.bf16.mxu0 %v1918
  %7159 = vmatpush1.bf16.msra.mxu0 %v1917
  %7160 = vmatprep.subr.bf16.mxu0 %v1930
  %7161 = vmatpush1.bf16.msra.mxu0 %v1929
  %7162 = vmatprep.subr.bf16.mxu0 %v1942
  %7163 = vmatpush1.bf16.msra.mxu0 %v1941
  %7164 = vmatprep.subr.bf16.mxu0 %v1954
  %7165 = vmatpush1.bf16.msra.mxu0 %v1953
  %7166 = vmatprep.subr.bf16.mxu0 %v1966
  %7167 = vmatpush1.bf16.msra.mxu0 %v1965
  %7168 = vmatprep.subr.bf16.mxu0 %v1978
  %7169 = vmatpush1.bf16.msra.mxu0 %v1977
  %7170 = vmatprep.subr.bf16.mxu0 %v1990
  %7171 = vmatpush1.bf16.msra.mxu0 %v1989
  %7172 = vmatprep.subr.bf16.mxu0 %v2002
  %7173 = vmatpush1.bf16.msra.mxu0 %v2001
  %7174 = vmatprep.subr.bf16.mxu0 %v2014
  %7175 = vmatpush1.bf16.msra.mxu0 %v2013
  %7176 = vmatprep.subr.bf16.mxu0 %v2026
  %7177 = vmatpush1.bf16.msra.mxu0 %v2025
  %7178 = vmatprep.subr.bf16.mxu0 %v2038
  %7179 = vmatpush1.bf16.msra.mxu0 %v2037
  %7180 = vmatprep.subr.bf16.mxu0 %v2050
  %7181 = vmatpush1.bf16.msra.mxu0 %v2049
  %7182 = vmatprep.subr.bf16.mxu0 %v2062
  %7183 = vmatpush1.bf16.msra.mxu0 %v2061
  %7184 = vmatprep.subr.bf16.mxu0 %v2074
  %7185 = vmatpush1.bf16.msra.mxu0 %v2073
  %7186 = vmatprep.subr.bf16.mxu0 %v2086
  %7187 = vmatpush1.bf16.msra.mxu0 %v2085
  %7188 = vmatprep.mubr.bf16.mxu0 %v7109
  %7189 = vmatmul.mubr.bf16.gmra.mrb[0].mxu0 %v7108
  %v7190 = vpop.f32.mrb[0].mxu0
  %v7191 = vadd.f32 %v7150, %v7190
  %v7192 = vpop.f32.mrb[0].mxu0
  %v7193 = vadd.f32 %v7152, %v7192
  %v7194 = vpop.f32.mrb[0].mxu0
  %v7195 = vpop.f32.mrb[0].mxu0
  %7196 = vdwg.mxu0
  %7197 = vmatprep.subr.bf16.mxu0 %v1716
  %7198 = vmatpush1.bf16.msra.mxu0 %v1715
  %7199 = vmatprep.subr.bf16.mxu0 %v1728
  %7200 = vmatpush1.bf16.msra.mxu0 %v1727
  %7201 = vmatprep.subr.bf16.mxu0 %v1740
  %7202 = vmatpush1.bf16.msra.mxu0 %v1739
  %7203 = vmatprep.subr.bf16.mxu0 %v1752
  %7204 = vmatpush1.bf16.msra.mxu0 %v1751
  %7205 = vmatprep.subr.bf16.mxu0 %v1764
  %7206 = vmatpush1.bf16.msra.mxu0 %v1763
  %7207 = vmatprep.subr.bf16.mxu0 %v1776
  %7208 = vmatpush1.bf16.msra.mxu0 %v1775
  %7209 = vmatprep.subr.bf16.mxu0 %v1788
  %7210 = vmatpush1.bf16.msra.mxu0 %v1787
  %7211 = vmatprep.subr.bf16.mxu0 %v1800
  %7212 = vmatpush1.bf16.msra.mxu0 %v1799
  %7213 = vmatprep.subr.bf16.mxu0 %v1812
  %7214 = vmatpush1.bf16.msra.mxu0 %v1811
  %7215 = vmatprep.subr.bf16.mxu0 %v1824
  %7216 = vmatpush1.bf16.msra.mxu0 %v1823
  %7217 = vmatprep.subr.bf16.mxu0 %v1836
  %7218 = vmatpush1.bf16.msra.mxu0 %v1835
  %7219 = vmatprep.subr.bf16.mxu0 %v1848
  %7220 = vmatpush1.bf16.msra.mxu0 %v1847
  %7221 = vmatprep.subr.bf16.mxu0 %v1860
  %7222 = vmatpush1.bf16.msra.mxu0 %v1859
  %7223 = vmatprep.subr.bf16.mxu0 %v1872
  %7224 = vmatpush1.bf16.msra.mxu0 %v1871
  %7225 = vmatprep.subr.bf16.mxu0 %v1884
  %7226 = vmatpush1.bf16.msra.mxu0 %v1883
  %7227 = vmatprep.subr.bf16.mxu0 %v1896
  %7228 = vmatpush1.bf16.msra.mxu0 %v1895
  %7229 = vmatprep.mubr.bf16.mxu0 %v7107
  %7230 = vmatmul.mubr.bf16.gmra.mrb[0].mxu0 %v7106
  %v7231 = vpop.f32.mrb[0].mxu0
  %v7232 = vadd.f32 0.0, %v7231
  %v7233 = vpop.f32.mrb[0].mxu0
  %v7234 = vadd.f32 0.0, %v7233
  %v7235 = vpop.f32.mrb[0].mxu0
  %v7236 = vpop.f32.mrb[0].mxu0
  %7237 = vdwg.mxu0
  %7238 = vmatprep.subr.bf16.mxu0 %v1908
  %7239 = vmatpush1.bf16.msra.mxu0 %v1907
  %7240 = vmatprep.subr.bf16.mxu0 %v1920
  %7241 = vmatpush1.bf16.msra.mxu0 %v1919
  %7242 = vmatprep.subr.bf16.mxu0 %v1932
  %7243 = vmatpush1.bf16.msra.mxu0 %v1931
  %7244 = vmatprep.subr.bf16.mxu0 %v1944
  %7245 = vmatpush1.bf16.msra.mxu0 %v1943
  %7246 = vmatprep.subr.bf16.mxu0 %v1956
  %7247 = vmatpush1.bf16.msra.mxu0 %v1955
  %7248 = vmatprep.subr.bf16.mxu0 %v1968
  %7249 = vmatpush1.bf16.msra.mxu0 %v1967
  %7250 = vmatprep.subr.bf16.mxu0 %v1980
  %7251 = vmatpush1.bf16.msra.mxu0 %v1979
  %7252 = vmatprep.subr.bf16.mxu0 %v1992
  %7253 = vmatpush1.bf16.msra.mxu0 %v1991
  %7254 = vmatprep.subr.bf16.mxu0 %v2004
  %7255 = vmatpush1.bf16.msra.mxu0 %v2003
  %7256 = vmatprep.subr.bf16.mxu0 %v2016
  %7257 = vmatpush1.bf16.msra.mxu0 %v2015
  %7258 = vmatprep.subr.bf16.mxu0 %v2028
  %7259 = vmatpush1.bf16.msra.mxu0 %v2027
  %7260 = vmatprep.subr.bf16.mxu0 %v2040
  %7261 = vmatpush1.bf16.msra.mxu0 %v2039
  %7262 = vmatprep.subr.bf16.mxu0 %v2052
  %7263 = vmatpush1.bf16.msra.mxu0 %v2051
  %7264 = vmatprep.subr.bf16.mxu0 %v2064
  %7265 = vmatpush1.bf16.msra.mxu0 %v2063
  %7266 = vmatprep.subr.bf16.mxu0 %v2076
  %7267 = vmatpush1.bf16.msra.mxu0 %v2075
  %7268 = vmatprep.subr.bf16.mxu0 %v2088
  %7269 = vmatpush1.bf16.msra.mxu0 %v2087
  %7270 = vmatprep.mubr.bf16.mxu0 %v7109
  %7271 = vmatmul.mubr.bf16.gmra.mrb[0].mxu0 %v7108
  %v7272 = vpop.f32.mrb[0].mxu0
  %v7273 = vadd.f32 %v7232, %v7272
  %v7274 = vpop.f32.mrb[0].mxu0
  %v7275 = vadd.f32 %v7234, %v7274
  %v7276 = vpop.f32.mrb[0].mxu0
  %v7277 = vpop.f32.mrb[0].mxu0
  %7278 = vdwg.mxu0
  %7279 = vmatprep.subr.bf16.mxu0 %v1718
  %7280 = vmatpush1.bf16.msra.mxu0 %v1717
  %7281 = vmatprep.subr.bf16.mxu0 %v1730
  %7282 = vmatpush1.bf16.msra.mxu0 %v1729
  %7283 = vmatprep.subr.bf16.mxu0 %v1742
  %7284 = vmatpush1.bf16.msra.mxu0 %v1741
  %7285 = vmatprep.subr.bf16.mxu0 %v1754
  %7286 = vmatpush1.bf16.msra.mxu0 %v1753
  %7287 = vmatprep.subr.bf16.mxu0 %v1766
  %7288 = vmatpush1.bf16.msra.mxu0 %v1765
  %7289 = vmatprep.subr.bf16.mxu0 %v1778
  %7290 = vmatpush1.bf16.msra.mxu0 %v1777
  %7291 = vmatprep.subr.bf16.mxu0 %v1790
  %7292 = vmatpush1.bf16.msra.mxu0 %v1789
  %7293 = vmatprep.subr.bf16.mxu0 %v1802
  %7294 = vmatpush1.bf16.msra.mxu0 %v1801
  %7295 = vmatprep.subr.bf16.mxu0 %v1814
  %7296 = vmatpush1.bf16.msra.mxu0 %v1813
  %7297 = vmatprep.subr.bf16.mxu0 %v1826
  %7298 = vmatpush1.bf16.msra.mxu0 %v1825
  %7299 = vmatprep.subr.bf16.mxu0 %v1838
  %7300 = vmatpush1.bf16.msra.mxu0 %v1837
  %7301 = vmatprep.subr.bf16.mxu0 %v1850
  %7302 = vmatpush1.bf16.msra.mxu0 %v1849
  %7303 = vmatprep.subr.bf16.mxu0 %v1862
  %7304 = vmatpush1.bf16.msra.mxu0 %v1861
  %7305 = vmatprep.subr.bf16.mxu0 %v1874
  %7306 = vmatpush1.bf16.msra.mxu0 %v1873
  %7307 = vmatprep.subr.bf16.mxu0 %v1886
  %7308 = vmatpush1.bf16.msra.mxu0 %v1885
  %7309 = vmatprep.subr.bf16.mxu0 %v1898
  %7310 = vmatpush1.bf16.msra.mxu0 %v1897
  %7311 = vmatprep.mubr.bf16.mxu0 %v7107
  %7312 = vmatmul.mubr.bf16.gmra.mrb[0].mxu0 %v7106
  %v7313 = vpop.f32.mrb[0].mxu0
  %v7314 = vadd.f32 0.0, %v7313
  %v7315 = vpop.f32.mrb[0].mxu0
  %v7316 = vadd.f32 0.0, %v7315
  %v7317 = vpop.f32.mrb[0].mxu0
  %v7318 = vpop.f32.mrb[0].mxu0
  %7319 = vdwg.mxu0
  %7320 = vmatprep.subr.bf16.mxu0 %v1910
  %7321 = vmatpush1.bf16.msra.mxu0 %v1909
  %7322 = vmatprep.subr.bf16.mxu0 %v1922
  %7323 = vmatpush1.bf16.msra.mxu0 %v1921
  %7324 = vmatprep.subr.bf16.mxu0 %v1934
  %7325 = vmatpush1.bf16.msra.mxu0 %v1933
  %7326 = vmatprep.subr.bf16.mxu0 %v1946
  %7327 = vmatpush1.bf16.msra.mxu0 %v1945
  %7328 = vmatprep.subr.bf16.mxu0 %v1958
  %7329 = vmatpush1.bf16.msra.mxu0 %v1957
  %7330 = vmatprep.subr.bf16.mxu0 %v1970
  %7331 = vmatpush1.bf16.msra.mxu0 %v1969
  %7332 = vmatprep.subr.bf16.mxu0 %v1982
  %7333 = vmatpush1.bf16.msra.mxu0 %v1981
  %7334 = vmatprep.subr.bf16.mxu0 %v1994
  %7335 = vmatpush1.bf16.msra.mxu0 %v1993
  %7336 = vmatprep.subr.bf16.mxu0 %v2006
  %7337 = vmatpush1.bf16.msra.mxu0 %v2005
  %7338 = vmatprep.subr.bf16.mxu0 %v2018
  %7339 = vmatpush1.bf16.msra.mxu0 %v2017
  %7340 = vmatprep.subr.bf16.mxu0 %v2030
  %7341 = vmatpush1.bf16.msra.mxu0 %v2029
  %7342 = vmatprep.subr.bf16.mxu0 %v2042
  %7343 = vmatpush1.bf16.msra.mxu0 %v2041
  %7344 = vmatprep.subr.bf16.mxu0 %v2054
  %7345 = vmatpush1.bf16.msra.mxu0 %v2053
  %7346 = vmatprep.subr.bf16.mxu0 %v2066
  %7347 = vmatpush1.bf16.msra.mxu0 %v2065
  %7348 = vmatprep.subr.bf16.mxu0 %v2078
  %7349 = vmatpush1.bf16.msra.mxu0 %v2077
  %7350 = vmatprep.subr.bf16.mxu0 %v2090
  %7351 = vmatpush1.bf16.msra.mxu0 %v2089
  %7352 = vmatprep.mubr.bf16.mxu0 %v7109
  %7353 = vmatmul.mubr.bf16.gmra.mrb[0].mxu0 %v7108
  %v7354 = vpop.f32.mrb[0].mxu0
  %v7355 = vadd.f32 %v7314, %v7354
  %v7356 = vpop.f32.mrb[0].mxu0
  %v7357 = vadd.f32 %v7316, %v7356
  %v7358 = vpop.f32.mrb[0].mxu0
  %v7359 = vpop.f32.mrb[0].mxu0
  %7360 = vdwg.mxu0
  %7361 = vmatprep.subr.bf16.mxu0 %v1720
  %7362 = vmatpush1.bf16.msra.mxu0 %v1719
  %7363 = vmatprep.subr.bf16.mxu0 %v1732
  %7364 = vmatpush1.bf16.msra.mxu0 %v1731
  %7365 = vmatprep.subr.bf16.mxu0 %v1744
  %7366 = vmatpush1.bf16.msra.mxu0 %v1743
  %7367 = vmatprep.subr.bf16.mxu0 %v1756
  %7368 = vmatpush1.bf16.msra.mxu0 %v1755
  %7369 = vmatprep.subr.bf16.mxu0 %v1768
  %7370 = vmatpush1.bf16.msra.mxu0 %v1767
  %7371 = vmatprep.subr.bf16.mxu0 %v1780
  %7372 = vmatpush1.bf16.msra.mxu0 %v1779
  %7373 = vmatprep.subr.bf16.mxu0 %v1792
  %7374 = vmatpush1.bf16.msra.mxu0 %v1791
  %7375 = vmatprep.subr.bf16.mxu0 %v1804
  %7376 = vmatpush1.bf16.msra.mxu0 %v1803
  %7377 = vmatprep.subr.bf16.mxu0 %v1816
  %7378 = vmatpush1.bf16.msra.mxu0 %v1815
  %7379 = vmatprep.subr.bf16.mxu0 %v1828
  %7380 = vmatpush1.bf16.msra.mxu0 %v1827
  %7381 = vmatprep.subr.bf16.mxu0 %v1840
  %7382 = vmatpush1.bf16.msra.mxu0 %v1839
  %7383 = vmatprep.subr.bf16.mxu0 %v1852
  %7384 = vmatpush1.bf16.msra.mxu0 %v1851
  %7385 = vmatprep.subr.bf16.mxu0 %v1864
  %7386 = vmatpush1.bf16.msra.mxu0 %v1863
  %7387 = vmatprep.subr.bf16.mxu0 %v1876
  %7388 = vmatpush1.bf16.msra.mxu0 %v1875
  %7389 = vmatprep.subr.bf16.mxu0 %v1888
  %7390 = vmatpush1.bf16.msra.mxu0 %v1887
  %7391 = vmatprep.subr.bf16.mxu0 %v1900
  %7392 = vmatpush1.bf16.msra.mxu0 %v1899
  %7393 = vmatprep.mubr.bf16.mxu0 %v7107
  %7394 = vmatmul.mubr.bf16.gmra.mrb[0].mxu0 %v7106
  %v7395 = vpop.f32.mrb[0].mxu0
  %v7396 = vadd.f32 0.0, %v7395
  %v7397 = vpop.f32.mrb[0].mxu0
  %v7398 = vadd.f32 0.0, %v7397
  %v7399 = vpop.f32.mrb[0].mxu0
  %v7400 = vpop.f32.mrb[0].mxu0
  %7401 = vdwg.mxu0
  %7402 = vmatprep.subr.bf16.mxu0 %v1912
  %7403 = vmatpush1.bf16.msra.mxu0 %v1911
  %7404 = vmatprep.subr.bf16.mxu0 %v1924
  %7405 = vmatpush1.bf16.msra.mxu0 %v1923
  %7406 = vmatprep.subr.bf16.mxu0 %v1936
  %7407 = vmatpush1.bf16.msra.mxu0 %v1935
  %7408 = vmatprep.subr.bf16.mxu0 %v1948
  %7409 = vmatpush1.bf16.msra.mxu0 %v1947
  %7410 = vmatprep.subr.bf16.mxu0 %v1960
  %7411 = vmatpush1.bf16.msra.mxu0 %v1959
  %7412 = vmatprep.subr.bf16.mxu0 %v1972
  %7413 = vmatpush1.bf16.msra.mxu0 %v1971
  %7414 = vmatprep.subr.bf16.mxu0 %v1984
  %7415 = vmatpush1.bf16.msra.mxu0 %v1983
  %7416 = vmatprep.subr.bf16.mxu0 %v1996
  %7417 = vmatpush1.bf16.msra.mxu0 %v1995
  %7418 = vmatprep.subr.bf16.mxu0 %v2008
  %7419 = vmatpush1.bf16.msra.mxu0 %v2007
  %7420 = vmatprep.subr.bf16.mxu0 %v2020
  %7421 = vmatpush1.bf16.msra.mxu0 %v2019
  %7422 = vmatprep.subr.bf16.mxu0 %v2032
  %7423 = vmatpush1.bf16.msra.mxu0 %v2031
  %7424 = vmatprep.subr.bf16.mxu0 %v2044
  %7425 = vmatpush1.bf16.msra.mxu0 %v2043
  %7426 = vmatprep.subr.bf16.mxu0 %v2056
  %7427 = vmatpush1.bf16.msra.mxu0 %v2055
  %7428 = vmatprep.subr.bf16.mxu0 %v2068
  %7429 = vmatpush1.bf16.msra.mxu0 %v2067
  %7430 = vmatprep.subr.bf16.mxu0 %v2080
  %7431 = vmatpush1.bf16.msra.mxu0 %v2079
  %7432 = vmatprep.subr.bf16.mxu0 %v2092
  %7433 = vmatpush1.bf16.msra.mxu0 %v2091
  %7434 = vmatprep.mubr.bf16.mxu0 %v7109
  %7435 = vmatmul.mubr.bf16.gmra.mrb[0].mxu0 %v7108
  %v7436 = vpop.f32.mrb[0].mxu0
  %v7437 = vadd.f32 %v7396, %v7436
  %v7438 = vpop.f32.mrb[0].mxu0
  %v7439 = vadd.f32 %v7398, %v7438
  %v7440 = vpop.f32.mrb[0].mxu0
  %v7441 = vpop.f32.mrb[0].mxu0
  %7442 = vdwg.mxu0
  %7443 = vmatprep.subr.bf16.mxu0 %v1722
  %7444 = vmatpush1.bf16.msra.mxu0 %v1721
  %7445 = vmatprep.subr.bf16.mxu0 %v1734
  %7446 = vmatpush1.bf16.msra.mxu0 %v1733
  %7447 = vmatprep.subr.bf16.mxu0 %v1746
  %7448 = vmatpush1.bf16.msra.mxu0 %v1745
  %7449 = vmatprep.subr.bf16.mxu0 %v1758
  %7450 = vmatpush1.bf16.msra.mxu0 %v1757
  %7451 = vmatprep.subr.bf16.mxu0 %v1770
  %7452 = vmatpush1.bf16.msra.mxu0 %v1769
  %7453 = vmatprep.subr.bf16.mxu0 %v1782
  %7454 = vmatpush1.bf16.msra.mxu0 %v1781
  %7455 = vmatprep.subr.bf16.mxu0 %v1794
  %7456 = vmatpush1.bf16.msra.mxu0 %v1793
  %7457 = vmatprep.subr.bf16.mxu0 %v1806
  %7458 = vmatpush1.bf16.msra.mxu0 %v1805
  %7459 = vmatprep.subr.bf16.mxu0 %v1818
  %7460 = vmatpush1.bf16.msra.mxu0 %v1817
  %7461 = vmatprep.subr.bf16.mxu0 %v1830
  %7462 = vmatpush1.bf16.msra.mxu0 %v1829
  %7463 = vmatprep.subr.bf16.mxu0 %v1842
  %7464 = vmatpush1.bf16.msra.mxu0 %v1841
  %7465 = vmatprep.subr.bf16.mxu0 %v1854
  %7466 = vmatpush1.bf16.msra.mxu0 %v1853
  %7467 = vmatprep.subr.bf16.mxu0 %v1866
  %7468 = vmatpush1.bf16.msra.mxu0 %v1865
  %7469 = vmatprep.subr.bf16.mxu0 %v1878
  %7470 = vmatpush1.bf16.msra.mxu0 %v1877
  %7471 = vmatprep.subr.bf16.mxu0 %v1890
  %7472 = vmatpush1.bf16.msra.mxu0 %v1889
  %7473 = vmatprep.subr.bf16.mxu0 %v1902
  %7474 = vmatpush1.bf16.msra.mxu0 %v1901
  %7475 = vmatprep.mubr.bf16.mxu0 %v7107
  %7476 = vmatmul.mubr.bf16.gmra.mrb[0].mxu0 %v7106
  %v7477 = vpop.f32.mrb[0].mxu0
  %v7478 = vadd.f32 0.0, %v7477
  %v7479 = vpop.f32.mrb[0].mxu0
  %v7480 = vadd.f32 0.0, %v7479
  %v7481 = vpop.f32.mrb[0].mxu0
  %v7482 = vpop.f32.mrb[0].mxu0
  %7483 = vdwg.mxu0
  %7484 = vmatprep.subr.bf16.mxu0 %v1914
  %7485 = vmatpush1.bf16.msra.mxu0 %v1913
  %7486 = vmatprep.subr.bf16.mxu0 %v1926
  %7487 = vmatpush1.bf16.msra.mxu0 %v1925
  %7488 = vmatprep.subr.bf16.mxu0 %v1938
  %7489 = vmatpush1.bf16.msra.mxu0 %v1937
  %7490 = vmatprep.subr.bf16.mxu0 %v1950
  %7491 = vmatpush1.bf16.msra.mxu0 %v1949
  %7492 = vmatprep.subr.bf16.mxu0 %v1962
  %7493 = vmatpush1.bf16.msra.mxu0 %v1961
  %7494 = vmatprep.subr.bf16.mxu0 %v1974
  %7495 = vmatpush1.bf16.msra.mxu0 %v1973
  %7496 = vmatprep.subr.bf16.mxu0 %v1986
  %7497 = vmatpush1.bf16.msra.mxu0 %v1985
  %7498 = vmatprep.subr.bf16.mxu0 %v1998
  %7499 = vmatpush1.bf16.msra.mxu0 %v1997
  %7500 = vmatprep.subr.bf16.mxu0 %v2010
  %7501 = vmatpush1.bf16.msra.mxu0 %v2009
  %7502 = vmatprep.subr.bf16.mxu0 %v2022
  %7503 = vmatpush1.bf16.msra.mxu0 %v2021
  %7504 = vmatprep.subr.bf16.mxu0 %v2034
  %7505 = vmatpush1.bf16.msra.mxu0 %v2033
  %7506 = vmatprep.subr.bf16.mxu0 %v2046
  %7507 = vmatpush1.bf16.msra.mxu0 %v2045
  %7508 = vmatprep.subr.bf16.mxu0 %v2058
  %7509 = vmatpush1.bf16.msra.mxu0 %v2057
  %7510 = vmatprep.subr.bf16.mxu0 %v2070
  %7511 = vmatpush1.bf16.msra.mxu0 %v2069
  %7512 = vmatprep.subr.bf16.mxu0 %v2082
  %7513 = vmatpush1.bf16.msra.mxu0 %v2081
  %7514 = vmatprep.subr.bf16.mxu0 %v2094
  %7515 = vmatpush1.bf16.msra.mxu0 %v2093
  %7516 = vmatprep.mubr.bf16.mxu0 %v7109
  %7517 = vmatmul.mubr.bf16.gmra.mrb[0].mxu0 %v7108
  %v7518 = vpop.f32.mrb[0].mxu0
  %v7519 = vadd.f32 %v7478, %v7518
  %v7520 = vpop.f32.mrb[0].mxu0
  %v7521 = vadd.f32 %v7480, %v7520
  %v7522 = vpop.f32.mrb[0].mxu0
  %v7523 = vpop.f32.mrb[0].mxu0
  %7524 = vdwg.mxu0
  %7525 = vmatprep.subr.bf16.mxu0 %v1724
  %7526 = vmatpush1.bf16.msra.mxu0 %v1723
  %7527 = vmatprep.subr.bf16.mxu0 %v1736
  %7528 = vmatpush1.bf16.msra.mxu0 %v1735
  %7529 = vmatprep.subr.bf16.mxu0 %v1748
  %7530 = vmatpush1.bf16.msra.mxu0 %v1747
  %7531 = vmatprep.subr.bf16.mxu0 %v1760
  %7532 = vmatpush1.bf16.msra.mxu0 %v1759
  %7533 = vmatprep.subr.bf16.mxu0 %v1772
  %7534 = vmatpush1.bf16.msra.mxu0 %v1771
  %7535 = vmatprep.subr.bf16.mxu0 %v1784
  %7536 = vmatpush1.bf16.msra.mxu0 %v1783
  %7537 = vmatprep.subr.bf16.mxu0 %v1796
  %7538 = vmatpush1.bf16.msra.mxu0 %v1795
  %7539 = vmatprep.subr.bf16.mxu0 %v1808
  %7540 = vmatpush1.bf16.msra.mxu0 %v1807
  %7541 = vmatprep.subr.bf16.mxu0 %v1820
  %7542 = vmatpush1.bf16.msra.mxu0 %v1819
  %7543 = vmatprep.subr.bf16.mxu0 %v1832
  %7544 = vmatpush1.bf16.msra.mxu0 %v1831
  %7545 = vmatprep.subr.bf16.mxu0 %v1844
  %7546 = vmatpush1.bf16.msra.mxu0 %v1843
  %7547 = vmatprep.subr.bf16.mxu0 %v1856
  %7548 = vmatpush1.bf16.msra.mxu0 %v1855
  %7549 = vmatprep.subr.bf16.mxu0 %v1868
  %7550 = vmatpush1.bf16.msra.mxu0 %v1867
  %7551 = vmatprep.subr.bf16.mxu0 %v1880
  %7552 = vmatpush1.bf16.msra.mxu0 %v1879
  %7553 = vmatprep.subr.bf16.mxu0 %v1892
  %7554 = vmatpush1.bf16.msra.mxu0 %v1891
  %7555 = vmatprep.subr.bf16.mxu0 %v1904
  %7556 = vmatpush1.bf16.msra.mxu0 %v1903
  %7557 = vmatprep.mubr.bf16.mxu0 %v7107
  %7558 = vmatmul.mubr.bf16.gmra.mrb[0].mxu0 %v7106
  %v7559 = vpop.f32.mrb[0].mxu0
  %v7560 = vadd.f32 0.0, %v7559
  %v7561 = vpop.f32.mrb[0].mxu0
  %v7562 = vadd.f32 0.0, %v7561
  %v7563 = vpop.f32.mrb[0].mxu0
  %v7564 = vpop.f32.mrb[0].mxu0
  %7565 = vdwg.mxu0
  %7566 = vmatprep.subr.bf16.mxu0 %v1916
  %7567 = vmatpush1.bf16.msra.mxu0 %v1915
  %7568 = vmatprep.subr.bf16.mxu0 %v1928
  %7569 = vmatpush1.bf16.msra.mxu0 %v1927
  %7570 = vmatprep.subr.bf16.mxu0 %v1940
  %7571 = vmatpush1.bf16.msra.mxu0 %v1939
  %7572 = vmatprep.subr.bf16.mxu0 %v1952
  %7573 = vmatpush1.bf16.msra.mxu0 %v1951
  %7574 = vmatprep.subr.bf16.mxu0 %v1964
  %7575 = vmatpush1.bf16.msra.mxu0 %v1963
  %7576 = vmatprep.subr.bf16.mxu0 %v1976
  %7577 = vmatpush1.bf16.msra.mxu0 %v1975
  %7578 = vmatprep.subr.bf16.mxu0 %v1988
  %7579 = vmatpush1.bf16.msra.mxu0 %v1987
  %7580 = vmatprep.subr.bf16.mxu0 %v2000
  %7581 = vmatpush1.bf16.msra.mxu0 %v1999
  %7582 = vmatprep.subr.bf16.mxu0 %v2012
  %7583 = vmatpush1.bf16.msra.mxu0 %v2011
  %7584 = vmatprep.subr.bf16.mxu0 %v2024
  %7585 = vmatpush1.bf16.msra.mxu0 %v2023
  %7586 = vmatprep.subr.bf16.mxu0 %v2036
  %7587 = vmatpush1.bf16.msra.mxu0 %v2035
  %7588 = vmatprep.subr.bf16.mxu0 %v2048
  %7589 = vmatpush1.bf16.msra.mxu0 %v2047
  %7590 = vmatprep.subr.bf16.mxu0 %v2060
  %7591 = vmatpush1.bf16.msra.mxu0 %v2059
  %7592 = vmatprep.subr.bf16.mxu0 %v2072
  %7593 = vmatpush1.bf16.msra.mxu0 %v2071
  %7594 = vmatprep.subr.bf16.mxu0 %v2084
  %7595 = vmatpush1.bf16.msra.mxu0 %v2083
  %7596 = vmatprep.subr.bf16.mxu0 %v2096
  %7597 = vmatpush1.bf16.msra.mxu0 %v2095
  %7598 = vmatprep.mubr.bf16.mxu0 %v7109
  %7599 = vmatmul.mubr.bf16.gmra.mrb[0].mxu0 %v7108
  %v7600 = vpop.f32.mrb[0].mxu0
  %v7601 = vadd.f32 %v7560, %v7600
  %v7602 = vpop.f32.mrb[0].mxu0
  %v7603 = vadd.f32 %v7562, %v7602
  %v7604 = vpop.f32.mrb[0].mxu0
  %v7605 = vpop.f32.mrb[0].mxu0
  %7606 = vdwg.mxu0
  %v7619 = vcombine.low %v7191, %v7193
  %v7620 = vcombine.low %v7273, %v7275
  %v7622 = vunpack.c.l.s4 1983009808
  %v7623 = vunpack.c.0.s8 %v7622
  %v7624 = vlaneseq
  %v7625 = vshrl.u32 %v7624, 7
  %v7626 = vsub.s32 %v7623, %v7625
  %v7627 = vrot.slane %v7619, %v7626
  %v7629 = vunpack.c.l.s4 1983009808
  %v7630 = vunpack.c.0.s8 %v7629
  %v7631 = vlaneseq
  %v7632 = vshrl.u32 %v7631, 7
  %v7633 = vsub.s32 %v7630, %v7632
  %v7634 = vrot.slane %v7620, %v7633
  %v7635 = vcombine.low %v7627, %v7634
  %v7636 = vcombine.low %v7355, %v7357
  %v7637 = vcombine.low %v7437, %v7439
  %v7639 = vunpack.c.l.s4 1983009808
  %v7640 = vunpack.c.0.s8 %v7639
  %v7641 = vlaneseq
  %v7642 = vshrl.u32 %v7641, 7
  %v7643 = vsub.s32 %v7640, %v7642
  %v7644 = vrot.slane %v7636, %v7643
  %v7646 = vunpack.c.l.s4 1983009808
  %v7647 = vunpack.c.0.s8 %v7646
  %v7648 = vlaneseq
  %v7649 = vshrl.u32 %v7648, 7
  %v7650 = vsub.s32 %v7647, %v7649
  %v7651 = vrot.slane %v7637, %v7650
  %v7652 = vcombine.low %v7644, %v7651
  %v7653 = vcombine.low %v7519, %v7521
  %v7654 = vcombine.low %v7601, %v7603
  %v7656 = vunpack.c.l.s4 1983009808
  %v7657 = vunpack.c.0.s8 %v7656
  %v7658 = vlaneseq
  %v7659 = vshrl.u32 %v7658, 7
  %v7660 = vsub.s32 %v7657, %v7659
  %v7661 = vrot.slane %v7653, %v7660
  %v7663 = vunpack.c.l.s4 1983009808
  %v7664 = vunpack.c.0.s8 %v7663
  %v7665 = vlaneseq
  %v7666 = vshrl.u32 %v7665, 7
  %v7667 = vsub.s32 %v7664, %v7666
  %v7668 = vrot.slane %v7654, %v7667
  %v7669 = vcombine.low %v7661, %v7668
  %v7673 = vadd.f32 %v7111, %v7635
  %v7674 = vadd.f32 %v7112, %v7652
  %v7675 = vadd.f32 %v7113, %v7669
  %7676 = vmatprep.subr.bf16.mxu0 %v3427
  %7677 = vmatpush1.bf16.msra.mxu0 %v3426
  %7678 = vmatprep.subr.bf16.mxu0 %v3431
  %7679 = vmatpush1.bf16.msra.mxu0 %v3430
  %7680 = vmatprep.subr.bf16.mxu0 %v3435
  %7681 = vmatpush1.bf16.msra.mxu0 %v3434
  %7682 = vmatprep.subr.bf16.mxu0 %v3439
  %7683 = vmatpush1.bf16.msra.mxu0 %v3438
  %7684 = vmatprep.subr.bf16.mxu0 %v3443
  %7685 = vmatpush1.bf16.msra.mxu0 %v3442
  %7686 = vmatprep.subr.bf16.mxu0 %v3447
  %7687 = vmatpush1.bf16.msra.mxu0 %v3446
  %7688 = vmatprep.subr.bf16.mxu0 %v3451
  %7689 = vmatpush1.bf16.msra.mxu0 %v3450
  %7690 = vmatprep.subr.bf16.mxu0 %v3455
  %7691 = vmatpush1.bf16.msra.mxu0 %v3454
  %7692 = vmatprep.subr.bf16.mxu0 %v3459
  %7693 = vmatpush1.bf16.msra.mxu0 %v3458
  %7694 = vmatprep.subr.bf16.mxu0 %v3463
  %7695 = vmatpush1.bf16.msra.mxu0 %v3462
  %7696 = vmatprep.subr.bf16.mxu0 %v3467
  %7697 = vmatpush1.bf16.msra.mxu0 %v3466
  %7698 = vmatprep.subr.bf16.mxu0 %v3471
  %7699 = vmatpush1.bf16.msra.mxu0 %v3470
  %7700 = vmatprep.subr.bf16.mxu0 %v3475
  %7701 = vmatpush1.bf16.msra.mxu0 %v3474
  %7702 = vmatprep.subr.bf16.mxu0 %v3479
  %7703 = vmatpush1.bf16.msra.mxu0 %v3478
  %7704 = vmatprep.subr.bf16.mxu0 %v3483
  %7705 = vmatpush1.bf16.msra.mxu0 %v3482
  %7706 = vmatprep.subr.bf16.mxu0 %v3487
  %7707 = vmatpush1.bf16.msra.mxu0 %v3486
  %7708 = vmatprep.mubr.bf16.mxu0 %v7107
  %7709 = vmatmul.mubr.bf16.gmra.mrb[0].mxu0 %v7106
  %v7710 = vpop.f32.mrb[0].mxu0
  %v7711 = vadd.f32 0.0, %v7710
  %v7712 = vpop.f32.mrb[0].mxu0
  %v7713 = vadd.f32 0.0, %v7712
  %v7714 = vpop.f32.mrb[0].mxu0
  %v7715 = vpop.f32.mrb[0].mxu0
  %7716 = vdwg.mxu0
  %7717 = vmatprep.subr.bf16.mxu0 %v3491
  %7718 = vmatpush1.bf16.msra.mxu0 %v3490
  %7719 = vmatprep.subr.bf16.mxu0 %v3495
  %7720 = vmatpush1.bf16.msra.mxu0 %v3494
  %7721 = vmatprep.subr.bf16.mxu0 %v3499
  %7722 = vmatpush1.bf16.msra.mxu0 %v3498
  %7723 = vmatprep.subr.bf16.mxu0 %v3503
  %7724 = vmatpush1.bf16.msra.mxu0 %v3502
  %7725 = vmatprep.subr.bf16.mxu0 %v3507
  %7726 = vmatpush1.bf16.msra.mxu0 %v3506
  %7727 = vmatprep.subr.bf16.mxu0 %v3511
  %7728 = vmatpush1.bf16.msra.mxu0 %v3510
  %7729 = vmatprep.subr.bf16.mxu0 %v3515
  %7730 = vmatpush1.bf16.msra.mxu0 %v3514
  %7731 = vmatprep.subr.bf16.mxu0 %v3519
  %7732 = vmatpush1.bf16.msra.mxu0 %v3518
  %7733 = vmatprep.subr.bf16.mxu0 %v3523
  %7734 = vmatpush1.bf16.msra.mxu0 %v3522
  %7735 = vmatprep.subr.bf16.mxu0 %v3527
  %7736 = vmatpush1.bf16.msra.mxu0 %v3526
  %7737 = vmatprep.subr.bf16.mxu0 %v3531
  %7738 = vmatpush1.bf16.msra.mxu0 %v3530
  %7739 = vmatprep.subr.bf16.mxu0 %v3535
  %7740 = vmatpush1.bf16.msra.mxu0 %v3534
  %7741 = vmatprep.subr.bf16.mxu0 %v3539
  %7742 = vmatpush1.bf16.msra.mxu0 %v3538
  %7743 = vmatprep.subr.bf16.mxu0 %v3543
  %7744 = vmatpush1.bf16.msra.mxu0 %v3542
  %7745 = vmatprep.subr.bf16.mxu0 %v3547
  %7746 = vmatpush1.bf16.msra.mxu0 %v3546
  %7747 = vmatprep.subr.bf16.mxu0 %v3551
  %7748 = vmatpush1.bf16.msra.mxu0 %v3550
  %7749 = vmatprep.mubr.bf16.mxu0 %v7109
  %7750 = vmatmul.mubr.bf16.gmra.mrb[0].mxu0 %v7108
  %v7751 = vpop.f32.mrb[0].mxu0
  %v7752 = vadd.f32 %v7711, %v7751
  %v7753 = vpop.f32.mrb[0].mxu0
  %v7754 = vadd.f32 %v7713, %v7753
  %v7755 = vpop.f32.mrb[0].mxu0
  %v7756 = vpop.f32.mrb[0].mxu0
  %7757 = vdwg.mxu0
  %7758 = vmatprep.subr.bf16.mxu0 %v3429
  %7759 = vmatpush1.bf16.msra.mxu0 %v3428
  %7760 = vmatprep.subr.bf16.mxu0 %v3433
  %7761 = vmatpush1.bf16.msra.mxu0 %v3432
  %7762 = vmatprep.subr.bf16.mxu0 %v3437
  %7763 = vmatpush1.bf16.msra.mxu0 %v3436
  %7764 = vmatprep.subr.bf16.mxu0 %v3441
  %7765 = vmatpush1.bf16.msra.mxu0 %v3440
  %7766 = vmatprep.subr.bf16.mxu0 %v3445
  %7767 = vmatpush1.bf16.msra.mxu0 %v3444
  %7768 = vmatprep.subr.bf16.mxu0 %v3449
  %7769 = vmatpush1.bf16.msra.mxu0 %v3448
  %7770 = vmatprep.subr.bf16.mxu0 %v3453
  %7771 = vmatpush1.bf16.msra.mxu0 %v3452
  %7772 = vmatprep.subr.bf16.mxu0 %v3457
  %7773 = vmatpush1.bf16.msra.mxu0 %v3456
  %7774 = vmatprep.subr.bf16.mxu0 %v3461
  %7775 = vmatpush1.bf16.msra.mxu0 %v3460
  %7776 = vmatprep.subr.bf16.mxu0 %v3465
  %7777 = vmatpush1.bf16.msra.mxu0 %v3464
  %7778 = vmatprep.subr.bf16.mxu0 %v3469
  %7779 = vmatpush1.bf16.msra.mxu0 %v3468
  %7780 = vmatprep.subr.bf16.mxu0 %v3473
  %7781 = vmatpush1.bf16.msra.mxu0 %v3472
  %7782 = vmatprep.subr.bf16.mxu0 %v3477
  %7783 = vmatpush1.bf16.msra.mxu0 %v3476
  %7784 = vmatprep.subr.bf16.mxu0 %v3481
  %7785 = vmatpush1.bf16.msra.mxu0 %v3480
  %7786 = vmatprep.subr.bf16.mxu0 %v3485
  %7787 = vmatpush1.bf16.msra.mxu0 %v3484
  %7788 = vmatprep.subr.bf16.mxu0 %v3489
  %7789 = vmatpush1.bf16.msra.mxu0 %v3488
  %7790 = vmatprep.mubr.bf16.mxu0 %v7107
  %7791 = vmatmul.mubr.bf16.gmra.mrb[0].mxu0 %v7106
  %v7792 = vpop.f32.mrb[0].mxu0
  %v7793 = vadd.f32 0.0, %v7792
  %v7794 = vpop.f32.mrb[0].mxu0
  %v7795 = vadd.f32 0.0, %v7794
  %v7796 = vpop.f32.mrb[0].mxu0
  %v7797 = vpop.f32.mrb[0].mxu0
  %7798 = vdwg.mxu0
  %7799 = vmatprep.subr.bf16.mxu0 %v3493
  %7800 = vmatpush1.bf16.msra.mxu0 %v3492
  %7801 = vmatprep.subr.bf16.mxu0 %v3497
  %7802 = vmatpush1.bf16.msra.mxu0 %v3496
  %7803 = vmatprep.subr.bf16.mxu0 %v3501
  %7804 = vmatpush1.bf16.msra.mxu0 %v3500
  %7805 = vmatprep.subr.bf16.mxu0 %v3505
  %7806 = vmatpush1.bf16.msra.mxu0 %v3504
  %7807 = vmatprep.subr.bf16.mxu0 %v3509
  %7808 = vmatpush1.bf16.msra.mxu0 %v3508
  %7809 = vmatprep.subr.bf16.mxu0 %v3513
  %7810 = vmatpush1.bf16.msra.mxu0 %v3512
  %7811 = vmatprep.subr.bf16.mxu0 %v3517
  %7812 = vmatpush1.bf16.msra.mxu0 %v3516
  %7813 = vmatprep.subr.bf16.mxu0 %v3521
  %7814 = vmatpush1.bf16.msra.mxu0 %v3520
  %7815 = vmatprep.subr.bf16.mxu0 %v3525
  %7816 = vmatpush1.bf16.msra.mxu0 %v3524
  %7817 = vmatprep.subr.bf16.mxu0 %v3529
  %7818 = vmatpush1.bf16.msra.mxu0 %v3528
  %7819 = vmatprep.subr.bf16.mxu0 %v3533
  %7820 = vmatpush1.bf16.msra.mxu0 %v3532
  %7821 = vmatprep.subr.bf16.mxu0 %v3537
  %7822 = vmatpush1.bf16.msra.mxu0 %v3536
  %7823 = vmatprep.subr.bf16.mxu0 %v3541
  %7824 = vmatpush1.bf16.msra.mxu0 %v3540
  %7825 = vmatprep.subr.bf16.mxu0 %v3545
  %7826 = vmatpush1.bf16.msra.mxu0 %v3544
  %7827 = vmatprep.subr.bf16.mxu0 %v3549
  %7828 = vmatpush1.bf16.msra.mxu0 %v3548
  %7829 = vmatprep.subr.bf16.mxu0 %v3553
  %7830 = vmatpush1.bf16.msra.mxu0 %v3552
  %7831 = vmatprep.mubr.bf16.mxu0 %v7109
  %7832 = vmatmul.mubr.bf16.gmra.mrb[0].mxu0 %v7108
  %v7833 = vpop.f32.mrb[0].mxu0
  %v7834 = vadd.f32 %v7793, %v7833
  %v7835 = vpop.f32.mrb[0].mxu0
  %v7836 = vadd.f32 %v7795, %v7835
  %v7837 = vpop.f32.mrb[0].mxu0
  %v7838 = vpop.f32.mrb[0].mxu0
  %7839 = vdwg.mxu0
  %v7844 = vcombine.low %v7752, %v7754
  %v7845 = vcombine.low %v7834, %v7836
  %v7847 = vunpack.c.l.s4 1983009808
  %v7848 = vunpack.c.0.s8 %v7847
  %v7849 = vlaneseq
  %v7850 = vshrl.u32 %v7849, 7
  %v7851 = vsub.s32 %v7848, %v7850
  %v7852 = vrot.slane %v7844, %v7851
  %v7854 = vunpack.c.l.s4 1983009808
  %v7855 = vunpack.c.0.s8 %v7854
  %v7856 = vlaneseq
  %v7857 = vshrl.u32 %v7856, 7
  %v7858 = vsub.s32 %v7855, %v7857
  %v7859 = vrot.slane %v7845, %v7858
  %v7860 = vcombine.low %v7852, %v7859
  %v7862 = vadd.f32 %v7114, %v7860
  %v7863 = vmul.f32 %v7673, 0.5
  %v7864 = vtanh.pop %v7863
  %v7865 = vadd.f32 %v7864, 1.0
  %v7866 = vmul.f32 %v7865, 0.5
  %v7867 = vmul.f32 %v7674, 0.5
  %v7868 = vtanh.pop %v7867
  %v7869 = vadd.f32 %v7868, 1.0
  %v7870 = vmul.f32 %v7869, 0.5
  %v7871 = vtanh.pop %v7675
  %v7872 = vmul.f32 %v7870, %v7075
  %v7873 = vmul.f32 %v7866, %v7871
  %v7874 = vadd.f32 %v7872, %v7873
  %v7875 = vmul.f32 %v7862, 0.5
  %v7876 = vtanh.pop %v7875
  %v7877 = vadd.f32 %v7876, 1.0
  %v7878 = vmul.f32 %v7877, 0.5
  %v7879 = vtanh.pop %v7874
  %v7880 = vmul.f32 %v7878, %v7879
  %s7881 = scalar_lea.vmem %s2, 40
  %7882 = vst [vmem:[%s7881] sm:$0xff] %v7880
  %v7884 = vcombine.high %v7880, %v7880
  %v7886 = vunpack.c.l.s4 1983009808
  %v7887 = vunpack.c.0.s8 %v7886
  %v7888 = vlaneseq
  %v7889 = vshrl.u32 %v7888, 7
  %v7890 = vsub.s32 %v7887, %v7889
  %v7891 = vrot.slane %v7880, %v7890
  %v7893 = vunpack.c.l.s4 1983009808
  %v7894 = vunpack.c.0.s8 %v7893
  %v7895 = vlaneseq
  %v7896 = vshrl.u32 %v7895, 7
  %v7897 = vsub.s32 %v7894, %v7896
  %v7898 = vrot.slane %v7884, %v7897
  %v7899 = vcombine.high %v7891, %v7891
  %v7900 = vcombine.high %v7898, %v7898
  %v7905 = vpack.c.bf16 %v7891, %v7891
  %v7906 = vpack.c.bf16 %v7899, %v7899
  %v7907 = vpack.c.bf16 %v7898, %v7898
  %v7908 = vpack.c.bf16 %v7900, %v7900
  %s7909 = scalar_lea.vmem %s0, 192
  %v7910 = vld [vmem:[%s7909] sm:$0xff]
  %v7911 = vld [vmem:[%s7909 + $0x8] sm:$0xff]
  %v7912 = vld [vmem:[%s7909 + $0x10] sm:$0xff]
  %v7913 = vld [vmem:[%s7909 + $0x18] sm:$0xff]
  %7914 = vmatprep.subr.bf16.mxu0 %v1714
  %7915 = vmatpush1.bf16.msra.mxu0 %v1713
  %7916 = vmatprep.subr.bf16.mxu0 %v1726
  %7917 = vmatpush1.bf16.msra.mxu0 %v1725
  %7918 = vmatprep.subr.bf16.mxu0 %v1738
  %7919 = vmatpush1.bf16.msra.mxu0 %v1737
  %7920 = vmatprep.subr.bf16.mxu0 %v1750
  %7921 = vmatpush1.bf16.msra.mxu0 %v1749
  %7922 = vmatprep.subr.bf16.mxu0 %v1762
  %7923 = vmatpush1.bf16.msra.mxu0 %v1761
  %7924 = vmatprep.subr.bf16.mxu0 %v1774
  %7925 = vmatpush1.bf16.msra.mxu0 %v1773
  %7926 = vmatprep.subr.bf16.mxu0 %v1786
  %7927 = vmatpush1.bf16.msra.mxu0 %v1785
  %7928 = vmatprep.subr.bf16.mxu0 %v1798
  %7929 = vmatpush1.bf16.msra.mxu0 %v1797
  %7930 = vmatprep.subr.bf16.mxu0 %v1810
  %7931 = vmatpush1.bf16.msra.mxu0 %v1809
  %7932 = vmatprep.subr.bf16.mxu0 %v1822
  %7933 = vmatpush1.bf16.msra.mxu0 %v1821
  %7934 = vmatprep.subr.bf16.mxu0 %v1834
  %7935 = vmatpush1.bf16.msra.mxu0 %v1833
  %7936 = vmatprep.subr.bf16.mxu0 %v1846
  %7937 = vmatpush1.bf16.msra.mxu0 %v1845
  %7938 = vmatprep.subr.bf16.mxu0 %v1858
  %7939 = vmatpush1.bf16.msra.mxu0 %v1857
  %7940 = vmatprep.subr.bf16.mxu0 %v1870
  %7941 = vmatpush1.bf16.msra.mxu0 %v1869
  %7942 = vmatprep.subr.bf16.mxu0 %v1882
  %7943 = vmatpush1.bf16.msra.mxu0 %v1881
  %7944 = vmatprep.subr.bf16.mxu0 %v1894
  %7945 = vmatpush1.bf16.msra.mxu0 %v1893
  %7946 = vmatprep.mubr.bf16.mxu0 %v7906
  %7947 = vmatmul.mubr.bf16.gmra.mrb[0].mxu0 %v7905
  %v7948 = vpop.f32.mrb[0].mxu0
  %v7949 = vadd.f32 0.0, %v7948
  %v7950 = vpop.f32.mrb[0].mxu0
  %v7951 = vadd.f32 0.0, %v7950
  %v7952 = vpop.f32.mrb[0].mxu0
  %v7953 = vpop.f32.mrb[0].mxu0
  %7954 = vdwg.mxu0
  %7955 = vmatprep.subr.bf16.mxu0 %v1906
  %7956 = vmatpush1.bf16.msra.mxu0 %v1905
  %7957 = vmatprep.subr.bf16.mxu0 %v1918
  %7958 = vmatpush1.bf16.msra.mxu0 %v1917
  %7959 = vmatprep.subr.bf16.mxu0 %v1930
  %7960 = vmatpush1.bf16.msra.mxu0 %v1929
  %7961 = vmatprep.subr.bf16.mxu0 %v1942
  %7962 = vmatpush1.bf16.msra.mxu0 %v1941
  %7963 = vmatprep.subr.bf16.mxu0 %v1954
  %7964 = vmatpush1.bf16.msra.mxu0 %v1953
  %7965 = vmatprep.subr.bf16.mxu0 %v1966
  %7966 = vmatpush1.bf16.msra.mxu0 %v1965
  %7967 = vmatprep.subr.bf16.mxu0 %v1978
  %7968 = vmatpush1.bf16.msra.mxu0 %v1977
  %7969 = vmatprep.subr.bf16.mxu0 %v1990
  %7970 = vmatpush1.bf16.msra.mxu0 %v1989
  %7971 = vmatprep.subr.bf16.mxu0 %v2002
  %7972 = vmatpush1.bf16.msra.mxu0 %v2001
  %7973 = vmatprep.subr.bf16.mxu0 %v2014
  %7974 = vmatpush1.bf16.msra.mxu0 %v2013
  %7975 = vmatprep.subr.bf16.mxu0 %v2026
  %7976 = vmatpush1.bf16.msra.mxu0 %v2025
  %7977 = vmatprep.subr.bf16.mxu0 %v2038
  %7978 = vmatpush1.bf16.msra.mxu0 %v2037
  %7979 = vmatprep.subr.bf16.mxu0 %v2050
  %7980 = vmatpush1.bf16.msra.mxu0 %v2049
  %7981 = vmatprep.subr.bf16.mxu0 %v2062
  %7982 = vmatpush1.bf16.msra.mxu0 %v2061
  %7983 = vmatprep.subr.bf16.mxu0 %v2074
  %7984 = vmatpush1.bf16.msra.mxu0 %v2073
  %7985 = vmatprep.subr.bf16.mxu0 %v2086
  %7986 = vmatpush1.bf16.msra.mxu0 %v2085
  %7987 = vmatprep.mubr.bf16.mxu0 %v7908
  %7988 = vmatmul.mubr.bf16.gmra.mrb[0].mxu0 %v7907
  %v7989 = vpop.f32.mrb[0].mxu0
  %v7990 = vadd.f32 %v7949, %v7989
  %v7991 = vpop.f32.mrb[0].mxu0
  %v7992 = vadd.f32 %v7951, %v7991
  %v7993 = vpop.f32.mrb[0].mxu0
  %v7994 = vpop.f32.mrb[0].mxu0
  %7995 = vdwg.mxu0
  %7996 = vmatprep.subr.bf16.mxu0 %v1716
  %7997 = vmatpush1.bf16.msra.mxu0 %v1715
  %7998 = vmatprep.subr.bf16.mxu0 %v1728
  %7999 = vmatpush1.bf16.msra.mxu0 %v1727
  %8000 = vmatprep.subr.bf16.mxu0 %v1740
  %8001 = vmatpush1.bf16.msra.mxu0 %v1739
  %8002 = vmatprep.subr.bf16.mxu0 %v1752
  %8003 = vmatpush1.bf16.msra.mxu0 %v1751
  %8004 = vmatprep.subr.bf16.mxu0 %v1764
  %8005 = vmatpush1.bf16.msra.mxu0 %v1763
  %8006 = vmatprep.subr.bf16.mxu0 %v1776
  %8007 = vmatpush1.bf16.msra.mxu0 %v1775
  %8008 = vmatprep.subr.bf16.mxu0 %v1788
  %8009 = vmatpush1.bf16.msra.mxu0 %v1787
  %8010 = vmatprep.subr.bf16.mxu0 %v1800
  %8011 = vmatpush1.bf16.msra.mxu0 %v1799
  %8012 = vmatprep.subr.bf16.mxu0 %v1812
  %8013 = vmatpush1.bf16.msra.mxu0 %v1811
  %8014 = vmatprep.subr.bf16.mxu0 %v1824
  %8015 = vmatpush1.bf16.msra.mxu0 %v1823
  %8016 = vmatprep.subr.bf16.mxu0 %v1836
  %8017 = vmatpush1.bf16.msra.mxu0 %v1835
  %8018 = vmatprep.subr.bf16.mxu0 %v1848
  %8019 = vmatpush1.bf16.msra.mxu0 %v1847
  %8020 = vmatprep.subr.bf16.mxu0 %v1860
  %8021 = vmatpush1.bf16.msra.mxu0 %v1859
  %8022 = vmatprep.subr.bf16.mxu0 %v1872
  %8023 = vmatpush1.bf16.msra.mxu0 %v1871
  %8024 = vmatprep.subr.bf16.mxu0 %v1884
  %8025 = vmatpush1.bf16.msra.mxu0 %v1883
  %8026 = vmatprep.subr.bf16.mxu0 %v1896
  %8027 = vmatpush1.bf16.msra.mxu0 %v1895
  %8028 = vmatprep.mubr.bf16.mxu0 %v7906
  %8029 = vmatmul.mubr.bf16.gmra.mrb[0].mxu0 %v7905
  %v8030 = vpop.f32.mrb[0].mxu0
  %v8031 = vadd.f32 0.0, %v8030
  %v8032 = vpop.f32.mrb[0].mxu0
  %v8033 = vadd.f32 0.0, %v8032
  %v8034 = vpop.f32.mrb[0].mxu0
  %v8035 = vpop.f32.mrb[0].mxu0
  %8036 = vdwg.mxu0
  %8037 = vmatprep.subr.bf16.mxu0 %v1908
  %8038 = vmatpush1.bf16.msra.mxu0 %v1907
  %8039 = vmatprep.subr.bf16.mxu0 %v1920
  %8040 = vmatpush1.bf16.msra.mxu0 %v1919
  %8041 = vmatprep.subr.bf16.mxu0 %v1932
  %8042 = vmatpush1.bf16.msra.mxu0 %v1931
  %8043 = vmatprep.subr.bf16.mxu0 %v1944
  %8044 = vmatpush1.bf16.msra.mxu0 %v1943
  %8045 = vmatprep.subr.bf16.mxu0 %v1956
  %8046 = vmatpush1.bf16.msra.mxu0 %v1955
  %8047 = vmatprep.subr.bf16.mxu0 %v1968
  %8048 = vmatpush1.bf16.msra.mxu0 %v1967
  %8049 = vmatprep.subr.bf16.mxu0 %v1980
  %8050 = vmatpush1.bf16.msra.mxu0 %v1979
  %8051 = vmatprep.subr.bf16.mxu0 %v1992
  %8052 = vmatpush1.bf16.msra.mxu0 %v1991
  %8053 = vmatprep.subr.bf16.mxu0 %v2004
  %8054 = vmatpush1.bf16.msra.mxu0 %v2003
  %8055 = vmatprep.subr.bf16.mxu0 %v2016
  %8056 = vmatpush1.bf16.msra.mxu0 %v2015
  %8057 = vmatprep.subr.bf16.mxu0 %v2028
  %8058 = vmatpush1.bf16.msra.mxu0 %v2027
  %8059 = vmatprep.subr.bf16.mxu0 %v2040
  %8060 = vmatpush1.bf16.msra.mxu0 %v2039
  %8061 = vmatprep.subr.bf16.mxu0 %v2052
  %8062 = vmatpush1.bf16.msra.mxu0 %v2051
  %8063 = vmatprep.subr.bf16.mxu0 %v2064
  %8064 = vmatpush1.bf16.msra.mxu0 %v2063
  %8065 = vmatprep.subr.bf16.mxu0 %v2076
  %8066 = vmatpush1.bf16.msra.mxu0 %v2075
  %8067 = vmatprep.subr.bf16.mxu0 %v2088
  %8068 = vmatpush1.bf16.msra.mxu0 %v2087
  %8069 = vmatprep.mubr.bf16.mxu0 %v7908
  %8070 = vmatmul.mubr.bf16.gmra.mrb[0].mxu0 %v7907
  %v8071 = vpop.f32.mrb[0].mxu0
  %v8072 = vadd.f32 %v8031, %v8071
  %v8073 = vpop.f32.mrb[0].mxu0
  %v8074 = vadd.f32 %v8033, %v8073
  %v8075 = vpop.f32.mrb[0].mxu0
  %v8076 = vpop.f32.mrb[0].mxu0
  %8077 = vdwg.mxu0
  %8078 = vmatprep.subr.bf16.mxu0 %v1718
  %8079 = vmatpush1.bf16.msra.mxu0 %v1717
  %8080 = vmatprep.subr.bf16.mxu0 %v1730
  %8081 = vmatpush1.bf16.msra.mxu0 %v1729
  %8082 = vmatprep.subr.bf16.mxu0 %v1742
  %8083 = vmatpush1.bf16.msra.mxu0 %v1741
  %8084 = vmatprep.subr.bf16.mxu0 %v1754
  %8085 = vmatpush1.bf16.msra.mxu0 %v1753
  %8086 = vmatprep.subr.bf16.mxu0 %v1766
  %8087 = vmatpush1.bf16.msra.mxu0 %v1765
  %8088 = vmatprep.subr.bf16.mxu0 %v1778
  %8089 = vmatpush1.bf16.msra.mxu0 %v1777
  %8090 = vmatprep.subr.bf16.mxu0 %v1790
  %8091 = vmatpush1.bf16.msra.mxu0 %v1789
  %8092 = vmatprep.subr.bf16.mxu0 %v1802
  %8093 = vmatpush1.bf16.msra.mxu0 %v1801
  %8094 = vmatprep.subr.bf16.mxu0 %v1814
  %8095 = vmatpush1.bf16.msra.mxu0 %v1813
  %8096 = vmatprep.subr.bf16.mxu0 %v1826
  %8097 = vmatpush1.bf16.msra.mxu0 %v1825
  %8098 = vmatprep.subr.bf16.mxu0 %v1838
  %8099 = vmatpush1.bf16.msra.mxu0 %v1837
  %8100 = vmatprep.subr.bf16.mxu0 %v1850
  %8101 = vmatpush1.bf16.msra.mxu0 %v1849
  %8102 = vmatprep.subr.bf16.mxu0 %v1862
  %8103 = vmatpush1.bf16.msra.mxu0 %v1861
  %8104 = vmatprep.subr.bf16.mxu0 %v1874
  %8105 = vmatpush1.bf16.msra.mxu0 %v1873
  %8106 = vmatprep.subr.bf16.mxu0 %v1886
  %8107 = vmatpush1.bf16.msra.mxu0 %v1885
  %8108 = vmatprep.subr.bf16.mxu0 %v1898
  %8109 = vmatpush1.bf16.msra.mxu0 %v1897
  %8110 = vmatprep.mubr.bf16.mxu0 %v7906
  %8111 = vmatmul.mubr.bf16.gmra.mrb[0].mxu0 %v7905
  %v8112 = vpop.f32.mrb[0].mxu0
  %v8113 = vadd.f32 0.0, %v8112
  %v8114 = vpop.f32.mrb[0].mxu0
  %v8115 = vadd.f32 0.0, %v8114
  %v8116 = vpop.f32.mrb[0].mxu0
  %v8117 = vpop.f32.mrb[0].mxu0
  %8118 = vdwg.mxu0
  %8119 = vmatprep.subr.bf16.mxu0 %v1910
  %8120 = vmatpush1.bf16.msra.mxu0 %v1909
  %8121 = vmatprep.subr.bf16.mxu0 %v1922
  %8122 = vmatpush1.bf16.msra.mxu0 %v1921
  %8123 = vmatprep.subr.bf16.mxu0 %v1934
  %8124 = vmatpush1.bf16.msra.mxu0 %v1933
  %8125 = vmatprep.subr.bf16.mxu0 %v1946
  %8126 = vmatpush1.bf16.msra.mxu0 %v1945
  %8127 = vmatprep.subr.bf16.mxu0 %v1958
  %8128 = vmatpush1.bf16.msra.mxu0 %v1957
  %8129 = vmatprep.subr.bf16.mxu0 %v1970
  %8130 = vmatpush1.bf16.msra.mxu0 %v1969
  %8131 = vmatprep.subr.bf16.mxu0 %v1982
  %8132 = vmatpush1.bf16.msra.mxu0 %v1981
  %8133 = vmatprep.subr.bf16.mxu0 %v1994
  %8134 = vmatpush1.bf16.msra.mxu0 %v1993
  %8135 = vmatprep.subr.bf16.mxu0 %v2006
  %8136 = vmatpush1.bf16.msra.mxu0 %v2005
  %8137 = vmatprep.subr.bf16.mxu0 %v2018
  %8138 = vmatpush1.bf16.msra.mxu0 %v2017
  %8139 = vmatprep.subr.bf16.mxu0 %v2030
  %8140 = vmatpush1.bf16.msra.mxu0 %v2029
  %8141 = vmatprep.subr.bf16.mxu0 %v2042
  %8142 = vmatpush1.bf16.msra.mxu0 %v2041
  %8143 = vmatprep.subr.bf16.mxu0 %v2054
  %8144 = vmatpush1.bf16.msra.mxu0 %v2053
  %8145 = vmatprep.subr.bf16.mxu0 %v2066
  %8146 = vmatpush1.bf16.msra.mxu0 %v2065
  %8147 = vmatprep.subr.bf16.mxu0 %v2078
  %8148 = vmatpush1.bf16.msra.mxu0 %v2077
  %8149 = vmatprep.subr.bf16.mxu0 %v2090
  %8150 = vmatpush1.bf16.msra.mxu0 %v2089
  %8151 = vmatprep.mubr.bf16.mxu0 %v7908
  %8152 = vmatmul.mubr.bf16.gmra.mrb[0].mxu0 %v7907
  %v8153 = vpop.f32.mrb[0].mxu0
  %v8154 = vadd.f32 %v8113, %v8153
  %v8155 = vpop.f32.mrb[0].mxu0
  %v8156 = vadd.f32 %v8115, %v8155
  %v8157 = vpop.f32.mrb[0].mxu0
  %v8158 = vpop.f32.mrb[0].mxu0
  %8159 = vdwg.mxu0
  %8160 = vmatprep.subr.bf16.mxu0 %v1720
  %8161 = vmatpush1.bf16.msra.mxu0 %v1719
  %8162 = vmatprep.subr.bf16.mxu0 %v1732
  %8163 = vmatpush1.bf16.msra.mxu0 %v1731
  %8164 = vmatprep.subr.bf16.mxu0 %v1744
  %8165 = vmatpush1.bf16.msra.mxu0 %v1743
  %8166 = vmatprep.subr.bf16.mxu0 %v1756
  %8167 = vmatpush1.bf16.msra.mxu0 %v1755
  %8168 = vmatprep.subr.bf16.mxu0 %v1768
  %8169 = vmatpush1.bf16.msra.mxu0 %v1767
  %8170 = vmatprep.subr.bf16.mxu0 %v1780
  %8171 = vmatpush1.bf16.msra.mxu0 %v1779
  %8172 = vmatprep.subr.bf16.mxu0 %v1792
  %8173 = vmatpush1.bf16.msra.mxu0 %v1791
  %8174 = vmatprep.subr.bf16.mxu0 %v1804
  %8175 = vmatpush1.bf16.msra.mxu0 %v1803
  %8176 = vmatprep.subr.bf16.mxu0 %v1816
  %8177 = vmatpush1.bf16.msra.mxu0 %v1815
  %8178 = vmatprep.subr.bf16.mxu0 %v1828
  %8179 = vmatpush1.bf16.msra.mxu0 %v1827
  %8180 = vmatprep.subr.bf16.mxu0 %v1840
  %8181 = vmatpush1.bf16.msra.mxu0 %v1839
  %8182 = vmatprep.subr.bf16.mxu0 %v1852
  %8183 = vmatpush1.bf16.msra.mxu0 %v1851
  %8184 = vmatprep.subr.bf16.mxu0 %v1864
  %8185 = vmatpush1.bf16.msra.mxu0 %v1863
  %8186 = vmatprep.subr.bf16.mxu0 %v1876
  %8187 = vmatpush1.bf16.msra.mxu0 %v1875
  %8188 = vmatprep.subr.bf16.mxu0 %v1888
  %8189 = vmatpush1.bf16.msra.mxu0 %v1887
  %8190 = vmatprep.subr.bf16.mxu0 %v1900
  %8191 = vmatpush1.bf16.msra.mxu0 %v1899
  %8192 = vmatprep.mubr.bf16.mxu0 %v7906
  %8193 = vmatmul.mubr.bf16.gmra.mrb[0].mxu0 %v7905
  %v8194 = vpop.f32.mrb[0].mxu0
  %v8195 = vadd.f32 0.0, %v8194
  %v8196 = vpop.f32.mrb[0].mxu0
  %v8197 = vadd.f32 0.0, %v8196
  %v8198 = vpop.f32.mrb[0].mxu0
  %v8199 = vpop.f32.mrb[0].mxu0
  %8200 = vdwg.mxu0
  %8201 = vmatprep.subr.bf16.mxu0 %v1912
  %8202 = vmatpush1.bf16.msra.mxu0 %v1911
  %8203 = vmatprep.subr.bf16.mxu0 %v1924
  %8204 = vmatpush1.bf16.msra.mxu0 %v1923
  %8205 = vmatprep.subr.bf16.mxu0 %v1936
  %8206 = vmatpush1.bf16.msra.mxu0 %v1935
  %8207 = vmatprep.subr.bf16.mxu0 %v1948
  %8208 = vmatpush1.bf16.msra.mxu0 %v1947
  %8209 = vmatprep.subr.bf16.mxu0 %v1960
  %8210 = vmatpush1.bf16.msra.mxu0 %v1959
  %8211 = vmatprep.subr.bf16.mxu0 %v1972
  %8212 = vmatpush1.bf16.msra.mxu0 %v1971
  %8213 = vmatprep.subr.bf16.mxu0 %v1984
  %8214 = vmatpush1.bf16.msra.mxu0 %v1983
  %8215 = vmatprep.subr.bf16.mxu0 %v1996
  %8216 = vmatpush1.bf16.msra.mxu0 %v1995
  %8217 = vmatprep.subr.bf16.mxu0 %v2008
  %8218 = vmatpush1.bf16.msra.mxu0 %v2007
  %8219 = vmatprep.subr.bf16.mxu0 %v2020
  %8220 = vmatpush1.bf16.msra.mxu0 %v2019
  %8221 = vmatprep.subr.bf16.mxu0 %v2032
  %8222 = vmatpush1.bf16.msra.mxu0 %v2031
  %8223 = vmatprep.subr.bf16.mxu0 %v2044
  %8224 = vmatpush1.bf16.msra.mxu0 %v2043
  %8225 = vmatprep.subr.bf16.mxu0 %v2056
  %8226 = vmatpush1.bf16.msra.mxu0 %v2055
  %8227 = vmatprep.subr.bf16.mxu0 %v2068
  %8228 = vmatpush1.bf16.msra.mxu0 %v2067
  %8229 = vmatprep.subr.bf16.mxu0 %v2080
  %8230 = vmatpush1.bf16.msra.mxu0 %v2079
  %8231 = vmatprep.subr.bf16.mxu0 %v2092
  %8232 = vmatpush1.bf16.msra.mxu0 %v2091
  %8233 = vmatprep.mubr.bf16.mxu0 %v7908
  %8234 = vmatmul.mubr.bf16.gmra.mrb[0].mxu0 %v7907
  %v8235 = vpop.f32.mrb[0].mxu0
  %v8236 = vadd.f32 %v8195, %v8235
  %v8237 = vpop.f32.mrb[0].mxu0
  %v8238 = vadd.f32 %v8197, %v8237
  %v8239 = vpop.f32.mrb[0].mxu0
  %v8240 = vpop.f32.mrb[0].mxu0
  %8241 = vdwg.mxu0
  %8242 = vmatprep.subr.bf16.mxu0 %v1722
  %8243 = vmatpush1.bf16.msra.mxu0 %v1721
  %8244 = vmatprep.subr.bf16.mxu0 %v1734
  %8245 = vmatpush1.bf16.msra.mxu0 %v1733
  %8246 = vmatprep.subr.bf16.mxu0 %v1746
  %8247 = vmatpush1.bf16.msra.mxu0 %v1745
  %8248 = vmatprep.subr.bf16.mxu0 %v1758
  %8249 = vmatpush1.bf16.msra.mxu0 %v1757
  %8250 = vmatprep.subr.bf16.mxu0 %v1770
  %8251 = vmatpush1.bf16.msra.mxu0 %v1769
  %8252 = vmatprep.subr.bf16.mxu0 %v1782
  %8253 = vmatpush1.bf16.msra.mxu0 %v1781
  %8254 = vmatprep.subr.bf16.mxu0 %v1794
  %8255 = vmatpush1.bf16.msra.mxu0 %v1793
  %8256 = vmatprep.subr.bf16.mxu0 %v1806
  %8257 = vmatpush1.bf16.msra.mxu0 %v1805
  %8258 = vmatprep.subr.bf16.mxu0 %v1818
  %8259 = vmatpush1.bf16.msra.mxu0 %v1817
  %8260 = vmatprep.subr.bf16.mxu0 %v1830
  %8261 = vmatpush1.bf16.msra.mxu0 %v1829
  %8262 = vmatprep.subr.bf16.mxu0 %v1842
  %8263 = vmatpush1.bf16.msra.mxu0 %v1841
  %8264 = vmatprep.subr.bf16.mxu0 %v1854
  %8265 = vmatpush1.bf16.msra.mxu0 %v1853
  %8266 = vmatprep.subr.bf16.mxu0 %v1866
  %8267 = vmatpush1.bf16.msra.mxu0 %v1865
  %8268 = vmatprep.subr.bf16.mxu0 %v1878
  %8269 = vmatpush1.bf16.msra.mxu0 %v1877
  %8270 = vmatprep.subr.bf16.mxu0 %v1890
  %8271 = vmatpush1.bf16.msra.mxu0 %v1889
  %8272 = vmatprep.subr.bf16.mxu0 %v1902
  %8273 = vmatpush1.bf16.msra.mxu0 %v1901
  %8274 = vmatprep.mubr.bf16.mxu0 %v7906
  %8275 = vmatmul.mubr.bf16.gmra.mrb[0].mxu0 %v7905
  %v8276 = vpop.f32.mrb[0].mxu0
  %v8277 = vadd.f32 0.0, %v8276
  %v8278 = vpop.f32.mrb[0].mxu0
  %v8279 = vadd.f32 0.0, %v8278
  %v8280 = vpop.f32.mrb[0].mxu0
  %v8281 = vpop.f32.mrb[0].mxu0
  %8282 = vdwg.mxu0
  %8283 = vmatprep.subr.bf16.mxu0 %v1914
  %8284 = vmatpush1.bf16.msra.mxu0 %v1913
  %8285 = vmatprep.subr.bf16.mxu0 %v1926
  %8286 = vmatpush1.bf16.msra.mxu0 %v1925
  %8287 = vmatprep.subr.bf16.mxu0 %v1938
  %8288 = vmatpush1.bf16.msra.mxu0 %v1937
  %8289 = vmatprep.subr.bf16.mxu0 %v1950
  %8290 = vmatpush1.bf16.msra.mxu0 %v1949
  %8291 = vmatprep.subr.bf16.mxu0 %v1962
  %8292 = vmatpush1.bf16.msra.mxu0 %v1961
  %8293 = vmatprep.subr.bf16.mxu0 %v1974
  %8294 = vmatpush1.bf16.msra.mxu0 %v1973
  %8295 = vmatprep.subr.bf16.mxu0 %v1986
  %8296 = vmatpush1.bf16.msra.mxu0 %v1985
  %8297 = vmatprep.subr.bf16.mxu0 %v1998
  %8298 = vmatpush1.bf16.msra.mxu0 %v1997
  %8299 = vmatprep.subr.bf16.mxu0 %v2010
  %8300 = vmatpush1.bf16.msra.mxu0 %v2009
  %8301 = vmatprep.subr.bf16.mxu0 %v2022
  %8302 = vmatpush1.bf16.msra.mxu0 %v2021
  %8303 = vmatprep.subr.bf16.mxu0 %v2034
  %8304 = vmatpush1.bf16.msra.mxu0 %v2033
  %8305 = vmatprep.subr.bf16.mxu0 %v2046
  %8306 = vmatpush1.bf16.msra.mxu0 %v2045
  %8307 = vmatprep.subr.bf16.mxu0 %v2058
  %8308 = vmatpush1.bf16.msra.mxu0 %v2057
  %8309 = vmatprep.subr.bf16.mxu0 %v2070
  %8310 = vmatpush1.bf16.msra.mxu0 %v2069
  %8311 = vmatprep.subr.bf16.mxu0 %v2082
  %8312 = vmatpush1.bf16.msra.mxu0 %v2081
  %8313 = vmatprep.subr.bf16.mxu0 %v2094
  %8314 = vmatpush1.bf16.msra.mxu0 %v2093
  %8315 = vmatprep.mubr.bf16.mxu0 %v7908
  %8316 = vmatmul.mubr.bf16.gmra.mrb[0].mxu0 %v7907
  %v8317 = vpop.f32.mrb[0].mxu0
  %v8318 = vadd.f32 %v8277, %v8317
  %v8319 = vpop.f32.mrb[0].mxu0
  %v8320 = vadd.f32 %v8279, %v8319
  %v8321 = vpop.f32.mrb[0].mxu0
  %v8322 = vpop.f32.mrb[0].mxu0
  %8323 = vdwg.mxu0
  %8324 = vmatprep.subr.bf16.mxu0 %v1724
  %8325 = vmatpush1.bf16.msra.mxu0 %v1723
  %8326 = vmatprep.subr.bf16.mxu0 %v1736
  %8327 = vmatpush1.bf16.msra.mxu0 %v1735
  %8328 = vmatprep.subr.bf16.mxu0 %v1748
  %8329 = vmatpush1.bf16.msra.mxu0 %v1747
  %8330 = vmatprep.subr.bf16.mxu0 %v1760
  %8331 = vmatpush1.bf16.msra.mxu0 %v1759
  %8332 = vmatprep.subr.bf16.mxu0 %v1772
  %8333 = vmatpush1.bf16.msra.mxu0 %v1771
  %8334 = vmatprep.subr.bf16.mxu0 %v1784
  %8335 = vmatpush1.bf16.msra.mxu0 %v1783
  %8336 = vmatprep.subr.bf16.mxu0 %v1796
  %8337 = vmatpush1.bf16.msra.mxu0 %v1795
  %8338 = vmatprep.subr.bf16.mxu0 %v1808
  %8339 = vmatpush1.bf16.msra.mxu0 %v1807
  %8340 = vmatprep.subr.bf16.mxu0 %v1820
  %8341 = vmatpush1.bf16.msra.mxu0 %v1819
  %8342 = vmatprep.subr.bf16.mxu0 %v1832
  %8343 = vmatpush1.bf16.msra.mxu0 %v1831
  %8344 = vmatprep.subr.bf16.mxu0 %v1844
  %8345 = vmatpush1.bf16.msra.mxu0 %v1843
  %8346 = vmatprep.subr.bf16.mxu0 %v1856
  %8347 = vmatpush1.bf16.msra.mxu0 %v1855
  %8348 = vmatprep.subr.bf16.mxu0 %v1868
  %8349 = vmatpush1.bf16.msra.mxu0 %v1867
  %8350 = vmatprep.subr.bf16.mxu0 %v1880
  %8351 = vmatpush1.bf16.msra.mxu0 %v1879
  %8352 = vmatprep.subr.bf16.mxu0 %v1892
  %8353 = vmatpush1.bf16.msra.mxu0 %v1891
  %8354 = vmatprep.subr.bf16.mxu0 %v1904
  %8355 = vmatpush1.bf16.msra.mxu0 %v1903
  %8356 = vmatprep.mubr.bf16.mxu0 %v7906
  %8357 = vmatmul.mubr.bf16.gmra.mrb[0].mxu0 %v7905
  %v8358 = vpop.f32.mrb[0].mxu0
  %v8359 = vadd.f32 0.0, %v8358
  %v8360 = vpop.f32.mrb[0].mxu0
  %v8361 = vadd.f32 0.0, %v8360
  %v8362 = vpop.f32.mrb[0].mxu0
  %v8363 = vpop.f32.mrb[0].mxu0
  %8364 = vdwg.mxu0
  %8365 = vmatprep.subr.bf16.mxu0 %v1916
  %8366 = vmatpush1.bf16.msra.mxu0 %v1915
  %8367 = vmatprep.subr.bf16.mxu0 %v1928
  %8368 = vmatpush1.bf16.msra.mxu0 %v1927
  %8369 = vmatprep.subr.bf16.mxu0 %v1940
  %8370 = vmatpush1.bf16.msra.mxu0 %v1939
  %8371 = vmatprep.subr.bf16.mxu0 %v1952
  %8372 = vmatpush1.bf16.msra.mxu0 %v1951
  %8373 = vmatprep.subr.bf16.mxu0 %v1964
  %8374 = vmatpush1.bf16.msra.mxu0 %v1963
  %8375 = vmatprep.subr.bf16.mxu0 %v1976
  %8376 = vmatpush1.bf16.msra.mxu0 %v1975
  %8377 = vmatprep.subr.bf16.mxu0 %v1988
  %8378 = vmatpush1.bf16.msra.mxu0 %v1987
  %8379 = vmatprep.subr.bf16.mxu0 %v2000
  %8380 = vmatpush1.bf16.msra.mxu0 %v1999
  %8381 = vmatprep.subr.bf16.mxu0 %v2012
  %8382 = vmatpush1.bf16.msra.mxu0 %v2011
  %8383 = vmatprep.subr.bf16.mxu0 %v2024
  %8384 = vmatpush1.bf16.msra.mxu0 %v2023
  %8385 = vmatprep.subr.bf16.mxu0 %v2036
  %8386 = vmatpush1.bf16.msra.mxu0 %v2035
  %8387 = vmatprep.subr.bf16.mxu0 %v2048
  %8388 = vmatpush1.bf16.msra.mxu0 %v2047
  %8389 = vmatprep.subr.bf16.mxu0 %v2060
  %8390 = vmatpush1.bf16.msra.mxu0 %v2059
  %8391 = vmatprep.subr.bf16.mxu0 %v2072
  %8392 = vmatpush1.bf16.msra.mxu0 %v2071
  %8393 = vmatprep.subr.bf16.mxu0 %v2084
  %8394 = vmatpush1.bf16.msra.mxu0 %v2083
  %8395 = vmatprep.subr.bf16.mxu0 %v2096
  %8396 = vmatpush1.bf16.msra.mxu0 %v2095
  %8397 = vmatprep.mubr.bf16.mxu0 %v7908
  %8398 = vmatmul.mubr.bf16.gmra.mrb[0].mxu0 %v7907
  %v8399 = vpop.f32.mrb[0].mxu0
  %v8400 = vadd.f32 %v8359, %v8399
  %v8401 = vpop.f32.mrb[0].mxu0
  %v8402 = vadd.f32 %v8361, %v8401
  %v8403 = vpop.f32.mrb[0].mxu0
  %v8404 = vpop.f32.mrb[0].mxu0
  %8405 = vdwg.mxu0
  %v8418 = vcombine.low %v7990, %v7992
  %v8419 = vcombine.low %v8072, %v8074
  %v8421 = vunpack.c.l.s4 1983009808
  %v8422 = vunpack.c.0.s8 %v8421
  %v8423 = vlaneseq
  %v8424 = vshrl.u32 %v8423, 7
  %v8425 = vsub.s32 %v8422, %v8424
  %v8426 = vrot.slane %v8418, %v8425
  %v8428 = vunpack.c.l.s4 1983009808
  %v8429 = vunpack.c.0.s8 %v8428
  %v8430 = vlaneseq
  %v8431 = vshrl.u32 %v8430, 7
  %v8432 = vsub.s32 %v8429, %v8431
  %v8433 = vrot.slane %v8419, %v8432
  %v8434 = vcombine.low %v8426, %v8433
  %v8435 = vcombine.low %v8154, %v8156
  %v8436 = vcombine.low %v8236, %v8238
  %v8438 = vunpack.c.l.s4 1983009808
  %v8439 = vunpack.c.0.s8 %v8438
  %v8440 = vlaneseq
  %v8441 = vshrl.u32 %v8440, 7
  %v8442 = vsub.s32 %v8439, %v8441
  %v8443 = vrot.slane %v8435, %v8442
  %v8445 = vunpack.c.l.s4 1983009808
  %v8446 = vunpack.c.0.s8 %v8445
  %v8447 = vlaneseq
  %v8448 = vshrl.u32 %v8447, 7
  %v8449 = vsub.s32 %v8446, %v8448
  %v8450 = vrot.slane %v8436, %v8449
  %v8451 = vcombine.low %v8443, %v8450
  %v8452 = vcombine.low %v8318, %v8320
  %v8453 = vcombine.low %v8400, %v8402
  %v8455 = vunpack.c.l.s4 1983009808
  %v8456 = vunpack.c.0.s8 %v8455
  %v8457 = vlaneseq
  %v8458 = vshrl.u32 %v8457, 7
  %v8459 = vsub.s32 %v8456, %v8458
  %v8460 = vrot.slane %v8452, %v8459
  %v8462 = vunpack.c.l.s4 1983009808
  %v8463 = vunpack.c.0.s8 %v8462
  %v8464 = vlaneseq
  %v8465 = vshrl.u32 %v8464, 7
  %v8466 = vsub.s32 %v8463, %v8465
  %v8467 = vrot.slane %v8453, %v8466
  %v8468 = vcombine.low %v8460, %v8467
  %v8472 = vadd.f32 %v7910, %v8434
  %v8473 = vadd.f32 %v7911, %v8451
  %v8474 = vadd.f32 %v7912, %v8468
  %8475 = vmatprep.subr.bf16.mxu0 %v3427
  %8476 = vmatpush1.bf16.msra.mxu0 %v3426
  %8477 = vmatprep.subr.bf16.mxu0 %v3431
  %8478 = vmatpush1.bf16.msra.mxu0 %v3430
  %8479 = vmatprep.subr.bf16.mxu0 %v3435
  %8480 = vmatpush1.bf16.msra.mxu0 %v3434
  %8481 = vmatprep.subr.bf16.mxu0 %v3439
  %8482 = vmatpush1.bf16.msra.mxu0 %v3438
  %8483 = vmatprep.subr.bf16.mxu0 %v3443
  %8484 = vmatpush1.bf16.msra.mxu0 %v3442
  %8485 = vmatprep.subr.bf16.mxu0 %v3447
  %8486 = vmatpush1.bf16.msra.mxu0 %v3446
  %8487 = vmatprep.subr.bf16.mxu0 %v3451
  %8488 = vmatpush1.bf16.msra.mxu0 %v3450
  %8489 = vmatprep.subr.bf16.mxu0 %v3455
  %8490 = vmatpush1.bf16.msra.mxu0 %v3454
  %8491 = vmatprep.subr.bf16.mxu0 %v3459
  %8492 = vmatpush1.bf16.msra.mxu0 %v3458
  %8493 = vmatprep.subr.bf16.mxu0 %v3463
  %8494 = vmatpush1.bf16.msra.mxu0 %v3462
  %8495 = vmatprep.subr.bf16.mxu0 %v3467
  %8496 = vmatpush1.bf16.msra.mxu0 %v3466
  %8497 = vmatprep.subr.bf16.mxu0 %v3471
  %8498 = vmatpush1.bf16.msra.mxu0 %v3470
  %8499 = vmatprep.subr.bf16.mxu0 %v3475
  %8500 = vmatpush1.bf16.msra.mxu0 %v3474
  %8501 = vmatprep.subr.bf16.mxu0 %v3479
  %8502 = vmatpush1.bf16.msra.mxu0 %v3478
  %8503 = vmatprep.subr.bf16.mxu0 %v3483
  %8504 = vmatpush1.bf16.msra.mxu0 %v3482
  %8505 = vmatprep.subr.bf16.mxu0 %v3487
  %8506 = vmatpush1.bf16.msra.mxu0 %v3486
  %8507 = vmatprep.mubr.bf16.mxu0 %v7906
  %8508 = vmatmul.mubr.bf16.gmra.mrb[0].mxu0 %v7905
  %v8509 = vpop.f32.mrb[0].mxu0
  %v8510 = vadd.f32 0.0, %v8509
  %v8511 = vpop.f32.mrb[0].mxu0
  %v8512 = vadd.f32 0.0, %v8511
  %v8513 = vpop.f32.mrb[0].mxu0
  %v8514 = vpop.f32.mrb[0].mxu0
  %8515 = vdwg.mxu0
  %8516 = vmatprep.subr.bf16.mxu0 %v3491
  %8517 = vmatpush1.bf16.msra.mxu0 %v3490
  %8518 = vmatprep.subr.bf16.mxu0 %v3495
  %8519 = vmatpush1.bf16.msra.mxu0 %v3494
  %8520 = vmatprep.subr.bf16.mxu0 %v3499
  %8521 = vmatpush1.bf16.msra.mxu0 %v3498
  %8522 = vmatprep.subr.bf16.mxu0 %v3503
  %8523 = vmatpush1.bf16.msra.mxu0 %v3502
  %8524 = vmatprep.subr.bf16.mxu0 %v3507
  %8525 = vmatpush1.bf16.msra.mxu0 %v3506
  %8526 = vmatprep.subr.bf16.mxu0 %v3511
  %8527 = vmatpush1.bf16.msra.mxu0 %v3510
  %8528 = vmatprep.subr.bf16.mxu0 %v3515
  %8529 = vmatpush1.bf16.msra.mxu0 %v3514
  %8530 = vmatprep.subr.bf16.mxu0 %v3519
  %8531 = vmatpush1.bf16.msra.mxu0 %v3518
  %8532 = vmatprep.subr.bf16.mxu0 %v3523
  %8533 = vmatpush1.bf16.msra.mxu0 %v3522
  %8534 = vmatprep.subr.bf16.mxu0 %v3527
  %8535 = vmatpush1.bf16.msra.mxu0 %v3526
  %8536 = vmatprep.subr.bf16.mxu0 %v3531
  %8537 = vmatpush1.bf16.msra.mxu0 %v3530
  %8538 = vmatprep.subr.bf16.mxu0 %v3535
  %8539 = vmatpush1.bf16.msra.mxu0 %v3534
  %8540 = vmatprep.subr.bf16.mxu0 %v3539
  %8541 = vmatpush1.bf16.msra.mxu0 %v3538
  %8542 = vmatprep.subr.bf16.mxu0 %v3543
  %8543 = vmatpush1.bf16.msra.mxu0 %v3542
  %8544 = vmatprep.subr.bf16.mxu0 %v3547
  %8545 = vmatpush1.bf16.msra.mxu0 %v3546
  %8546 = vmatprep.subr.bf16.mxu0 %v3551
  %8547 = vmatpush1.bf16.msra.mxu0 %v3550
  %8548 = vmatprep.mubr.bf16.mxu0 %v7908
  %8549 = vmatmul.mubr.bf16.gmra.mrb[0].mxu0 %v7907
  %v8550 = vpop.f32.mrb[0].mxu0
  %v8551 = vadd.f32 %v8510, %v8550
  %v8552 = vpop.f32.mrb[0].mxu0
  %v8553 = vadd.f32 %v8512, %v8552
  %v8554 = vpop.f32.mrb[0].mxu0
  %v8555 = vpop.f32.mrb[0].mxu0
  %8556 = vdwg.mxu0
  %8557 = vmatprep.subr.bf16.mxu0 %v3429
  %8558 = vmatpush1.bf16.msra.mxu0 %v3428
  %8559 = vmatprep.subr.bf16.mxu0 %v3433
  %8560 = vmatpush1.bf16.msra.mxu0 %v3432
  %8561 = vmatprep.subr.bf16.mxu0 %v3437
  %8562 = vmatpush1.bf16.msra.mxu0 %v3436
  %8563 = vmatprep.subr.bf16.mxu0 %v3441
  %8564 = vmatpush1.bf16.msra.mxu0 %v3440
  %8565 = vmatprep.subr.bf16.mxu0 %v3445
  %8566 = vmatpush1.bf16.msra.mxu0 %v3444
  %8567 = vmatprep.subr.bf16.mxu0 %v3449
  %8568 = vmatpush1.bf16.msra.mxu0 %v3448
  %8569 = vmatprep.subr.bf16.mxu0 %v3453
  %8570 = vmatpush1.bf16.msra.mxu0 %v3452
  %8571 = vmatprep.subr.bf16.mxu0 %v3457
  %8572 = vmatpush1.bf16.msra.mxu0 %v3456
  %8573 = vmatprep.subr.bf16.mxu0 %v3461
  %8574 = vmatpush1.bf16.msra.mxu0 %v3460
  %8575 = vmatprep.subr.bf16.mxu0 %v3465
  %8576 = vmatpush1.bf16.msra.mxu0 %v3464
  %8577 = vmatprep.subr.bf16.mxu0 %v3469
  %8578 = vmatpush1.bf16.msra.mxu0 %v3468
  %8579 = vmatprep.subr.bf16.mxu0 %v3473
  %8580 = vmatpush1.bf16.msra.mxu0 %v3472
  %8581 = vmatprep.subr.bf16.mxu0 %v3477
  %8582 = vmatpush1.bf16.msra.mxu0 %v3476
  %8583 = vmatprep.subr.bf16.mxu0 %v3481
  %8584 = vmatpush1.bf16.msra.mxu0 %v3480
  %8585 = vmatprep.subr.bf16.mxu0 %v3485
  %8586 = vmatpush1.bf16.msra.mxu0 %v3484
  %8587 = vmatprep.subr.bf16.mxu0 %v3489
  %8588 = vmatpush1.bf16.msra.mxu0 %v3488
  %8589 = vmatprep.mubr.bf16.mxu0 %v7906
  %8590 = vmatmul.mubr.bf16.gmra.mrb[0].mxu0 %v7905
  %v8591 = vpop.f32.mrb[0].mxu0
  %v8592 = vadd.f32 0.0, %v8591
  %v8593 = vpop.f32.mrb[0].mxu0
  %v8594 = vadd.f32 0.0, %v8593
  %v8595 = vpop.f32.mrb[0].mxu0
  %v8596 = vpop.f32.mrb[0].mxu0
  %8597 = vdwg.mxu0
  %8598 = vmatprep.subr.bf16.mxu0 %v3493
  %8599 = vmatpush1.bf16.msra.mxu0 %v3492
  %8600 = vmatprep.subr.bf16.mxu0 %v3497
  %8601 = vmatpush1.bf16.msra.mxu0 %v3496
  %8602 = vmatprep.subr.bf16.mxu0 %v3501
  %8603 = vmatpush1.bf16.msra.mxu0 %v3500
  %8604 = vmatprep.subr.bf16.mxu0 %v3505
  %8605 = vmatpush1.bf16.msra.mxu0 %v3504
  %8606 = vmatprep.subr.bf16.mxu0 %v3509
  %8607 = vmatpush1.bf16.msra.mxu0 %v3508
  %8608 = vmatprep.subr.bf16.mxu0 %v3513
  %8609 = vmatpush1.bf16.msra.mxu0 %v3512
  %8610 = vmatprep.subr.bf16.mxu0 %v3517
  %8611 = vmatpush1.bf16.msra.mxu0 %v3516
  %8612 = vmatprep.subr.bf16.mxu0 %v3521
  %8613 = vmatpush1.bf16.msra.mxu0 %v3520
  %8614 = vmatprep.subr.bf16.mxu0 %v3525
  %8615 = vmatpush1.bf16.msra.mxu0 %v3524
  %8616 = vmatprep.subr.bf16.mxu0 %v3529
  %8617 = vmatpush1.bf16.msra.mxu0 %v3528
  %8618 = vmatprep.subr.bf16.mxu0 %v3533
  %8619 = vmatpush1.bf16.msra.mxu0 %v3532
  %8620 = vmatprep.subr.bf16.mxu0 %v3537
  %8621 = vmatpush1.bf16.msra.mxu0 %v3536
  %8622 = vmatprep.subr.bf16.mxu0 %v3541
  %8623 = vmatpush1.bf16.msra.mxu0 %v3540
  %8624 = vmatprep.subr.bf16.mxu0 %v3545
  %8625 = vmatpush1.bf16.msra.mxu0 %v3544
  %8626 = vmatprep.subr.bf16.mxu0 %v3549
  %8627 = vmatpush1.bf16.msra.mxu0 %v3548
  %8628 = vmatprep.subr.bf16.mxu0 %v3553
  %8629 = vmatpush1.bf16.msra.mxu0 %v3552
  %8630 = vmatprep.mubr.bf16.mxu0 %v7908
  %8631 = vmatmul.mubr.bf16.gmra.mrb[0].mxu0 %v7907
  %v8632 = vpop.f32.mrb[0].mxu0
  %v8633 = vadd.f32 %v8592, %v8632
  %v8634 = vpop.f32.mrb[0].mxu0
  %v8635 = vadd.f32 %v8594, %v8634
  %v8636 = vpop.f32.mrb[0].mxu0
  %v8637 = vpop.f32.mrb[0].mxu0
  %8638 = vdwg.mxu0
  %v8643 = vcombine.low %v8551, %v8553
  %v8644 = vcombine.low %v8633, %v8635
  %v8646 = vunpack.c.l.s4 1983009808
  %v8647 = vunpack.c.0.s8 %v8646
  %v8648 = vlaneseq
  %v8649 = vshrl.u32 %v8648, 7
  %v8650 = vsub.s32 %v8647, %v8649
  %v8651 = vrot.slane %v8643, %v8650
  %v8653 = vunpack.c.l.s4 1983009808
  %v8654 = vunpack.c.0.s8 %v8653
  %v8655 = vlaneseq
  %v8656 = vshrl.u32 %v8655, 7
  %v8657 = vsub.s32 %v8654, %v8656
  %v8658 = vrot.slane %v8644, %v8657
  %v8659 = vcombine.low %v8651, %v8658
  %v8661 = vadd.f32 %v7913, %v8659
  %v8662 = vmul.f32 %v8472, 0.5
  %v8663 = vtanh.pop %v8662
  %v8664 = vadd.f32 %v8663, 1.0
  %v8665 = vmul.f32 %v8664, 0.5
  %v8666 = vmul.f32 %v8473, 0.5
  %v8667 = vtanh.pop %v8666
  %v8668 = vadd.f32 %v8667, 1.0
  %v8669 = vmul.f32 %v8668, 0.5
  %v8670 = vtanh.pop %v8474
  %v8671 = vmul.f32 %v8669, %v7874
  %v8672 = vmul.f32 %v8665, %v8670
  %v8673 = vadd.f32 %v8671, %v8672
  %v8674 = vmul.f32 %v8661, 0.5
  %v8675 = vtanh.pop %v8674
  %v8676 = vadd.f32 %v8675, 1.0
  %v8677 = vmul.f32 %v8676, 0.5
  %v8678 = vtanh.pop %v8673
  %v8679 = vmul.f32 %v8677, %v8678
  %s8680 = scalar_lea.vmem %s2, 48
  %8681 = vst [vmem:[%s8680] sm:$0xff] %v8679
  %v8683 = vcombine.high %v8679, %v8679
  %v8685 = vunpack.c.l.s4 1983009808
  %v8686 = vunpack.c.0.s8 %v8685
  %v8687 = vlaneseq
  %v8688 = vshrl.u32 %v8687, 7
  %v8689 = vsub.s32 %v8686, %v8688
  %v8690 = vrot.slane %v8679, %v8689
  %v8692 = vunpack.c.l.s4 1983009808
  %v8693 = vunpack.c.0.s8 %v8692
  %v8694 = vlaneseq
  %v8695 = vshrl.u32 %v8694, 7
  %v8696 = vsub.s32 %v8693, %v8695
  %v8697 = vrot.slane %v8683, %v8696
  %v8698 = vcombine.high %v8690, %v8690
  %v8699 = vcombine.high %v8697, %v8697
  %v8704 = vpack.c.bf16 %v8690, %v8690
  %v8705 = vpack.c.bf16 %v8698, %v8698
  %v8706 = vpack.c.bf16 %v8697, %v8697
  %v8707 = vpack.c.bf16 %v8699, %v8699
  %s8708 = scalar_lea.vmem %s0, 224
  %v8709 = vld [vmem:[%s8708] sm:$0xff]
  %v8710 = vld [vmem:[%s8708 + $0x8] sm:$0xff]
  %v8711 = vld [vmem:[%s8708 + $0x10] sm:$0xff]
  %v8712 = vld [vmem:[%s8708 + $0x18] sm:$0xff]
  %8713 = vmatprep.subr.bf16.mxu0 %v1714
  %8714 = vmatpush1.bf16.msra.mxu0 %v1713
  %8715 = vmatprep.subr.bf16.mxu0 %v1726
  %8716 = vmatpush1.bf16.msra.mxu0 %v1725
  %8717 = vmatprep.subr.bf16.mxu0 %v1738
  %8718 = vmatpush1.bf16.msra.mxu0 %v1737
  %8719 = vmatprep.subr.bf16.mxu0 %v1750
  %8720 = vmatpush1.bf16.msra.mxu0 %v1749
  %8721 = vmatprep.subr.bf16.mxu0 %v1762
  %8722 = vmatpush1.bf16.msra.mxu0 %v1761
  %8723 = vmatprep.subr.bf16.mxu0 %v1774
  %8724 = vmatpush1.bf16.msra.mxu0 %v1773
  %8725 = vmatprep.subr.bf16.mxu0 %v1786
  %8726 = vmatpush1.bf16.msra.mxu0 %v1785
  %8727 = vmatprep.subr.bf16.mxu0 %v1798
  %8728 = vmatpush1.bf16.msra.mxu0 %v1797
  %8729 = vmatprep.subr.bf16.mxu0 %v1810
  %8730 = vmatpush1.bf16.msra.mxu0 %v1809
  %8731 = vmatprep.subr.bf16.mxu0 %v1822
  %8732 = vmatpush1.bf16.msra.mxu0 %v1821
  %8733 = vmatprep.subr.bf16.mxu0 %v1834
  %8734 = vmatpush1.bf16.msra.mxu0 %v1833
  %8735 = vmatprep.subr.bf16.mxu0 %v1846
  %8736 = vmatpush1.bf16.msra.mxu0 %v1845
  %8737 = vmatprep.subr.bf16.mxu0 %v1858
  %8738 = vmatpush1.bf16.msra.mxu0 %v1857
  %8739 = vmatprep.subr.bf16.mxu0 %v1870
  %8740 = vmatpush1.bf16.msra.mxu0 %v1869
  %8741 = vmatprep.subr.bf16.mxu0 %v1882
  %8742 = vmatpush1.bf16.msra.mxu0 %v1881
  %8743 = vmatprep.subr.bf16.mxu0 %v1894
  %8744 = vmatpush1.bf16.msra.mxu0 %v1893
  %8745 = vmatprep.mubr.bf16.mxu0 %v8705
  %8746 = vmatmul.mubr.bf16.gmra.mrb[0].mxu0 %v8704
  %v8747 = vpop.f32.mrb[0].mxu0
  %v8748 = vadd.f32 0.0, %v8747
  %v8749 = vpop.f32.mrb[0].mxu0
  %v8750 = vadd.f32 0.0, %v8749
  %v8751 = vpop.f32.mrb[0].mxu0
  %v8752 = vpop.f32.mrb[0].mxu0
  %8753 = vdwg.mxu0
  %8754 = vmatprep.subr.bf16.mxu0 %v1906
  %8755 = vmatpush1.bf16.msra.mxu0 %v1905
  %8756 = vmatprep.subr.bf16.mxu0 %v1918
  %8757 = vmatpush1.bf16.msra.mxu0 %v1917
  %8758 = vmatprep.subr.bf16.mxu0 %v1930
  %8759 = vmatpush1.bf16.msra.mxu0 %v1929
  %8760 = vmatprep.subr.bf16.mxu0 %v1942
  %8761 = vmatpush1.bf16.msra.mxu0 %v1941
  %8762 = vmatprep.subr.bf16.mxu0 %v1954
  %8763 = vmatpush1.bf16.msra.mxu0 %v1953
  %8764 = vmatprep.subr.bf16.mxu0 %v1966
  %8765 = vmatpush1.bf16.msra.mxu0 %v1965
  %8766 = vmatprep.subr.bf16.mxu0 %v1978
  %8767 = vmatpush1.bf16.msra.mxu0 %v1977
  %8768 = vmatprep.subr.bf16.mxu0 %v1990
  %8769 = vmatpush1.bf16.msra.mxu0 %v1989
  %8770 = vmatprep.subr.bf16.mxu0 %v2002
  %8771 = vmatpush1.bf16.msra.mxu0 %v2001
  %8772 = vmatprep.subr.bf16.mxu0 %v2014
  %8773 = vmatpush1.bf16.msra.mxu0 %v2013
  %8774 = vmatprep.subr.bf16.mxu0 %v2026
  %8775 = vmatpush1.bf16.msra.mxu0 %v2025
  %8776 = vmatprep.subr.bf16.mxu0 %v2038
  %8777 = vmatpush1.bf16.msra.mxu0 %v2037
  %8778 = vmatprep.subr.bf16.mxu0 %v2050
  %8779 = vmatpush1.bf16.msra.mxu0 %v2049
  %8780 = vmatprep.subr.bf16.mxu0 %v2062
  %8781 = vmatpush1.bf16.msra.mxu0 %v2061
  %8782 = vmatprep.subr.bf16.mxu0 %v2074
  %8783 = vmatpush1.bf16.msra.mxu0 %v2073
  %8784 = vmatprep.subr.bf16.mxu0 %v2086
  %8785 = vmatpush1.bf16.msra.mxu0 %v2085
  %8786 = vmatprep.mubr.bf16.mxu0 %v8707
  %8787 = vmatmul.mubr.bf16.gmra.mrb[0].mxu0 %v8706
  %v8788 = vpop.f32.mrb[0].mxu0
  %v8789 = vadd.f32 %v8748, %v8788
  %v8790 = vpop.f32.mrb[0].mxu0
  %v8791 = vadd.f32 %v8750, %v8790
  %v8792 = vpop.f32.mrb[0].mxu0
  %v8793 = vpop.f32.mrb[0].mxu0
  %8794 = vdwg.mxu0
  %8795 = vmatprep.subr.bf16.mxu0 %v1716
  %8796 = vmatpush1.bf16.msra.mxu0 %v1715
  %8797 = vmatprep.subr.bf16.mxu0 %v1728
  %8798 = vmatpush1.bf16.msra.mxu0 %v1727
  %8799 = vmatprep.subr.bf16.mxu0 %v1740
  %8800 = vmatpush1.bf16.msra.mxu0 %v1739
  %8801 = vmatprep.subr.bf16.mxu0 %v1752
  %8802 = vmatpush1.bf16.msra.mxu0 %v1751
  %8803 = vmatprep.subr.bf16.mxu0 %v1764
  %8804 = vmatpush1.bf16.msra.mxu0 %v1763
  %8805 = vmatprep.subr.bf16.mxu0 %v1776
  %8806 = vmatpush1.bf16.msra.mxu0 %v1775
  %8807 = vmatprep.subr.bf16.mxu0 %v1788
  %8808 = vmatpush1.bf16.msra.mxu0 %v1787
  %8809 = vmatprep.subr.bf16.mxu0 %v1800
  %8810 = vmatpush1.bf16.msra.mxu0 %v1799
  %8811 = vmatprep.subr.bf16.mxu0 %v1812
  %8812 = vmatpush1.bf16.msra.mxu0 %v1811
  %8813 = vmatprep.subr.bf16.mxu0 %v1824
  %8814 = vmatpush1.bf16.msra.mxu0 %v1823
  %8815 = vmatprep.subr.bf16.mxu0 %v1836
  %8816 = vmatpush1.bf16.msra.mxu0 %v1835
  %8817 = vmatprep.subr.bf16.mxu0 %v1848
  %8818 = vmatpush1.bf16.msra.mxu0 %v1847
  %8819 = vmatprep.subr.bf16.mxu0 %v1860
  %8820 = vmatpush1.bf16.msra.mxu0 %v1859
  %8821 = vmatprep.subr.bf16.mxu0 %v1872
  %8822 = vmatpush1.bf16.msra.mxu0 %v1871
  %8823 = vmatprep.subr.bf16.mxu0 %v1884
  %8824 = vmatpush1.bf16.msra.mxu0 %v1883
  %8825 = vmatprep.subr.bf16.mxu0 %v1896
  %8826 = vmatpush1.bf16.msra.mxu0 %v1895
  %8827 = vmatprep.mubr.bf16.mxu0 %v8705
  %8828 = vmatmul.mubr.bf16.gmra.mrb[0].mxu0 %v8704
  %v8829 = vpop.f32.mrb[0].mxu0
  %v8830 = vadd.f32 0.0, %v8829
  %v8831 = vpop.f32.mrb[0].mxu0
  %v8832 = vadd.f32 0.0, %v8831
  %v8833 = vpop.f32.mrb[0].mxu0
  %v8834 = vpop.f32.mrb[0].mxu0
  %8835 = vdwg.mxu0
  %8836 = vmatprep.subr.bf16.mxu0 %v1908
  %8837 = vmatpush1.bf16.msra.mxu0 %v1907
  %8838 = vmatprep.subr.bf16.mxu0 %v1920
  %8839 = vmatpush1.bf16.msra.mxu0 %v1919
  %8840 = vmatprep.subr.bf16.mxu0 %v1932
  %8841 = vmatpush1.bf16.msra.mxu0 %v1931
  %8842 = vmatprep.subr.bf16.mxu0 %v1944
  %8843 = vmatpush1.bf16.msra.mxu0 %v1943
  %8844 = vmatprep.subr.bf16.mxu0 %v1956
  %8845 = vmatpush1.bf16.msra.mxu0 %v1955
  %8846 = vmatprep.subr.bf16.mxu0 %v1968
  %8847 = vmatpush1.bf16.msra.mxu0 %v1967
  %8848 = vmatprep.subr.bf16.mxu0 %v1980
  %8849 = vmatpush1.bf16.msra.mxu0 %v1979
  %8850 = vmatprep.subr.bf16.mxu0 %v1992
  %8851 = vmatpush1.bf16.msra.mxu0 %v1991
  %8852 = vmatprep.subr.bf16.mxu0 %v2004
  %8853 = vmatpush1.bf16.msra.mxu0 %v2003
  %8854 = vmatprep.subr.bf16.mxu0 %v2016
  %8855 = vmatpush1.bf16.msra.mxu0 %v2015
  %8856 = vmatprep.subr.bf16.mxu0 %v2028
  %8857 = vmatpush1.bf16.msra.mxu0 %v2027
  %8858 = vmatprep.subr.bf16.mxu0 %v2040
  %8859 = vmatpush1.bf16.msra.mxu0 %v2039
  %8860 = vmatprep.subr.bf16.mxu0 %v2052
  %8861 = vmatpush1.bf16.msra.mxu0 %v2051
  %8862 = vmatprep.subr.bf16.mxu0 %v2064
  %8863 = vmatpush1.bf16.msra.mxu0 %v2063
  %8864 = vmatprep.subr.bf16.mxu0 %v2076
  %8865 = vmatpush1.bf16.msra.mxu0 %v2075
  %8866 = vmatprep.subr.bf16.mxu0 %v2088
  %8867 = vmatpush1.bf16.msra.mxu0 %v2087
  %8868 = vmatprep.mubr.bf16.mxu0 %v8707
  %8869 = vmatmul.mubr.bf16.gmra.mrb[0].mxu0 %v8706
  %v8870 = vpop.f32.mrb[0].mxu0
  %v8871 = vadd.f32 %v8830, %v8870
  %v8872 = vpop.f32.mrb[0].mxu0
  %v8873 = vadd.f32 %v8832, %v8872
  %v8874 = vpop.f32.mrb[0].mxu0
  %v8875 = vpop.f32.mrb[0].mxu0
  %8876 = vdwg.mxu0
  %8877 = vmatprep.subr.bf16.mxu0 %v1718
  %8878 = vmatpush1.bf16.msra.mxu0 %v1717
  %8879 = vmatprep.subr.bf16.mxu0 %v1730
  %8880 = vmatpush1.bf16.msra.mxu0 %v1729
  %8881 = vmatprep.subr.bf16.mxu0 %v1742
  %8882 = vmatpush1.bf16.msra.mxu0 %v1741
  %8883 = vmatprep.subr.bf16.mxu0 %v1754
  %8884 = vmatpush1.bf16.msra.mxu0 %v1753
  %8885 = vmatprep.subr.bf16.mxu0 %v1766
  %8886 = vmatpush1.bf16.msra.mxu0 %v1765
  %8887 = vmatprep.subr.bf16.mxu0 %v1778
  %8888 = vmatpush1.bf16.msra.mxu0 %v1777
  %8889 = vmatprep.subr.bf16.mxu0 %v1790
  %8890 = vmatpush1.bf16.msra.mxu0 %v1789
  %8891 = vmatprep.subr.bf16.mxu0 %v1802
  %8892 = vmatpush1.bf16.msra.mxu0 %v1801
  %8893 = vmatprep.subr.bf16.mxu0 %v1814
  %8894 = vmatpush1.bf16.msra.mxu0 %v1813
  %8895 = vmatprep.subr.bf16.mxu0 %v1826
  %8896 = vmatpush1.bf16.msra.mxu0 %v1825
  %8897 = vmatprep.subr.bf16.mxu0 %v1838
  %8898 = vmatpush1.bf16.msra.mxu0 %v1837
  %8899 = vmatprep.subr.bf16.mxu0 %v1850
  %8900 = vmatpush1.bf16.msra.mxu0 %v1849
  %8901 = vmatprep.subr.bf16.mxu0 %v1862
  %8902 = vmatpush1.bf16.msra.mxu0 %v1861
  %8903 = vmatprep.subr.bf16.mxu0 %v1874
  %8904 = vmatpush1.bf16.msra.mxu0 %v1873
  %8905 = vmatprep.subr.bf16.mxu0 %v1886
  %8906 = vmatpush1.bf16.msra.mxu0 %v1885
  %8907 = vmatprep.subr.bf16.mxu0 %v1898
  %8908 = vmatpush1.bf16.msra.mxu0 %v1897
  %8909 = vmatprep.mubr.bf16.mxu0 %v8705
  %8910 = vmatmul.mubr.bf16.gmra.mrb[0].mxu0 %v8704
  %v8911 = vpop.f32.mrb[0].mxu0
  %v8912 = vadd.f32 0.0, %v8911
  %v8913 = vpop.f32.mrb[0].mxu0
  %v8914 = vadd.f32 0.0, %v8913
  %v8915 = vpop.f32.mrb[0].mxu0
  %v8916 = vpop.f32.mrb[0].mxu0
  %8917 = vdwg.mxu0
  %8918 = vmatprep.subr.bf16.mxu0 %v1910
  %8919 = vmatpush1.bf16.msra.mxu0 %v1909
  %8920 = vmatprep.subr.bf16.mxu0 %v1922
  %8921 = vmatpush1.bf16.msra.mxu0 %v1921
  %8922 = vmatprep.subr.bf16.mxu0 %v1934
  %8923 = vmatpush1.bf16.msra.mxu0 %v1933
  %8924 = vmatprep.subr.bf16.mxu0 %v1946
  %8925 = vmatpush1.bf16.msra.mxu0 %v1945
  %8926 = vmatprep.subr.bf16.mxu0 %v1958
  %8927 = vmatpush1.bf16.msra.mxu0 %v1957
  %8928 = vmatprep.subr.bf16.mxu0 %v1970
  %8929 = vmatpush1.bf16.msra.mxu0 %v1969
  %8930 = vmatprep.subr.bf16.mxu0 %v1982
  %8931 = vmatpush1.bf16.msra.mxu0 %v1981
  %8932 = vmatprep.subr.bf16.mxu0 %v1994
  %8933 = vmatpush1.bf16.msra.mxu0 %v1993
  %8934 = vmatprep.subr.bf16.mxu0 %v2006
  %8935 = vmatpush1.bf16.msra.mxu0 %v2005
  %8936 = vmatprep.subr.bf16.mxu0 %v2018
  %8937 = vmatpush1.bf16.msra.mxu0 %v2017
  %8938 = vmatprep.subr.bf16.mxu0 %v2030
  %8939 = vmatpush1.bf16.msra.mxu0 %v2029
  %8940 = vmatprep.subr.bf16.mxu0 %v2042
  %8941 = vmatpush1.bf16.msra.mxu0 %v2041
  %8942 = vmatprep.subr.bf16.mxu0 %v2054
  %8943 = vmatpush1.bf16.msra.mxu0 %v2053
  %8944 = vmatprep.subr.bf16.mxu0 %v2066
  %8945 = vmatpush1.bf16.msra.mxu0 %v2065
  %8946 = vmatprep.subr.bf16.mxu0 %v2078
  %8947 = vmatpush1.bf16.msra.mxu0 %v2077
  %8948 = vmatprep.subr.bf16.mxu0 %v2090
  %8949 = vmatpush1.bf16.msra.mxu0 %v2089
  %8950 = vmatprep.mubr.bf16.mxu0 %v8707
  %8951 = vmatmul.mubr.bf16.gmra.mrb[0].mxu0 %v8706
  %v8952 = vpop.f32.mrb[0].mxu0
  %v8953 = vadd.f32 %v8912, %v8952
  %v8954 = vpop.f32.mrb[0].mxu0
  %v8955 = vadd.f32 %v8914, %v8954
  %v8956 = vpop.f32.mrb[0].mxu0
  %v8957 = vpop.f32.mrb[0].mxu0
  %8958 = vdwg.mxu0
  %8959 = vmatprep.subr.bf16.mxu0 %v1720
  %8960 = vmatpush1.bf16.msra.mxu0 %v1719
  %8961 = vmatprep.subr.bf16.mxu0 %v1732
  %8962 = vmatpush1.bf16.msra.mxu0 %v1731
  %8963 = vmatprep.subr.bf16.mxu0 %v1744
  %8964 = vmatpush1.bf16.msra.mxu0 %v1743
  %8965 = vmatprep.subr.bf16.mxu0 %v1756
  %8966 = vmatpush1.bf16.msra.mxu0 %v1755
  %8967 = vmatprep.subr.bf16.mxu0 %v1768
  %8968 = vmatpush1.bf16.msra.mxu0 %v1767
  %8969 = vmatprep.subr.bf16.mxu0 %v1780
  %8970 = vmatpush1.bf16.msra.mxu0 %v1779
  %8971 = vmatprep.subr.bf16.mxu0 %v1792
  %8972 = vmatpush1.bf16.msra.mxu0 %v1791
  %8973 = vmatprep.subr.bf16.mxu0 %v1804
  %8974 = vmatpush1.bf16.msra.mxu0 %v1803
  %8975 = vmatprep.subr.bf16.mxu0 %v1816
  %8976 = vmatpush1.bf16.msra.mxu0 %v1815
  %8977 = vmatprep.subr.bf16.mxu0 %v1828
  %8978 = vmatpush1.bf16.msra.mxu0 %v1827
  %8979 = vmatprep.subr.bf16.mxu0 %v1840
  %8980 = vmatpush1.bf16.msra.mxu0 %v1839
  %8981 = vmatprep.subr.bf16.mxu0 %v1852
  %8982 = vmatpush1.bf16.msra.mxu0 %v1851
  %8983 = vmatprep.subr.bf16.mxu0 %v1864
  %8984 = vmatpush1.bf16.msra.mxu0 %v1863
  %8985 = vmatprep.subr.bf16.mxu0 %v1876
  %8986 = vmatpush1.bf16.msra.mxu0 %v1875
  %8987 = vmatprep.subr.bf16.mxu0 %v1888
  %8988 = vmatpush1.bf16.msra.mxu0 %v1887
  %8989 = vmatprep.subr.bf16.mxu0 %v1900
  %8990 = vmatpush1.bf16.msra.mxu0 %v1899
  %8991 = vmatprep.mubr.bf16.mxu0 %v8705
  %8992 = vmatmul.mubr.bf16.gmra.mrb[0].mxu0 %v8704
  %v8993 = vpop.f32.mrb[0].mxu0
  %v8994 = vadd.f32 0.0, %v8993
  %v8995 = vpop.f32.mrb[0].mxu0
  %v8996 = vadd.f32 0.0, %v8995
  %v8997 = vpop.f32.mrb[0].mxu0
  %v8998 = vpop.f32.mrb[0].mxu0
  %8999 = vdwg.mxu0
  %9000 = vmatprep.subr.bf16.mxu0 %v1912
  %9001 = vmatpush1.bf16.msra.mxu0 %v1911
  %9002 = vmatprep.subr.bf16.mxu0 %v1924
  %9003 = vmatpush1.bf16.msra.mxu0 %v1923
  %9004 = vmatprep.subr.bf16.mxu0 %v1936
  %9005 = vmatpush1.bf16.msra.mxu0 %v1935
  %9006 = vmatprep.subr.bf16.mxu0 %v1948
  %9007 = vmatpush1.bf16.msra.mxu0 %v1947
  %9008 = vmatprep.subr.bf16.mxu0 %v1960
  %9009 = vmatpush1.bf16.msra.mxu0 %v1959
  %9010 = vmatprep.subr.bf16.mxu0 %v1972
  %9011 = vmatpush1.bf16.msra.mxu0 %v1971
  %9012 = vmatprep.subr.bf16.mxu0 %v1984
  %9013 = vmatpush1.bf16.msra.mxu0 %v1983
  %9014 = vmatprep.subr.bf16.mxu0 %v1996
  %9015 = vmatpush1.bf16.msra.mxu0 %v1995
  %9016 = vmatprep.subr.bf16.mxu0 %v2008
  %9017 = vmatpush1.bf16.msra.mxu0 %v2007
  %9018 = vmatprep.subr.bf16.mxu0 %v2020
  %9019 = vmatpush1.bf16.msra.mxu0 %v2019
  %9020 = vmatprep.subr.bf16.mxu0 %v2032
  %9021 = vmatpush1.bf16.msra.mxu0 %v2031
  %9022 = vmatprep.subr.bf16.mxu0 %v2044
  %9023 = vmatpush1.bf16.msra.mxu0 %v2043
  %9024 = vmatprep.subr.bf16.mxu0 %v2056
  %9025 = vmatpush1.bf16.msra.mxu0 %v2055
  %9026 = vmatprep.subr.bf16.mxu0 %v2068
  %9027 = vmatpush1.bf16.msra.mxu0 %v2067
  %9028 = vmatprep.subr.bf16.mxu0 %v2080
  %9029 = vmatpush1.bf16.msra.mxu0 %v2079
  %9030 = vmatprep.subr.bf16.mxu0 %v2092
  %9031 = vmatpush1.bf16.msra.mxu0 %v2091
  %9032 = vmatprep.mubr.bf16.mxu0 %v8707
  %9033 = vmatmul.mubr.bf16.gmra.mrb[0].mxu0 %v8706
  %v9034 = vpop.f32.mrb[0].mxu0
  %v9035 = vadd.f32 %v8994, %v9034
  %v9036 = vpop.f32.mrb[0].mxu0
  %v9037 = vadd.f32 %v8996, %v9036
  %v9038 = vpop.f32.mrb[0].mxu0
  %v9039 = vpop.f32.mrb[0].mxu0
  %9040 = vdwg.mxu0
  %9041 = vmatprep.subr.bf16.mxu0 %v1722
  %9042 = vmatpush1.bf16.msra.mxu0 %v1721
  %9043 = vmatprep.subr.bf16.mxu0 %v1734
  %9044 = vmatpush1.bf16.msra.mxu0 %v1733
  %9045 = vmatprep.subr.bf16.mxu0 %v1746
  %9046 = vmatpush1.bf16.msra.mxu0 %v1745
  %9047 = vmatprep.subr.bf16.mxu0 %v1758
  %9048 = vmatpush1.bf16.msra.mxu0 %v1757
  %9049 = vmatprep.subr.bf16.mxu0 %v1770
  %9050 = vmatpush1.bf16.msra.mxu0 %v1769
  %9051 = vmatprep.subr.bf16.mxu0 %v1782
  %9052 = vmatpush1.bf16.msra.mxu0 %v1781
  %9053 = vmatprep.subr.bf16.mxu0 %v1794
  %9054 = vmatpush1.bf16.msra.mxu0 %v1793
  %9055 = vmatprep.subr.bf16.mxu0 %v1806
  %9056 = vmatpush1.bf16.msra.mxu0 %v1805
  %9057 = vmatprep.subr.bf16.mxu0 %v1818
  %9058 = vmatpush1.bf16.msra.mxu0 %v1817
  %9059 = vmatprep.subr.bf16.mxu0 %v1830
  %9060 = vmatpush1.bf16.msra.mxu0 %v1829
  %9061 = vmatprep.subr.bf16.mxu0 %v1842
  %9062 = vmatpush1.bf16.msra.mxu0 %v1841
  %9063 = vmatprep.subr.bf16.mxu0 %v1854
  %9064 = vmatpush1.bf16.msra.mxu0 %v1853
  %9065 = vmatprep.subr.bf16.mxu0 %v1866
  %9066 = vmatpush1.bf16.msra.mxu0 %v1865
  %9067 = vmatprep.subr.bf16.mxu0 %v1878
  %9068 = vmatpush1.bf16.msra.mxu0 %v1877
  %9069 = vmatprep.subr.bf16.mxu0 %v1890
  %9070 = vmatpush1.bf16.msra.mxu0 %v1889
  %9071 = vmatprep.subr.bf16.mxu0 %v1902
  %9072 = vmatpush1.bf16.msra.mxu0 %v1901
  %9073 = vmatprep.mubr.bf16.mxu0 %v8705
  %9074 = vmatmul.mubr.bf16.gmra.mrb[0].mxu0 %v8704
  %v9075 = vpop.f32.mrb[0].mxu0
  %v9076 = vadd.f32 0.0, %v9075
  %v9077 = vpop.f32.mrb[0].mxu0
  %v9078 = vadd.f32 0.0, %v9077
  %v9079 = vpop.f32.mrb[0].mxu0
  %v9080 = vpop.f32.mrb[0].mxu0
  %9081 = vdwg.mxu0
  %9082 = vmatprep.subr.bf16.mxu0 %v1914
  %9083 = vmatpush1.bf16.msra.mxu0 %v1913
  %9084 = vmatprep.subr.bf16.mxu0 %v1926
  %9085 = vmatpush1.bf16.msra.mxu0 %v1925
  %9086 = vmatprep.subr.bf16.mxu0 %v1938
  %9087 = vmatpush1.bf16.msra.mxu0 %v1937
  %9088 = vmatprep.subr.bf16.mxu0 %v1950
  %9089 = vmatpush1.bf16.msra.mxu0 %v1949
  %9090 = vmatprep.subr.bf16.mxu0 %v1962
  %9091 = vmatpush1.bf16.msra.mxu0 %v1961
  %9092 = vmatprep.subr.bf16.mxu0 %v1974
  %9093 = vmatpush1.bf16.msra.mxu0 %v1973
  %9094 = vmatprep.subr.bf16.mxu0 %v1986
  %9095 = vmatpush1.bf16.msra.mxu0 %v1985
  %9096 = vmatprep.subr.bf16.mxu0 %v1998
  %9097 = vmatpush1.bf16.msra.mxu0 %v1997
  %9098 = vmatprep.subr.bf16.mxu0 %v2010
  %9099 = vmatpush1.bf16.msra.mxu0 %v2009
  %9100 = vmatprep.subr.bf16.mxu0 %v2022
  %9101 = vmatpush1.bf16.msra.mxu0 %v2021
  %9102 = vmatprep.subr.bf16.mxu0 %v2034
  %9103 = vmatpush1.bf16.msra.mxu0 %v2033
  %9104 = vmatprep.subr.bf16.mxu0 %v2046
  %9105 = vmatpush1.bf16.msra.mxu0 %v2045
  %9106 = vmatprep.subr.bf16.mxu0 %v2058
  %9107 = vmatpush1.bf16.msra.mxu0 %v2057
  %9108 = vmatprep.subr.bf16.mxu0 %v2070
  %9109 = vmatpush1.bf16.msra.mxu0 %v2069
  %9110 = vmatprep.subr.bf16.mxu0 %v2082
  %9111 = vmatpush1.bf16.msra.mxu0 %v2081
  %9112 = vmatprep.subr.bf16.mxu0 %v2094
  %9113 = vmatpush1.bf16.msra.mxu0 %v2093
  %9114 = vmatprep.mubr.bf16.mxu0 %v8707
  %9115 = vmatmul.mubr.bf16.gmra.mrb[0].mxu0 %v8706
  %v9116 = vpop.f32.mrb[0].mxu0
  %v9117 = vadd.f32 %v9076, %v9116
  %v9118 = vpop.f32.mrb[0].mxu0
  %v9119 = vadd.f32 %v9078, %v9118
  %v9120 = vpop.f32.mrb[0].mxu0
  %v9121 = vpop.f32.mrb[0].mxu0
  %9122 = vdwg.mxu0
  %9123 = vmatprep.subr.bf16.mxu0 %v1724
  %9124 = vmatpush1.bf16.msra.mxu0 %v1723
  %9125 = vmatprep.subr.bf16.mxu0 %v1736
  %9126 = vmatpush1.bf16.msra.mxu0 %v1735
  %9127 = vmatprep.subr.bf16.mxu0 %v1748
  %9128 = vmatpush1.bf16.msra.mxu0 %v1747
  %9129 = vmatprep.subr.bf16.mxu0 %v1760
  %9130 = vmatpush1.bf16.msra.mxu0 %v1759
  %9131 = vmatprep.subr.bf16.mxu0 %v1772
  %9132 = vmatpush1.bf16.msra.mxu0 %v1771
  %9133 = vmatprep.subr.bf16.mxu0 %v1784
  %9134 = vmatpush1.bf16.msra.mxu0 %v1783
  %9135 = vmatprep.subr.bf16.mxu0 %v1796
  %9136 = vmatpush1.bf16.msra.mxu0 %v1795
  %9137 = vmatprep.subr.bf16.mxu0 %v1808
  %9138 = vmatpush1.bf16.msra.mxu0 %v1807
  %9139 = vmatprep.subr.bf16.mxu0 %v1820
  %9140 = vmatpush1.bf16.msra.mxu0 %v1819
  %9141 = vmatprep.subr.bf16.mxu0 %v1832
  %9142 = vmatpush1.bf16.msra.mxu0 %v1831
  %9143 = vmatprep.subr.bf16.mxu0 %v1844
  %9144 = vmatpush1.bf16.msra.mxu0 %v1843
  %9145 = vmatprep.subr.bf16.mxu0 %v1856
  %9146 = vmatpush1.bf16.msra.mxu0 %v1855
  %9147 = vmatprep.subr.bf16.mxu0 %v1868
  %9148 = vmatpush1.bf16.msra.mxu0 %v1867
  %9149 = vmatprep.subr.bf16.mxu0 %v1880
  %9150 = vmatpush1.bf16.msra.mxu0 %v1879
  %9151 = vmatprep.subr.bf16.mxu0 %v1892
  %9152 = vmatpush1.bf16.msra.mxu0 %v1891
  %9153 = vmatprep.subr.bf16.mxu0 %v1904
  %9154 = vmatpush1.bf16.msra.mxu0 %v1903
  %9155 = vmatprep.mubr.bf16.mxu0 %v8705
  %9156 = vmatmul.mubr.bf16.gmra.mrb[0].mxu0 %v8704
  %v9157 = vpop.f32.mrb[0].mxu0
  %v9158 = vadd.f32 0.0, %v9157
  %v9159 = vpop.f32.mrb[0].mxu0
  %v9160 = vadd.f32 0.0, %v9159
  %v9161 = vpop.f32.mrb[0].mxu0
  %v9162 = vpop.f32.mrb[0].mxu0
  %9163 = vdwg.mxu0
  %9164 = vmatprep.subr.bf16.mxu0 %v1916
  %9165 = vmatpush1.bf16.msra.mxu0 %v1915
  %9166 = vmatprep.subr.bf16.mxu0 %v1928
  %9167 = vmatpush1.bf16.msra.mxu0 %v1927
  %9168 = vmatprep.subr.bf16.mxu0 %v1940
  %9169 = vmatpush1.bf16.msra.mxu0 %v1939
  %9170 = vmatprep.subr.bf16.mxu0 %v1952
  %9171 = vmatpush1.bf16.msra.mxu0 %v1951
  %9172 = vmatprep.subr.bf16.mxu0 %v1964
  %9173 = vmatpush1.bf16.msra.mxu0 %v1963
  %9174 = vmatprep.subr.bf16.mxu0 %v1976
  %9175 = vmatpush1.bf16.msra.mxu0 %v1975
  %9176 = vmatprep.subr.bf16.mxu0 %v1988
  %9177 = vmatpush1.bf16.msra.mxu0 %v1987
  %9178 = vmatprep.subr.bf16.mxu0 %v2000
  %9179 = vmatpush1.bf16.msra.mxu0 %v1999
  %9180 = vmatprep.subr.bf16.mxu0 %v2012
  %9181 = vmatpush1.bf16.msra.mxu0 %v2011
  %9182 = vmatprep.subr.bf16.mxu0 %v2024
  %9183 = vmatpush1.bf16.msra.mxu0 %v2023
  %9184 = vmatprep.subr.bf16.mxu0 %v2036
  %9185 = vmatpush1.bf16.msra.mxu0 %v2035
  %9186 = vmatprep.subr.bf16.mxu0 %v2048
  %9187 = vmatpush1.bf16.msra.mxu0 %v2047
  %9188 = vmatprep.subr.bf16.mxu0 %v2060
  %9189 = vmatpush1.bf16.msra.mxu0 %v2059
  %9190 = vmatprep.subr.bf16.mxu0 %v2072
  %9191 = vmatpush1.bf16.msra.mxu0 %v2071
  %9192 = vmatprep.subr.bf16.mxu0 %v2084
  %9193 = vmatpush1.bf16.msra.mxu0 %v2083
  %9194 = vmatprep.subr.bf16.mxu0 %v2096
  %9195 = vmatpush1.bf16.msra.mxu0 %v2095
  %9196 = vmatprep.mubr.bf16.mxu0 %v8707
  %9197 = vmatmul.mubr.bf16.gmra.mrb[0].mxu0 %v8706
  %v9198 = vpop.f32.mrb[0].mxu0
  %v9199 = vadd.f32 %v9158, %v9198
  %v9200 = vpop.f32.mrb[0].mxu0
  %v9201 = vadd.f32 %v9160, %v9200
  %v9202 = vpop.f32.mrb[0].mxu0
  %v9203 = vpop.f32.mrb[0].mxu0
  %9204 = vdwg.mxu0
  %v9217 = vcombine.low %v8789, %v8791
  %v9218 = vcombine.low %v8871, %v8873
  %v9220 = vunpack.c.l.s4 1983009808
  %v9221 = vunpack.c.0.s8 %v9220
  %v9222 = vlaneseq
  %v9223 = vshrl.u32 %v9222, 7
  %v9224 = vsub.s32 %v9221, %v9223
  %v9225 = vrot.slane %v9217, %v9224
  %v9227 = vunpack.c.l.s4 1983009808
  %v9228 = vunpack.c.0.s8 %v9227
  %v9229 = vlaneseq
  %v9230 = vshrl.u32 %v9229, 7
  %v9231 = vsub.s32 %v9228, %v9230
  %v9232 = vrot.slane %v9218, %v9231
  %v9233 = vcombine.low %v9225, %v9232
  %v9234 = vcombine.low %v8953, %v8955
  %v9235 = vcombine.low %v9035, %v9037
  %v9237 = vunpack.c.l.s4 1983009808
  %v9238 = vunpack.c.0.s8 %v9237
  %v9239 = vlaneseq
  %v9240 = vshrl.u32 %v9239, 7
  %v9241 = vsub.s32 %v9238, %v9240
  %v9242 = vrot.slane %v9234, %v9241
  %v9244 = vunpack.c.l.s4 1983009808
  %v9245 = vunpack.c.0.s8 %v9244
  %v9246 = vlaneseq
  %v9247 = vshrl.u32 %v9246, 7
  %v9248 = vsub.s32 %v9245, %v9247
  %v9249 = vrot.slane %v9235, %v9248
  %v9250 = vcombine.low %v9242, %v9249
  %v9251 = vcombine.low %v9117, %v9119
  %v9252 = vcombine.low %v9199, %v9201
  %v9254 = vunpack.c.l.s4 1983009808
  %v9255 = vunpack.c.0.s8 %v9254
  %v9256 = vlaneseq
  %v9257 = vshrl.u32 %v9256, 7
  %v9258 = vsub.s32 %v9255, %v9257
  %v9259 = vrot.slane %v9251, %v9258
  %v9261 = vunpack.c.l.s4 1983009808
  %v9262 = vunpack.c.0.s8 %v9261
  %v9263 = vlaneseq
  %v9264 = vshrl.u32 %v9263, 7
  %v9265 = vsub.s32 %v9262, %v9264
  %v9266 = vrot.slane %v9252, %v9265
  %v9267 = vcombine.low %v9259, %v9266
  %v9271 = vadd.f32 %v8709, %v9233
  %v9272 = vadd.f32 %v8710, %v9250
  %v9273 = vadd.f32 %v8711, %v9267
  %9274 = vmatprep.subr.bf16.mxu0 %v3427
  %9275 = vmatpush1.bf16.msra.mxu0 %v3426
  %9276 = vmatprep.subr.bf16.mxu0 %v3431
  %9277 = vmatpush1.bf16.msra.mxu0 %v3430
  %9278 = vmatprep.subr.bf16.mxu0 %v3435
  %9279 = vmatpush1.bf16.msra.mxu0 %v3434
  %9280 = vmatprep.subr.bf16.mxu0 %v3439
  %9281 = vmatpush1.bf16.msra.mxu0 %v3438
  %9282 = vmatprep.subr.bf16.mxu0 %v3443
  %9283 = vmatpush1.bf16.msra.mxu0 %v3442
  %9284 = vmatprep.subr.bf16.mxu0 %v3447
  %9285 = vmatpush1.bf16.msra.mxu0 %v3446
  %9286 = vmatprep.subr.bf16.mxu0 %v3451
  %9287 = vmatpush1.bf16.msra.mxu0 %v3450
  %9288 = vmatprep.subr.bf16.mxu0 %v3455
  %9289 = vmatpush1.bf16.msra.mxu0 %v3454
  %9290 = vmatprep.subr.bf16.mxu0 %v3459
  %9291 = vmatpush1.bf16.msra.mxu0 %v3458
  %9292 = vmatprep.subr.bf16.mxu0 %v3463
  %9293 = vmatpush1.bf16.msra.mxu0 %v3462
  %9294 = vmatprep.subr.bf16.mxu0 %v3467
  %9295 = vmatpush1.bf16.msra.mxu0 %v3466
  %9296 = vmatprep.subr.bf16.mxu0 %v3471
  %9297 = vmatpush1.bf16.msra.mxu0 %v3470
  %9298 = vmatprep.subr.bf16.mxu0 %v3475
  %9299 = vmatpush1.bf16.msra.mxu0 %v3474
  %9300 = vmatprep.subr.bf16.mxu0 %v3479
  %9301 = vmatpush1.bf16.msra.mxu0 %v3478
  %9302 = vmatprep.subr.bf16.mxu0 %v3483
  %9303 = vmatpush1.bf16.msra.mxu0 %v3482
  %9304 = vmatprep.subr.bf16.mxu0 %v3487
  %9305 = vmatpush1.bf16.msra.mxu0 %v3486
  %9306 = vmatprep.mubr.bf16.mxu0 %v8705
  %9307 = vmatmul.mubr.bf16.gmra.mrb[0].mxu0 %v8704
  %v9308 = vpop.f32.mrb[0].mxu0
  %v9309 = vadd.f32 0.0, %v9308
  %v9310 = vpop.f32.mrb[0].mxu0
  %v9311 = vadd.f32 0.0, %v9310
  %v9312 = vpop.f32.mrb[0].mxu0
  %v9313 = vpop.f32.mrb[0].mxu0
  %9314 = vdwg.mxu0
  %9315 = vmatprep.subr.bf16.mxu0 %v3491
  %9316 = vmatpush1.bf16.msra.mxu0 %v3490
  %9317 = vmatprep.subr.bf16.mxu0 %v3495
  %9318 = vmatpush1.bf16.msra.mxu0 %v3494
  %9319 = vmatprep.subr.bf16.mxu0 %v3499
  %9320 = vmatpush1.bf16.msra.mxu0 %v3498
  %9321 = vmatprep.subr.bf16.mxu0 %v3503
  %9322 = vmatpush1.bf16.msra.mxu0 %v3502
  %9323 = vmatprep.subr.bf16.mxu0 %v3507
  %9324 = vmatpush1.bf16.msra.mxu0 %v3506
  %9325 = vmatprep.subr.bf16.mxu0 %v3511
  %9326 = vmatpush1.bf16.msra.mxu0 %v3510
  %9327 = vmatprep.subr.bf16.mxu0 %v3515
  %9328 = vmatpush1.bf16.msra.mxu0 %v3514
  %9329 = vmatprep.subr.bf16.mxu0 %v3519
  %9330 = vmatpush1.bf16.msra.mxu0 %v3518
  %9331 = vmatprep.subr.bf16.mxu0 %v3523
  %9332 = vmatpush1.bf16.msra.mxu0 %v3522
  %9333 = vmatprep.subr.bf16.mxu0 %v3527
  %9334 = vmatpush1.bf16.msra.mxu0 %v3526
  %9335 = vmatprep.subr.bf16.mxu0 %v3531
  %9336 = vmatpush1.bf16.msra.mxu0 %v3530
  %9337 = vmatprep.subr.bf16.mxu0 %v3535
  %9338 = vmatpush1.bf16.msra.mxu0 %v3534
  %9339 = vmatprep.subr.bf16.mxu0 %v3539
  %9340 = vmatpush1.bf16.msra.mxu0 %v3538
  %9341 = vmatprep.subr.bf16.mxu0 %v3543
  %9342 = vmatpush1.bf16.msra.mxu0 %v3542
  %9343 = vmatprep.subr.bf16.mxu0 %v3547
  %9344 = vmatpush1.bf16.msra.mxu0 %v3546
  %9345 = vmatprep.subr.bf16.mxu0 %v3551
  %9346 = vmatpush1.bf16.msra.mxu0 %v3550
  %9347 = vmatprep.mubr.bf16.mxu0 %v8707
  %9348 = vmatmul.mubr.bf16.gmra.mrb[0].mxu0 %v8706
  %v9349 = vpop.f32.mrb[0].mxu0
  %v9350 = vadd.f32 %v9309, %v9349
  %v9351 = vpop.f32.mrb[0].mxu0
  %v9352 = vadd.f32 %v9311, %v9351
  %v9353 = vpop.f32.mrb[0].mxu0
  %v9354 = vpop.f32.mrb[0].mxu0
  %9355 = vdwg.mxu0
  %9356 = vmatprep.subr.bf16.mxu0 %v3429
  %9357 = vmatpush1.bf16.msra.mxu0 %v3428
  %9358 = vmatprep.subr.bf16.mxu0 %v3433
  %9359 = vmatpush1.bf16.msra.mxu0 %v3432
  %9360 = vmatprep.subr.bf16.mxu0 %v3437
  %9361 = vmatpush1.bf16.msra.mxu0 %v3436
  %9362 = vmatprep.subr.bf16.mxu0 %v3441
  %9363 = vmatpush1.bf16.msra.mxu0 %v3440
  %9364 = vmatprep.subr.bf16.mxu0 %v3445
  %9365 = vmatpush1.bf16.msra.mxu0 %v3444
  %9366 = vmatprep.subr.bf16.mxu0 %v3449
  %9367 = vmatpush1.bf16.msra.mxu0 %v3448
  %9368 = vmatprep.subr.bf16.mxu0 %v3453
  %9369 = vmatpush1.bf16.msra.mxu0 %v3452
  %9370 = vmatprep.subr.bf16.mxu0 %v3457
  %9371 = vmatpush1.bf16.msra.mxu0 %v3456
  %9372 = vmatprep.subr.bf16.mxu0 %v3461
  %9373 = vmatpush1.bf16.msra.mxu0 %v3460
  %9374 = vmatprep.subr.bf16.mxu0 %v3465
  %9375 = vmatpush1.bf16.msra.mxu0 %v3464
  %9376 = vmatprep.subr.bf16.mxu0 %v3469
  %9377 = vmatpush1.bf16.msra.mxu0 %v3468
  %9378 = vmatprep.subr.bf16.mxu0 %v3473
  %9379 = vmatpush1.bf16.msra.mxu0 %v3472
  %9380 = vmatprep.subr.bf16.mxu0 %v3477
  %9381 = vmatpush1.bf16.msra.mxu0 %v3476
  %9382 = vmatprep.subr.bf16.mxu0 %v3481
  %9383 = vmatpush1.bf16.msra.mxu0 %v3480
  %9384 = vmatprep.subr.bf16.mxu0 %v3485
  %9385 = vmatpush1.bf16.msra.mxu0 %v3484
  %9386 = vmatprep.subr.bf16.mxu0 %v3489
  %9387 = vmatpush1.bf16.msra.mxu0 %v3488
  %9388 = vmatprep.mubr.bf16.mxu0 %v8705
  %9389 = vmatmul.mubr.bf16.gmra.mrb[0].mxu0 %v8704
  %v9390 = vpop.f32.mrb[0].mxu0
  %v9391 = vadd.f32 0.0, %v9390
  %v9392 = vpop.f32.mrb[0].mxu0
  %v9393 = vadd.f32 0.0, %v9392
  %v9394 = vpop.f32.mrb[0].mxu0
  %v9395 = vpop.f32.mrb[0].mxu0
  %9396 = vdwg.mxu0
  %9397 = vmatprep.subr.bf16.mxu0 %v3493
  %9398 = vmatpush1.bf16.msra.mxu0 %v3492
  %9399 = vmatprep.subr.bf16.mxu0 %v3497
  %9400 = vmatpush1.bf16.msra.mxu0 %v3496
  %9401 = vmatprep.subr.bf16.mxu0 %v3501
  %9402 = vmatpush1.bf16.msra.mxu0 %v3500
  %9403 = vmatprep.subr.bf16.mxu0 %v3505
  %9404 = vmatpush1.bf16.msra.mxu0 %v3504
  %9405 = vmatprep.subr.bf16.mxu0 %v3509
  %9406 = vmatpush1.bf16.msra.mxu0 %v3508
  %9407 = vmatprep.subr.bf16.mxu0 %v3513
  %9408 = vmatpush1.bf16.msra.mxu0 %v3512
  %9409 = vmatprep.subr.bf16.mxu0 %v3517
  %9410 = vmatpush1.bf16.msra.mxu0 %v3516
  %9411 = vmatprep.subr.bf16.mxu0 %v3521
  %9412 = vmatpush1.bf16.msra.mxu0 %v3520
  %9413 = vmatprep.subr.bf16.mxu0 %v3525
  %9414 = vmatpush1.bf16.msra.mxu0 %v3524
  %9415 = vmatprep.subr.bf16.mxu0 %v3529
  %9416 = vmatpush1.bf16.msra.mxu0 %v3528
  %9417 = vmatprep.subr.bf16.mxu0 %v3533
  %9418 = vmatpush1.bf16.msra.mxu0 %v3532
  %9419 = vmatprep.subr.bf16.mxu0 %v3537
  %9420 = vmatpush1.bf16.msra.mxu0 %v3536
  %9421 = vmatprep.subr.bf16.mxu0 %v3541
  %9422 = vmatpush1.bf16.msra.mxu0 %v3540
  %9423 = vmatprep.subr.bf16.mxu0 %v3545
  %9424 = vmatpush1.bf16.msra.mxu0 %v3544
  %9425 = vmatprep.subr.bf16.mxu0 %v3549
  %9426 = vmatpush1.bf16.msra.mxu0 %v3548
  %9427 = vmatprep.subr.bf16.mxu0 %v3553
  %9428 = vmatpush1.bf16.msra.mxu0 %v3552
  %9429 = vmatprep.mubr.bf16.mxu0 %v8707
  %9430 = vmatmul.mubr.bf16.gmra.mrb[0].mxu0 %v8706
  %v9431 = vpop.f32.mrb[0].mxu0
  %v9432 = vadd.f32 %v9391, %v9431
  %v9433 = vpop.f32.mrb[0].mxu0
  %v9434 = vadd.f32 %v9393, %v9433
  %v9435 = vpop.f32.mrb[0].mxu0
  %v9436 = vpop.f32.mrb[0].mxu0
  %9437 = vdwg.mxu0
  %v9442 = vcombine.low %v9350, %v9352
  %v9443 = vcombine.low %v9432, %v9434
  %v9445 = vunpack.c.l.s4 1983009808
  %v9446 = vunpack.c.0.s8 %v9445
  %v9447 = vlaneseq
  %v9448 = vshrl.u32 %v9447, 7
  %v9449 = vsub.s32 %v9446, %v9448
  %v9450 = vrot.slane %v9442, %v9449
  %v9452 = vunpack.c.l.s4 1983009808
  %v9453 = vunpack.c.0.s8 %v9452
  %v9454 = vlaneseq
  %v9455 = vshrl.u32 %v9454, 7
  %v9456 = vsub.s32 %v9453, %v9455
  %v9457 = vrot.slane %v9443, %v9456
  %v9458 = vcombine.low %v9450, %v9457
  %v9460 = vadd.f32 %v8712, %v9458
  %v9461 = vmul.f32 %v9271, 0.5
  %v9462 = vtanh.pop %v9461
  %v9463 = vadd.f32 %v9462, 1.0
  %v9464 = vmul.f32 %v9463, 0.5
  %v9465 = vmul.f32 %v9272, 0.5
  %v9466 = vtanh.pop %v9465
  %v9467 = vadd.f32 %v9466, 1.0
  %v9468 = vmul.f32 %v9467, 0.5
  %v9469 = vtanh.pop %v9273
  %v9470 = vmul.f32 %v9468, %v8673
  %v9471 = vmul.f32 %v9464, %v9469
  %v9472 = vadd.f32 %v9470, %v9471
  %v9473 = vmul.f32 %v9460, 0.5
  %v9474 = vtanh.pop %v9473
  %v9475 = vadd.f32 %v9474, 1.0
  %v9476 = vmul.f32 %v9475, 0.5
  %v9477 = vtanh.pop %v9472
  %v9478 = vmul.f32 %v9476, %v9477
  %s9479 = scalar_lea.vmem %s2, 56
  %9480 = vst [vmem:[%s9479] sm:$0xff] %v9478
  %9481 = vst [vmem:[#allocation2] sm:$0xff] %v9478
  %9482 = vst [vmem:[#allocation3] sm:$0xff] %v9472
  // Predicated region
  $region14: #{lstm_module_forward.1} parent=0 // pred_check
    _
  $region15: #{lstm_module_forward.1} parent=0 // pred_check_branch
    %9484 = sbr.rel (0) target = $region17
  $region16: #{lstm_module_forward.1} parent=0 // pred_region
    _
  $region17: #{lstm_module_forward.1} parent=0 // pred_fallthru
    _
  // Predicated region
  $region18: #{lstm_module_forward.1} parent=0 // pred_check
    _
  $region19: #{lstm_module_forward.1} parent=0 // pred_check_branch
    %9486 = sbr.rel (0) target = $region21
  $region20: #{lstm_module_forward.1} parent=0 // pred_region
    _
  $region21: #{lstm_module_forward.1} parent=0 // pred_fallthru
    _

</llo_original>
